<compile_context>
chip_gen: v7x
topology: tpu7x:2x2x1
jax: 0.10.0
libtpu: 0.0.40
codegen_flags: <defaults>
</compile_context>

<pallas_src>
import jax
import jax.numpy as jnp
from jax.experimental import pallas as pl
from jax.experimental.pallas import tpu as pltpu

IN_DIM = 1024
HID1 = 1024
HID2 = 256


def classifier_kernel(x_ref, w1_ref, b1_ref, w2_ref, b2_ref, w3_ref, b3_ref,
                      o_ref):
    # Layer 1: Linear(1024 -> 1024) + ReLU  (bf16 MXU, f32 accumulate)
    x_bf = x_ref[...].astype(jnp.bfloat16)
    h1 = jnp.dot(x_bf, w1_ref[...], preferred_element_type=jnp.float32)
    h1 = jnp.maximum(h1 + b1_ref[...], 0.0)

    # Dropout(0.5): identity in eval mode.

    # Layer 2: Linear(1024 -> 256) + ReLU
    h2 = jnp.dot(h1.astype(jnp.bfloat16), w2_ref[...],
                 preferred_element_type=jnp.float32)
    h2 = jnp.maximum(h2 + b2_ref[...], 0.0)

    # Layer 3: Linear(256 -> 1) as a VPU multiply + cross-lane (XLU) reduction;
    # an N=1 MXU matmul would waste 255/256 of the MXU columns.
    logits = jnp.sum(h2 * w3_ref[...], axis=-1, keepdims=True) + b3_ref[...]

    # NOTE: output block is (TM, 1); lane-dense (1, TM) layout would need an
    # in-kernel transpose — skipped since output bytes here are negligible.
    o_ref[...] = jax.nn.sigmoid(logits).astype(o_ref.dtype)


def classifier_forward(x, params, *, block_b=256):
    """x: (B, 1024) float32 -> (B, 1) float32."""
    w1, b1, w2, b2, w3, b3 = params
    B = x.shape[0]

    # Pad batch to a multiple of the tile so every block is (block_b, 1024).
    b_pad = pl.cdiv(B, block_b) * block_b
    if b_pad != B:
        x = jnp.pad(x, ((0, b_pad - B), (0, 0)))
    grid = (b_pad // block_b,)

    const2d = lambda i: (0, 0)  # weights/biases stay resident in VMEM

    cost = pl.CostEstimate(
        flops=2 * b_pad * (IN_DIM * HID1 + HID1 * HID2 + HID2),
        transcendentals=b_pad,  # sigmoid
        bytes_accessed=(b_pad * IN_DIM * 4                 # x (f32)
                        + (IN_DIM * HID1 + HID1 * HID2) * 2  # bf16 weights
                        + (HID1 + HID2 + HID2 + 1) * 4       # f32 biases + w3
                        + b_pad * 4))                        # output

    out = pl.pallas_call(
        classifier_kernel,
        out_shape=jax.ShapeDtypeStruct((b_pad, 1), jnp.float32),
        grid=grid,
        in_specs=[
            pl.BlockSpec((block_b, IN_DIM), lambda i: (i, 0)),   # x tile
            pl.BlockSpec((IN_DIM, HID1), const2d),               # w1 (bf16)
            pl.BlockSpec((1, HID1), const2d),                    # b1
            pl.BlockSpec((HID1, HID2), const2d),                 # w2 (bf16)
            pl.BlockSpec((1, HID2), const2d),                    # b2
            pl.BlockSpec((1, HID2), const2d),                    # w3 row
            pl.BlockSpec((1, 1), const2d),                       # b3
        ],
        out_specs=pl.BlockSpec((block_b, 1), lambda i: (i, 0)),
        compiler_params=pltpu.CompilerParams(
            dimension_semantics=("parallel",),   # megacore sharding on v7x
            vmem_limit_bytes=24 << 20),
        cost_estimate=cost,
    )(x, w1, b1, w2, b2, w3, b3)

    return out[:B]


def init_params(key):
    """Deterministic init. Weights stored as (in, out) = PyTorch weight.T.

    w1/w2 are kept in bf16 (MXU operands); biases and the (1, 256) final-layer
    row stay in f32 (VPU math).
    """
    k1, k2, k3, k4, k5, k6 = jax.random.split(key, 6)

    def linear_init(kw, kb, fan_in, fan_out, w_dtype):
        # Mimic PyTorch's default U(-1/sqrt(fan_in), 1/sqrt(fan_in)).
        bound = 1.0 / (fan_in ** 0.5)
        w = jax.random.uniform(kw, (fan_in, fan_out), jnp.float32,
                               minval=-bound, maxval=bound).astype(w_dtype)
        b = jax.random.uniform(kb, (1, fan_out), jnp.float32,
                               minval=-bound, maxval=bound)
        return w, b

    w1, b1 = linear_init(k1, k2, IN_DIM, HID1, jnp.bfloat16)
    w2, b2 = linear_init(k3, k4, HID1, HID2, jnp.bfloat16)
    w3_col, b3 = linear_init(k5, k6, HID2, 1, jnp.float32)
    w3 = w3_col.reshape(1, HID2)  # pass as a row for the VPU reduction
    return (w1, b1, w2, b2, w3, b3)


def reference_forward(x, params):
    """Plain-JAX reference using the same precision path as the kernel."""
    w1, b1, w2, b2, w3, b3 = params
    h1 = jnp.dot(x.astype(jnp.bfloat16), w1,
                 preferred_element_type=jnp.float32)
    h1 = jnp.maximum(h1 + b1, 0.0)
    h2 = jnp.dot(h1.astype(jnp.bfloat16), w2,
                 preferred_element_type=jnp.float32)
    h2 = jnp.maximum(h2 + b2, 0.0)
    logits = jnp.sum(h2 * w3, axis=-1, keepdims=True) + b3
    return jax.nn.sigmoid(logits)


if __name__ == "__main__":
    key = jax.random.PRNGKey(0)
    kx, kp = jax.random.split(key)

    B = 8
    x = jax.random.normal(kx, (B, IN_DIM), dtype=jnp.float32)
    params = init_params(kp)

    out = jax.block_until_ready(classifier_forward(x, params))
    ref = reference_forward(x, params)

    assert out.shape == (B, 1), out.shape
    assert jnp.allclose(out, ref, atol=1e-3, rtol=1e-3), "mismatch vs reference"

    print("KERNEL_OK")
</pallas_src>

<mosaic_0001>
module attributes {stable_mosaic.version = 11 : i64} {
  func.func @classifier_kernel(%arg0: i32, %arg1: memref<256x1024xf32, #tpu.memory_space<vmem>>, %arg2: memref<1024x1024xbf16, #tpu.memory_space<vmem>>, %arg3: memref<1x1024xf32, #tpu.memory_space<vmem>>, %arg4: memref<1024x256xbf16, #tpu.memory_space<vmem>>, %arg5: memref<1x256xf32, #tpu.memory_space<vmem>>, %arg6: memref<1x256xf32, #tpu.memory_space<vmem>>, %arg7: memref<1x1xf32, #tpu.memory_space<vmem>>, %arg8: memref<256x1xf32, #tpu.memory_space<vmem>>) attributes {dimension_semantics = [#tpu.dimension_semantics<parallel>], iteration_bounds = array<i64: 1>, scalar_prefetch = 0 : i64, scratch_operands = 0 : i64, tpu.core_type = #tpu.core_type<tc>, window_params = [{transform_indices = @transform_0, window_bounds = array<i64: 256, 1024>}, {pipeline_mode = #tpu.pipeline_mode<synchronous>, transform_indices = @transform_1, window_bounds = array<i64: 1024, 1024>}, {pipeline_mode = #tpu.pipeline_mode<synchronous>, transform_indices = @transform_2, window_bounds = array<i64: 1, 1024>}, {pipeline_mode = #tpu.pipeline_mode<synchronous>, transform_indices = @transform_3, window_bounds = array<i64: 1024, 256>}, {pipeline_mode = #tpu.pipeline_mode<synchronous>, transform_indices = @transform_4, window_bounds = array<i64: 1, 256>}, {pipeline_mode = #tpu.pipeline_mode<synchronous>, transform_indices = @transform_5, window_bounds = array<i64: 1, 256>}, {pipeline_mode = #tpu.pipeline_mode<synchronous>, transform_indices = @transform_6, window_bounds = array<i64: 1, 1>}, {transform_indices = @transform_7, window_bounds = array<i64: 256, 1>}]} {
    %c0 = arith.constant 0 : index
    %c0_0 = arith.constant 0 : index
    %0 = vector.load %arg1[%c0, %c0_0] : memref<256x1024xf32, #tpu.memory_space<vmem>>, vector<256x1024xf32>
    %1 = arith.truncf %0 : vector<256x1024xf32> to vector<256x1024xbf16>
    %c0_1 = arith.constant 0 : index
    %c0_2 = arith.constant 0 : index
    %2 = vector.load %arg2[%c0_1, %c0_2] : memref<1024x1024xbf16, #tpu.memory_space<vmem>>, vector<1024x1024xbf16>
    %cst = arith.constant dense<0.000000e+00> : vector<256x1024xf32>
    %3 = tpu.matmul %1, %2, %cst {dimension_numbers = #tpu.dot_dimension_numbers<[1], [0], [0], [1], [0, 0, 1, 1], [], []>} : vector<256x1024xbf16>, vector<1024x1024xbf16>, vector<256x1024xf32> -> vector<256x1024xf32>
    %c0_3 = arith.constant 0 : index
    %c0_4 = arith.constant 0 : index
    %4 = vector.load %arg3[%c0_3, %c0_4] : memref<1x1024xf32, #tpu.memory_space<vmem>>, vector<1x1024xf32>
    %5 = vector.broadcast %4 : vector<1x1024xf32> to vector<256x1024xf32>
    %6 = arith.addf %3, %5 : vector<256x1024xf32>
    %cst_5 = arith.constant 0.000000e+00 : f32
    %7 = vector.broadcast %cst_5 : f32 to vector<256x1024xf32>
    %8 = arith.maximumf %6, %7 : vector<256x1024xf32>
    %9 = arith.truncf %8 : vector<256x1024xf32> to vector<256x1024xbf16>
    %c0_6 = arith.constant 0 : index
    %c0_7 = arith.constant 0 : index
    %10 = vector.load %arg4[%c0_6, %c0_7] : memref<1024x256xbf16, #tpu.memory_space<vmem>>, vector<1024x256xbf16>
    %cst_8 = arith.constant dense<0.000000e+00> : vector<256x256xf32>
    %11 = tpu.matmul %9, %10, %cst_8 {dimension_numbers = #tpu.dot_dimension_numbers<[1], [0], [0], [1], [0, 0, 1, 1], [], []>} : vector<256x1024xbf16>, vector<1024x256xbf16>, vector<256x256xf32> -> vector<256x256xf32>
    %c0_9 = arith.constant 0 : index
    %c0_10 = arith.constant 0 : index
    %12 = vector.load %arg5[%c0_9, %c0_10] : memref<1x256xf32, #tpu.memory_space<vmem>>, vector<1x256xf32>
    %13 = vector.broadcast %12 : vector<1x256xf32> to vector<256x256xf32>
    %14 = arith.addf %11, %13 : vector<256x256xf32>
    %cst_11 = arith.constant 0.000000e+00 : f32
    %15 = vector.broadcast %cst_11 : f32 to vector<256x256xf32>
    %16 = arith.maximumf %14, %15 : vector<256x256xf32>
    %c0_12 = arith.constant 0 : index
    %c0_13 = arith.constant 0 : index
    %17 = vector.load %arg6[%c0_12, %c0_13] : memref<1x256xf32, #tpu.memory_space<vmem>>, vector<1x256xf32>
    %18 = vector.broadcast %17 : vector<1x256xf32> to vector<256x256xf32>
    %19 = arith.mulf %16, %18 : vector<256x256xf32>
    %cst_14 = arith.constant dense<0.000000e+00> : vector<256xf32>
    %20 = vector.multi_reduction <add>, %19, %cst_14 [1] : vector<256x256xf32> to vector<256xf32>
    %21 = vector.shape_cast %20 : vector<256xf32> to vector<256x1xf32>
    %c0_15 = arith.constant 0 : index
    %c0_16 = arith.constant 0 : index
    %22 = vector.load %arg7[%c0_15, %c0_16] : memref<1x1xf32, #tpu.memory_space<vmem>>, vector<1x1xf32>
    %23 = vector.broadcast %22 : vector<1x1xf32> to vector<256x1xf32>
    %24 = arith.addf %21, %23 : vector<256x1xf32>
    %25 = arith.negf %24 : vector<256x1xf32>
    %26 = math.exp %25 : vector<256x1xf32>
    %cst_17 = arith.constant 1.000000e+00 : f32
    %27 = vector.broadcast %cst_17 : f32 to vector<256x1xf32>
    %28 = arith.addf %27, %26 : vector<256x1xf32>
    %29 = arith.divf %27, %28 : vector<256x1xf32>
    %c0_18 = arith.constant 0 : index
    %c0_19 = arith.constant 0 : index
    %30 = vector.load %arg8[%c0_18, %c0_19] : memref<256x1xf32, #tpu.memory_space<vmem>>, vector<256x1xf32>
    tpu.vector_store %arg8[%c0_18, %c0_19], %29 {strides = array<i32>} : memref<256x1xf32, #tpu.memory_space<vmem>>, vector<256x1xf32>,
    return
  }
  func.func @transform_0(%arg0: i32) -> (i32, i32) {
    %c0_i32 = arith.constant 0 : i32
    %c0_i32_0 = arith.constant 0 : i32
    return %arg0, %c0_i32 : i32, i32
  }
  func.func @transform_1(%arg0: i32) -> (i32, i32) {
    %c0_i32 = arith.constant 0 : i32
    %c0_i32_0 = arith.constant 0 : i32
    %c0_i32_1 = arith.constant 0 : i32
    return %c0_i32, %c0_i32_0 : i32, i32
  }
  func.func @transform_2(%arg0: i32) -> (i32, i32) {
    %c0_i32 = arith.constant 0 : i32
    %c0_i32_0 = arith.constant 0 : i32
    %c0_i32_1 = arith.constant 0 : i32
    return %c0_i32, %c0_i32_0 : i32, i32
  }
  func.func @transform_3(%arg0: i32) -> (i32, i32) {
    %c0_i32 = arith.constant 0 : i32
    %c0_i32_0 = arith.constant 0 : i32
    %c0_i32_1 = arith.constant 0 : i32
    return %c0_i32, %c0_i32_0 : i32, i32
  }
  func.func @transform_4(%arg0: i32) -> (i32, i32) {
    %c0_i32 = arith.constant 0 : i32
    %c0_i32_0 = arith.constant 0 : i32
    %c0_i32_1 = arith.constant 0 : i32
    return %c0_i32, %c0_i32_0 : i32, i32
  }
  func.func @transform_5(%arg0: i32) -> (i32, i32) {
    %c0_i32 = arith.constant 0 : i32
    %c0_i32_0 = arith.constant 0 : i32
    %c0_i32_1 = arith.constant 0 : i32
    return %c0_i32, %c0_i32_0 : i32, i32
  }
  func.func @transform_6(%arg0: i32) -> (i32, i32) {
    %c0_i32 = arith.constant 0 : i32
    %c0_i32_0 = arith.constant 0 : i32
    %c0_i32_1 = arith.constant 0 : i32
    return %c0_i32, %c0_i32_0 : i32, i32
  }
  func.func @transform_7(%arg0: i32) -> (i32, i32) {
    %c0_i32 = arith.constant 0 : i32
    %c0_i32_0 = arith.constant 0 : i32
    return %arg0, %c0_i32 : i32, i32
  }
}

</mosaic_0001>

<llo_original>
// kernel: tpu_custom_call.1
$region0: #{tpu_custom_call.1}
  #allocation0 [shape = 'u32[]', space=smem, size = 0x4, offset = 0x4, fixed_abs, tag = 'smem constant byte address 0x4 - core index']
  #allocation1 [shape = 'u32[144,128]{1,0:T(1,128)}', space=vmem, size = 0x12000, scoped, tag = 'internal scratch']
  #allocation2 [shape = 'f32[1,1]{1,0:T(1,128)S(1)}', space=vmem, size = 0x200, scoped, tag = 'scoped memory for tpu_custom_call.1']
  %s0 = inlined_call_operand.hbm [shape: f32[256,1024], index: 0, kind: input, shape index: {}]
  %s1 = inlined_call_operand.hbm [shape: bf16[1024,1024], index: 1, kind: input, shape index: {}]
  %s2 = inlined_call_operand.hbm [shape: f32[1,1024], index: 2, kind: input, shape index: {}]
  %s3 = inlined_call_operand.hbm [shape: bf16[1024,256], index: 3, kind: input, shape index: {}]
  %s4 = inlined_call_operand.hbm [shape: f32[1,256], index: 4, kind: input, shape index: {}]
  %s5 = inlined_call_operand.hbm [shape: f32[1,256], index: 5, kind: input, shape index: {}]
  %s6 = inlined_call_operand.<no memory space> [shape: f32[1,1], index: 6, kind: input, shape index: {}]
  %s7 = inlined_call_operand.vmem [shape: f32[256,1], index: 7, kind: output, shape index: {}]
  %s8 = sld [smem:[#allocation0]]
  $region62: #{tpu_custom_call.1} parent=0
    _
  %s10 = ssub.s32 1, %s8
  %s11 = scalar_select 0, %s10, %s8
  %v12 = vstv %s6
  %13 = vst [vmem:[#allocation2] sm:$0x1] %v12
  $region1: #{tpu_custom_call.1} parent=0
    #allocation3 [shape = 'u8[1048576]{0}', space=vmem, size = 0x100000, scoped, tag = 'input window, operand 0, single buffered']
    #allocation4 [shape = 's32[1]{0}', space=sflag, size = 0x4, scoped, tag = 'scoped memory for tpu_custom_call.1']
    #allocation5 [shape = 'u8[2097152]{0}', space=vmem, size = 0x200000, scoped, tag = 'input window, operand 1, single buffered']
    #allocation6 [shape = 's32[1]{0}', space=sflag, size = 0x4, scoped, tag = 'scoped memory for tpu_custom_call.1']
    #allocation7 [shape = 'u8[4096]{0}', space=vmem, size = 0x1000, scoped, tag = 'input window, operand 2, single buffered']
    #allocation8 [shape = 'u8[524288]{0}', space=vmem, size = 0x80000, scoped, tag = 'input window, operand 3, single buffered']
    #allocation9 [shape = 's32[1]{0}', space=sflag, size = 0x4, scoped, tag = 'scoped memory for tpu_custom_call.1']
    #allocation10 [shape = 'u8[1024]{0}', space=vmem, size = 0x400, scoped, tag = 'input window, operand 4, single buffered']
    #allocation11 [shape = 'u8[1024]{0}', space=vmem, size = 0x400, scoped, tag = 'input window, operand 5, single buffered']
    #allocation12 [shape = 's32[1]{0}', space=sflag, size = 0x4, scoped, tag = 'scoped memory for tpu_custom_call.1']
    %14 = vsyncpa [#allocation4], 0
    %15 = vsyncpa [#allocation6], 0
    %16 = vsyncpa [#allocation9], 0
    %17 = vsyncpa [#allocation12], 0
    // Predicated region
    $region2: #{tpu_custom_call.1} parent=1 // pred_check
      _
    $region3: #{tpu_custom_call.1} parent=1 // pred_check_branch
      %19 = sbr.rel (0) target = $region5
    $region4: #{tpu_custom_call.1} parent=1 // pred_region
      %s21 = ssub.s32 32768, 32768
      %22 = vsyncadd [#allocation4], %s21
      %s23 = sshll.u32 [#allocation3], 4
      %s24 = int_to_ptr.vmem [resolvable:$true] %s23
      %29 = dma.hbm_to_vmem [thread:$0]  %s0, 32768, %s24, [#allocation4], 1024, 1024, 64
    $region5: #{tpu_custom_call.1} parent=1 // pred_fallthru
      _
    // Predicated region
    $region6: #{tpu_custom_call.1} parent=1 // pred_check
      _
    $region7: #{tpu_custom_call.1} parent=1 // pred_check_branch
      %31 = sbr.rel (0) target = $region9
    $region8: #{tpu_custom_call.1} parent=1 // pred_region
      %s33 = ssub.s32 65536, 65536
      %34 = vsyncadd [#allocation6], %s33
      %s35 = sshll.u32 [#allocation5], 4
      %s36 = int_to_ptr.vmem [resolvable:$true] %s35
      %41 = dma.hbm_to_vmem [thread:$0]  %s1, 65536, %s36, [#allocation6], 512, 512, 32
    $region9: #{tpu_custom_call.1} parent=1 // pred_fallthru
      _
    // Predicated region
    $region10: #{tpu_custom_call.1} parent=1 // pred_check
      _
    $region11: #{tpu_custom_call.1} parent=1 // pred_check_branch
      %43 = sbr.rel (0) target = $region13
    $region12: #{tpu_custom_call.1} parent=1 // pred_region
      %s45 = ssub.s32 128, 128
      %46 = vsyncadd [#allocation6], %s45
      %s48 = sshll.u32 [#allocation7], 4
      %s49 = int_to_ptr.vmem [resolvable:$true] %s48
      %51 = dma.hbm_to_vmem [thread:$0]  %s2, 128, %s49, [#allocation6]
    $region13: #{tpu_custom_call.1} parent=1 // pred_fallthru
      _
    // Predicated region
    $region14: #{tpu_custom_call.1} parent=1 // pred_check
      _
    $region15: #{tpu_custom_call.1} parent=1 // pred_check_branch
      %53 = sbr.rel (0) target = $region17
    $region16: #{tpu_custom_call.1} parent=1 // pred_region
      %s55 = ssub.s32 16384, 16384
      %56 = vsyncadd [#allocation9], %s55
      %s57 = sshll.u32 [#allocation8], 4
      %s58 = int_to_ptr.vmem [resolvable:$true] %s57
      %63 = dma.hbm_to_vmem [thread:$0]  %s3, 16384, %s58, [#allocation9], 128, 128, 8
    $region17: #{tpu_custom_call.1} parent=1 // pred_fallthru
      _
    // Predicated region
    $region18: #{tpu_custom_call.1} parent=1 // pred_check
      _
    $region19: #{tpu_custom_call.1} parent=1 // pred_check_branch
      %65 = sbr.rel (0) target = $region21
    $region20: #{tpu_custom_call.1} parent=1 // pred_region
      %s67 = ssub.s32 32, 32
      %68 = vsyncadd [#allocation9], %s67
      %s70 = sshll.u32 [#allocation10], 4
      %s71 = int_to_ptr.vmem [resolvable:$true] %s70
      %73 = dma.hbm_to_vmem [thread:$0]  %s4, 32, %s71, [#allocation9]
    $region21: #{tpu_custom_call.1} parent=1 // pred_fallthru
      _
    // Predicated region
    $region22: #{tpu_custom_call.1} parent=1 // pred_check
      _
    $region23: #{tpu_custom_call.1} parent=1 // pred_check_branch
      %75 = sbr.rel (0) target = $region25
    $region24: #{tpu_custom_call.1} parent=1 // pred_region
      %s77 = ssub.s32 32, 32
      %78 = vsyncadd [#allocation12], %s77
      %s80 = sshll.u32 [#allocation11], 4
      %s81 = int_to_ptr.vmem [resolvable:$true] %s80
      %83 = dma.hbm_to_vmem [thread:$0]  %s5, 32, %s81, [#allocation12]
    $region25: #{tpu_custom_call.1} parent=1 // pred_fallthru
      _
    // Predicated region
    $region26: #{tpu_custom_call.1} parent=1 // pred_check
      _
    $region27: #{tpu_custom_call.1} parent=1 // pred_check_branch
      %85 = sbr.rel (0) target = $region29
    $region28: #{tpu_custom_call.1} parent=1 // pred_region
      _
    $region29: #{tpu_custom_call.1} parent=1 // pred_fallthru
      _
    // Predicated region
    $region30: #{tpu_custom_call.1} parent=1 // pred_check
      _
    $region31: #{tpu_custom_call.1} parent=1 // pred_check_branch
      %87 = sbr.rel (0) target = $region33
    $region32: #{tpu_custom_call.1} parent=1 // pred_region
      %88 = dma.done [#allocation4], 32768
    $region33: #{tpu_custom_call.1} parent=1 // pred_fallthru
      _
    // Predicated region
    $region34: #{tpu_custom_call.1} parent=1 // pred_check
      _
    $region35: #{tpu_custom_call.1} parent=1 // pred_check_branch
      %90 = sbr.rel (0) target = $region37
    $region36: #{tpu_custom_call.1} parent=1 // pred_region
      %91 = dma.done [#allocation6], 65536
    $region37: #{tpu_custom_call.1} parent=1 // pred_fallthru
      _
    // Predicated region
    $region38: #{tpu_custom_call.1} parent=1 // pred_check
      _
    $region39: #{tpu_custom_call.1} parent=1 // pred_check_branch
      %93 = sbr.rel (0) target = $region41
    $region40: #{tpu_custom_call.1} parent=1 // pred_region
      %94 = dma.done [#allocation6], 128
    $region41: #{tpu_custom_call.1} parent=1 // pred_fallthru
      _
    // Predicated region
    $region42: #{tpu_custom_call.1} parent=1 // pred_check
      _
    $region43: #{tpu_custom_call.1} parent=1 // pred_check_branch
      %96 = sbr.rel (0) target = $region45
    $region44: #{tpu_custom_call.1} parent=1 // pred_region
      %97 = dma.done [#allocation9], 16384
    $region45: #{tpu_custom_call.1} parent=1 // pred_fallthru
      _
    // Predicated region
    $region46: #{tpu_custom_call.1} parent=1 // pred_check
      _
    $region47: #{tpu_custom_call.1} parent=1 // pred_check_branch
      %99 = sbr.rel (0) target = $region49
    $region48: #{tpu_custom_call.1} parent=1 // pred_region
      %100 = dma.done [#allocation9], 32
    $region49: #{tpu_custom_call.1} parent=1 // pred_fallthru
      _
    // Predicated region
    $region50: #{tpu_custom_call.1} parent=1 // pred_check
      _
    $region51: #{tpu_custom_call.1} parent=1 // pred_check_branch
      %102 = sbr.rel (0) target = $region53
    $region52: #{tpu_custom_call.1} parent=1 // pred_region
      %103 = dma.done [#allocation12], 32
    $region53: #{tpu_custom_call.1} parent=1 // pred_fallthru
      _
    %v104 = vld [vmem:[#allocation3] sm:$0xff]
    %v105 = vld [vmem:[#allocation3 + $0x8] sm:$0xff]
    %v106 = vld [vmem:[#allocation3 + $0x10] sm:$0xff]
    %v107 = vld [vmem:[#allocation3 + $0x18] sm:$0xff]
    %v108 = vld [vmem:[#allocation3 + $0x20] sm:$0xff]
    %v109 = vld [vmem:[#allocation3 + $0x28] sm:$0xff]
    %v110 = vld [vmem:[#allocation3 + $0x30] sm:$0xff]
    %v111 = vld [vmem:[#allocation3 + $0x38] sm:$0xff]
    %v112 = vld [vmem:[#allocation3 + $0x40] sm:$0xff]
    %v113 = vld [vmem:[#allocation3 + $0x48] sm:$0xff]
    %v114 = vld [vmem:[#allocation3 + $0x50] sm:$0xff]
    %v115 = vld [vmem:[#allocation3 + $0x58] sm:$0xff]
    %v116 = vld [vmem:[#allocation3 + $0x60] sm:$0xff]
    %v117 = vld [vmem:[#allocation3 + $0x68] sm:$0xff]
    %v118 = vld [vmem:[#allocation3 + $0x70] sm:$0xff]
    %v119 = vld [vmem:[#allocation3 + $0x78] sm:$0xff]
    %v120 = vld [vmem:[#allocation3 + $0x80] sm:$0xff]
    %v121 = vld [vmem:[#allocation3 + $0x88] sm:$0xff]
    %v122 = vld [vmem:[#allocation3 + $0x90] sm:$0xff]
    %v123 = vld [vmem:[#allocation3 + $0x98] sm:$0xff]
    %v124 = vld [vmem:[#allocation3 + $0xa0] sm:$0xff]
    %v125 = vld [vmem:[#allocation3 + $0xa8] sm:$0xff]
    %v126 = vld [vmem:[#allocation3 + $0xb0] sm:$0xff]
    %v127 = vld [vmem:[#allocation3 + $0xb8] sm:$0xff]
    %v128 = vld [vmem:[#allocation3 + $0xc0] sm:$0xff]
    %v129 = vld [vmem:[#allocation3 + $0xc8] sm:$0xff]
    %v130 = vld [vmem:[#allocation3 + $0xd0] sm:$0xff]
    %v131 = vld [vmem:[#allocation3 + $0xd8] sm:$0xff]
    %v132 = vld [vmem:[#allocation3 + $0xe0] sm:$0xff]
    %v133 = vld [vmem:[#allocation3 + $0xe8] sm:$0xff]
    %v134 = vld [vmem:[#allocation3 + $0xf0] sm:$0xff]
    %v135 = vld [vmem:[#allocation3 + $0xf8] sm:$0xff]
    %v136 = vld [vmem:[#allocation3 + $0x100] sm:$0xff]
    %v137 = vld [vmem:[#allocation3 + $0x108] sm:$0xff]
    %v138 = vld [vmem:[#allocation3 + $0x110] sm:$0xff]
    %v139 = vld [vmem:[#allocation3 + $0x118] sm:$0xff]
    %v140 = vld [vmem:[#allocation3 + $0x120] sm:$0xff]
    %v141 = vld [vmem:[#allocation3 + $0x128] sm:$0xff]
    %v142 = vld [vmem:[#allocation3 + $0x130] sm:$0xff]
    %v143 = vld [vmem:[#allocation3 + $0x138] sm:$0xff]
    %v144 = vld [vmem:[#allocation3 + $0x140] sm:$0xff]
    %v145 = vld [vmem:[#allocation3 + $0x148] sm:$0xff]
    %v146 = vld [vmem:[#allocation3 + $0x150] sm:$0xff]
    %v147 = vld [vmem:[#allocation3 + $0x158] sm:$0xff]
    %v148 = vld [vmem:[#allocation3 + $0x160] sm:$0xff]
    %v149 = vld [vmem:[#allocation3 + $0x168] sm:$0xff]
    %v150 = vld [vmem:[#allocation3 + $0x170] sm:$0xff]
    %v151 = vld [vmem:[#allocation3 + $0x178] sm:$0xff]
    %v152 = vld [vmem:[#allocation3 + $0x180] sm:$0xff]
    %v153 = vld [vmem:[#allocation3 + $0x188] sm:$0xff]
    %v154 = vld [vmem:[#allocation3 + $0x190] sm:$0xff]
    %v155 = vld [vmem:[#allocation3 + $0x198] sm:$0xff]
    %v156 = vld [vmem:[#allocation3 + $0x1a0] sm:$0xff]
    %v157 = vld [vmem:[#allocation3 + $0x1a8] sm:$0xff]
    %v158 = vld [vmem:[#allocation3 + $0x1b0] sm:$0xff]
    %v159 = vld [vmem:[#allocation3 + $0x1b8] sm:$0xff]
    %v160 = vld [vmem:[#allocation3 + $0x1c0] sm:$0xff]
    %v161 = vld [vmem:[#allocation3 + $0x1c8] sm:$0xff]
    %v162 = vld [vmem:[#allocation3 + $0x1d0] sm:$0xff]
    %v163 = vld [vmem:[#allocation3 + $0x1d8] sm:$0xff]
    %v164 = vld [vmem:[#allocation3 + $0x1e0] sm:$0xff]
    %v165 = vld [vmem:[#allocation3 + $0x1e8] sm:$0xff]
    %v166 = vld [vmem:[#allocation3 + $0x1f0] sm:$0xff]
    %v167 = vld [vmem:[#allocation3 + $0x1f8] sm:$0xff]
    %v168 = vld [vmem:[#allocation3 + $0x200] sm:$0xff]
    %v169 = vld [vmem:[#allocation3 + $0x208] sm:$0xff]
    %v170 = vld [vmem:[#allocation3 + $0x210] sm:$0xff]
    %v171 = vld [vmem:[#allocation3 + $0x218] sm:$0xff]
    %v172 = vld [vmem:[#allocation3 + $0x220] sm:$0xff]
    %v173 = vld [vmem:[#allocation3 + $0x228] sm:$0xff]
    %v174 = vld [vmem:[#allocation3 + $0x230] sm:$0xff]
    %v175 = vld [vmem:[#allocation3 + $0x238] sm:$0xff]
    %v176 = vld [vmem:[#allocation3 + $0x240] sm:$0xff]
    %v177 = vld [vmem:[#allocation3 + $0x248] sm:$0xff]
    %v178 = vld [vmem:[#allocation3 + $0x250] sm:$0xff]
    %v179 = vld [vmem:[#allocation3 + $0x258] sm:$0xff]
    %v180 = vld [vmem:[#allocation3 + $0x260] sm:$0xff]
    %v181 = vld [vmem:[#allocation3 + $0x268] sm:$0xff]
    %v182 = vld [vmem:[#allocation3 + $0x270] sm:$0xff]
    %v183 = vld [vmem:[#allocation3 + $0x278] sm:$0xff]
    %v184 = vld [vmem:[#allocation3 + $0x280] sm:$0xff]
    %v185 = vld [vmem:[#allocation3 + $0x288] sm:$0xff]
    %v186 = vld [vmem:[#allocation3 + $0x290] sm:$0xff]
    %v187 = vld [vmem:[#allocation3 + $0x298] sm:$0xff]
    %v188 = vld [vmem:[#allocation3 + $0x2a0] sm:$0xff]
    %v189 = vld [vmem:[#allocation3 + $0x2a8] sm:$0xff]
    %v190 = vld [vmem:[#allocation3 + $0x2b0] sm:$0xff]
    %v191 = vld [vmem:[#allocation3 + $0x2b8] sm:$0xff]
    %v192 = vld [vmem:[#allocation3 + $0x2c0] sm:$0xff]
    %v193 = vld [vmem:[#allocation3 + $0x2c8] sm:$0xff]
    %v194 = vld [vmem:[#allocation3 + $0x2d0] sm:$0xff]
    %v195 = vld [vmem:[#allocation3 + $0x2d8] sm:$0xff]
    %v196 = vld [vmem:[#allocation3 + $0x2e0] sm:$0xff]
    %v197 = vld [vmem:[#allocation3 + $0x2e8] sm:$0xff]
    %v198 = vld [vmem:[#allocation3 + $0x2f0] sm:$0xff]
    %v199 = vld [vmem:[#allocation3 + $0x2f8] sm:$0xff]
    %v200 = vld [vmem:[#allocation3 + $0x300] sm:$0xff]
    %v201 = vld [vmem:[#allocation3 + $0x308] sm:$0xff]
    %v202 = vld [vmem:[#allocation3 + $0x310] sm:$0xff]
    %v203 = vld [vmem:[#allocation3 + $0x318] sm:$0xff]
    %v204 = vld [vmem:[#allocation3 + $0x320] sm:$0xff]
    %v205 = vld [vmem:[#allocation3 + $0x328] sm:$0xff]
    %v206 = vld [vmem:[#allocation3 + $0x330] sm:$0xff]
    %v207 = vld [vmem:[#allocation3 + $0x338] sm:$0xff]
    %v208 = vld [vmem:[#allocation3 + $0x340] sm:$0xff]
    %v209 = vld [vmem:[#allocation3 + $0x348] sm:$0xff]
    %v210 = vld [vmem:[#allocation3 + $0x350] sm:$0xff]
    %v211 = vld [vmem:[#allocation3 + $0x358] sm:$0xff]
    %v212 = vld [vmem:[#allocation3 + $0x360] sm:$0xff]
    %v213 = vld [vmem:[#allocation3 + $0x368] sm:$0xff]
    %v214 = vld [vmem:[#allocation3 + $0x370] sm:$0xff]
    %v215 = vld [vmem:[#allocation3 + $0x378] sm:$0xff]
    %v216 = vld [vmem:[#allocation3 + $0x380] sm:$0xff]
    %v217 = vld [vmem:[#allocation3 + $0x388] sm:$0xff]
    %v218 = vld [vmem:[#allocation3 + $0x390] sm:$0xff]
    %v219 = vld [vmem:[#allocation3 + $0x398] sm:$0xff]
    %v220 = vld [vmem:[#allocation3 + $0x3a0] sm:$0xff]
    %v221 = vld [vmem:[#allocation3 + $0x3a8] sm:$0xff]
    %v222 = vld [vmem:[#allocation3 + $0x3b0] sm:$0xff]
    %v223 = vld [vmem:[#allocation3 + $0x3b8] sm:$0xff]
    %v224 = vld [vmem:[#allocation3 + $0x3c0] sm:$0xff]
    %v225 = vld [vmem:[#allocation3 + $0x3c8] sm:$0xff]
    %v226 = vld [vmem:[#allocation3 + $0x3d0] sm:$0xff]
    %v227 = vld [vmem:[#allocation3 + $0x3d8] sm:$0xff]
    %v228 = vld [vmem:[#allocation3 + $0x3e0] sm:$0xff]
    %v229 = vld [vmem:[#allocation3 + $0x3e8] sm:$0xff]
    %v230 = vld [vmem:[#allocation3 + $0x3f0] sm:$0xff]
    %v231 = vld [vmem:[#allocation3 + $0x3f8] sm:$0xff]
    %v232 = vld [vmem:[#allocation3 + $0x400] sm:$0xff]
    %v233 = vld [vmem:[#allocation3 + $0x408] sm:$0xff]
    %v234 = vld [vmem:[#allocation3 + $0x410] sm:$0xff]
    %v235 = vld [vmem:[#allocation3 + $0x418] sm:$0xff]
    %v236 = vld [vmem:[#allocation3 + $0x420] sm:$0xff]
    %v237 = vld [vmem:[#allocation3 + $0x428] sm:$0xff]
    %v238 = vld [vmem:[#allocation3 + $0x430] sm:$0xff]
    %v239 = vld [vmem:[#allocation3 + $0x438] sm:$0xff]
    %v240 = vld [vmem:[#allocation3 + $0x440] sm:$0xff]
    %v241 = vld [vmem:[#allocation3 + $0x448] sm:$0xff]
    %v242 = vld [vmem:[#allocation3 + $0x450] sm:$0xff]
    %v243 = vld [vmem:[#allocation3 + $0x458] sm:$0xff]
    %v244 = vld [vmem:[#allocation3 + $0x460] sm:$0xff]
    %v245 = vld [vmem:[#allocation3 + $0x468] sm:$0xff]
    %v246 = vld [vmem:[#allocation3 + $0x470] sm:$0xff]
    %v247 = vld [vmem:[#allocation3 + $0x478] sm:$0xff]
    %v248 = vld [vmem:[#allocation3 + $0x480] sm:$0xff]
    %v249 = vld [vmem:[#allocation3 + $0x488] sm:$0xff]
    %v250 = vld [vmem:[#allocation3 + $0x490] sm:$0xff]
    %v251 = vld [vmem:[#allocation3 + $0x498] sm:$0xff]
    %v252 = vld [vmem:[#allocation3 + $0x4a0] sm:$0xff]
    %v253 = vld [vmem:[#allocation3 + $0x4a8] sm:$0xff]
    %v254 = vld [vmem:[#allocation3 + $0x4b0] sm:$0xff]
    %v255 = vld [vmem:[#allocation3 + $0x4b8] sm:$0xff]
    %v256 = vld [vmem:[#allocation3 + $0x4c0] sm:$0xff]
    %v257 = vld [vmem:[#allocation3 + $0x4c8] sm:$0xff]
    %v258 = vld [vmem:[#allocation3 + $0x4d0] sm:$0xff]
    %v259 = vld [vmem:[#allocation3 + $0x4d8] sm:$0xff]
    %v260 = vld [vmem:[#allocation3 + $0x4e0] sm:$0xff]
    %v261 = vld [vmem:[#allocation3 + $0x4e8] sm:$0xff]
    %v262 = vld [vmem:[#allocation3 + $0x4f0] sm:$0xff]
    %v263 = vld [vmem:[#allocation3 + $0x4f8] sm:$0xff]
    %v264 = vld [vmem:[#allocation3 + $0x500] sm:$0xff]
    %v265 = vld [vmem:[#allocation3 + $0x508] sm:$0xff]
    %v266 = vld [vmem:[#allocation3 + $0x510] sm:$0xff]
    %v267 = vld [vmem:[#allocation3 + $0x518] sm:$0xff]
    %v268 = vld [vmem:[#allocation3 + $0x520] sm:$0xff]
    %v269 = vld [vmem:[#allocation3 + $0x528] sm:$0xff]
    %v270 = vld [vmem:[#allocation3 + $0x530] sm:$0xff]
    %v271 = vld [vmem:[#allocation3 + $0x538] sm:$0xff]
    %v272 = vld [vmem:[#allocation3 + $0x540] sm:$0xff]
    %v273 = vld [vmem:[#allocation3 + $0x548] sm:$0xff]
    %v274 = vld [vmem:[#allocation3 + $0x550] sm:$0xff]
    %v275 = vld [vmem:[#allocation3 + $0x558] sm:$0xff]
    %v276 = vld [vmem:[#allocation3 + $0x560] sm:$0xff]
    %v277 = vld [vmem:[#allocation3 + $0x568] sm:$0xff]
    %v278 = vld [vmem:[#allocation3 + $0x570] sm:$0xff]
    %v279 = vld [vmem:[#allocation3 + $0x578] sm:$0xff]
    %v280 = vld [vmem:[#allocation3 + $0x580] sm:$0xff]
    %v281 = vld [vmem:[#allocation3 + $0x588] sm:$0xff]
    %v282 = vld [vmem:[#allocation3 + $0x590] sm:$0xff]
    %v283 = vld [vmem:[#allocation3 + $0x598] sm:$0xff]
    %v284 = vld [vmem:[#allocation3 + $0x5a0] sm:$0xff]
    %v285 = vld [vmem:[#allocation3 + $0x5a8] sm:$0xff]
    %v286 = vld [vmem:[#allocation3 + $0x5b0] sm:$0xff]
    %v287 = vld [vmem:[#allocation3 + $0x5b8] sm:$0xff]
    %v288 = vld [vmem:[#allocation3 + $0x5c0] sm:$0xff]
    %v289 = vld [vmem:[#allocation3 + $0x5c8] sm:$0xff]
    %v290 = vld [vmem:[#allocation3 + $0x5d0] sm:$0xff]
    %v291 = vld [vmem:[#allocation3 + $0x5d8] sm:$0xff]
    %v292 = vld [vmem:[#allocation3 + $0x5e0] sm:$0xff]
    %v293 = vld [vmem:[#allocation3 + $0x5e8] sm:$0xff]
    %v294 = vld [vmem:[#allocation3 + $0x5f0] sm:$0xff]
    %v295 = vld [vmem:[#allocation3 + $0x5f8] sm:$0xff]
    %v296 = vld [vmem:[#allocation3 + $0x600] sm:$0xff]
    %v297 = vld [vmem:[#allocation3 + $0x608] sm:$0xff]
    %v298 = vld [vmem:[#allocation3 + $0x610] sm:$0xff]
    %v299 = vld [vmem:[#allocation3 + $0x618] sm:$0xff]
    %v300 = vld [vmem:[#allocation3 + $0x620] sm:$0xff]
    %v301 = vld [vmem:[#allocation3 + $0x628] sm:$0xff]
    %v302 = vld [vmem:[#allocation3 + $0x630] sm:$0xff]
    %v303 = vld [vmem:[#allocation3 + $0x638] sm:$0xff]
    %v304 = vld [vmem:[#allocation3 + $0x640] sm:$0xff]
    %v305 = vld [vmem:[#allocation3 + $0x648] sm:$0xff]
    %v306 = vld [vmem:[#allocation3 + $0x650] sm:$0xff]
    %v307 = vld [vmem:[#allocation3 + $0x658] sm:$0xff]
    %v308 = vld [vmem:[#allocation3 + $0x660] sm:$0xff]
    %v309 = vld [vmem:[#allocation3 + $0x668] sm:$0xff]
    %v310 = vld [vmem:[#allocation3 + $0x670] sm:$0xff]
    %v311 = vld [vmem:[#allocation3 + $0x678] sm:$0xff]
    %v312 = vld [vmem:[#allocation3 + $0x680] sm:$0xff]
    %v313 = vld [vmem:[#allocation3 + $0x688] sm:$0xff]
    %v314 = vld [vmem:[#allocation3 + $0x690] sm:$0xff]
    %v315 = vld [vmem:[#allocation3 + $0x698] sm:$0xff]
    %v316 = vld [vmem:[#allocation3 + $0x6a0] sm:$0xff]
    %v317 = vld [vmem:[#allocation3 + $0x6a8] sm:$0xff]
    %v318 = vld [vmem:[#allocation3 + $0x6b0] sm:$0xff]
    %v319 = vld [vmem:[#allocation3 + $0x6b8] sm:$0xff]
    %v320 = vld [vmem:[#allocation3 + $0x6c0] sm:$0xff]
    %v321 = vld [vmem:[#allocation3 + $0x6c8] sm:$0xff]
    %v322 = vld [vmem:[#allocation3 + $0x6d0] sm:$0xff]
    %v323 = vld [vmem:[#allocation3 + $0x6d8] sm:$0xff]
    %v324 = vld [vmem:[#allocation3 + $0x6e0] sm:$0xff]
    %v325 = vld [vmem:[#allocation3 + $0x6e8] sm:$0xff]
    %v326 = vld [vmem:[#allocation3 + $0x6f0] sm:$0xff]
    %v327 = vld [vmem:[#allocation3 + $0x6f8] sm:$0xff]
    %v328 = vld [vmem:[#allocation3 + $0x700] sm:$0xff]
    %v329 = vld [vmem:[#allocation3 + $0x708] sm:$0xff]
    %v330 = vld [vmem:[#allocation3 + $0x710] sm:$0xff]
    %v331 = vld [vmem:[#allocation3 + $0x718] sm:$0xff]
    %v332 = vld [vmem:[#allocation3 + $0x720] sm:$0xff]
    %v333 = vld [vmem:[#allocation3 + $0x728] sm:$0xff]
    %v334 = vld [vmem:[#allocation3 + $0x730] sm:$0xff]
    %v335 = vld [vmem:[#allocation3 + $0x738] sm:$0xff]
    %v336 = vld [vmem:[#allocation3 + $0x740] sm:$0xff]
    %v337 = vld [vmem:[#allocation3 + $0x748] sm:$0xff]
    %v338 = vld [vmem:[#allocation3 + $0x750] sm:$0xff]
    %v339 = vld [vmem:[#allocation3 + $0x758] sm:$0xff]
    %v340 = vld [vmem:[#allocation3 + $0x760] sm:$0xff]
    %v341 = vld [vmem:[#allocation3 + $0x768] sm:$0xff]
    %v342 = vld [vmem:[#allocation3 + $0x770] sm:$0xff]
    %v343 = vld [vmem:[#allocation3 + $0x778] sm:$0xff]
    %v344 = vld [vmem:[#allocation3 + $0x780] sm:$0xff]
    %v345 = vld [vmem:[#allocation3 + $0x788] sm:$0xff]
    %v346 = vld [vmem:[#allocation3 + $0x790] sm:$0xff]
    %v347 = vld [vmem:[#allocation3 + $0x798] sm:$0xff]
    %v348 = vld [vmem:[#allocation3 + $0x7a0] sm:$0xff]
    %v349 = vld [vmem:[#allocation3 + $0x7a8] sm:$0xff]
    %v350 = vld [vmem:[#allocation3 + $0x7b0] sm:$0xff]
    %v351 = vld [vmem:[#allocation3 + $0x7b8] sm:$0xff]
    %v352 = vld [vmem:[#allocation3 + $0x7c0] sm:$0xff]
    %v353 = vld [vmem:[#allocation3 + $0x7c8] sm:$0xff]
    %v354 = vld [vmem:[#allocation3 + $0x7d0] sm:$0xff]
    %v355 = vld [vmem:[#allocation3 + $0x7d8] sm:$0xff]
    %v356 = vld [vmem:[#allocation3 + $0x7e0] sm:$0xff]
    %v357 = vld [vmem:[#allocation3 + $0x7e8] sm:$0xff]
    %v358 = vld [vmem:[#allocation3 + $0x7f0] sm:$0xff]
    %v359 = vld [vmem:[#allocation3 + $0x7f8] sm:$0xff]
    %v360 = vpack.c.bf16 %v112, %v104
    %v361 = vpack.c.bf16 %v113, %v105
    %v362 = vpack.c.bf16 %v114, %v106
    %v363 = vpack.c.bf16 %v115, %v107
    %v364 = vpack.c.bf16 %v116, %v108
    %v365 = vpack.c.bf16 %v117, %v109
    %v366 = vpack.c.bf16 %v118, %v110
    %v367 = vpack.c.bf16 %v119, %v111
    %v368 = vpack.c.bf16 %v128, %v120
    %v369 = vpack.c.bf16 %v129, %v121
    %v370 = vpack.c.bf16 %v130, %v122
    %v371 = vpack.c.bf16 %v131, %v123
    %v372 = vpack.c.bf16 %v132, %v124
    %v373 = vpack.c.bf16 %v133, %v125
    %v374 = vpack.c.bf16 %v134, %v126
    %v375 = vpack.c.bf16 %v135, %v127
    %v376 = vpack.c.bf16 %v144, %v136
    %v377 = vpack.c.bf16 %v145, %v137
    %v378 = vpack.c.bf16 %v146, %v138
    %v379 = vpack.c.bf16 %v147, %v139
    %v380 = vpack.c.bf16 %v148, %v140
    %v381 = vpack.c.bf16 %v149, %v141
    %v382 = vpack.c.bf16 %v150, %v142
    %v383 = vpack.c.bf16 %v151, %v143
    %v384 = vpack.c.bf16 %v160, %v152
    %v385 = vpack.c.bf16 %v161, %v153
    %v386 = vpack.c.bf16 %v162, %v154
    %v387 = vpack.c.bf16 %v163, %v155
    %v388 = vpack.c.bf16 %v164, %v156
    %v389 = vpack.c.bf16 %v165, %v157
    %v390 = vpack.c.bf16 %v166, %v158
    %v391 = vpack.c.bf16 %v167, %v159
    %v392 = vpack.c.bf16 %v176, %v168
    %v393 = vpack.c.bf16 %v177, %v169
    %v394 = vpack.c.bf16 %v178, %v170
    %v395 = vpack.c.bf16 %v179, %v171
    %v396 = vpack.c.bf16 %v180, %v172
    %v397 = vpack.c.bf16 %v181, %v173
    %v398 = vpack.c.bf16 %v182, %v174
    %v399 = vpack.c.bf16 %v183, %v175
    %v400 = vpack.c.bf16 %v192, %v184
    %v401 = vpack.c.bf16 %v193, %v185
    %v402 = vpack.c.bf16 %v194, %v186
    %v403 = vpack.c.bf16 %v195, %v187
    %v404 = vpack.c.bf16 %v196, %v188
    %v405 = vpack.c.bf16 %v197, %v189
    %v406 = vpack.c.bf16 %v198, %v190
    %v407 = vpack.c.bf16 %v199, %v191
    %v408 = vpack.c.bf16 %v208, %v200
    %v409 = vpack.c.bf16 %v209, %v201
    %v410 = vpack.c.bf16 %v210, %v202
    %v411 = vpack.c.bf16 %v211, %v203
    %v412 = vpack.c.bf16 %v212, %v204
    %v413 = vpack.c.bf16 %v213, %v205
    %v414 = vpack.c.bf16 %v214, %v206
    %v415 = vpack.c.bf16 %v215, %v207
    %v416 = vpack.c.bf16 %v224, %v216
    %v417 = vpack.c.bf16 %v225, %v217
    %v418 = vpack.c.bf16 %v226, %v218
    %v419 = vpack.c.bf16 %v227, %v219
    %v420 = vpack.c.bf16 %v228, %v220
    %v421 = vpack.c.bf16 %v229, %v221
    %v422 = vpack.c.bf16 %v230, %v222
    %v423 = vpack.c.bf16 %v231, %v223
    %v424 = vpack.c.bf16 %v240, %v232
    %v425 = vpack.c.bf16 %v241, %v233
    %v426 = vpack.c.bf16 %v242, %v234
    %v427 = vpack.c.bf16 %v243, %v235
    %v428 = vpack.c.bf16 %v244, %v236
    %v429 = vpack.c.bf16 %v245, %v237
    %v430 = vpack.c.bf16 %v246, %v238
    %v431 = vpack.c.bf16 %v247, %v239
    %v432 = vpack.c.bf16 %v256, %v248
    %v433 = vpack.c.bf16 %v257, %v249
    %v434 = vpack.c.bf16 %v258, %v250
    %v435 = vpack.c.bf16 %v259, %v251
    %v436 = vpack.c.bf16 %v260, %v252
    %v437 = vpack.c.bf16 %v261, %v253
    %v438 = vpack.c.bf16 %v262, %v254
    %v439 = vpack.c.bf16 %v263, %v255
    %v440 = vpack.c.bf16 %v272, %v264
    %v441 = vpack.c.bf16 %v273, %v265
    %v442 = vpack.c.bf16 %v274, %v266
    %v443 = vpack.c.bf16 %v275, %v267
    %v444 = vpack.c.bf16 %v276, %v268
    %v445 = vpack.c.bf16 %v277, %v269
    %v446 = vpack.c.bf16 %v278, %v270
    %v447 = vpack.c.bf16 %v279, %v271
    %v448 = vpack.c.bf16 %v288, %v280
    %v449 = vpack.c.bf16 %v289, %v281
    %v450 = vpack.c.bf16 %v290, %v282
    %v451 = vpack.c.bf16 %v291, %v283
    %v452 = vpack.c.bf16 %v292, %v284
    %v453 = vpack.c.bf16 %v293, %v285
    %v454 = vpack.c.bf16 %v294, %v286
    %v455 = vpack.c.bf16 %v295, %v287
    %v456 = vpack.c.bf16 %v304, %v296
    %v457 = vpack.c.bf16 %v305, %v297
    %v458 = vpack.c.bf16 %v306, %v298
    %v459 = vpack.c.bf16 %v307, %v299
    %v460 = vpack.c.bf16 %v308, %v300
    %v461 = vpack.c.bf16 %v309, %v301
    %v462 = vpack.c.bf16 %v310, %v302
    %v463 = vpack.c.bf16 %v311, %v303
    %v464 = vpack.c.bf16 %v320, %v312
    %v465 = vpack.c.bf16 %v321, %v313
    %v466 = vpack.c.bf16 %v322, %v314
    %v467 = vpack.c.bf16 %v323, %v315
    %v468 = vpack.c.bf16 %v324, %v316
    %v469 = vpack.c.bf16 %v325, %v317
    %v470 = vpack.c.bf16 %v326, %v318
    %v471 = vpack.c.bf16 %v327, %v319
    %v472 = vpack.c.bf16 %v336, %v328
    %v473 = vpack.c.bf16 %v337, %v329
    %v474 = vpack.c.bf16 %v338, %v330
    %v475 = vpack.c.bf16 %v339, %v331
    %v476 = vpack.c.bf16 %v340, %v332
    %v477 = vpack.c.bf16 %v341, %v333
    %v478 = vpack.c.bf16 %v342, %v334
    %v479 = vpack.c.bf16 %v343, %v335
    %v480 = vpack.c.bf16 %v352, %v344
    %v481 = vpack.c.bf16 %v353, %v345
    %v482 = vpack.c.bf16 %v354, %v346
    %v483 = vpack.c.bf16 %v355, %v347
    %v484 = vpack.c.bf16 %v356, %v348
    %v485 = vpack.c.bf16 %v357, %v349
    %v486 = vpack.c.bf16 %v358, %v350
    %v487 = vpack.c.bf16 %v359, %v351
    %v488 = vld [vmem:[#allocation5] sm:$0xff]
    %v489 = vld [vmem:[#allocation5 + $0x8] sm:$0xff]
    %v490 = vld [vmem:[#allocation5 + $0x10] sm:$0xff]
    %v491 = vld [vmem:[#allocation5 + $0x18] sm:$0xff]
    %v492 = vld [vmem:[#allocation5 + $0x20] sm:$0xff]
    %v493 = vld [vmem:[#allocation5 + $0x28] sm:$0xff]
    %v494 = vld [vmem:[#allocation5 + $0x30] sm:$0xff]
    %v495 = vld [vmem:[#allocation5 + $0x38] sm:$0xff]
    %v496 = vld [vmem:[#allocation5 + $0x40] sm:$0xff]
    %v497 = vld [vmem:[#allocation5 + $0x48] sm:$0xff]
    %v498 = vld [vmem:[#allocation5 + $0x50] sm:$0xff]
    %v499 = vld [vmem:[#allocation5 + $0x58] sm:$0xff]
    %v500 = vld [vmem:[#allocation5 + $0x60] sm:$0xff]
    %v501 = vld [vmem:[#allocation5 + $0x68] sm:$0xff]
    %v502 = vld [vmem:[#allocation5 + $0x70] sm:$0xff]
    %v503 = vld [vmem:[#allocation5 + $0x78] sm:$0xff]
    %v504 = vld [vmem:[#allocation5 + $0x80] sm:$0xff]
    %v505 = vld [vmem:[#allocation5 + $0x88] sm:$0xff]
    %v506 = vld [vmem:[#allocation5 + $0x90] sm:$0xff]
    %v507 = vld [vmem:[#allocation5 + $0x98] sm:$0xff]
    %v508 = vld [vmem:[#allocation5 + $0xa0] sm:$0xff]
    %v509 = vld [vmem:[#allocation5 + $0xa8] sm:$0xff]
    %v510 = vld [vmem:[#allocation5 + $0xb0] sm:$0xff]
    %v511 = vld [vmem:[#allocation5 + $0xb8] sm:$0xff]
    %v512 = vld [vmem:[#allocation5 + $0xc0] sm:$0xff]
    %v513 = vld [vmem:[#allocation5 + $0xc8] sm:$0xff]
    %v514 = vld [vmem:[#allocation5 + $0xd0] sm:$0xff]
    %v515 = vld [vmem:[#allocation5 + $0xd8] sm:$0xff]
    %v516 = vld [vmem:[#allocation5 + $0xe0] sm:$0xff]
    %v517 = vld [vmem:[#allocation5 + $0xe8] sm:$0xff]
    %v518 = vld [vmem:[#allocation5 + $0xf0] sm:$0xff]
    %v519 = vld [vmem:[#allocation5 + $0xf8] sm:$0xff]
    %v520 = vld [vmem:[#allocation5 + $0x100] sm:$0xff]
    %v521 = vld [vmem:[#allocation5 + $0x108] sm:$0xff]
    %v522 = vld [vmem:[#allocation5 + $0x110] sm:$0xff]
    %v523 = vld [vmem:[#allocation5 + $0x118] sm:$0xff]
    %v524 = vld [vmem:[#allocation5 + $0x120] sm:$0xff]
    %v525 = vld [vmem:[#allocation5 + $0x128] sm:$0xff]
    %v526 = vld [vmem:[#allocation5 + $0x130] sm:$0xff]
    %v527 = vld [vmem:[#allocation5 + $0x138] sm:$0xff]
    %v528 = vld [vmem:[#allocation5 + $0x140] sm:$0xff]
    %v529 = vld [vmem:[#allocation5 + $0x148] sm:$0xff]
    %v530 = vld [vmem:[#allocation5 + $0x150] sm:$0xff]
    %v531 = vld [vmem:[#allocation5 + $0x158] sm:$0xff]
    %v532 = vld [vmem:[#allocation5 + $0x160] sm:$0xff]
    %v533 = vld [vmem:[#allocation5 + $0x168] sm:$0xff]
    %v534 = vld [vmem:[#allocation5 + $0x170] sm:$0xff]
    %v535 = vld [vmem:[#allocation5 + $0x178] sm:$0xff]
    %v536 = vld [vmem:[#allocation5 + $0x180] sm:$0xff]
    %v537 = vld [vmem:[#allocation5 + $0x188] sm:$0xff]
    %v538 = vld [vmem:[#allocation5 + $0x190] sm:$0xff]
    %v539 = vld [vmem:[#allocation5 + $0x198] sm:$0xff]
    %v540 = vld [vmem:[#allocation5 + $0x1a0] sm:$0xff]
    %v541 = vld [vmem:[#allocation5 + $0x1a8] sm:$0xff]
    %v542 = vld [vmem:[#allocation5 + $0x1b0] sm:$0xff]
    %v543 = vld [vmem:[#allocation5 + $0x1b8] sm:$0xff]
    %v544 = vld [vmem:[#allocation5 + $0x1c0] sm:$0xff]
    %v545 = vld [vmem:[#allocation5 + $0x1c8] sm:$0xff]
    %v546 = vld [vmem:[#allocation5 + $0x1d0] sm:$0xff]
    %v547 = vld [vmem:[#allocation5 + $0x1d8] sm:$0xff]
    %v548 = vld [vmem:[#allocation5 + $0x1e0] sm:$0xff]
    %v549 = vld [vmem:[#allocation5 + $0x1e8] sm:$0xff]
    %v550 = vld [vmem:[#allocation5 + $0x1f0] sm:$0xff]
    %v551 = vld [vmem:[#allocation5 + $0x1f8] sm:$0xff]
    %v552 = vld [vmem:[#allocation5 + $0x200] sm:$0xff]
    %v553 = vld [vmem:[#allocation5 + $0x208] sm:$0xff]
    %v554 = vld [vmem:[#allocation5 + $0x210] sm:$0xff]
    %v555 = vld [vmem:[#allocation5 + $0x218] sm:$0xff]
    %v556 = vld [vmem:[#allocation5 + $0x220] sm:$0xff]
    %v557 = vld [vmem:[#allocation5 + $0x228] sm:$0xff]
    %v558 = vld [vmem:[#allocation5 + $0x230] sm:$0xff]
    %v559 = vld [vmem:[#allocation5 + $0x238] sm:$0xff]
    %v560 = vld [vmem:[#allocation5 + $0x240] sm:$0xff]
    %v561 = vld [vmem:[#allocation5 + $0x248] sm:$0xff]
    %v562 = vld [vmem:[#allocation5 + $0x250] sm:$0xff]
    %v563 = vld [vmem:[#allocation5 + $0x258] sm:$0xff]
    %v564 = vld [vmem:[#allocation5 + $0x260] sm:$0xff]
    %v565 = vld [vmem:[#allocation5 + $0x268] sm:$0xff]
    %v566 = vld [vmem:[#allocation5 + $0x270] sm:$0xff]
    %v567 = vld [vmem:[#allocation5 + $0x278] sm:$0xff]
    %v568 = vld [vmem:[#allocation5 + $0x280] sm:$0xff]
    %v569 = vld [vmem:[#allocation5 + $0x288] sm:$0xff]
    %v570 = vld [vmem:[#allocation5 + $0x290] sm:$0xff]
    %v571 = vld [vmem:[#allocation5 + $0x298] sm:$0xff]
    %v572 = vld [vmem:[#allocation5 + $0x2a0] sm:$0xff]
    %v573 = vld [vmem:[#allocation5 + $0x2a8] sm:$0xff]
    %v574 = vld [vmem:[#allocation5 + $0x2b0] sm:$0xff]
    %v575 = vld [vmem:[#allocation5 + $0x2b8] sm:$0xff]
    %v576 = vld [vmem:[#allocation5 + $0x2c0] sm:$0xff]
    %v577 = vld [vmem:[#allocation5 + $0x2c8] sm:$0xff]
    %v578 = vld [vmem:[#allocation5 + $0x2d0] sm:$0xff]
    %v579 = vld [vmem:[#allocation5 + $0x2d8] sm:$0xff]
    %v580 = vld [vmem:[#allocation5 + $0x2e0] sm:$0xff]
    %v581 = vld [vmem:[#allocation5 + $0x2e8] sm:$0xff]
    %v582 = vld [vmem:[#allocation5 + $0x2f0] sm:$0xff]
    %v583 = vld [vmem:[#allocation5 + $0x2f8] sm:$0xff]
    %v584 = vld [vmem:[#allocation5 + $0x300] sm:$0xff]
    %v585 = vld [vmem:[#allocation5 + $0x308] sm:$0xff]
    %v586 = vld [vmem:[#allocation5 + $0x310] sm:$0xff]
    %v587 = vld [vmem:[#allocation5 + $0x318] sm:$0xff]
    %v588 = vld [vmem:[#allocation5 + $0x320] sm:$0xff]
    %v589 = vld [vmem:[#allocation5 + $0x328] sm:$0xff]
    %v590 = vld [vmem:[#allocation5 + $0x330] sm:$0xff]
    %v591 = vld [vmem:[#allocation5 + $0x338] sm:$0xff]
    %v592 = vld [vmem:[#allocation5 + $0x340] sm:$0xff]
    %v593 = vld [vmem:[#allocation5 + $0x348] sm:$0xff]
    %v594 = vld [vmem:[#allocation5 + $0x350] sm:$0xff]
    %v595 = vld [vmem:[#allocation5 + $0x358] sm:$0xff]
    %v596 = vld [vmem:[#allocation5 + $0x360] sm:$0xff]
    %v597 = vld [vmem:[#allocation5 + $0x368] sm:$0xff]
    %v598 = vld [vmem:[#allocation5 + $0x370] sm:$0xff]
    %v599 = vld [vmem:[#allocation5 + $0x378] sm:$0xff]
    %v600 = vld [vmem:[#allocation5 + $0x380] sm:$0xff]
    %v601 = vld [vmem:[#allocation5 + $0x388] sm:$0xff]
    %v602 = vld [vmem:[#allocation5 + $0x390] sm:$0xff]
    %v603 = vld [vmem:[#allocation5 + $0x398] sm:$0xff]
    %v604 = vld [vmem:[#allocation5 + $0x3a0] sm:$0xff]
    %v605 = vld [vmem:[#allocation5 + $0x3a8] sm:$0xff]
    %v606 = vld [vmem:[#allocation5 + $0x3b0] sm:$0xff]
    %v607 = vld [vmem:[#allocation5 + $0x3b8] sm:$0xff]
    %v608 = vld [vmem:[#allocation5 + $0x3c0] sm:$0xff]
    %v609 = vld [vmem:[#allocation5 + $0x3c8] sm:$0xff]
    %v610 = vld [vmem:[#allocation5 + $0x3d0] sm:$0xff]
    %v611 = vld [vmem:[#allocation5 + $0x3d8] sm:$0xff]
    %v612 = vld [vmem:[#allocation5 + $0x3e0] sm:$0xff]
    %v613 = vld [vmem:[#allocation5 + $0x3e8] sm:$0xff]
    %v614 = vld [vmem:[#allocation5 + $0x3f0] sm:$0xff]
    %v615 = vld [vmem:[#allocation5 + $0x3f8] sm:$0xff]
    %v616 = vld [vmem:[#allocation5 + $0x400] sm:$0xff]
    %v617 = vld [vmem:[#allocation5 + $0x408] sm:$0xff]
    %v618 = vld [vmem:[#allocation5 + $0x410] sm:$0xff]
    %v619 = vld [vmem:[#allocation5 + $0x418] sm:$0xff]
    %v620 = vld [vmem:[#allocation5 + $0x420] sm:$0xff]
    %v621 = vld [vmem:[#allocation5 + $0x428] sm:$0xff]
    %v622 = vld [vmem:[#allocation5 + $0x430] sm:$0xff]
    %v623 = vld [vmem:[#allocation5 + $0x438] sm:$0xff]
    %v624 = vld [vmem:[#allocation5 + $0x440] sm:$0xff]
    %v625 = vld [vmem:[#allocation5 + $0x448] sm:$0xff]
    %v626 = vld [vmem:[#allocation5 + $0x450] sm:$0xff]
    %v627 = vld [vmem:[#allocation5 + $0x458] sm:$0xff]
    %v628 = vld [vmem:[#allocation5 + $0x460] sm:$0xff]
    %v629 = vld [vmem:[#allocation5 + $0x468] sm:$0xff]
    %v630 = vld [vmem:[#allocation5 + $0x470] sm:$0xff]
    %v631 = vld [vmem:[#allocation5 + $0x478] sm:$0xff]
    %v632 = vld [vmem:[#allocation5 + $0x480] sm:$0xff]
    %v633 = vld [vmem:[#allocation5 + $0x488] sm:$0xff]
    %v634 = vld [vmem:[#allocation5 + $0x490] sm:$0xff]
    %v635 = vld [vmem:[#allocation5 + $0x498] sm:$0xff]
    %v636 = vld [vmem:[#allocation5 + $0x4a0] sm:$0xff]
    %v637 = vld [vmem:[#allocation5 + $0x4a8] sm:$0xff]
    %v638 = vld [vmem:[#allocation5 + $0x4b0] sm:$0xff]
    %v639 = vld [vmem:[#allocation5 + $0x4b8] sm:$0xff]
    %v640 = vld [vmem:[#allocation5 + $0x4c0] sm:$0xff]
    %v641 = vld [vmem:[#allocation5 + $0x4c8] sm:$0xff]
    %v642 = vld [vmem:[#allocation5 + $0x4d0] sm:$0xff]
    %v643 = vld [vmem:[#allocation5 + $0x4d8] sm:$0xff]
    %v644 = vld [vmem:[#allocation5 + $0x4e0] sm:$0xff]
    %v645 = vld [vmem:[#allocation5 + $0x4e8] sm:$0xff]
    %v646 = vld [vmem:[#allocation5 + $0x4f0] sm:$0xff]
    %v647 = vld [vmem:[#allocation5 + $0x4f8] sm:$0xff]
    %v648 = vld [vmem:[#allocation5 + $0x500] sm:$0xff]
    %v649 = vld [vmem:[#allocation5 + $0x508] sm:$0xff]
    %v650 = vld [vmem:[#allocation5 + $0x510] sm:$0xff]
    %v651 = vld [vmem:[#allocation5 + $0x518] sm:$0xff]
    %v652 = vld [vmem:[#allocation5 + $0x520] sm:$0xff]
    %v653 = vld [vmem:[#allocation5 + $0x528] sm:$0xff]
    %v654 = vld [vmem:[#allocation5 + $0x530] sm:$0xff]
    %v655 = vld [vmem:[#allocation5 + $0x538] sm:$0xff]
    %v656 = vld [vmem:[#allocation5 + $0x540] sm:$0xff]
    %v657 = vld [vmem:[#allocation5 + $0x548] sm:$0xff]
    %v658 = vld [vmem:[#allocation5 + $0x550] sm:$0xff]
    %v659 = vld [vmem:[#allocation5 + $0x558] sm:$0xff]
    %v660 = vld [vmem:[#allocation5 + $0x560] sm:$0xff]
    %v661 = vld [vmem:[#allocation5 + $0x568] sm:$0xff]
    %v662 = vld [vmem:[#allocation5 + $0x570] sm:$0xff]
    %v663 = vld [vmem:[#allocation5 + $0x578] sm:$0xff]
    %v664 = vld [vmem:[#allocation5 + $0x580] sm:$0xff]
    %v665 = vld [vmem:[#allocation5 + $0x588] sm:$0xff]
    %v666 = vld [vmem:[#allocation5 + $0x590] sm:$0xff]
    %v667 = vld [vmem:[#allocation5 + $0x598] sm:$0xff]
    %v668 = vld [vmem:[#allocation5 + $0x5a0] sm:$0xff]
    %v669 = vld [vmem:[#allocation5 + $0x5a8] sm:$0xff]
    %v670 = vld [vmem:[#allocation5 + $0x5b0] sm:$0xff]
    %v671 = vld [vmem:[#allocation5 + $0x5b8] sm:$0xff]
    %v672 = vld [vmem:[#allocation5 + $0x5c0] sm:$0xff]
    %v673 = vld [vmem:[#allocation5 + $0x5c8] sm:$0xff]
    %v674 = vld [vmem:[#allocation5 + $0x5d0] sm:$0xff]
    %v675 = vld [vmem:[#allocation5 + $0x5d8] sm:$0xff]
    %v676 = vld [vmem:[#allocation5 + $0x5e0] sm:$0xff]
    %v677 = vld [vmem:[#allocation5 + $0x5e8] sm:$0xff]
    %v678 = vld [vmem:[#allocation5 + $0x5f0] sm:$0xff]
    %v679 = vld [vmem:[#allocation5 + $0x5f8] sm:$0xff]
    %v680 = vld [vmem:[#allocation5 + $0x600] sm:$0xff]
    %v681 = vld [vmem:[#allocation5 + $0x608] sm:$0xff]
    %v682 = vld [vmem:[#allocation5 + $0x610] sm:$0xff]
    %v683 = vld [vmem:[#allocation5 + $0x618] sm:$0xff]
    %v684 = vld [vmem:[#allocation5 + $0x620] sm:$0xff]
    %v685 = vld [vmem:[#allocation5 + $0x628] sm:$0xff]
    %v686 = vld [vmem:[#allocation5 + $0x630] sm:$0xff]
    %v687 = vld [vmem:[#allocation5 + $0x638] sm:$0xff]
    %v688 = vld [vmem:[#allocation5 + $0x640] sm:$0xff]
    %v689 = vld [vmem:[#allocation5 + $0x648] sm:$0xff]
    %v690 = vld [vmem:[#allocation5 + $0x650] sm:$0xff]
    %v691 = vld [vmem:[#allocation5 + $0x658] sm:$0xff]
    %v692 = vld [vmem:[#allocation5 + $0x660] sm:$0xff]
    %v693 = vld [vmem:[#allocation5 + $0x668] sm:$0xff]
    %v694 = vld [vmem:[#allocation5 + $0x670] sm:$0xff]
    %v695 = vld [vmem:[#allocation5 + $0x678] sm:$0xff]
    %v696 = vld [vmem:[#allocation5 + $0x680] sm:$0xff]
    %v697 = vld [vmem:[#allocation5 + $0x688] sm:$0xff]
    %v698 = vld [vmem:[#allocation5 + $0x690] sm:$0xff]
    %v699 = vld [vmem:[#allocation5 + $0x698] sm:$0xff]
    %v700 = vld [vmem:[#allocation5 + $0x6a0] sm:$0xff]
    %v701 = vld [vmem:[#allocation5 + $0x6a8] sm:$0xff]
    %v702 = vld [vmem:[#allocation5 + $0x6b0] sm:$0xff]
    %v703 = vld [vmem:[#allocation5 + $0x6b8] sm:$0xff]
    %v704 = vld [vmem:[#allocation5 + $0x6c0] sm:$0xff]
    %v705 = vld [vmem:[#allocation5 + $0x6c8] sm:$0xff]
    %v706 = vld [vmem:[#allocation5 + $0x6d0] sm:$0xff]
    %v707 = vld [vmem:[#allocation5 + $0x6d8] sm:$0xff]
    %v708 = vld [vmem:[#allocation5 + $0x6e0] sm:$0xff]
    %v709 = vld [vmem:[#allocation5 + $0x6e8] sm:$0xff]
    %v710 = vld [vmem:[#allocation5 + $0x6f0] sm:$0xff]
    %v711 = vld [vmem:[#allocation5 + $0x6f8] sm:$0xff]
    %v712 = vld [vmem:[#allocation5 + $0x700] sm:$0xff]
    %v713 = vld [vmem:[#allocation5 + $0x708] sm:$0xff]
    %v714 = vld [vmem:[#allocation5 + $0x710] sm:$0xff]
    %v715 = vld [vmem:[#allocation5 + $0x718] sm:$0xff]
    %v716 = vld [vmem:[#allocation5 + $0x720] sm:$0xff]
    %v717 = vld [vmem:[#allocation5 + $0x728] sm:$0xff]
    %v718 = vld [vmem:[#allocation5 + $0x730] sm:$0xff]
    %v719 = vld [vmem:[#allocation5 + $0x738] sm:$0xff]
    %v720 = vld [vmem:[#allocation5 + $0x740] sm:$0xff]
    %v721 = vld [vmem:[#allocation5 + $0x748] sm:$0xff]
    %v722 = vld [vmem:[#allocation5 + $0x750] sm:$0xff]
    %v723 = vld [vmem:[#allocation5 + $0x758] sm:$0xff]
    %v724 = vld [vmem:[#allocation5 + $0x760] sm:$0xff]
    %v725 = vld [vmem:[#allocation5 + $0x768] sm:$0xff]
    %v726 = vld [vmem:[#allocation5 + $0x770] sm:$0xff]
    %v727 = vld [vmem:[#allocation5 + $0x778] sm:$0xff]
    %v728 = vld [vmem:[#allocation5 + $0x780] sm:$0xff]
    %v729 = vld [vmem:[#allocation5 + $0x788] sm:$0xff]
    %v730 = vld [vmem:[#allocation5 + $0x790] sm:$0xff]
    %v731 = vld [vmem:[#allocation5 + $0x798] sm:$0xff]
    %v732 = vld [vmem:[#allocation5 + $0x7a0] sm:$0xff]
    %v733 = vld [vmem:[#allocation5 + $0x7a8] sm:$0xff]
    %v734 = vld [vmem:[#allocation5 + $0x7b0] sm:$0xff]
    %v735 = vld [vmem:[#allocation5 + $0x7b8] sm:$0xff]
    %v736 = vld [vmem:[#allocation5 + $0x7c0] sm:$0xff]
    %v737 = vld [vmem:[#allocation5 + $0x7c8] sm:$0xff]
    %v738 = vld [vmem:[#allocation5 + $0x7d0] sm:$0xff]
    %v739 = vld [vmem:[#allocation5 + $0x7d8] sm:$0xff]
    %v740 = vld [vmem:[#allocation5 + $0x7e0] sm:$0xff]
    %v741 = vld [vmem:[#allocation5 + $0x7e8] sm:$0xff]
    %v742 = vld [vmem:[#allocation5 + $0x7f0] sm:$0xff]
    %v743 = vld [vmem:[#allocation5 + $0x7f8] sm:$0xff]
    %v744 = vld [vmem:[#allocation5 + $0x800] sm:$0xff]
    %v745 = vld [vmem:[#allocation5 + $0x808] sm:$0xff]
    %v746 = vld [vmem:[#allocation5 + $0x810] sm:$0xff]
    %v747 = vld [vmem:[#allocation5 + $0x818] sm:$0xff]
    %v748 = vld [vmem:[#allocation5 + $0x820] sm:$0xff]
    %v749 = vld [vmem:[#allocation5 + $0x828] sm:$0xff]
    %v750 = vld [vmem:[#allocation5 + $0x830] sm:$0xff]
    %v751 = vld [vmem:[#allocation5 + $0x838] sm:$0xff]
    %v752 = vld [vmem:[#allocation5 + $0x840] sm:$0xff]
    %v753 = vld [vmem:[#allocation5 + $0x848] sm:$0xff]
    %v754 = vld [vmem:[#allocation5 + $0x850] sm:$0xff]
    %v755 = vld [vmem:[#allocation5 + $0x858] sm:$0xff]
    %v756 = vld [vmem:[#allocation5 + $0x860] sm:$0xff]
    %v757 = vld [vmem:[#allocation5 + $0x868] sm:$0xff]
    %v758 = vld [vmem:[#allocation5 + $0x870] sm:$0xff]
    %v759 = vld [vmem:[#allocation5 + $0x878] sm:$0xff]
    %v760 = vld [vmem:[#allocation5 + $0x880] sm:$0xff]
    %v761 = vld [vmem:[#allocation5 + $0x888] sm:$0xff]
    %v762 = vld [vmem:[#allocation5 + $0x890] sm:$0xff]
    %v763 = vld [vmem:[#allocation5 + $0x898] sm:$0xff]
    %v764 = vld [vmem:[#allocation5 + $0x8a0] sm:$0xff]
    %v765 = vld [vmem:[#allocation5 + $0x8a8] sm:$0xff]
    %v766 = vld [vmem:[#allocation5 + $0x8b0] sm:$0xff]
    %v767 = vld [vmem:[#allocation5 + $0x8b8] sm:$0xff]
    %v768 = vld [vmem:[#allocation5 + $0x8c0] sm:$0xff]
    %v769 = vld [vmem:[#allocation5 + $0x8c8] sm:$0xff]
    %v770 = vld [vmem:[#allocation5 + $0x8d0] sm:$0xff]
    %v771 = vld [vmem:[#allocation5 + $0x8d8] sm:$0xff]
    %v772 = vld [vmem:[#allocation5 + $0x8e0] sm:$0xff]
    %v773 = vld [vmem:[#allocation5 + $0x8e8] sm:$0xff]
    %v774 = vld [vmem:[#allocation5 + $0x8f0] sm:$0xff]
    %v775 = vld [vmem:[#allocation5 + $0x8f8] sm:$0xff]
    %v776 = vld [vmem:[#allocation5 + $0x900] sm:$0xff]
    %v777 = vld [vmem:[#allocation5 + $0x908] sm:$0xff]
    %v778 = vld [vmem:[#allocation5 + $0x910] sm:$0xff]
    %v779 = vld [vmem:[#allocation5 + $0x918] sm:$0xff]
    %v780 = vld [vmem:[#allocation5 + $0x920] sm:$0xff]
    %v781 = vld [vmem:[#allocation5 + $0x928] sm:$0xff]
    %v782 = vld [vmem:[#allocation5 + $0x930] sm:$0xff]
    %v783 = vld [vmem:[#allocation5 + $0x938] sm:$0xff]
    %v784 = vld [vmem:[#allocation5 + $0x940] sm:$0xff]
    %v785 = vld [vmem:[#allocation5 + $0x948] sm:$0xff]
    %v786 = vld [vmem:[#allocation5 + $0x950] sm:$0xff]
    %v787 = vld [vmem:[#allocation5 + $0x958] sm:$0xff]
    %v788 = vld [vmem:[#allocation5 + $0x960] sm:$0xff]
    %v789 = vld [vmem:[#allocation5 + $0x968] sm:$0xff]
    %v790 = vld [vmem:[#allocation5 + $0x970] sm:$0xff]
    %v791 = vld [vmem:[#allocation5 + $0x978] sm:$0xff]
    %v792 = vld [vmem:[#allocation5 + $0x980] sm:$0xff]
    %v793 = vld [vmem:[#allocation5 + $0x988] sm:$0xff]
    %v794 = vld [vmem:[#allocation5 + $0x990] sm:$0xff]
    %v795 = vld [vmem:[#allocation5 + $0x998] sm:$0xff]
    %v796 = vld [vmem:[#allocation5 + $0x9a0] sm:$0xff]
    %v797 = vld [vmem:[#allocation5 + $0x9a8] sm:$0xff]
    %v798 = vld [vmem:[#allocation5 + $0x9b0] sm:$0xff]
    %v799 = vld [vmem:[#allocation5 + $0x9b8] sm:$0xff]
    %v800 = vld [vmem:[#allocation5 + $0x9c0] sm:$0xff]
    %v801 = vld [vmem:[#allocation5 + $0x9c8] sm:$0xff]
    %v802 = vld [vmem:[#allocation5 + $0x9d0] sm:$0xff]
    %v803 = vld [vmem:[#allocation5 + $0x9d8] sm:$0xff]
    %v804 = vld [vmem:[#allocation5 + $0x9e0] sm:$0xff]
    %v805 = vld [vmem:[#allocation5 + $0x9e8] sm:$0xff]
    %v806 = vld [vmem:[#allocation5 + $0x9f0] sm:$0xff]
    %v807 = vld [vmem:[#allocation5 + $0x9f8] sm:$0xff]
    %v808 = vld [vmem:[#allocation5 + $0xa00] sm:$0xff]
    %v809 = vld [vmem:[#allocation5 + $0xa08] sm:$0xff]
    %v810 = vld [vmem:[#allocation5 + $0xa10] sm:$0xff]
    %v811 = vld [vmem:[#allocation5 + $0xa18] sm:$0xff]
    %v812 = vld [vmem:[#allocation5 + $0xa20] sm:$0xff]
    %v813 = vld [vmem:[#allocation5 + $0xa28] sm:$0xff]
    %v814 = vld [vmem:[#allocation5 + $0xa30] sm:$0xff]
    %v815 = vld [vmem:[#allocation5 + $0xa38] sm:$0xff]
    %v816 = vld [vmem:[#allocation5 + $0xa40] sm:$0xff]
    %v817 = vld [vmem:[#allocation5 + $0xa48] sm:$0xff]
    %v818 = vld [vmem:[#allocation5 + $0xa50] sm:$0xff]
    %v819 = vld [vmem:[#allocation5 + $0xa58] sm:$0xff]
    %v820 = vld [vmem:[#allocation5 + $0xa60] sm:$0xff]
    %v821 = vld [vmem:[#allocation5 + $0xa68] sm:$0xff]
    %v822 = vld [vmem:[#allocation5 + $0xa70] sm:$0xff]
    %v823 = vld [vmem:[#allocation5 + $0xa78] sm:$0xff]
    %v824 = vld [vmem:[#allocation5 + $0xa80] sm:$0xff]
    %v825 = vld [vmem:[#allocation5 + $0xa88] sm:$0xff]
    %v826 = vld [vmem:[#allocation5 + $0xa90] sm:$0xff]
    %v827 = vld [vmem:[#allocation5 + $0xa98] sm:$0xff]
    %v828 = vld [vmem:[#allocation5 + $0xaa0] sm:$0xff]
    %v829 = vld [vmem:[#allocation5 + $0xaa8] sm:$0xff]
    %v830 = vld [vmem:[#allocation5 + $0xab0] sm:$0xff]
    %v831 = vld [vmem:[#allocation5 + $0xab8] sm:$0xff]
    %v832 = vld [vmem:[#allocation5 + $0xac0] sm:$0xff]
    %v833 = vld [vmem:[#allocation5 + $0xac8] sm:$0xff]
    %v834 = vld [vmem:[#allocation5 + $0xad0] sm:$0xff]
    %v835 = vld [vmem:[#allocation5 + $0xad8] sm:$0xff]
    %v836 = vld [vmem:[#allocation5 + $0xae0] sm:$0xff]
    %v837 = vld [vmem:[#allocation5 + $0xae8] sm:$0xff]
    %v838 = vld [vmem:[#allocation5 + $0xaf0] sm:$0xff]
    %v839 = vld [vmem:[#allocation5 + $0xaf8] sm:$0xff]
    %v840 = vld [vmem:[#allocation5 + $0xb00] sm:$0xff]
    %v841 = vld [vmem:[#allocation5 + $0xb08] sm:$0xff]
    %v842 = vld [vmem:[#allocation5 + $0xb10] sm:$0xff]
    %v843 = vld [vmem:[#allocation5 + $0xb18] sm:$0xff]
    %v844 = vld [vmem:[#allocation5 + $0xb20] sm:$0xff]
    %v845 = vld [vmem:[#allocation5 + $0xb28] sm:$0xff]
    %v846 = vld [vmem:[#allocation5 + $0xb30] sm:$0xff]
    %v847 = vld [vmem:[#allocation5 + $0xb38] sm:$0xff]
    %v848 = vld [vmem:[#allocation5 + $0xb40] sm:$0xff]
    %v849 = vld [vmem:[#allocation5 + $0xb48] sm:$0xff]
    %v850 = vld [vmem:[#allocation5 + $0xb50] sm:$0xff]
    %v851 = vld [vmem:[#allocation5 + $0xb58] sm:$0xff]
    %v852 = vld [vmem:[#allocation5 + $0xb60] sm:$0xff]
    %v853 = vld [vmem:[#allocation5 + $0xb68] sm:$0xff]
    %v854 = vld [vmem:[#allocation5 + $0xb70] sm:$0xff]
    %v855 = vld [vmem:[#allocation5 + $0xb78] sm:$0xff]
    %v856 = vld [vmem:[#allocation5 + $0xb80] sm:$0xff]
    %v857 = vld [vmem:[#allocation5 + $0xb88] sm:$0xff]
    %v858 = vld [vmem:[#allocation5 + $0xb90] sm:$0xff]
    %v859 = vld [vmem:[#allocation5 + $0xb98] sm:$0xff]
    %v860 = vld [vmem:[#allocation5 + $0xba0] sm:$0xff]
    %v861 = vld [vmem:[#allocation5 + $0xba8] sm:$0xff]
    %v862 = vld [vmem:[#allocation5 + $0xbb0] sm:$0xff]
    %v863 = vld [vmem:[#allocation5 + $0xbb8] sm:$0xff]
    %v864 = vld [vmem:[#allocation5 + $0xbc0] sm:$0xff]
    %v865 = vld [vmem:[#allocation5 + $0xbc8] sm:$0xff]
    %v866 = vld [vmem:[#allocation5 + $0xbd0] sm:$0xff]
    %v867 = vld [vmem:[#allocation5 + $0xbd8] sm:$0xff]
    %v868 = vld [vmem:[#allocation5 + $0xbe0] sm:$0xff]
    %v869 = vld [vmem:[#allocation5 + $0xbe8] sm:$0xff]
    %v870 = vld [vmem:[#allocation5 + $0xbf0] sm:$0xff]
    %v871 = vld [vmem:[#allocation5 + $0xbf8] sm:$0xff]
    %v872 = vld [vmem:[#allocation5 + $0xc00] sm:$0xff]
    %v873 = vld [vmem:[#allocation5 + $0xc08] sm:$0xff]
    %v874 = vld [vmem:[#allocation5 + $0xc10] sm:$0xff]
    %v875 = vld [vmem:[#allocation5 + $0xc18] sm:$0xff]
    %v876 = vld [vmem:[#allocation5 + $0xc20] sm:$0xff]
    %v877 = vld [vmem:[#allocation5 + $0xc28] sm:$0xff]
    %v878 = vld [vmem:[#allocation5 + $0xc30] sm:$0xff]
    %v879 = vld [vmem:[#allocation5 + $0xc38] sm:$0xff]
    %v880 = vld [vmem:[#allocation5 + $0xc40] sm:$0xff]
    %v881 = vld [vmem:[#allocation5 + $0xc48] sm:$0xff]
    %v882 = vld [vmem:[#allocation5 + $0xc50] sm:$0xff]
    %v883 = vld [vmem:[#allocation5 + $0xc58] sm:$0xff]
    %v884 = vld [vmem:[#allocation5 + $0xc60] sm:$0xff]
    %v885 = vld [vmem:[#allocation5 + $0xc68] sm:$0xff]
    %v886 = vld [vmem:[#allocation5 + $0xc70] sm:$0xff]
    %v887 = vld [vmem:[#allocation5 + $0xc78] sm:$0xff]
    %v888 = vld [vmem:[#allocation5 + $0xc80] sm:$0xff]
    %v889 = vld [vmem:[#allocation5 + $0xc88] sm:$0xff]
    %v890 = vld [vmem:[#allocation5 + $0xc90] sm:$0xff]
    %v891 = vld [vmem:[#allocation5 + $0xc98] sm:$0xff]
    %v892 = vld [vmem:[#allocation5 + $0xca0] sm:$0xff]
    %v893 = vld [vmem:[#allocation5 + $0xca8] sm:$0xff]
    %v894 = vld [vmem:[#allocation5 + $0xcb0] sm:$0xff]
    %v895 = vld [vmem:[#allocation5 + $0xcb8] sm:$0xff]
    %v896 = vld [vmem:[#allocation5 + $0xcc0] sm:$0xff]
    %v897 = vld [vmem:[#allocation5 + $0xcc8] sm:$0xff]
    %v898 = vld [vmem:[#allocation5 + $0xcd0] sm:$0xff]
    %v899 = vld [vmem:[#allocation5 + $0xcd8] sm:$0xff]
    %v900 = vld [vmem:[#allocation5 + $0xce0] sm:$0xff]
    %v901 = vld [vmem:[#allocation5 + $0xce8] sm:$0xff]
    %v902 = vld [vmem:[#allocation5 + $0xcf0] sm:$0xff]
    %v903 = vld [vmem:[#allocation5 + $0xcf8] sm:$0xff]
    %v904 = vld [vmem:[#allocation5 + $0xd00] sm:$0xff]
    %v905 = vld [vmem:[#allocation5 + $0xd08] sm:$0xff]
    %v906 = vld [vmem:[#allocation5 + $0xd10] sm:$0xff]
    %v907 = vld [vmem:[#allocation5 + $0xd18] sm:$0xff]
    %v908 = vld [vmem:[#allocation5 + $0xd20] sm:$0xff]
    %v909 = vld [vmem:[#allocation5 + $0xd28] sm:$0xff]
    %v910 = vld [vmem:[#allocation5 + $0xd30] sm:$0xff]
    %v911 = vld [vmem:[#allocation5 + $0xd38] sm:$0xff]
    %v912 = vld [vmem:[#allocation5 + $0xd40] sm:$0xff]
    %v913 = vld [vmem:[#allocation5 + $0xd48] sm:$0xff]
    %v914 = vld [vmem:[#allocation5 + $0xd50] sm:$0xff]
    %v915 = vld [vmem:[#allocation5 + $0xd58] sm:$0xff]
    %v916 = vld [vmem:[#allocation5 + $0xd60] sm:$0xff]
    %v917 = vld [vmem:[#allocation5 + $0xd68] sm:$0xff]
    %v918 = vld [vmem:[#allocation5 + $0xd70] sm:$0xff]
    %v919 = vld [vmem:[#allocation5 + $0xd78] sm:$0xff]
    %v920 = vld [vmem:[#allocation5 + $0xd80] sm:$0xff]
    %v921 = vld [vmem:[#allocation5 + $0xd88] sm:$0xff]
    %v922 = vld [vmem:[#allocation5 + $0xd90] sm:$0xff]
    %v923 = vld [vmem:[#allocation5 + $0xd98] sm:$0xff]
    %v924 = vld [vmem:[#allocation5 + $0xda0] sm:$0xff]
    %v925 = vld [vmem:[#allocation5 + $0xda8] sm:$0xff]
    %v926 = vld [vmem:[#allocation5 + $0xdb0] sm:$0xff]
    %v927 = vld [vmem:[#allocation5 + $0xdb8] sm:$0xff]
    %v928 = vld [vmem:[#allocation5 + $0xdc0] sm:$0xff]
    %v929 = vld [vmem:[#allocation5 + $0xdc8] sm:$0xff]
    %v930 = vld [vmem:[#allocation5 + $0xdd0] sm:$0xff]
    %v931 = vld [vmem:[#allocation5 + $0xdd8] sm:$0xff]
    %v932 = vld [vmem:[#allocation5 + $0xde0] sm:$0xff]
    %v933 = vld [vmem:[#allocation5 + $0xde8] sm:$0xff]
    %v934 = vld [vmem:[#allocation5 + $0xdf0] sm:$0xff]
    %v935 = vld [vmem:[#allocation5 + $0xdf8] sm:$0xff]
    %v936 = vld [vmem:[#allocation5 + $0xe00] sm:$0xff]
    %v937 = vld [vmem:[#allocation5 + $0xe08] sm:$0xff]
    %v938 = vld [vmem:[#allocation5 + $0xe10] sm:$0xff]
    %v939 = vld [vmem:[#allocation5 + $0xe18] sm:$0xff]
    %v940 = vld [vmem:[#allocation5 + $0xe20] sm:$0xff]
    %v941 = vld [vmem:[#allocation5 + $0xe28] sm:$0xff]
    %v942 = vld [vmem:[#allocation5 + $0xe30] sm:$0xff]
    %v943 = vld [vmem:[#allocation5 + $0xe38] sm:$0xff]
    %v944 = vld [vmem:[#allocation5 + $0xe40] sm:$0xff]
    %v945 = vld [vmem:[#allocation5 + $0xe48] sm:$0xff]
    %v946 = vld [vmem:[#allocation5 + $0xe50] sm:$0xff]
    %v947 = vld [vmem:[#allocation5 + $0xe58] sm:$0xff]
    %v948 = vld [vmem:[#allocation5 + $0xe60] sm:$0xff]
    %v949 = vld [vmem:[#allocation5 + $0xe68] sm:$0xff]
    %v950 = vld [vmem:[#allocation5 + $0xe70] sm:$0xff]
    %v951 = vld [vmem:[#allocation5 + $0xe78] sm:$0xff]
    %v952 = vld [vmem:[#allocation5 + $0xe80] sm:$0xff]
    %v953 = vld [vmem:[#allocation5 + $0xe88] sm:$0xff]
    %v954 = vld [vmem:[#allocation5 + $0xe90] sm:$0xff]
    %v955 = vld [vmem:[#allocation5 + $0xe98] sm:$0xff]
    %v956 = vld [vmem:[#allocation5 + $0xea0] sm:$0xff]
    %v957 = vld [vmem:[#allocation5 + $0xea8] sm:$0xff]
    %v958 = vld [vmem:[#allocation5 + $0xeb0] sm:$0xff]
    %v959 = vld [vmem:[#allocation5 + $0xeb8] sm:$0xff]
    %v960 = vld [vmem:[#allocation5 + $0xec0] sm:$0xff]
    %v961 = vld [vmem:[#allocation5 + $0xec8] sm:$0xff]
    %v962 = vld [vmem:[#allocation5 + $0xed0] sm:$0xff]
    %v963 = vld [vmem:[#allocation5 + $0xed8] sm:$0xff]
    %v964 = vld [vmem:[#allocation5 + $0xee0] sm:$0xff]
    %v965 = vld [vmem:[#allocation5 + $0xee8] sm:$0xff]
    %v966 = vld [vmem:[#allocation5 + $0xef0] sm:$0xff]
    %v967 = vld [vmem:[#allocation5 + $0xef8] sm:$0xff]
    %v968 = vld [vmem:[#allocation5 + $0xf00] sm:$0xff]
    %v969 = vld [vmem:[#allocation5 + $0xf08] sm:$0xff]
    %v970 = vld [vmem:[#allocation5 + $0xf10] sm:$0xff]
    %v971 = vld [vmem:[#allocation5 + $0xf18] sm:$0xff]
    %v972 = vld [vmem:[#allocation5 + $0xf20] sm:$0xff]
    %v973 = vld [vmem:[#allocation5 + $0xf28] sm:$0xff]
    %v974 = vld [vmem:[#allocation5 + $0xf30] sm:$0xff]
    %v975 = vld [vmem:[#allocation5 + $0xf38] sm:$0xff]
    %v976 = vld [vmem:[#allocation5 + $0xf40] sm:$0xff]
    %v977 = vld [vmem:[#allocation5 + $0xf48] sm:$0xff]
    %v978 = vld [vmem:[#allocation5 + $0xf50] sm:$0xff]
    %v979 = vld [vmem:[#allocation5 + $0xf58] sm:$0xff]
    %v980 = vld [vmem:[#allocation5 + $0xf60] sm:$0xff]
    %v981 = vld [vmem:[#allocation5 + $0xf68] sm:$0xff]
    %v982 = vld [vmem:[#allocation5 + $0xf70] sm:$0xff]
    %v983 = vld [vmem:[#allocation5 + $0xf78] sm:$0xff]
    %v984 = vld [vmem:[#allocation5 + $0xf80] sm:$0xff]
    %v985 = vld [vmem:[#allocation5 + $0xf88] sm:$0xff]
    %v986 = vld [vmem:[#allocation5 + $0xf90] sm:$0xff]
    %v987 = vld [vmem:[#allocation5 + $0xf98] sm:$0xff]
    %v988 = vld [vmem:[#allocation5 + $0xfa0] sm:$0xff]
    %v989 = vld [vmem:[#allocation5 + $0xfa8] sm:$0xff]
    %v990 = vld [vmem:[#allocation5 + $0xfb0] sm:$0xff]
    %v991 = vld [vmem:[#allocation5 + $0xfb8] sm:$0xff]
    %v992 = vld [vmem:[#allocation5 + $0xfc0] sm:$0xff]
    %v993 = vld [vmem:[#allocation5 + $0xfc8] sm:$0xff]
    %v994 = vld [vmem:[#allocation5 + $0xfd0] sm:$0xff]
    %v995 = vld [vmem:[#allocation5 + $0xfd8] sm:$0xff]
    %v996 = vld [vmem:[#allocation5 + $0xfe0] sm:$0xff]
    %v997 = vld [vmem:[#allocation5 + $0xfe8] sm:$0xff]
    %v998 = vld [vmem:[#allocation5 + $0xff0] sm:$0xff]
    %v999 = vld [vmem:[#allocation5 + $0xff8] sm:$0xff]
    %v1000 = vld [vmem:[#allocation7] sm:$0xff]
    %v1002 = vlaneseq
    %v1003 = vshrl.u32 %v1002, 7
    %v1004 = vsub.s32 0, %v1003
    %v1005 = vrot.slane %v1000, %v1004
    %v1006 = vlaneseq
    %v1007 = vshrl.u32 %v1006, 7
    %v1008 = vsub.s32 1, %v1007
    %v1009 = vrot.slane %v1000, %v1008
    %v1010 = vlaneseq
    %v1011 = vshrl.u32 %v1010, 7
    %v1012 = vsub.s32 2, %v1011
    %v1013 = vrot.slane %v1000, %v1012
    %v1014 = vlaneseq
    %v1015 = vshrl.u32 %v1014, 7
    %v1016 = vsub.s32 3, %v1015
    %v1017 = vrot.slane %v1000, %v1016
    %v1018 = vlaneseq
    %v1019 = vshrl.u32 %v1018, 7
    %v1020 = vsub.s32 4, %v1019
    %v1021 = vrot.slane %v1000, %v1020
    %v1022 = vlaneseq
    %v1023 = vshrl.u32 %v1022, 7
    %v1024 = vsub.s32 5, %v1023
    %v1025 = vrot.slane %v1000, %v1024
    %v1026 = vlaneseq
    %v1027 = vshrl.u32 %v1026, 7
    %v1028 = vsub.s32 6, %v1027
    %v1029 = vrot.slane %v1000, %v1028
    %v1030 = vlaneseq
    %v1031 = vshrl.u32 %v1030, 7
    %v1032 = vsub.s32 7, %v1031
    %v1033 = vrot.slane %v1000, %v1032
    %v1554 = vunpack.c.l.b16 %v488
    %v1555 = vunpack.c.h.b16 %v488
    %v1556 = vunpack.c.l.b16 %v489
    %v1557 = vunpack.c.h.b16 %v489
    %v1558 = vunpack.c.l.b16 %v490
    %v1559 = vunpack.c.h.b16 %v490
    %v1560 = vunpack.c.l.b16 %v491
    %v1561 = vunpack.c.h.b16 %v491
    %v1562 = vunpack.c.l.b16 %v492
    %v1563 = vunpack.c.h.b16 %v492
    %v1564 = vunpack.c.l.b16 %v493
    %v1565 = vunpack.c.h.b16 %v493
    %v1566 = vunpack.c.l.b16 %v494
    %v1567 = vunpack.c.h.b16 %v494
    %v1568 = vunpack.c.l.b16 %v495
    %v1569 = vunpack.c.h.b16 %v495
    %v1570 = vunpack.c.l.b16 %v496
    %v1571 = vunpack.c.h.b16 %v496
    %v1572 = vunpack.c.l.b16 %v497
    %v1573 = vunpack.c.h.b16 %v497
    %v1574 = vunpack.c.l.b16 %v498
    %v1575 = vunpack.c.h.b16 %v498
    %v1576 = vunpack.c.l.b16 %v499
    %v1577 = vunpack.c.h.b16 %v499
    %v1578 = vunpack.c.l.b16 %v500
    %v1579 = vunpack.c.h.b16 %v500
    %v1580 = vunpack.c.l.b16 %v501
    %v1581 = vunpack.c.h.b16 %v501
    %v1582 = vunpack.c.l.b16 %v502
    %v1583 = vunpack.c.h.b16 %v502
    %v1584 = vunpack.c.l.b16 %v503
    %v1585 = vunpack.c.h.b16 %v503
    %v1586 = vunpack.c.l.b16 %v504
    %v1587 = vunpack.c.h.b16 %v504
    %v1588 = vunpack.c.l.b16 %v505
    %v1589 = vunpack.c.h.b16 %v505
    %v1590 = vunpack.c.l.b16 %v506
    %v1591 = vunpack.c.h.b16 %v506
    %v1592 = vunpack.c.l.b16 %v507
    %v1593 = vunpack.c.h.b16 %v507
    %v1594 = vunpack.c.l.b16 %v508
    %v1595 = vunpack.c.h.b16 %v508
    %v1596 = vunpack.c.l.b16 %v509
    %v1597 = vunpack.c.h.b16 %v509
    %v1598 = vunpack.c.l.b16 %v510
    %v1599 = vunpack.c.h.b16 %v510
    %v1600 = vunpack.c.l.b16 %v511
    %v1601 = vunpack.c.h.b16 %v511
    %v1602 = vunpack.c.l.b16 %v512
    %v1603 = vunpack.c.h.b16 %v512
    %v1604 = vunpack.c.l.b16 %v513
    %v1605 = vunpack.c.h.b16 %v513
    %v1606 = vunpack.c.l.b16 %v514
    %v1607 = vunpack.c.h.b16 %v514
    %v1608 = vunpack.c.l.b16 %v515
    %v1609 = vunpack.c.h.b16 %v515
    %v1610 = vunpack.c.l.b16 %v516
    %v1611 = vunpack.c.h.b16 %v516
    %v1612 = vunpack.c.l.b16 %v517
    %v1613 = vunpack.c.h.b16 %v517
    %v1614 = vunpack.c.l.b16 %v518
    %v1615 = vunpack.c.h.b16 %v518
    %v1616 = vunpack.c.l.b16 %v519
    %v1617 = vunpack.c.h.b16 %v519
    %v1618 = vunpack.c.l.b16 %v520
    %v1619 = vunpack.c.h.b16 %v520
    %v1620 = vunpack.c.l.b16 %v521
    %v1621 = vunpack.c.h.b16 %v521
    %v1622 = vunpack.c.l.b16 %v522
    %v1623 = vunpack.c.h.b16 %v522
    %v1624 = vunpack.c.l.b16 %v523
    %v1625 = vunpack.c.h.b16 %v523
    %v1626 = vunpack.c.l.b16 %v524
    %v1627 = vunpack.c.h.b16 %v524
    %v1628 = vunpack.c.l.b16 %v525
    %v1629 = vunpack.c.h.b16 %v525
    %v1630 = vunpack.c.l.b16 %v526
    %v1631 = vunpack.c.h.b16 %v526
    %v1632 = vunpack.c.l.b16 %v527
    %v1633 = vunpack.c.h.b16 %v527
    %v1634 = vunpack.c.l.b16 %v528
    %v1635 = vunpack.c.h.b16 %v528
    %v1636 = vunpack.c.l.b16 %v529
    %v1637 = vunpack.c.h.b16 %v529
    %v1638 = vunpack.c.l.b16 %v530
    %v1639 = vunpack.c.h.b16 %v530
    %v1640 = vunpack.c.l.b16 %v531
    %v1641 = vunpack.c.h.b16 %v531
    %v1642 = vunpack.c.l.b16 %v532
    %v1643 = vunpack.c.h.b16 %v532
    %v1644 = vunpack.c.l.b16 %v533
    %v1645 = vunpack.c.h.b16 %v533
    %v1646 = vunpack.c.l.b16 %v534
    %v1647 = vunpack.c.h.b16 %v534
    %v1648 = vunpack.c.l.b16 %v535
    %v1649 = vunpack.c.h.b16 %v535
    %v1650 = vunpack.c.l.b16 %v536
    %v1651 = vunpack.c.h.b16 %v536
    %v1652 = vunpack.c.l.b16 %v537
    %v1653 = vunpack.c.h.b16 %v537
    %v1654 = vunpack.c.l.b16 %v538
    %v1655 = vunpack.c.h.b16 %v538
    %v1656 = vunpack.c.l.b16 %v539
    %v1657 = vunpack.c.h.b16 %v539
    %v1658 = vunpack.c.l.b16 %v540
    %v1659 = vunpack.c.h.b16 %v540
    %v1660 = vunpack.c.l.b16 %v541
    %v1661 = vunpack.c.h.b16 %v541
    %v1662 = vunpack.c.l.b16 %v542
    %v1663 = vunpack.c.h.b16 %v542
    %v1664 = vunpack.c.l.b16 %v543
    %v1665 = vunpack.c.h.b16 %v543
    %v1666 = vunpack.c.l.b16 %v544
    %v1667 = vunpack.c.h.b16 %v544
    %v1668 = vunpack.c.l.b16 %v545
    %v1669 = vunpack.c.h.b16 %v545
    %v1670 = vunpack.c.l.b16 %v546
    %v1671 = vunpack.c.h.b16 %v546
    %v1672 = vunpack.c.l.b16 %v547
    %v1673 = vunpack.c.h.b16 %v547
    %v1674 = vunpack.c.l.b16 %v548
    %v1675 = vunpack.c.h.b16 %v548
    %v1676 = vunpack.c.l.b16 %v549
    %v1677 = vunpack.c.h.b16 %v549
    %v1678 = vunpack.c.l.b16 %v550
    %v1679 = vunpack.c.h.b16 %v550
    %v1680 = vunpack.c.l.b16 %v551
    %v1681 = vunpack.c.h.b16 %v551
    %v1682 = vunpack.c.l.b16 %v552
    %v1683 = vunpack.c.h.b16 %v552
    %v1684 = vunpack.c.l.b16 %v553
    %v1685 = vunpack.c.h.b16 %v553
    %v1686 = vunpack.c.l.b16 %v554
    %v1687 = vunpack.c.h.b16 %v554
    %v1688 = vunpack.c.l.b16 %v555
    %v1689 = vunpack.c.h.b16 %v555
    %v1690 = vunpack.c.l.b16 %v556
    %v1691 = vunpack.c.h.b16 %v556
    %v1692 = vunpack.c.l.b16 %v557
    %v1693 = vunpack.c.h.b16 %v557
    %v1694 = vunpack.c.l.b16 %v558
    %v1695 = vunpack.c.h.b16 %v558
    %v1696 = vunpack.c.l.b16 %v559
    %v1697 = vunpack.c.h.b16 %v559
    %v1698 = vunpack.c.l.b16 %v560
    %v1699 = vunpack.c.h.b16 %v560
    %v1700 = vunpack.c.l.b16 %v561
    %v1701 = vunpack.c.h.b16 %v561
    %v1702 = vunpack.c.l.b16 %v562
    %v1703 = vunpack.c.h.b16 %v562
    %v1704 = vunpack.c.l.b16 %v563
    %v1705 = vunpack.c.h.b16 %v563
    %v1706 = vunpack.c.l.b16 %v564
    %v1707 = vunpack.c.h.b16 %v564
    %v1708 = vunpack.c.l.b16 %v565
    %v1709 = vunpack.c.h.b16 %v565
    %v1710 = vunpack.c.l.b16 %v566
    %v1711 = vunpack.c.h.b16 %v566
    %v1712 = vunpack.c.l.b16 %v567
    %v1713 = vunpack.c.h.b16 %v567
    %v1714 = vunpack.c.l.b16 %v568
    %v1715 = vunpack.c.h.b16 %v568
    %v1716 = vunpack.c.l.b16 %v569
    %v1717 = vunpack.c.h.b16 %v569
    %v1718 = vunpack.c.l.b16 %v570
    %v1719 = vunpack.c.h.b16 %v570
    %v1720 = vunpack.c.l.b16 %v571
    %v1721 = vunpack.c.h.b16 %v571
    %v1722 = vunpack.c.l.b16 %v572
    %v1723 = vunpack.c.h.b16 %v572
    %v1724 = vunpack.c.l.b16 %v573
    %v1725 = vunpack.c.h.b16 %v573
    %v1726 = vunpack.c.l.b16 %v574
    %v1727 = vunpack.c.h.b16 %v574
    %v1728 = vunpack.c.l.b16 %v575
    %v1729 = vunpack.c.h.b16 %v575
    %v1730 = vunpack.c.l.b16 %v576
    %v1731 = vunpack.c.h.b16 %v576
    %v1732 = vunpack.c.l.b16 %v577
    %v1733 = vunpack.c.h.b16 %v577
    %v1734 = vunpack.c.l.b16 %v578
    %v1735 = vunpack.c.h.b16 %v578
    %v1736 = vunpack.c.l.b16 %v579
    %v1737 = vunpack.c.h.b16 %v579
    %v1738 = vunpack.c.l.b16 %v580
    %v1739 = vunpack.c.h.b16 %v580
    %v1740 = vunpack.c.l.b16 %v581
    %v1741 = vunpack.c.h.b16 %v581
    %v1742 = vunpack.c.l.b16 %v582
    %v1743 = vunpack.c.h.b16 %v582
    %v1744 = vunpack.c.l.b16 %v583
    %v1745 = vunpack.c.h.b16 %v583
    %v1746 = vunpack.c.l.b16 %v584
    %v1747 = vunpack.c.h.b16 %v584
    %v1748 = vunpack.c.l.b16 %v585
    %v1749 = vunpack.c.h.b16 %v585
    %v1750 = vunpack.c.l.b16 %v586
    %v1751 = vunpack.c.h.b16 %v586
    %v1752 = vunpack.c.l.b16 %v587
    %v1753 = vunpack.c.h.b16 %v587
    %v1754 = vunpack.c.l.b16 %v588
    %v1755 = vunpack.c.h.b16 %v588
    %v1756 = vunpack.c.l.b16 %v589
    %v1757 = vunpack.c.h.b16 %v589
    %v1758 = vunpack.c.l.b16 %v590
    %v1759 = vunpack.c.h.b16 %v590
    %v1760 = vunpack.c.l.b16 %v591
    %v1761 = vunpack.c.h.b16 %v591
    %v1762 = vunpack.c.l.b16 %v592
    %v1763 = vunpack.c.h.b16 %v592
    %v1764 = vunpack.c.l.b16 %v593
    %v1765 = vunpack.c.h.b16 %v593
    %v1766 = vunpack.c.l.b16 %v594
    %v1767 = vunpack.c.h.b16 %v594
    %v1768 = vunpack.c.l.b16 %v595
    %v1769 = vunpack.c.h.b16 %v595
    %v1770 = vunpack.c.l.b16 %v596
    %v1771 = vunpack.c.h.b16 %v596
    %v1772 = vunpack.c.l.b16 %v597
    %v1773 = vunpack.c.h.b16 %v597
    %v1774 = vunpack.c.l.b16 %v598
    %v1775 = vunpack.c.h.b16 %v598
    %v1776 = vunpack.c.l.b16 %v599
    %v1777 = vunpack.c.h.b16 %v599
    %v1778 = vunpack.c.l.b16 %v600
    %v1779 = vunpack.c.h.b16 %v600
    %v1780 = vunpack.c.l.b16 %v601
    %v1781 = vunpack.c.h.b16 %v601
    %v1782 = vunpack.c.l.b16 %v602
    %v1783 = vunpack.c.h.b16 %v602
    %v1784 = vunpack.c.l.b16 %v603
    %v1785 = vunpack.c.h.b16 %v603
    %v1786 = vunpack.c.l.b16 %v604
    %v1787 = vunpack.c.h.b16 %v604
    %v1788 = vunpack.c.l.b16 %v605
    %v1789 = vunpack.c.h.b16 %v605
    %v1790 = vunpack.c.l.b16 %v606
    %v1791 = vunpack.c.h.b16 %v606
    %v1792 = vunpack.c.l.b16 %v607
    %v1793 = vunpack.c.h.b16 %v607
    %v1794 = vunpack.c.l.b16 %v608
    %v1795 = vunpack.c.h.b16 %v608
    %v1796 = vunpack.c.l.b16 %v609
    %v1797 = vunpack.c.h.b16 %v609
    %v1798 = vunpack.c.l.b16 %v610
    %v1799 = vunpack.c.h.b16 %v610
    %v1800 = vunpack.c.l.b16 %v611
    %v1801 = vunpack.c.h.b16 %v611
    %v1802 = vunpack.c.l.b16 %v612
    %v1803 = vunpack.c.h.b16 %v612
    %v1804 = vunpack.c.l.b16 %v613
    %v1805 = vunpack.c.h.b16 %v613
    %v1806 = vunpack.c.l.b16 %v614
    %v1807 = vunpack.c.h.b16 %v614
    %v1808 = vunpack.c.l.b16 %v615
    %v1809 = vunpack.c.h.b16 %v615
    %v1810 = vunpack.c.l.b16 %v616
    %v1811 = vunpack.c.h.b16 %v616
    %v1812 = vunpack.c.l.b16 %v617
    %v1813 = vunpack.c.h.b16 %v617
    %v1814 = vunpack.c.l.b16 %v618
    %v1815 = vunpack.c.h.b16 %v618
    %v1816 = vunpack.c.l.b16 %v619
    %v1817 = vunpack.c.h.b16 %v619
    %v1818 = vunpack.c.l.b16 %v620
    %v1819 = vunpack.c.h.b16 %v620
    %v1820 = vunpack.c.l.b16 %v621
    %v1821 = vunpack.c.h.b16 %v621
    %v1822 = vunpack.c.l.b16 %v622
    %v1823 = vunpack.c.h.b16 %v622
    %v1824 = vunpack.c.l.b16 %v623
    %v1825 = vunpack.c.h.b16 %v623
    %v1826 = vunpack.c.l.b16 %v624
    %v1827 = vunpack.c.h.b16 %v624
    %v1828 = vunpack.c.l.b16 %v625
    %v1829 = vunpack.c.h.b16 %v625
    %v1830 = vunpack.c.l.b16 %v626
    %v1831 = vunpack.c.h.b16 %v626
    %v1832 = vunpack.c.l.b16 %v627
    %v1833 = vunpack.c.h.b16 %v627
    %v1834 = vunpack.c.l.b16 %v628
    %v1835 = vunpack.c.h.b16 %v628
    %v1836 = vunpack.c.l.b16 %v629
    %v1837 = vunpack.c.h.b16 %v629
    %v1838 = vunpack.c.l.b16 %v630
    %v1839 = vunpack.c.h.b16 %v630
    %v1840 = vunpack.c.l.b16 %v631
    %v1841 = vunpack.c.h.b16 %v631
    %v1842 = vunpack.c.l.b16 %v632
    %v1843 = vunpack.c.h.b16 %v632
    %v1844 = vunpack.c.l.b16 %v633
    %v1845 = vunpack.c.h.b16 %v633
    %v1846 = vunpack.c.l.b16 %v634
    %v1847 = vunpack.c.h.b16 %v634
    %v1848 = vunpack.c.l.b16 %v635
    %v1849 = vunpack.c.h.b16 %v635
    %v1850 = vunpack.c.l.b16 %v636
    %v1851 = vunpack.c.h.b16 %v636
    %v1852 = vunpack.c.l.b16 %v637
    %v1853 = vunpack.c.h.b16 %v637
    %v1854 = vunpack.c.l.b16 %v638
    %v1855 = vunpack.c.h.b16 %v638
    %v1856 = vunpack.c.l.b16 %v639
    %v1857 = vunpack.c.h.b16 %v639
    %v1858 = vunpack.c.l.b16 %v640
    %v1859 = vunpack.c.h.b16 %v640
    %v1860 = vunpack.c.l.b16 %v641
    %v1861 = vunpack.c.h.b16 %v641
    %v1862 = vunpack.c.l.b16 %v642
    %v1863 = vunpack.c.h.b16 %v642
    %v1864 = vunpack.c.l.b16 %v643
    %v1865 = vunpack.c.h.b16 %v643
    %v1866 = vunpack.c.l.b16 %v644
    %v1867 = vunpack.c.h.b16 %v644
    %v1868 = vunpack.c.l.b16 %v645
    %v1869 = vunpack.c.h.b16 %v645
    %v1870 = vunpack.c.l.b16 %v646
    %v1871 = vunpack.c.h.b16 %v646
    %v1872 = vunpack.c.l.b16 %v647
    %v1873 = vunpack.c.h.b16 %v647
    %v1874 = vunpack.c.l.b16 %v648
    %v1875 = vunpack.c.h.b16 %v648
    %v1876 = vunpack.c.l.b16 %v649
    %v1877 = vunpack.c.h.b16 %v649
    %v1878 = vunpack.c.l.b16 %v650
    %v1879 = vunpack.c.h.b16 %v650
    %v1880 = vunpack.c.l.b16 %v651
    %v1881 = vunpack.c.h.b16 %v651
    %v1882 = vunpack.c.l.b16 %v652
    %v1883 = vunpack.c.h.b16 %v652
    %v1884 = vunpack.c.l.b16 %v653
    %v1885 = vunpack.c.h.b16 %v653
    %v1886 = vunpack.c.l.b16 %v654
    %v1887 = vunpack.c.h.b16 %v654
    %v1888 = vunpack.c.l.b16 %v655
    %v1889 = vunpack.c.h.b16 %v655
    %v1890 = vunpack.c.l.b16 %v656
    %v1891 = vunpack.c.h.b16 %v656
    %v1892 = vunpack.c.l.b16 %v657
    %v1893 = vunpack.c.h.b16 %v657
    %v1894 = vunpack.c.l.b16 %v658
    %v1895 = vunpack.c.h.b16 %v658
    %v1896 = vunpack.c.l.b16 %v659
    %v1897 = vunpack.c.h.b16 %v659
    %v1898 = vunpack.c.l.b16 %v660
    %v1899 = vunpack.c.h.b16 %v660
    %v1900 = vunpack.c.l.b16 %v661
    %v1901 = vunpack.c.h.b16 %v661
    %v1902 = vunpack.c.l.b16 %v662
    %v1903 = vunpack.c.h.b16 %v662
    %v1904 = vunpack.c.l.b16 %v663
    %v1905 = vunpack.c.h.b16 %v663
    %v1906 = vunpack.c.l.b16 %v664
    %v1907 = vunpack.c.h.b16 %v664
    %v1908 = vunpack.c.l.b16 %v665
    %v1909 = vunpack.c.h.b16 %v665
    %v1910 = vunpack.c.l.b16 %v666
    %v1911 = vunpack.c.h.b16 %v666
    %v1912 = vunpack.c.l.b16 %v667
    %v1913 = vunpack.c.h.b16 %v667
    %v1914 = vunpack.c.l.b16 %v668
    %v1915 = vunpack.c.h.b16 %v668
    %v1916 = vunpack.c.l.b16 %v669
    %v1917 = vunpack.c.h.b16 %v669
    %v1918 = vunpack.c.l.b16 %v670
    %v1919 = vunpack.c.h.b16 %v670
    %v1920 = vunpack.c.l.b16 %v671
    %v1921 = vunpack.c.h.b16 %v671
    %v1922 = vunpack.c.l.b16 %v672
    %v1923 = vunpack.c.h.b16 %v672
    %v1924 = vunpack.c.l.b16 %v673
    %v1925 = vunpack.c.h.b16 %v673
    %v1926 = vunpack.c.l.b16 %v674
    %v1927 = vunpack.c.h.b16 %v674
    %v1928 = vunpack.c.l.b16 %v675
    %v1929 = vunpack.c.h.b16 %v675
    %v1930 = vunpack.c.l.b16 %v676
    %v1931 = vunpack.c.h.b16 %v676
    %v1932 = vunpack.c.l.b16 %v677
    %v1933 = vunpack.c.h.b16 %v677
    %v1934 = vunpack.c.l.b16 %v678
    %v1935 = vunpack.c.h.b16 %v678
    %v1936 = vunpack.c.l.b16 %v679
    %v1937 = vunpack.c.h.b16 %v679
    %v1938 = vunpack.c.l.b16 %v680
    %v1939 = vunpack.c.h.b16 %v680
    %v1940 = vunpack.c.l.b16 %v681
    %v1941 = vunpack.c.h.b16 %v681
    %v1942 = vunpack.c.l.b16 %v682
    %v1943 = vunpack.c.h.b16 %v682
    %v1944 = vunpack.c.l.b16 %v683
    %v1945 = vunpack.c.h.b16 %v683
    %v1946 = vunpack.c.l.b16 %v684
    %v1947 = vunpack.c.h.b16 %v684
    %v1948 = vunpack.c.l.b16 %v685
    %v1949 = vunpack.c.h.b16 %v685
    %v1950 = vunpack.c.l.b16 %v686
    %v1951 = vunpack.c.h.b16 %v686
    %v1952 = vunpack.c.l.b16 %v687
    %v1953 = vunpack.c.h.b16 %v687
    %v1954 = vunpack.c.l.b16 %v688
    %v1955 = vunpack.c.h.b16 %v688
    %v1956 = vunpack.c.l.b16 %v689
    %v1957 = vunpack.c.h.b16 %v689
    %v1958 = vunpack.c.l.b16 %v690
    %v1959 = vunpack.c.h.b16 %v690
    %v1960 = vunpack.c.l.b16 %v691
    %v1961 = vunpack.c.h.b16 %v691
    %v1962 = vunpack.c.l.b16 %v692
    %v1963 = vunpack.c.h.b16 %v692
    %v1964 = vunpack.c.l.b16 %v693
    %v1965 = vunpack.c.h.b16 %v693
    %v1966 = vunpack.c.l.b16 %v694
    %v1967 = vunpack.c.h.b16 %v694
    %v1968 = vunpack.c.l.b16 %v695
    %v1969 = vunpack.c.h.b16 %v695
    %v1970 = vunpack.c.l.b16 %v696
    %v1971 = vunpack.c.h.b16 %v696
    %v1972 = vunpack.c.l.b16 %v697
    %v1973 = vunpack.c.h.b16 %v697
    %v1974 = vunpack.c.l.b16 %v698
    %v1975 = vunpack.c.h.b16 %v698
    %v1976 = vunpack.c.l.b16 %v699
    %v1977 = vunpack.c.h.b16 %v699
    %v1978 = vunpack.c.l.b16 %v700
    %v1979 = vunpack.c.h.b16 %v700
    %v1980 = vunpack.c.l.b16 %v701
    %v1981 = vunpack.c.h.b16 %v701
    %v1982 = vunpack.c.l.b16 %v702
    %v1983 = vunpack.c.h.b16 %v702
    %v1984 = vunpack.c.l.b16 %v703
    %v1985 = vunpack.c.h.b16 %v703
    %v1986 = vunpack.c.l.b16 %v704
    %v1987 = vunpack.c.h.b16 %v704
    %v1988 = vunpack.c.l.b16 %v705
    %v1989 = vunpack.c.h.b16 %v705
    %v1990 = vunpack.c.l.b16 %v706
    %v1991 = vunpack.c.h.b16 %v706
    %v1992 = vunpack.c.l.b16 %v707
    %v1993 = vunpack.c.h.b16 %v707
    %v1994 = vunpack.c.l.b16 %v708
    %v1995 = vunpack.c.h.b16 %v708
    %v1996 = vunpack.c.l.b16 %v709
    %v1997 = vunpack.c.h.b16 %v709
    %v1998 = vunpack.c.l.b16 %v710
    %v1999 = vunpack.c.h.b16 %v710
    %v2000 = vunpack.c.l.b16 %v711
    %v2001 = vunpack.c.h.b16 %v711
    %v2002 = vunpack.c.l.b16 %v712
    %v2003 = vunpack.c.h.b16 %v712
    %v2004 = vunpack.c.l.b16 %v713
    %v2005 = vunpack.c.h.b16 %v713
    %v2006 = vunpack.c.l.b16 %v714
    %v2007 = vunpack.c.h.b16 %v714
    %v2008 = vunpack.c.l.b16 %v715
    %v2009 = vunpack.c.h.b16 %v715
    %v2010 = vunpack.c.l.b16 %v716
    %v2011 = vunpack.c.h.b16 %v716
    %v2012 = vunpack.c.l.b16 %v717
    %v2013 = vunpack.c.h.b16 %v717
    %v2014 = vunpack.c.l.b16 %v718
    %v2015 = vunpack.c.h.b16 %v718
    %v2016 = vunpack.c.l.b16 %v719
    %v2017 = vunpack.c.h.b16 %v719
    %v2018 = vunpack.c.l.b16 %v720
    %v2019 = vunpack.c.h.b16 %v720
    %v2020 = vunpack.c.l.b16 %v721
    %v2021 = vunpack.c.h.b16 %v721
    %v2022 = vunpack.c.l.b16 %v722
    %v2023 = vunpack.c.h.b16 %v722
    %v2024 = vunpack.c.l.b16 %v723
    %v2025 = vunpack.c.h.b16 %v723
    %v2026 = vunpack.c.l.b16 %v724
    %v2027 = vunpack.c.h.b16 %v724
    %v2028 = vunpack.c.l.b16 %v725
    %v2029 = vunpack.c.h.b16 %v725
    %v2030 = vunpack.c.l.b16 %v726
    %v2031 = vunpack.c.h.b16 %v726
    %v2032 = vunpack.c.l.b16 %v727
    %v2033 = vunpack.c.h.b16 %v727
    %v2034 = vunpack.c.l.b16 %v728
    %v2035 = vunpack.c.h.b16 %v728
    %v2036 = vunpack.c.l.b16 %v729
    %v2037 = vunpack.c.h.b16 %v729
    %v2038 = vunpack.c.l.b16 %v730
    %v2039 = vunpack.c.h.b16 %v730
    %v2040 = vunpack.c.l.b16 %v731
    %v2041 = vunpack.c.h.b16 %v731
    %v2042 = vunpack.c.l.b16 %v732
    %v2043 = vunpack.c.h.b16 %v732
    %v2044 = vunpack.c.l.b16 %v733
    %v2045 = vunpack.c.h.b16 %v733
    %v2046 = vunpack.c.l.b16 %v734
    %v2047 = vunpack.c.h.b16 %v734
    %v2048 = vunpack.c.l.b16 %v735
    %v2049 = vunpack.c.h.b16 %v735
    %v2050 = vunpack.c.l.b16 %v736
    %v2051 = vunpack.c.h.b16 %v736
    %v2052 = vunpack.c.l.b16 %v737
    %v2053 = vunpack.c.h.b16 %v737
    %v2054 = vunpack.c.l.b16 %v738
    %v2055 = vunpack.c.h.b16 %v738
    %v2056 = vunpack.c.l.b16 %v739
    %v2057 = vunpack.c.h.b16 %v739
    %v2058 = vunpack.c.l.b16 %v740
    %v2059 = vunpack.c.h.b16 %v740
    %v2060 = vunpack.c.l.b16 %v741
    %v2061 = vunpack.c.h.b16 %v741
    %v2062 = vunpack.c.l.b16 %v742
    %v2063 = vunpack.c.h.b16 %v742
    %v2064 = vunpack.c.l.b16 %v743
    %v2065 = vunpack.c.h.b16 %v743
    %v2066 = vunpack.c.l.b16 %v744
    %v2067 = vunpack.c.h.b16 %v744
    %v2068 = vunpack.c.l.b16 %v745
    %v2069 = vunpack.c.h.b16 %v745
    %v2070 = vunpack.c.l.b16 %v746
    %v2071 = vunpack.c.h.b16 %v746
    %v2072 = vunpack.c.l.b16 %v747
    %v2073 = vunpack.c.h.b16 %v747
    %v2074 = vunpack.c.l.b16 %v748
    %v2075 = vunpack.c.h.b16 %v748
    %v2076 = vunpack.c.l.b16 %v749
    %v2077 = vunpack.c.h.b16 %v749
    %v2078 = vunpack.c.l.b16 %v750
    %v2079 = vunpack.c.h.b16 %v750
    %v2080 = vunpack.c.l.b16 %v751
    %v2081 = vunpack.c.h.b16 %v751
    %v2082 = vunpack.c.l.b16 %v752
    %v2083 = vunpack.c.h.b16 %v752
    %v2084 = vunpack.c.l.b16 %v753
    %v2085 = vunpack.c.h.b16 %v753
    %v2086 = vunpack.c.l.b16 %v754
    %v2087 = vunpack.c.h.b16 %v754
    %v2088 = vunpack.c.l.b16 %v755
    %v2089 = vunpack.c.h.b16 %v755
    %v2090 = vunpack.c.l.b16 %v756
    %v2091 = vunpack.c.h.b16 %v756
    %v2092 = vunpack.c.l.b16 %v757
    %v2093 = vunpack.c.h.b16 %v757
    %v2094 = vunpack.c.l.b16 %v758
    %v2095 = vunpack.c.h.b16 %v758
    %v2096 = vunpack.c.l.b16 %v759
    %v2097 = vunpack.c.h.b16 %v759
    %v2098 = vunpack.c.l.b16 %v760
    %v2099 = vunpack.c.h.b16 %v760
    %v2100 = vunpack.c.l.b16 %v761
    %v2101 = vunpack.c.h.b16 %v761
    %v2102 = vunpack.c.l.b16 %v762
    %v2103 = vunpack.c.h.b16 %v762
    %v2104 = vunpack.c.l.b16 %v763
    %v2105 = vunpack.c.h.b16 %v763
    %v2106 = vunpack.c.l.b16 %v764
    %v2107 = vunpack.c.h.b16 %v764
    %v2108 = vunpack.c.l.b16 %v765
    %v2109 = vunpack.c.h.b16 %v765
    %v2110 = vunpack.c.l.b16 %v766
    %v2111 = vunpack.c.h.b16 %v766
    %v2112 = vunpack.c.l.b16 %v767
    %v2113 = vunpack.c.h.b16 %v767
    %v2114 = vunpack.c.l.b16 %v768
    %v2115 = vunpack.c.h.b16 %v768
    %v2116 = vunpack.c.l.b16 %v769
    %v2117 = vunpack.c.h.b16 %v769
    %v2118 = vunpack.c.l.b16 %v770
    %v2119 = vunpack.c.h.b16 %v770
    %v2120 = vunpack.c.l.b16 %v771
    %v2121 = vunpack.c.h.b16 %v771
    %v2122 = vunpack.c.l.b16 %v772
    %v2123 = vunpack.c.h.b16 %v772
    %v2124 = vunpack.c.l.b16 %v773
    %v2125 = vunpack.c.h.b16 %v773
    %v2126 = vunpack.c.l.b16 %v774
    %v2127 = vunpack.c.h.b16 %v774
    %v2128 = vunpack.c.l.b16 %v775
    %v2129 = vunpack.c.h.b16 %v775
    %v2130 = vunpack.c.l.b16 %v776
    %v2131 = vunpack.c.h.b16 %v776
    %v2132 = vunpack.c.l.b16 %v777
    %v2133 = vunpack.c.h.b16 %v777
    %v2134 = vunpack.c.l.b16 %v778
    %v2135 = vunpack.c.h.b16 %v778
    %v2136 = vunpack.c.l.b16 %v779
    %v2137 = vunpack.c.h.b16 %v779
    %v2138 = vunpack.c.l.b16 %v780
    %v2139 = vunpack.c.h.b16 %v780
    %v2140 = vunpack.c.l.b16 %v781
    %v2141 = vunpack.c.h.b16 %v781
    %v2142 = vunpack.c.l.b16 %v782
    %v2143 = vunpack.c.h.b16 %v782
    %v2144 = vunpack.c.l.b16 %v783
    %v2145 = vunpack.c.h.b16 %v783
    %v2146 = vunpack.c.l.b16 %v784
    %v2147 = vunpack.c.h.b16 %v784
    %v2148 = vunpack.c.l.b16 %v785
    %v2149 = vunpack.c.h.b16 %v785
    %v2150 = vunpack.c.l.b16 %v786
    %v2151 = vunpack.c.h.b16 %v786
    %v2152 = vunpack.c.l.b16 %v787
    %v2153 = vunpack.c.h.b16 %v787
    %v2154 = vunpack.c.l.b16 %v788
    %v2155 = vunpack.c.h.b16 %v788
    %v2156 = vunpack.c.l.b16 %v789
    %v2157 = vunpack.c.h.b16 %v789
    %v2158 = vunpack.c.l.b16 %v790
    %v2159 = vunpack.c.h.b16 %v790
    %v2160 = vunpack.c.l.b16 %v791
    %v2161 = vunpack.c.h.b16 %v791
    %v2162 = vunpack.c.l.b16 %v792
    %v2163 = vunpack.c.h.b16 %v792
    %v2164 = vunpack.c.l.b16 %v793
    %v2165 = vunpack.c.h.b16 %v793
    %v2166 = vunpack.c.l.b16 %v794
    %v2167 = vunpack.c.h.b16 %v794
    %v2168 = vunpack.c.l.b16 %v795
    %v2169 = vunpack.c.h.b16 %v795
    %v2170 = vunpack.c.l.b16 %v796
    %v2171 = vunpack.c.h.b16 %v796
    %v2172 = vunpack.c.l.b16 %v797
    %v2173 = vunpack.c.h.b16 %v797
    %v2174 = vunpack.c.l.b16 %v798
    %v2175 = vunpack.c.h.b16 %v798
    %v2176 = vunpack.c.l.b16 %v799
    %v2177 = vunpack.c.h.b16 %v799
    %v2178 = vunpack.c.l.b16 %v800
    %v2179 = vunpack.c.h.b16 %v800
    %v2180 = vunpack.c.l.b16 %v801
    %v2181 = vunpack.c.h.b16 %v801
    %v2182 = vunpack.c.l.b16 %v802
    %v2183 = vunpack.c.h.b16 %v802
    %v2184 = vunpack.c.l.b16 %v803
    %v2185 = vunpack.c.h.b16 %v803
    %v2186 = vunpack.c.l.b16 %v804
    %v2187 = vunpack.c.h.b16 %v804
    %v2188 = vunpack.c.l.b16 %v805
    %v2189 = vunpack.c.h.b16 %v805
    %v2190 = vunpack.c.l.b16 %v806
    %v2191 = vunpack.c.h.b16 %v806
    %v2192 = vunpack.c.l.b16 %v807
    %v2193 = vunpack.c.h.b16 %v807
    %v2194 = vunpack.c.l.b16 %v808
    %v2195 = vunpack.c.h.b16 %v808
    %v2196 = vunpack.c.l.b16 %v809
    %v2197 = vunpack.c.h.b16 %v809
    %v2198 = vunpack.c.l.b16 %v810
    %v2199 = vunpack.c.h.b16 %v810
    %v2200 = vunpack.c.l.b16 %v811
    %v2201 = vunpack.c.h.b16 %v811
    %v2202 = vunpack.c.l.b16 %v812
    %v2203 = vunpack.c.h.b16 %v812
    %v2204 = vunpack.c.l.b16 %v813
    %v2205 = vunpack.c.h.b16 %v813
    %v2206 = vunpack.c.l.b16 %v814
    %v2207 = vunpack.c.h.b16 %v814
    %v2208 = vunpack.c.l.b16 %v815
    %v2209 = vunpack.c.h.b16 %v815
    %v2210 = vunpack.c.l.b16 %v816
    %v2211 = vunpack.c.h.b16 %v816
    %v2212 = vunpack.c.l.b16 %v817
    %v2213 = vunpack.c.h.b16 %v817
    %v2214 = vunpack.c.l.b16 %v818
    %v2215 = vunpack.c.h.b16 %v818
    %v2216 = vunpack.c.l.b16 %v819
    %v2217 = vunpack.c.h.b16 %v819
    %v2218 = vunpack.c.l.b16 %v820
    %v2219 = vunpack.c.h.b16 %v820
    %v2220 = vunpack.c.l.b16 %v821
    %v2221 = vunpack.c.h.b16 %v821
    %v2222 = vunpack.c.l.b16 %v822
    %v2223 = vunpack.c.h.b16 %v822
    %v2224 = vunpack.c.l.b16 %v823
    %v2225 = vunpack.c.h.b16 %v823
    %v2226 = vunpack.c.l.b16 %v824
    %v2227 = vunpack.c.h.b16 %v824
    %v2228 = vunpack.c.l.b16 %v825
    %v2229 = vunpack.c.h.b16 %v825
    %v2230 = vunpack.c.l.b16 %v826
    %v2231 = vunpack.c.h.b16 %v826
    %v2232 = vunpack.c.l.b16 %v827
    %v2233 = vunpack.c.h.b16 %v827
    %v2234 = vunpack.c.l.b16 %v828
    %v2235 = vunpack.c.h.b16 %v828
    %v2236 = vunpack.c.l.b16 %v829
    %v2237 = vunpack.c.h.b16 %v829
    %v2238 = vunpack.c.l.b16 %v830
    %v2239 = vunpack.c.h.b16 %v830
    %v2240 = vunpack.c.l.b16 %v831
    %v2241 = vunpack.c.h.b16 %v831
    %v2242 = vunpack.c.l.b16 %v832
    %v2243 = vunpack.c.h.b16 %v832
    %v2244 = vunpack.c.l.b16 %v833
    %v2245 = vunpack.c.h.b16 %v833
    %v2246 = vunpack.c.l.b16 %v834
    %v2247 = vunpack.c.h.b16 %v834
    %v2248 = vunpack.c.l.b16 %v835
    %v2249 = vunpack.c.h.b16 %v835
    %v2250 = vunpack.c.l.b16 %v836
    %v2251 = vunpack.c.h.b16 %v836
    %v2252 = vunpack.c.l.b16 %v837
    %v2253 = vunpack.c.h.b16 %v837
    %v2254 = vunpack.c.l.b16 %v838
    %v2255 = vunpack.c.h.b16 %v838
    %v2256 = vunpack.c.l.b16 %v839
    %v2257 = vunpack.c.h.b16 %v839
    %v2258 = vunpack.c.l.b16 %v840
    %v2259 = vunpack.c.h.b16 %v840
    %v2260 = vunpack.c.l.b16 %v841
    %v2261 = vunpack.c.h.b16 %v841
    %v2262 = vunpack.c.l.b16 %v842
    %v2263 = vunpack.c.h.b16 %v842
    %v2264 = vunpack.c.l.b16 %v843
    %v2265 = vunpack.c.h.b16 %v843
    %v2266 = vunpack.c.l.b16 %v844
    %v2267 = vunpack.c.h.b16 %v844
    %v2268 = vunpack.c.l.b16 %v845
    %v2269 = vunpack.c.h.b16 %v845
    %v2270 = vunpack.c.l.b16 %v846
    %v2271 = vunpack.c.h.b16 %v846
    %v2272 = vunpack.c.l.b16 %v847
    %v2273 = vunpack.c.h.b16 %v847
    %v2274 = vunpack.c.l.b16 %v848
    %v2275 = vunpack.c.h.b16 %v848
    %v2276 = vunpack.c.l.b16 %v849
    %v2277 = vunpack.c.h.b16 %v849
    %v2278 = vunpack.c.l.b16 %v850
    %v2279 = vunpack.c.h.b16 %v850
    %v2280 = vunpack.c.l.b16 %v851
    %v2281 = vunpack.c.h.b16 %v851
    %v2282 = vunpack.c.l.b16 %v852
    %v2283 = vunpack.c.h.b16 %v852
    %v2284 = vunpack.c.l.b16 %v853
    %v2285 = vunpack.c.h.b16 %v853
    %v2286 = vunpack.c.l.b16 %v854
    %v2287 = vunpack.c.h.b16 %v854
    %v2288 = vunpack.c.l.b16 %v855
    %v2289 = vunpack.c.h.b16 %v855
    %v2290 = vunpack.c.l.b16 %v856
    %v2291 = vunpack.c.h.b16 %v856
    %v2292 = vunpack.c.l.b16 %v857
    %v2293 = vunpack.c.h.b16 %v857
    %v2294 = vunpack.c.l.b16 %v858
    %v2295 = vunpack.c.h.b16 %v858
    %v2296 = vunpack.c.l.b16 %v859
    %v2297 = vunpack.c.h.b16 %v859
    %v2298 = vunpack.c.l.b16 %v860
    %v2299 = vunpack.c.h.b16 %v860
    %v2300 = vunpack.c.l.b16 %v861
    %v2301 = vunpack.c.h.b16 %v861
    %v2302 = vunpack.c.l.b16 %v862
    %v2303 = vunpack.c.h.b16 %v862
    %v2304 = vunpack.c.l.b16 %v863
    %v2305 = vunpack.c.h.b16 %v863
    %v2306 = vunpack.c.l.b16 %v864
    %v2307 = vunpack.c.h.b16 %v864
    %v2308 = vunpack.c.l.b16 %v865
    %v2309 = vunpack.c.h.b16 %v865
    %v2310 = vunpack.c.l.b16 %v866
    %v2311 = vunpack.c.h.b16 %v866
    %v2312 = vunpack.c.l.b16 %v867
    %v2313 = vunpack.c.h.b16 %v867
    %v2314 = vunpack.c.l.b16 %v868
    %v2315 = vunpack.c.h.b16 %v868
    %v2316 = vunpack.c.l.b16 %v869
    %v2317 = vunpack.c.h.b16 %v869
    %v2318 = vunpack.c.l.b16 %v870
    %v2319 = vunpack.c.h.b16 %v870
    %v2320 = vunpack.c.l.b16 %v871
    %v2321 = vunpack.c.h.b16 %v871
    %v2322 = vunpack.c.l.b16 %v872
    %v2323 = vunpack.c.h.b16 %v872
    %v2324 = vunpack.c.l.b16 %v873
    %v2325 = vunpack.c.h.b16 %v873
    %v2326 = vunpack.c.l.b16 %v874
    %v2327 = vunpack.c.h.b16 %v874
    %v2328 = vunpack.c.l.b16 %v875
    %v2329 = vunpack.c.h.b16 %v875
    %v2330 = vunpack.c.l.b16 %v876
    %v2331 = vunpack.c.h.b16 %v876
    %v2332 = vunpack.c.l.b16 %v877
    %v2333 = vunpack.c.h.b16 %v877
    %v2334 = vunpack.c.l.b16 %v878
    %v2335 = vunpack.c.h.b16 %v878
    %v2336 = vunpack.c.l.b16 %v879
    %v2337 = vunpack.c.h.b16 %v879
    %v2338 = vunpack.c.l.b16 %v880
    %v2339 = vunpack.c.h.b16 %v880
    %v2340 = vunpack.c.l.b16 %v881
    %v2341 = vunpack.c.h.b16 %v881
    %v2342 = vunpack.c.l.b16 %v882
    %v2343 = vunpack.c.h.b16 %v882
    %v2344 = vunpack.c.l.b16 %v883
    %v2345 = vunpack.c.h.b16 %v883
    %v2346 = vunpack.c.l.b16 %v884
    %v2347 = vunpack.c.h.b16 %v884
    %v2348 = vunpack.c.l.b16 %v885
    %v2349 = vunpack.c.h.b16 %v885
    %v2350 = vunpack.c.l.b16 %v886
    %v2351 = vunpack.c.h.b16 %v886
    %v2352 = vunpack.c.l.b16 %v887
    %v2353 = vunpack.c.h.b16 %v887
    %v2354 = vunpack.c.l.b16 %v888
    %v2355 = vunpack.c.h.b16 %v888
    %v2356 = vunpack.c.l.b16 %v889
    %v2357 = vunpack.c.h.b16 %v889
    %v2358 = vunpack.c.l.b16 %v890
    %v2359 = vunpack.c.h.b16 %v890
    %v2360 = vunpack.c.l.b16 %v891
    %v2361 = vunpack.c.h.b16 %v891
    %v2362 = vunpack.c.l.b16 %v892
    %v2363 = vunpack.c.h.b16 %v892
    %v2364 = vunpack.c.l.b16 %v893
    %v2365 = vunpack.c.h.b16 %v893
    %v2366 = vunpack.c.l.b16 %v894
    %v2367 = vunpack.c.h.b16 %v894
    %v2368 = vunpack.c.l.b16 %v895
    %v2369 = vunpack.c.h.b16 %v895
    %v2370 = vunpack.c.l.b16 %v896
    %v2371 = vunpack.c.h.b16 %v896
    %v2372 = vunpack.c.l.b16 %v897
    %v2373 = vunpack.c.h.b16 %v897
    %v2374 = vunpack.c.l.b16 %v898
    %v2375 = vunpack.c.h.b16 %v898
    %v2376 = vunpack.c.l.b16 %v899
    %v2377 = vunpack.c.h.b16 %v899
    %v2378 = vunpack.c.l.b16 %v900
    %v2379 = vunpack.c.h.b16 %v900
    %v2380 = vunpack.c.l.b16 %v901
    %v2381 = vunpack.c.h.b16 %v901
    %v2382 = vunpack.c.l.b16 %v902
    %v2383 = vunpack.c.h.b16 %v902
    %v2384 = vunpack.c.l.b16 %v903
    %v2385 = vunpack.c.h.b16 %v903
    %v2386 = vunpack.c.l.b16 %v904
    %v2387 = vunpack.c.h.b16 %v904
    %v2388 = vunpack.c.l.b16 %v905
    %v2389 = vunpack.c.h.b16 %v905
    %v2390 = vunpack.c.l.b16 %v906
    %v2391 = vunpack.c.h.b16 %v906
    %v2392 = vunpack.c.l.b16 %v907
    %v2393 = vunpack.c.h.b16 %v907
    %v2394 = vunpack.c.l.b16 %v908
    %v2395 = vunpack.c.h.b16 %v908
    %v2396 = vunpack.c.l.b16 %v909
    %v2397 = vunpack.c.h.b16 %v909
    %v2398 = vunpack.c.l.b16 %v910
    %v2399 = vunpack.c.h.b16 %v910
    %v2400 = vunpack.c.l.b16 %v911
    %v2401 = vunpack.c.h.b16 %v911
    %v2402 = vunpack.c.l.b16 %v912
    %v2403 = vunpack.c.h.b16 %v912
    %v2404 = vunpack.c.l.b16 %v913
    %v2405 = vunpack.c.h.b16 %v913
    %v2406 = vunpack.c.l.b16 %v914
    %v2407 = vunpack.c.h.b16 %v914
    %v2408 = vunpack.c.l.b16 %v915
    %v2409 = vunpack.c.h.b16 %v915
    %v2410 = vunpack.c.l.b16 %v916
    %v2411 = vunpack.c.h.b16 %v916
    %v2412 = vunpack.c.l.b16 %v917
    %v2413 = vunpack.c.h.b16 %v917
    %v2414 = vunpack.c.l.b16 %v918
    %v2415 = vunpack.c.h.b16 %v918
    %v2416 = vunpack.c.l.b16 %v919
    %v2417 = vunpack.c.h.b16 %v919
    %v2418 = vunpack.c.l.b16 %v920
    %v2419 = vunpack.c.h.b16 %v920
    %v2420 = vunpack.c.l.b16 %v921
    %v2421 = vunpack.c.h.b16 %v921
    %v2422 = vunpack.c.l.b16 %v922
    %v2423 = vunpack.c.h.b16 %v922
    %v2424 = vunpack.c.l.b16 %v923
    %v2425 = vunpack.c.h.b16 %v923
    %v2426 = vunpack.c.l.b16 %v924
    %v2427 = vunpack.c.h.b16 %v924
    %v2428 = vunpack.c.l.b16 %v925
    %v2429 = vunpack.c.h.b16 %v925
    %v2430 = vunpack.c.l.b16 %v926
    %v2431 = vunpack.c.h.b16 %v926
    %v2432 = vunpack.c.l.b16 %v927
    %v2433 = vunpack.c.h.b16 %v927
    %v2434 = vunpack.c.l.b16 %v928
    %v2435 = vunpack.c.h.b16 %v928
    %v2436 = vunpack.c.l.b16 %v929
    %v2437 = vunpack.c.h.b16 %v929
    %v2438 = vunpack.c.l.b16 %v930
    %v2439 = vunpack.c.h.b16 %v930
    %v2440 = vunpack.c.l.b16 %v931
    %v2441 = vunpack.c.h.b16 %v931
    %v2442 = vunpack.c.l.b16 %v932
    %v2443 = vunpack.c.h.b16 %v932
    %v2444 = vunpack.c.l.b16 %v933
    %v2445 = vunpack.c.h.b16 %v933
    %v2446 = vunpack.c.l.b16 %v934
    %v2447 = vunpack.c.h.b16 %v934
    %v2448 = vunpack.c.l.b16 %v935
    %v2449 = vunpack.c.h.b16 %v935
    %v2450 = vunpack.c.l.b16 %v936
    %v2451 = vunpack.c.h.b16 %v936
    %v2452 = vunpack.c.l.b16 %v937
    %v2453 = vunpack.c.h.b16 %v937
    %v2454 = vunpack.c.l.b16 %v938
    %v2455 = vunpack.c.h.b16 %v938
    %v2456 = vunpack.c.l.b16 %v939
    %v2457 = vunpack.c.h.b16 %v939
    %v2458 = vunpack.c.l.b16 %v940
    %v2459 = vunpack.c.h.b16 %v940
    %v2460 = vunpack.c.l.b16 %v941
    %v2461 = vunpack.c.h.b16 %v941
    %v2462 = vunpack.c.l.b16 %v942
    %v2463 = vunpack.c.h.b16 %v942
    %v2464 = vunpack.c.l.b16 %v943
    %v2465 = vunpack.c.h.b16 %v943
    %v2466 = vunpack.c.l.b16 %v944
    %v2467 = vunpack.c.h.b16 %v944
    %v2468 = vunpack.c.l.b16 %v945
    %v2469 = vunpack.c.h.b16 %v945
    %v2470 = vunpack.c.l.b16 %v946
    %v2471 = vunpack.c.h.b16 %v946
    %v2472 = vunpack.c.l.b16 %v947
    %v2473 = vunpack.c.h.b16 %v947
    %v2474 = vunpack.c.l.b16 %v948
    %v2475 = vunpack.c.h.b16 %v948
    %v2476 = vunpack.c.l.b16 %v949
    %v2477 = vunpack.c.h.b16 %v949
    %v2478 = vunpack.c.l.b16 %v950
    %v2479 = vunpack.c.h.b16 %v950
    %v2480 = vunpack.c.l.b16 %v951
    %v2481 = vunpack.c.h.b16 %v951
    %v2482 = vunpack.c.l.b16 %v952
    %v2483 = vunpack.c.h.b16 %v952
    %v2484 = vunpack.c.l.b16 %v953
    %v2485 = vunpack.c.h.b16 %v953
    %v2486 = vunpack.c.l.b16 %v954
    %v2487 = vunpack.c.h.b16 %v954
    %v2488 = vunpack.c.l.b16 %v955
    %v2489 = vunpack.c.h.b16 %v955
    %v2490 = vunpack.c.l.b16 %v956
    %v2491 = vunpack.c.h.b16 %v956
    %v2492 = vunpack.c.l.b16 %v957
    %v2493 = vunpack.c.h.b16 %v957
    %v2494 = vunpack.c.l.b16 %v958
    %v2495 = vunpack.c.h.b16 %v958
    %v2496 = vunpack.c.l.b16 %v959
    %v2497 = vunpack.c.h.b16 %v959
    %v2498 = vunpack.c.l.b16 %v960
    %v2499 = vunpack.c.h.b16 %v960
    %v2500 = vunpack.c.l.b16 %v961
    %v2501 = vunpack.c.h.b16 %v961
    %v2502 = vunpack.c.l.b16 %v962
    %v2503 = vunpack.c.h.b16 %v962
    %v2504 = vunpack.c.l.b16 %v963
    %v2505 = vunpack.c.h.b16 %v963
    %v2506 = vunpack.c.l.b16 %v964
    %v2507 = vunpack.c.h.b16 %v964
    %v2508 = vunpack.c.l.b16 %v965
    %v2509 = vunpack.c.h.b16 %v965
    %v2510 = vunpack.c.l.b16 %v966
    %v2511 = vunpack.c.h.b16 %v966
    %v2512 = vunpack.c.l.b16 %v967
    %v2513 = vunpack.c.h.b16 %v967
    %v2514 = vunpack.c.l.b16 %v968
    %v2515 = vunpack.c.h.b16 %v968
    %v2516 = vunpack.c.l.b16 %v969
    %v2517 = vunpack.c.h.b16 %v969
    %v2518 = vunpack.c.l.b16 %v970
    %v2519 = vunpack.c.h.b16 %v970
    %v2520 = vunpack.c.l.b16 %v971
    %v2521 = vunpack.c.h.b16 %v971
    %v2522 = vunpack.c.l.b16 %v972
    %v2523 = vunpack.c.h.b16 %v972
    %v2524 = vunpack.c.l.b16 %v973
    %v2525 = vunpack.c.h.b16 %v973
    %v2526 = vunpack.c.l.b16 %v974
    %v2527 = vunpack.c.h.b16 %v974
    %v2528 = vunpack.c.l.b16 %v975
    %v2529 = vunpack.c.h.b16 %v975
    %v2530 = vunpack.c.l.b16 %v976
    %v2531 = vunpack.c.h.b16 %v976
    %v2532 = vunpack.c.l.b16 %v977
    %v2533 = vunpack.c.h.b16 %v977
    %v2534 = vunpack.c.l.b16 %v978
    %v2535 = vunpack.c.h.b16 %v978
    %v2536 = vunpack.c.l.b16 %v979
    %v2537 = vunpack.c.h.b16 %v979
    %v2538 = vunpack.c.l.b16 %v980
    %v2539 = vunpack.c.h.b16 %v980
    %v2540 = vunpack.c.l.b16 %v981
    %v2541 = vunpack.c.h.b16 %v981
    %v2542 = vunpack.c.l.b16 %v982
    %v2543 = vunpack.c.h.b16 %v982
    %v2544 = vunpack.c.l.b16 %v983
    %v2545 = vunpack.c.h.b16 %v983
    %v2546 = vunpack.c.l.b16 %v984
    %v2547 = vunpack.c.h.b16 %v984
    %v2548 = vunpack.c.l.b16 %v985
    %v2549 = vunpack.c.h.b16 %v985
    %v2550 = vunpack.c.l.b16 %v986
    %v2551 = vunpack.c.h.b16 %v986
    %v2552 = vunpack.c.l.b16 %v987
    %v2553 = vunpack.c.h.b16 %v987
    %v2554 = vunpack.c.l.b16 %v988
    %v2555 = vunpack.c.h.b16 %v988
    %v2556 = vunpack.c.l.b16 %v989
    %v2557 = vunpack.c.h.b16 %v989
    %v2558 = vunpack.c.l.b16 %v990
    %v2559 = vunpack.c.h.b16 %v990
    %v2560 = vunpack.c.l.b16 %v991
    %v2561 = vunpack.c.h.b16 %v991
    %v2562 = vunpack.c.l.b16 %v992
    %v2563 = vunpack.c.h.b16 %v992
    %v2564 = vunpack.c.l.b16 %v993
    %v2565 = vunpack.c.h.b16 %v993
    %v2566 = vunpack.c.l.b16 %v994
    %v2567 = vunpack.c.h.b16 %v994
    %v2568 = vunpack.c.l.b16 %v995
    %v2569 = vunpack.c.h.b16 %v995
    %v2570 = vunpack.c.l.b16 %v996
    %v2571 = vunpack.c.h.b16 %v996
    %v2572 = vunpack.c.l.b16 %v997
    %v2573 = vunpack.c.h.b16 %v997
    %v2574 = vunpack.c.l.b16 %v998
    %v2575 = vunpack.c.h.b16 %v998
    %v2576 = vunpack.c.l.b16 %v999
    %v2577 = vunpack.c.h.b16 %v999
    %v2578 = vpack.c.b16 %v1562, %v1554
    %v2579 = vpack.c.b16 %v1563, %v1555
    %v2580 = vpack.c.b16 %v1564, %v1556
    %v2581 = vpack.c.b16 %v1565, %v1557
    %v2582 = vpack.c.b16 %v1566, %v1558
    %v2583 = vpack.c.b16 %v1567, %v1559
    %v2584 = vpack.c.b16 %v1568, %v1560
    %v2585 = vpack.c.b16 %v1569, %v1561
    %v2586 = vpack.c.b16 %v1578, %v1570
    %v2587 = vpack.c.b16 %v1579, %v1571
    %v2588 = vpack.c.b16 %v1580, %v1572
    %v2589 = vpack.c.b16 %v1581, %v1573
    %v2590 = vpack.c.b16 %v1582, %v1574
    %v2591 = vpack.c.b16 %v1583, %v1575
    %v2592 = vpack.c.b16 %v1584, %v1576
    %v2593 = vpack.c.b16 %v1585, %v1577
    %v2594 = vpack.c.b16 %v1594, %v1586
    %v2595 = vpack.c.b16 %v1595, %v1587
    %v2596 = vpack.c.b16 %v1596, %v1588
    %v2597 = vpack.c.b16 %v1597, %v1589
    %v2598 = vpack.c.b16 %v1598, %v1590
    %v2599 = vpack.c.b16 %v1599, %v1591
    %v2600 = vpack.c.b16 %v1600, %v1592
    %v2601 = vpack.c.b16 %v1601, %v1593
    %v2602 = vpack.c.b16 %v1610, %v1602
    %v2603 = vpack.c.b16 %v1611, %v1603
    %v2604 = vpack.c.b16 %v1612, %v1604
    %v2605 = vpack.c.b16 %v1613, %v1605
    %v2606 = vpack.c.b16 %v1614, %v1606
    %v2607 = vpack.c.b16 %v1615, %v1607
    %v2608 = vpack.c.b16 %v1616, %v1608
    %v2609 = vpack.c.b16 %v1617, %v1609
    %v2610 = vpack.c.b16 %v1626, %v1618
    %v2611 = vpack.c.b16 %v1627, %v1619
    %v2612 = vpack.c.b16 %v1628, %v1620
    %v2613 = vpack.c.b16 %v1629, %v1621
    %v2614 = vpack.c.b16 %v1630, %v1622
    %v2615 = vpack.c.b16 %v1631, %v1623
    %v2616 = vpack.c.b16 %v1632, %v1624
    %v2617 = vpack.c.b16 %v1633, %v1625
    %v2618 = vpack.c.b16 %v1642, %v1634
    %v2619 = vpack.c.b16 %v1643, %v1635
    %v2620 = vpack.c.b16 %v1644, %v1636
    %v2621 = vpack.c.b16 %v1645, %v1637
    %v2622 = vpack.c.b16 %v1646, %v1638
    %v2623 = vpack.c.b16 %v1647, %v1639
    %v2624 = vpack.c.b16 %v1648, %v1640
    %v2625 = vpack.c.b16 %v1649, %v1641
    %v2626 = vpack.c.b16 %v1658, %v1650
    %v2627 = vpack.c.b16 %v1659, %v1651
    %v2628 = vpack.c.b16 %v1660, %v1652
    %v2629 = vpack.c.b16 %v1661, %v1653
    %v2630 = vpack.c.b16 %v1662, %v1654
    %v2631 = vpack.c.b16 %v1663, %v1655
    %v2632 = vpack.c.b16 %v1664, %v1656
    %v2633 = vpack.c.b16 %v1665, %v1657
    %v2634 = vpack.c.b16 %v1674, %v1666
    %v2635 = vpack.c.b16 %v1675, %v1667
    %v2636 = vpack.c.b16 %v1676, %v1668
    %v2637 = vpack.c.b16 %v1677, %v1669
    %v2638 = vpack.c.b16 %v1678, %v1670
    %v2639 = vpack.c.b16 %v1679, %v1671
    %v2640 = vpack.c.b16 %v1680, %v1672
    %v2641 = vpack.c.b16 %v1681, %v1673
    %v2642 = vpack.c.b16 %v1690, %v1682
    %v2643 = vpack.c.b16 %v1691, %v1683
    %v2644 = vpack.c.b16 %v1692, %v1684
    %v2645 = vpack.c.b16 %v1693, %v1685
    %v2646 = vpack.c.b16 %v1694, %v1686
    %v2647 = vpack.c.b16 %v1695, %v1687
    %v2648 = vpack.c.b16 %v1696, %v1688
    %v2649 = vpack.c.b16 %v1697, %v1689
    %v2650 = vpack.c.b16 %v1706, %v1698
    %v2651 = vpack.c.b16 %v1707, %v1699
    %v2652 = vpack.c.b16 %v1708, %v1700
    %v2653 = vpack.c.b16 %v1709, %v1701
    %v2654 = vpack.c.b16 %v1710, %v1702
    %v2655 = vpack.c.b16 %v1711, %v1703
    %v2656 = vpack.c.b16 %v1712, %v1704
    %v2657 = vpack.c.b16 %v1713, %v1705
    %v2658 = vpack.c.b16 %v1722, %v1714
    %v2659 = vpack.c.b16 %v1723, %v1715
    %v2660 = vpack.c.b16 %v1724, %v1716
    %v2661 = vpack.c.b16 %v1725, %v1717
    %v2662 = vpack.c.b16 %v1726, %v1718
    %v2663 = vpack.c.b16 %v1727, %v1719
    %v2664 = vpack.c.b16 %v1728, %v1720
    %v2665 = vpack.c.b16 %v1729, %v1721
    %v2666 = vpack.c.b16 %v1738, %v1730
    %v2667 = vpack.c.b16 %v1739, %v1731
    %v2668 = vpack.c.b16 %v1740, %v1732
    %v2669 = vpack.c.b16 %v1741, %v1733
    %v2670 = vpack.c.b16 %v1742, %v1734
    %v2671 = vpack.c.b16 %v1743, %v1735
    %v2672 = vpack.c.b16 %v1744, %v1736
    %v2673 = vpack.c.b16 %v1745, %v1737
    %v2674 = vpack.c.b16 %v1754, %v1746
    %v2675 = vpack.c.b16 %v1755, %v1747
    %v2676 = vpack.c.b16 %v1756, %v1748
    %v2677 = vpack.c.b16 %v1757, %v1749
    %v2678 = vpack.c.b16 %v1758, %v1750
    %v2679 = vpack.c.b16 %v1759, %v1751
    %v2680 = vpack.c.b16 %v1760, %v1752
    %v2681 = vpack.c.b16 %v1761, %v1753
    %v2682 = vpack.c.b16 %v1770, %v1762
    %v2683 = vpack.c.b16 %v1771, %v1763
    %v2684 = vpack.c.b16 %v1772, %v1764
    %v2685 = vpack.c.b16 %v1773, %v1765
    %v2686 = vpack.c.b16 %v1774, %v1766
    %v2687 = vpack.c.b16 %v1775, %v1767
    %v2688 = vpack.c.b16 %v1776, %v1768
    %v2689 = vpack.c.b16 %v1777, %v1769
    %v2690 = vpack.c.b16 %v1786, %v1778
    %v2691 = vpack.c.b16 %v1787, %v1779
    %v2692 = vpack.c.b16 %v1788, %v1780
    %v2693 = vpack.c.b16 %v1789, %v1781
    %v2694 = vpack.c.b16 %v1790, %v1782
    %v2695 = vpack.c.b16 %v1791, %v1783
    %v2696 = vpack.c.b16 %v1792, %v1784
    %v2697 = vpack.c.b16 %v1793, %v1785
    %v2698 = vpack.c.b16 %v1802, %v1794
    %v2699 = vpack.c.b16 %v1803, %v1795
    %v2700 = vpack.c.b16 %v1804, %v1796
    %v2701 = vpack.c.b16 %v1805, %v1797
    %v2702 = vpack.c.b16 %v1806, %v1798
    %v2703 = vpack.c.b16 %v1807, %v1799
    %v2704 = vpack.c.b16 %v1808, %v1800
    %v2705 = vpack.c.b16 %v1809, %v1801
    %v2706 = vpack.c.b16 %v1818, %v1810
    %v2707 = vpack.c.b16 %v1819, %v1811
    %v2708 = vpack.c.b16 %v1820, %v1812
    %v2709 = vpack.c.b16 %v1821, %v1813
    %v2710 = vpack.c.b16 %v1822, %v1814
    %v2711 = vpack.c.b16 %v1823, %v1815
    %v2712 = vpack.c.b16 %v1824, %v1816
    %v2713 = vpack.c.b16 %v1825, %v1817
    %v2714 = vpack.c.b16 %v1834, %v1826
    %v2715 = vpack.c.b16 %v1835, %v1827
    %v2716 = vpack.c.b16 %v1836, %v1828
    %v2717 = vpack.c.b16 %v1837, %v1829
    %v2718 = vpack.c.b16 %v1838, %v1830
    %v2719 = vpack.c.b16 %v1839, %v1831
    %v2720 = vpack.c.b16 %v1840, %v1832
    %v2721 = vpack.c.b16 %v1841, %v1833
    %v2722 = vpack.c.b16 %v1850, %v1842
    %v2723 = vpack.c.b16 %v1851, %v1843
    %v2724 = vpack.c.b16 %v1852, %v1844
    %v2725 = vpack.c.b16 %v1853, %v1845
    %v2726 = vpack.c.b16 %v1854, %v1846
    %v2727 = vpack.c.b16 %v1855, %v1847
    %v2728 = vpack.c.b16 %v1856, %v1848
    %v2729 = vpack.c.b16 %v1857, %v1849
    %v2730 = vpack.c.b16 %v1866, %v1858
    %v2731 = vpack.c.b16 %v1867, %v1859
    %v2732 = vpack.c.b16 %v1868, %v1860
    %v2733 = vpack.c.b16 %v1869, %v1861
    %v2734 = vpack.c.b16 %v1870, %v1862
    %v2735 = vpack.c.b16 %v1871, %v1863
    %v2736 = vpack.c.b16 %v1872, %v1864
    %v2737 = vpack.c.b16 %v1873, %v1865
    %v2738 = vpack.c.b16 %v1882, %v1874
    %v2739 = vpack.c.b16 %v1883, %v1875
    %v2740 = vpack.c.b16 %v1884, %v1876
    %v2741 = vpack.c.b16 %v1885, %v1877
    %v2742 = vpack.c.b16 %v1886, %v1878
    %v2743 = vpack.c.b16 %v1887, %v1879
    %v2744 = vpack.c.b16 %v1888, %v1880
    %v2745 = vpack.c.b16 %v1889, %v1881
    %v2746 = vpack.c.b16 %v1898, %v1890
    %v2747 = vpack.c.b16 %v1899, %v1891
    %v2748 = vpack.c.b16 %v1900, %v1892
    %v2749 = vpack.c.b16 %v1901, %v1893
    %v2750 = vpack.c.b16 %v1902, %v1894
    %v2751 = vpack.c.b16 %v1903, %v1895
    %v2752 = vpack.c.b16 %v1904, %v1896
    %v2753 = vpack.c.b16 %v1905, %v1897
    %v2754 = vpack.c.b16 %v1914, %v1906
    %v2755 = vpack.c.b16 %v1915, %v1907
    %v2756 = vpack.c.b16 %v1916, %v1908
    %v2757 = vpack.c.b16 %v1917, %v1909
    %v2758 = vpack.c.b16 %v1918, %v1910
    %v2759 = vpack.c.b16 %v1919, %v1911
    %v2760 = vpack.c.b16 %v1920, %v1912
    %v2761 = vpack.c.b16 %v1921, %v1913
    %v2762 = vpack.c.b16 %v1930, %v1922
    %v2763 = vpack.c.b16 %v1931, %v1923
    %v2764 = vpack.c.b16 %v1932, %v1924
    %v2765 = vpack.c.b16 %v1933, %v1925
    %v2766 = vpack.c.b16 %v1934, %v1926
    %v2767 = vpack.c.b16 %v1935, %v1927
    %v2768 = vpack.c.b16 %v1936, %v1928
    %v2769 = vpack.c.b16 %v1937, %v1929
    %v2770 = vpack.c.b16 %v1946, %v1938
    %v2771 = vpack.c.b16 %v1947, %v1939
    %v2772 = vpack.c.b16 %v1948, %v1940
    %v2773 = vpack.c.b16 %v1949, %v1941
    %v2774 = vpack.c.b16 %v1950, %v1942
    %v2775 = vpack.c.b16 %v1951, %v1943
    %v2776 = vpack.c.b16 %v1952, %v1944
    %v2777 = vpack.c.b16 %v1953, %v1945
    %v2778 = vpack.c.b16 %v1962, %v1954
    %v2779 = vpack.c.b16 %v1963, %v1955
    %v2780 = vpack.c.b16 %v1964, %v1956
    %v2781 = vpack.c.b16 %v1965, %v1957
    %v2782 = vpack.c.b16 %v1966, %v1958
    %v2783 = vpack.c.b16 %v1967, %v1959
    %v2784 = vpack.c.b16 %v1968, %v1960
    %v2785 = vpack.c.b16 %v1969, %v1961
    %v2786 = vpack.c.b16 %v1978, %v1970
    %v2787 = vpack.c.b16 %v1979, %v1971
    %v2788 = vpack.c.b16 %v1980, %v1972
    %v2789 = vpack.c.b16 %v1981, %v1973
    %v2790 = vpack.c.b16 %v1982, %v1974
    %v2791 = vpack.c.b16 %v1983, %v1975
    %v2792 = vpack.c.b16 %v1984, %v1976
    %v2793 = vpack.c.b16 %v1985, %v1977
    %v2794 = vpack.c.b16 %v1994, %v1986
    %v2795 = vpack.c.b16 %v1995, %v1987
    %v2796 = vpack.c.b16 %v1996, %v1988
    %v2797 = vpack.c.b16 %v1997, %v1989
    %v2798 = vpack.c.b16 %v1998, %v1990
    %v2799 = vpack.c.b16 %v1999, %v1991
    %v2800 = vpack.c.b16 %v2000, %v1992
    %v2801 = vpack.c.b16 %v2001, %v1993
    %v2802 = vpack.c.b16 %v2010, %v2002
    %v2803 = vpack.c.b16 %v2011, %v2003
    %v2804 = vpack.c.b16 %v2012, %v2004
    %v2805 = vpack.c.b16 %v2013, %v2005
    %v2806 = vpack.c.b16 %v2014, %v2006
    %v2807 = vpack.c.b16 %v2015, %v2007
    %v2808 = vpack.c.b16 %v2016, %v2008
    %v2809 = vpack.c.b16 %v2017, %v2009
    %v2810 = vpack.c.b16 %v2026, %v2018
    %v2811 = vpack.c.b16 %v2027, %v2019
    %v2812 = vpack.c.b16 %v2028, %v2020
    %v2813 = vpack.c.b16 %v2029, %v2021
    %v2814 = vpack.c.b16 %v2030, %v2022
    %v2815 = vpack.c.b16 %v2031, %v2023
    %v2816 = vpack.c.b16 %v2032, %v2024
    %v2817 = vpack.c.b16 %v2033, %v2025
    %v2818 = vpack.c.b16 %v2042, %v2034
    %v2819 = vpack.c.b16 %v2043, %v2035
    %v2820 = vpack.c.b16 %v2044, %v2036
    %v2821 = vpack.c.b16 %v2045, %v2037
    %v2822 = vpack.c.b16 %v2046, %v2038
    %v2823 = vpack.c.b16 %v2047, %v2039
    %v2824 = vpack.c.b16 %v2048, %v2040
    %v2825 = vpack.c.b16 %v2049, %v2041
    %v2826 = vpack.c.b16 %v2058, %v2050
    %v2827 = vpack.c.b16 %v2059, %v2051
    %v2828 = vpack.c.b16 %v2060, %v2052
    %v2829 = vpack.c.b16 %v2061, %v2053
    %v2830 = vpack.c.b16 %v2062, %v2054
    %v2831 = vpack.c.b16 %v2063, %v2055
    %v2832 = vpack.c.b16 %v2064, %v2056
    %v2833 = vpack.c.b16 %v2065, %v2057
    %v2834 = vpack.c.b16 %v2074, %v2066
    %v2835 = vpack.c.b16 %v2075, %v2067
    %v2836 = vpack.c.b16 %v2076, %v2068
    %v2837 = vpack.c.b16 %v2077, %v2069
    %v2838 = vpack.c.b16 %v2078, %v2070
    %v2839 = vpack.c.b16 %v2079, %v2071
    %v2840 = vpack.c.b16 %v2080, %v2072
    %v2841 = vpack.c.b16 %v2081, %v2073
    %v2842 = vpack.c.b16 %v2090, %v2082
    %v2843 = vpack.c.b16 %v2091, %v2083
    %v2844 = vpack.c.b16 %v2092, %v2084
    %v2845 = vpack.c.b16 %v2093, %v2085
    %v2846 = vpack.c.b16 %v2094, %v2086
    %v2847 = vpack.c.b16 %v2095, %v2087
    %v2848 = vpack.c.b16 %v2096, %v2088
    %v2849 = vpack.c.b16 %v2097, %v2089
    %v2850 = vpack.c.b16 %v2106, %v2098
    %v2851 = vpack.c.b16 %v2107, %v2099
    %v2852 = vpack.c.b16 %v2108, %v2100
    %v2853 = vpack.c.b16 %v2109, %v2101
    %v2854 = vpack.c.b16 %v2110, %v2102
    %v2855 = vpack.c.b16 %v2111, %v2103
    %v2856 = vpack.c.b16 %v2112, %v2104
    %v2857 = vpack.c.b16 %v2113, %v2105
    %v2858 = vpack.c.b16 %v2122, %v2114
    %v2859 = vpack.c.b16 %v2123, %v2115
    %v2860 = vpack.c.b16 %v2124, %v2116
    %v2861 = vpack.c.b16 %v2125, %v2117
    %v2862 = vpack.c.b16 %v2126, %v2118
    %v2863 = vpack.c.b16 %v2127, %v2119
    %v2864 = vpack.c.b16 %v2128, %v2120
    %v2865 = vpack.c.b16 %v2129, %v2121
    %v2866 = vpack.c.b16 %v2138, %v2130
    %v2867 = vpack.c.b16 %v2139, %v2131
    %v2868 = vpack.c.b16 %v2140, %v2132
    %v2869 = vpack.c.b16 %v2141, %v2133
    %v2870 = vpack.c.b16 %v2142, %v2134
    %v2871 = vpack.c.b16 %v2143, %v2135
    %v2872 = vpack.c.b16 %v2144, %v2136
    %v2873 = vpack.c.b16 %v2145, %v2137
    %v2874 = vpack.c.b16 %v2154, %v2146
    %v2875 = vpack.c.b16 %v2155, %v2147
    %v2876 = vpack.c.b16 %v2156, %v2148
    %v2877 = vpack.c.b16 %v2157, %v2149
    %v2878 = vpack.c.b16 %v2158, %v2150
    %v2879 = vpack.c.b16 %v2159, %v2151
    %v2880 = vpack.c.b16 %v2160, %v2152
    %v2881 = vpack.c.b16 %v2161, %v2153
    %v2882 = vpack.c.b16 %v2170, %v2162
    %v2883 = vpack.c.b16 %v2171, %v2163
    %v2884 = vpack.c.b16 %v2172, %v2164
    %v2885 = vpack.c.b16 %v2173, %v2165
    %v2886 = vpack.c.b16 %v2174, %v2166
    %v2887 = vpack.c.b16 %v2175, %v2167
    %v2888 = vpack.c.b16 %v2176, %v2168
    %v2889 = vpack.c.b16 %v2177, %v2169
    %v2890 = vpack.c.b16 %v2186, %v2178
    %v2891 = vpack.c.b16 %v2187, %v2179
    %v2892 = vpack.c.b16 %v2188, %v2180
    %v2893 = vpack.c.b16 %v2189, %v2181
    %v2894 = vpack.c.b16 %v2190, %v2182
    %v2895 = vpack.c.b16 %v2191, %v2183
    %v2896 = vpack.c.b16 %v2192, %v2184
    %v2897 = vpack.c.b16 %v2193, %v2185
    %v2898 = vpack.c.b16 %v2202, %v2194
    %v2899 = vpack.c.b16 %v2203, %v2195
    %v2900 = vpack.c.b16 %v2204, %v2196
    %v2901 = vpack.c.b16 %v2205, %v2197
    %v2902 = vpack.c.b16 %v2206, %v2198
    %v2903 = vpack.c.b16 %v2207, %v2199
    %v2904 = vpack.c.b16 %v2208, %v2200
    %v2905 = vpack.c.b16 %v2209, %v2201
    %v2906 = vpack.c.b16 %v2218, %v2210
    %v2907 = vpack.c.b16 %v2219, %v2211
    %v2908 = vpack.c.b16 %v2220, %v2212
    %v2909 = vpack.c.b16 %v2221, %v2213
    %v2910 = vpack.c.b16 %v2222, %v2214
    %v2911 = vpack.c.b16 %v2223, %v2215
    %v2912 = vpack.c.b16 %v2224, %v2216
    %v2913 = vpack.c.b16 %v2225, %v2217
    %v2914 = vpack.c.b16 %v2234, %v2226
    %v2915 = vpack.c.b16 %v2235, %v2227
    %v2916 = vpack.c.b16 %v2236, %v2228
    %v2917 = vpack.c.b16 %v2237, %v2229
    %v2918 = vpack.c.b16 %v2238, %v2230
    %v2919 = vpack.c.b16 %v2239, %v2231
    %v2920 = vpack.c.b16 %v2240, %v2232
    %v2921 = vpack.c.b16 %v2241, %v2233
    %v2922 = vpack.c.b16 %v2250, %v2242
    %v2923 = vpack.c.b16 %v2251, %v2243
    %v2924 = vpack.c.b16 %v2252, %v2244
    %v2925 = vpack.c.b16 %v2253, %v2245
    %v2926 = vpack.c.b16 %v2254, %v2246
    %v2927 = vpack.c.b16 %v2255, %v2247
    %v2928 = vpack.c.b16 %v2256, %v2248
    %v2929 = vpack.c.b16 %v2257, %v2249
    %v2930 = vpack.c.b16 %v2266, %v2258
    %v2931 = vpack.c.b16 %v2267, %v2259
    %v2932 = vpack.c.b16 %v2268, %v2260
    %v2933 = vpack.c.b16 %v2269, %v2261
    %v2934 = vpack.c.b16 %v2270, %v2262
    %v2935 = vpack.c.b16 %v2271, %v2263
    %v2936 = vpack.c.b16 %v2272, %v2264
    %v2937 = vpack.c.b16 %v2273, %v2265
    %v2938 = vpack.c.b16 %v2282, %v2274
    %v2939 = vpack.c.b16 %v2283, %v2275
    %v2940 = vpack.c.b16 %v2284, %v2276
    %v2941 = vpack.c.b16 %v2285, %v2277
    %v2942 = vpack.c.b16 %v2286, %v2278
    %v2943 = vpack.c.b16 %v2287, %v2279
    %v2944 = vpack.c.b16 %v2288, %v2280
    %v2945 = vpack.c.b16 %v2289, %v2281
    %v2946 = vpack.c.b16 %v2298, %v2290
    %v2947 = vpack.c.b16 %v2299, %v2291
    %v2948 = vpack.c.b16 %v2300, %v2292
    %v2949 = vpack.c.b16 %v2301, %v2293
    %v2950 = vpack.c.b16 %v2302, %v2294
    %v2951 = vpack.c.b16 %v2303, %v2295
    %v2952 = vpack.c.b16 %v2304, %v2296
    %v2953 = vpack.c.b16 %v2305, %v2297
    %v2954 = vpack.c.b16 %v2314, %v2306
    %v2955 = vpack.c.b16 %v2315, %v2307
    %v2956 = vpack.c.b16 %v2316, %v2308
    %v2957 = vpack.c.b16 %v2317, %v2309
    %v2958 = vpack.c.b16 %v2318, %v2310
    %v2959 = vpack.c.b16 %v2319, %v2311
    %v2960 = vpack.c.b16 %v2320, %v2312
    %v2961 = vpack.c.b16 %v2321, %v2313
    %v2962 = vpack.c.b16 %v2330, %v2322
    %v2963 = vpack.c.b16 %v2331, %v2323
    %v2964 = vpack.c.b16 %v2332, %v2324
    %v2965 = vpack.c.b16 %v2333, %v2325
    %v2966 = vpack.c.b16 %v2334, %v2326
    %v2967 = vpack.c.b16 %v2335, %v2327
    %v2968 = vpack.c.b16 %v2336, %v2328
    %v2969 = vpack.c.b16 %v2337, %v2329
    %v2970 = vpack.c.b16 %v2346, %v2338
    %v2971 = vpack.c.b16 %v2347, %v2339
    %v2972 = vpack.c.b16 %v2348, %v2340
    %v2973 = vpack.c.b16 %v2349, %v2341
    %v2974 = vpack.c.b16 %v2350, %v2342
    %v2975 = vpack.c.b16 %v2351, %v2343
    %v2976 = vpack.c.b16 %v2352, %v2344
    %v2977 = vpack.c.b16 %v2353, %v2345
    %v2978 = vpack.c.b16 %v2362, %v2354
    %v2979 = vpack.c.b16 %v2363, %v2355
    %v2980 = vpack.c.b16 %v2364, %v2356
    %v2981 = vpack.c.b16 %v2365, %v2357
    %v2982 = vpack.c.b16 %v2366, %v2358
    %v2983 = vpack.c.b16 %v2367, %v2359
    %v2984 = vpack.c.b16 %v2368, %v2360
    %v2985 = vpack.c.b16 %v2369, %v2361
    %v2986 = vpack.c.b16 %v2378, %v2370
    %v2987 = vpack.c.b16 %v2379, %v2371
    %v2988 = vpack.c.b16 %v2380, %v2372
    %v2989 = vpack.c.b16 %v2381, %v2373
    %v2990 = vpack.c.b16 %v2382, %v2374
    %v2991 = vpack.c.b16 %v2383, %v2375
    %v2992 = vpack.c.b16 %v2384, %v2376
    %v2993 = vpack.c.b16 %v2385, %v2377
    %v2994 = vpack.c.b16 %v2394, %v2386
    %v2995 = vpack.c.b16 %v2395, %v2387
    %v2996 = vpack.c.b16 %v2396, %v2388
    %v2997 = vpack.c.b16 %v2397, %v2389
    %v2998 = vpack.c.b16 %v2398, %v2390
    %v2999 = vpack.c.b16 %v2399, %v2391
    %v3000 = vpack.c.b16 %v2400, %v2392
    %v3001 = vpack.c.b16 %v2401, %v2393
    %v3002 = vpack.c.b16 %v2410, %v2402
    %v3003 = vpack.c.b16 %v2411, %v2403
    %v3004 = vpack.c.b16 %v2412, %v2404
    %v3005 = vpack.c.b16 %v2413, %v2405
    %v3006 = vpack.c.b16 %v2414, %v2406
    %v3007 = vpack.c.b16 %v2415, %v2407
    %v3008 = vpack.c.b16 %v2416, %v2408
    %v3009 = vpack.c.b16 %v2417, %v2409
    %v3010 = vpack.c.b16 %v2426, %v2418
    %v3011 = vpack.c.b16 %v2427, %v2419
    %v3012 = vpack.c.b16 %v2428, %v2420
    %v3013 = vpack.c.b16 %v2429, %v2421
    %v3014 = vpack.c.b16 %v2430, %v2422
    %v3015 = vpack.c.b16 %v2431, %v2423
    %v3016 = vpack.c.b16 %v2432, %v2424
    %v3017 = vpack.c.b16 %v2433, %v2425
    %v3018 = vpack.c.b16 %v2442, %v2434
    %v3019 = vpack.c.b16 %v2443, %v2435
    %v3020 = vpack.c.b16 %v2444, %v2436
    %v3021 = vpack.c.b16 %v2445, %v2437
    %v3022 = vpack.c.b16 %v2446, %v2438
    %v3023 = vpack.c.b16 %v2447, %v2439
    %v3024 = vpack.c.b16 %v2448, %v2440
    %v3025 = vpack.c.b16 %v2449, %v2441
    %v3026 = vpack.c.b16 %v2458, %v2450
    %v3027 = vpack.c.b16 %v2459, %v2451
    %v3028 = vpack.c.b16 %v2460, %v2452
    %v3029 = vpack.c.b16 %v2461, %v2453
    %v3030 = vpack.c.b16 %v2462, %v2454
    %v3031 = vpack.c.b16 %v2463, %v2455
    %v3032 = vpack.c.b16 %v2464, %v2456
    %v3033 = vpack.c.b16 %v2465, %v2457
    %v3034 = vpack.c.b16 %v2474, %v2466
    %v3035 = vpack.c.b16 %v2475, %v2467
    %v3036 = vpack.c.b16 %v2476, %v2468
    %v3037 = vpack.c.b16 %v2477, %v2469
    %v3038 = vpack.c.b16 %v2478, %v2470
    %v3039 = vpack.c.b16 %v2479, %v2471
    %v3040 = vpack.c.b16 %v2480, %v2472
    %v3041 = vpack.c.b16 %v2481, %v2473
    %v3042 = vpack.c.b16 %v2490, %v2482
    %v3043 = vpack.c.b16 %v2491, %v2483
    %v3044 = vpack.c.b16 %v2492, %v2484
    %v3045 = vpack.c.b16 %v2493, %v2485
    %v3046 = vpack.c.b16 %v2494, %v2486
    %v3047 = vpack.c.b16 %v2495, %v2487
    %v3048 = vpack.c.b16 %v2496, %v2488
    %v3049 = vpack.c.b16 %v2497, %v2489
    %v3050 = vpack.c.b16 %v2506, %v2498
    %v3051 = vpack.c.b16 %v2507, %v2499
    %v3052 = vpack.c.b16 %v2508, %v2500
    %v3053 = vpack.c.b16 %v2509, %v2501
    %v3054 = vpack.c.b16 %v2510, %v2502
    %v3055 = vpack.c.b16 %v2511, %v2503
    %v3056 = vpack.c.b16 %v2512, %v2504
    %v3057 = vpack.c.b16 %v2513, %v2505
    %v3058 = vpack.c.b16 %v2522, %v2514
    %v3059 = vpack.c.b16 %v2523, %v2515
    %v3060 = vpack.c.b16 %v2524, %v2516
    %v3061 = vpack.c.b16 %v2525, %v2517
    %v3062 = vpack.c.b16 %v2526, %v2518
    %v3063 = vpack.c.b16 %v2527, %v2519
    %v3064 = vpack.c.b16 %v2528, %v2520
    %v3065 = vpack.c.b16 %v2529, %v2521
    %v3066 = vpack.c.b16 %v2538, %v2530
    %v3067 = vpack.c.b16 %v2539, %v2531
    %v3068 = vpack.c.b16 %v2540, %v2532
    %v3069 = vpack.c.b16 %v2541, %v2533
    %v3070 = vpack.c.b16 %v2542, %v2534
    %v3071 = vpack.c.b16 %v2543, %v2535
    %v3072 = vpack.c.b16 %v2544, %v2536
    %v3073 = vpack.c.b16 %v2545, %v2537
    %v3074 = vpack.c.b16 %v2554, %v2546
    %v3075 = vpack.c.b16 %v2555, %v2547
    %v3076 = vpack.c.b16 %v2556, %v2548
    %v3077 = vpack.c.b16 %v2557, %v2549
    %v3078 = vpack.c.b16 %v2558, %v2550
    %v3079 = vpack.c.b16 %v2559, %v2551
    %v3080 = vpack.c.b16 %v2560, %v2552
    %v3081 = vpack.c.b16 %v2561, %v2553
    %v3082 = vpack.c.b16 %v2570, %v2562
    %v3083 = vpack.c.b16 %v2571, %v2563
    %v3084 = vpack.c.b16 %v2572, %v2564
    %v3085 = vpack.c.b16 %v2573, %v2565
    %v3086 = vpack.c.b16 %v2574, %v2566
    %v3087 = vpack.c.b16 %v2575, %v2567
    %v3088 = vpack.c.b16 %v2576, %v2568
    %v3089 = vpack.c.b16 %v2577, %v2569
    %3602 = vmatprep.subr.bf16.mxu0 %v2579
    %3603 = vmatpush1.bf16.msra.mxu0 %v2578
    %3604 = vmatprep.subr.bf16.mxu0 %v2587
    %3605 = vmatpush1.bf16.msra.mxu0 %v2586
    %3606 = vmatprep.subr.bf16.mxu0 %v2595
    %3607 = vmatpush1.bf16.msra.mxu0 %v2594
    %3608 = vmatprep.subr.bf16.mxu0 %v2603
    %3609 = vmatpush1.bf16.msra.mxu0 %v2602
    %3610 = vmatprep.subr.bf16.mxu0 %v2611
    %3611 = vmatpush1.bf16.msra.mxu0 %v2610
    %3612 = vmatprep.subr.bf16.mxu0 %v2619
    %3613 = vmatpush1.bf16.msra.mxu0 %v2618
    %3614 = vmatprep.subr.bf16.mxu0 %v2627
    %3615 = vmatpush1.bf16.msra.mxu0 %v2626
    %3616 = vmatprep.subr.bf16.mxu0 %v2635
    %3617 = vmatpush1.bf16.msra.mxu0 %v2634
    %3618 = vmatprep.subr.bf16.mxu0 %v2643
    %3619 = vmatpush1.bf16.msra.mxu0 %v2642
    %3620 = vmatprep.subr.bf16.mxu0 %v2651
    %3621 = vmatpush1.bf16.msra.mxu0 %v2650
    %3622 = vmatprep.subr.bf16.mxu0 %v2659
    %3623 = vmatpush1.bf16.msra.mxu0 %v2658
    %3624 = vmatprep.subr.bf16.mxu0 %v2667
    %3625 = vmatpush1.bf16.msra.mxu0 %v2666
    %3626 = vmatprep.subr.bf16.mxu0 %v2675
    %3627 = vmatpush1.bf16.msra.mxu0 %v2674
    %3628 = vmatprep.subr.bf16.mxu0 %v2683
    %3629 = vmatpush1.bf16.msra.mxu0 %v2682
    %3630 = vmatprep.subr.bf16.mxu0 %v2691
    %3631 = vmatpush1.bf16.msra.mxu0 %v2690
    %3632 = vmatprep.subr.bf16.mxu0 %v2699
    %3633 = vmatpush1.bf16.msra.mxu0 %v2698
    %3634 = vmatprep.mubr.bf16.mxu0 %v361
    %3635 = vmatmul.mubr.bf16.gmra.mrb[0].mxu0 %v360
    %v3636 = vpop.f32.mrb[0].mxu0
    %v3637 = vadd.f32 %v1005, %v3636
    %v3638 = vpop.f32.mrb[0].mxu0
    %v3639 = vadd.f32 %v1009, %v3638
    %v3640 = vpop.f32.mrb[0].mxu0
    %v3641 = vadd.f32 %v1005, %v3640
    %v3642 = vpop.f32.mrb[0].mxu0
    %v3643 = vadd.f32 %v1009, %v3642
    %3644 = vmatprep.mubr.bf16.mxu0 %v369
    %3645 = vmatmul.mubr.bf16.gmra.mrb[0].mxu0 %v368
    %v3646 = vpop.f32.mrb[0].mxu0
    %v3647 = vadd.f32 %v1005, %v3646
    %v3648 = vpop.f32.mrb[0].mxu0
    %v3649 = vadd.f32 %v1009, %v3648
    %v3650 = vpop.f32.mrb[0].mxu0
    %v3651 = vadd.f32 %v1005, %v3650
    %v3652 = vpop.f32.mrb[0].mxu0
    %v3653 = vadd.f32 %v1009, %v3652
    %3654 = vmatprep.mubr.bf16.mxu0 %v377
    %3655 = vmatmul.mubr.bf16.gmra.mrb[0].mxu0 %v376
    %v3656 = vpop.f32.mrb[0].mxu0
    %v3657 = vadd.f32 %v1005, %v3656
    %v3658 = vpop.f32.mrb[0].mxu0
    %v3659 = vadd.f32 %v1009, %v3658
    %v3660 = vpop.f32.mrb[0].mxu0
    %v3661 = vadd.f32 %v1005, %v3660
    %v3662 = vpop.f32.mrb[0].mxu0
    %v3663 = vadd.f32 %v1009, %v3662
    %3664 = vmatprep.mubr.bf16.mxu0 %v385
    %3665 = vmatmul.mubr.bf16.gmra.mrb[0].mxu0 %v384
    %v3666 = vpop.f32.mrb[0].mxu0
    %v3667 = vadd.f32 %v1005, %v3666
    %v3668 = vpop.f32.mrb[0].mxu0
    %v3669 = vadd.f32 %v1009, %v3668
    %v3670 = vpop.f32.mrb[0].mxu0
    %v3671 = vadd.f32 %v1005, %v3670
    %v3672 = vpop.f32.mrb[0].mxu0
    %v3673 = vadd.f32 %v1009, %v3672
    %3674 = vmatprep.mubr.bf16.mxu0 %v393
    %3675 = vmatmul.mubr.bf16.gmra.mrb[0].mxu0 %v392
    %v3676 = vpop.f32.mrb[0].mxu0
    %v3677 = vadd.f32 %v1005, %v3676
    %v3678 = vpop.f32.mrb[0].mxu0
    %v3679 = vadd.f32 %v1009, %v3678
    %v3680 = vpop.f32.mrb[0].mxu0
    %v3681 = vadd.f32 %v1005, %v3680
    %v3682 = vpop.f32.mrb[0].mxu0
    %v3683 = vadd.f32 %v1009, %v3682
    %3684 = vmatprep.mubr.bf16.mxu0 %v401
    %3685 = vmatmul.mubr.bf16.gmra.mrb[0].mxu0 %v400
    %v3686 = vpop.f32.mrb[0].mxu0
    %v3687 = vadd.f32 %v1005, %v3686
    %v3688 = vpop.f32.mrb[0].mxu0
    %v3689 = vadd.f32 %v1009, %v3688
    %v3690 = vpop.f32.mrb[0].mxu0
    %v3691 = vadd.f32 %v1005, %v3690
    %v3692 = vpop.f32.mrb[0].mxu0
    %v3693 = vadd.f32 %v1009, %v3692
    %3694 = vmatprep.mubr.bf16.mxu0 %v409
    %3695 = vmatmul.mubr.bf16.gmra.mrb[0].mxu0 %v408
    %v3696 = vpop.f32.mrb[0].mxu0
    %v3697 = vadd.f32 %v1005, %v3696
    %v3698 = vpop.f32.mrb[0].mxu0
    %v3699 = vadd.f32 %v1009, %v3698
    %v3700 = vpop.f32.mrb[0].mxu0
    %v3701 = vadd.f32 %v1005, %v3700
    %v3702 = vpop.f32.mrb[0].mxu0
    %v3703 = vadd.f32 %v1009, %v3702
    %3704 = vmatprep.mubr.bf16.mxu0 %v417
    %3705 = vmatmul.mubr.bf16.gmra.mrb[0].mxu0 %v416
    %v3706 = vpop.f32.mrb[0].mxu0
    %v3707 = vadd.f32 %v1005, %v3706
    %v3708 = vpop.f32.mrb[0].mxu0
    %v3709 = vadd.f32 %v1009, %v3708
    %v3710 = vpop.f32.mrb[0].mxu0
    %v3711 = vadd.f32 %v1005, %v3710
    %v3712 = vpop.f32.mrb[0].mxu0
    %v3713 = vadd.f32 %v1009, %v3712
    %3714 = vmatprep.mubr.bf16.mxu0 %v425
    %3715 = vmatmul.mubr.bf16.gmra.mrb[0].mxu0 %v424
    %v3716 = vpop.f32.mrb[0].mxu0
    %v3717 = vadd.f32 %v1005, %v3716
    %v3718 = vpop.f32.mrb[0].mxu0
    %v3719 = vadd.f32 %v1009, %v3718
    %v3720 = vpop.f32.mrb[0].mxu0
    %v3721 = vadd.f32 %v1005, %v3720
    %v3722 = vpop.f32.mrb[0].mxu0
    %v3723 = vadd.f32 %v1009, %v3722
    %3724 = vmatprep.mubr.bf16.mxu0 %v433
    %3725 = vmatmul.mubr.bf16.gmra.mrb[0].mxu0 %v432
    %v3726 = vpop.f32.mrb[0].mxu0
    %v3727 = vadd.f32 %v1005, %v3726
    %v3728 = vpop.f32.mrb[0].mxu0
    %v3729 = vadd.f32 %v1009, %v3728
    %v3730 = vpop.f32.mrb[0].mxu0
    %v3731 = vadd.f32 %v1005, %v3730
    %v3732 = vpop.f32.mrb[0].mxu0
    %v3733 = vadd.f32 %v1009, %v3732
    %3734 = vmatprep.mubr.bf16.mxu0 %v441
    %3735 = vmatmul.mubr.bf16.gmra.mrb[0].mxu0 %v440
    %v3736 = vpop.f32.mrb[0].mxu0
    %v3737 = vadd.f32 %v1005, %v3736
    %v3738 = vpop.f32.mrb[0].mxu0
    %v3739 = vadd.f32 %v1009, %v3738
    %v3740 = vpop.f32.mrb[0].mxu0
    %v3741 = vadd.f32 %v1005, %v3740
    %v3742 = vpop.f32.mrb[0].mxu0
    %v3743 = vadd.f32 %v1009, %v3742
    %3744 = vmatprep.mubr.bf16.mxu0 %v449
    %3745 = vmatmul.mubr.bf16.gmra.mrb[0].mxu0 %v448
    %v3746 = vpop.f32.mrb[0].mxu0
    %v3747 = vadd.f32 %v1005, %v3746
    %v3748 = vpop.f32.mrb[0].mxu0
    %v3749 = vadd.f32 %v1009, %v3748
    %v3750 = vpop.f32.mrb[0].mxu0
    %v3751 = vadd.f32 %v1005, %v3750
    %v3752 = vpop.f32.mrb[0].mxu0
    %v3753 = vadd.f32 %v1009, %v3752
    %3754 = vmatprep.mubr.bf16.mxu0 %v457
    %3755 = vmatmul.mubr.bf16.gmra.mrb[0].mxu0 %v456
    %v3756 = vpop.f32.mrb[0].mxu0
    %v3757 = vadd.f32 %v1005, %v3756
    %v3758 = vpop.f32.mrb[0].mxu0
    %v3759 = vadd.f32 %v1009, %v3758
    %v3760 = vpop.f32.mrb[0].mxu0
    %v3761 = vadd.f32 %v1005, %v3760
    %v3762 = vpop.f32.mrb[0].mxu0
    %v3763 = vadd.f32 %v1009, %v3762
    %3764 = vmatprep.mubr.bf16.mxu0 %v465
    %3765 = vmatmul.mubr.bf16.gmra.mrb[0].mxu0 %v464
    %v3766 = vpop.f32.mrb[0].mxu0
    %v3767 = vadd.f32 %v1005, %v3766
    %v3768 = vpop.f32.mrb[0].mxu0
    %v3769 = vadd.f32 %v1009, %v3768
    %v3770 = vpop.f32.mrb[0].mxu0
    %v3771 = vadd.f32 %v1005, %v3770
    %v3772 = vpop.f32.mrb[0].mxu0
    %v3773 = vadd.f32 %v1009, %v3772
    %3774 = vmatprep.mubr.bf16.mxu0 %v473
    %3775 = vmatmul.mubr.bf16.gmra.mrb[0].mxu0 %v472
    %v3776 = vpop.f32.mrb[0].mxu0
    %v3777 = vadd.f32 %v1005, %v3776
    %v3778 = vpop.f32.mrb[0].mxu0
    %v3779 = vadd.f32 %v1009, %v3778
    %v3780 = vpop.f32.mrb[0].mxu0
    %v3781 = vadd.f32 %v1005, %v3780
    %v3782 = vpop.f32.mrb[0].mxu0
    %v3783 = vadd.f32 %v1009, %v3782
    %3784 = vmatprep.mubr.bf16.mxu0 %v481
    %3785 = vmatmul.mubr.bf16.gmra.mrb[0].mxu0 %v480
    %v3786 = vpop.f32.mrb[0].mxu0
    %v3787 = vadd.f32 %v1005, %v3786
    %v3788 = vpop.f32.mrb[0].mxu0
    %v3789 = vadd.f32 %v1009, %v3788
    %v3790 = vpop.f32.mrb[0].mxu0
    %v3791 = vadd.f32 %v1005, %v3790
    %v3792 = vpop.f32.mrb[0].mxu0
    %v3793 = vadd.f32 %v1009, %v3792
    %3794 = vdwg.mxu0
    %3795 = vmatprep.subr.bf16.mxu0 %v2707
    %3796 = vmatpush1.bf16.msra.mxu0 %v2706
    %3797 = vmatprep.subr.bf16.mxu0 %v2715
    %3798 = vmatpush1.bf16.msra.mxu0 %v2714
    %3799 = vmatprep.subr.bf16.mxu0 %v2723
    %3800 = vmatpush1.bf16.msra.mxu0 %v2722
    %3801 = vmatprep.subr.bf16.mxu0 %v2731
    %3802 = vmatpush1.bf16.msra.mxu0 %v2730
    %3803 = vmatprep.subr.bf16.mxu0 %v2739
    %3804 = vmatpush1.bf16.msra.mxu0 %v2738
    %3805 = vmatprep.subr.bf16.mxu0 %v2747
    %3806 = vmatpush1.bf16.msra.mxu0 %v2746
    %3807 = vmatprep.subr.bf16.mxu0 %v2755
    %3808 = vmatpush1.bf16.msra.mxu0 %v2754
    %3809 = vmatprep.subr.bf16.mxu0 %v2763
    %3810 = vmatpush1.bf16.msra.mxu0 %v2762
    %3811 = vmatprep.subr.bf16.mxu0 %v2771
    %3812 = vmatpush1.bf16.msra.mxu0 %v2770
    %3813 = vmatprep.subr.bf16.mxu0 %v2779
    %3814 = vmatpush1.bf16.msra.mxu0 %v2778
    %3815 = vmatprep.subr.bf16.mxu0 %v2787
    %3816 = vmatpush1.bf16.msra.mxu0 %v2786
    %3817 = vmatprep.subr.bf16.mxu0 %v2795
    %3818 = vmatpush1.bf16.msra.mxu0 %v2794
    %3819 = vmatprep.subr.bf16.mxu0 %v2803
    %3820 = vmatpush1.bf16.msra.mxu0 %v2802
    %3821 = vmatprep.subr.bf16.mxu0 %v2811
    %3822 = vmatpush1.bf16.msra.mxu0 %v2810
    %3823 = vmatprep.subr.bf16.mxu0 %v2819
    %3824 = vmatpush1.bf16.msra.mxu0 %v2818
    %3825 = vmatprep.subr.bf16.mxu0 %v2827
    %3826 = vmatpush1.bf16.msra.mxu0 %v2826
    %3827 = vmatprep.mubr.bf16.mxu0 %v363
    %3828 = vmatmul.mubr.bf16.gmra.mrb[0].mxu0 %v362
    %v3829 = vpop.f32.mrb[0].mxu0
    %v3830 = vadd.f32 %v3637, %v3829
    %v3831 = vpop.f32.mrb[0].mxu0
    %v3832 = vadd.f32 %v3639, %v3831
    %v3833 = vpop.f32.mrb[0].mxu0
    %v3834 = vadd.f32 %v3641, %v3833
    %v3835 = vpop.f32.mrb[0].mxu0
    %v3836 = vadd.f32 %v3643, %v3835
    %3837 = vmatprep.mubr.bf16.mxu0 %v371
    %3838 = vmatmul.mubr.bf16.gmra.mrb[0].mxu0 %v370
    %v3839 = vpop.f32.mrb[0].mxu0
    %v3840 = vadd.f32 %v3647, %v3839
    %v3841 = vpop.f32.mrb[0].mxu0
    %v3842 = vadd.f32 %v3649, %v3841
    %v3843 = vpop.f32.mrb[0].mxu0
    %v3844 = vadd.f32 %v3651, %v3843
    %v3845 = vpop.f32.mrb[0].mxu0
    %v3846 = vadd.f32 %v3653, %v3845
    %3847 = vmatprep.mubr.bf16.mxu0 %v379
    %3848 = vmatmul.mubr.bf16.gmra.mrb[0].mxu0 %v378
    %v3849 = vpop.f32.mrb[0].mxu0
    %v3850 = vadd.f32 %v3657, %v3849
    %v3851 = vpop.f32.mrb[0].mxu0
    %v3852 = vadd.f32 %v3659, %v3851
    %v3853 = vpop.f32.mrb[0].mxu0
    %v3854 = vadd.f32 %v3661, %v3853
    %v3855 = vpop.f32.mrb[0].mxu0
    %v3856 = vadd.f32 %v3663, %v3855
    %3857 = vmatprep.mubr.bf16.mxu0 %v387
    %3858 = vmatmul.mubr.bf16.gmra.mrb[0].mxu0 %v386
    %v3859 = vpop.f32.mrb[0].mxu0
    %v3860 = vadd.f32 %v3667, %v3859
    %v3861 = vpop.f32.mrb[0].mxu0
    %v3862 = vadd.f32 %v3669, %v3861
    %v3863 = vpop.f32.mrb[0].mxu0
    %v3864 = vadd.f32 %v3671, %v3863
    %v3865 = vpop.f32.mrb[0].mxu0
    %v3866 = vadd.f32 %v3673, %v3865
    %3867 = vmatprep.mubr.bf16.mxu0 %v395
    %3868 = vmatmul.mubr.bf16.gmra.mrb[0].mxu0 %v394
    %v3869 = vpop.f32.mrb[0].mxu0
    %v3870 = vadd.f32 %v3677, %v3869
    %v3871 = vpop.f32.mrb[0].mxu0
    %v3872 = vadd.f32 %v3679, %v3871
    %v3873 = vpop.f32.mrb[0].mxu0
    %v3874 = vadd.f32 %v3681, %v3873
    %v3875 = vpop.f32.mrb[0].mxu0
    %v3876 = vadd.f32 %v3683, %v3875
    %3877 = vmatprep.mubr.bf16.mxu0 %v403
    %3878 = vmatmul.mubr.bf16.gmra.mrb[0].mxu0 %v402
    %v3879 = vpop.f32.mrb[0].mxu0
    %v3880 = vadd.f32 %v3687, %v3879
    %v3881 = vpop.f32.mrb[0].mxu0
    %v3882 = vadd.f32 %v3689, %v3881
    %v3883 = vpop.f32.mrb[0].mxu0
    %v3884 = vadd.f32 %v3691, %v3883
    %v3885 = vpop.f32.mrb[0].mxu0
    %v3886 = vadd.f32 %v3693, %v3885
    %3887 = vmatprep.mubr.bf16.mxu0 %v411
    %3888 = vmatmul.mubr.bf16.gmra.mrb[0].mxu0 %v410
    %v3889 = vpop.f32.mrb[0].mxu0
    %v3890 = vadd.f32 %v3697, %v3889
    %v3891 = vpop.f32.mrb[0].mxu0
    %v3892 = vadd.f32 %v3699, %v3891
    %v3893 = vpop.f32.mrb[0].mxu0
    %v3894 = vadd.f32 %v3701, %v3893
    %v3895 = vpop.f32.mrb[0].mxu0
    %v3896 = vadd.f32 %v3703, %v3895
    %3897 = vmatprep.mubr.bf16.mxu0 %v419
    %3898 = vmatmul.mubr.bf16.gmra.mrb[0].mxu0 %v418
    %v3899 = vpop.f32.mrb[0].mxu0
    %v3900 = vadd.f32 %v3707, %v3899
    %v3901 = vpop.f32.mrb[0].mxu0
    %v3902 = vadd.f32 %v3709, %v3901
    %v3903 = vpop.f32.mrb[0].mxu0
    %v3904 = vadd.f32 %v3711, %v3903
    %v3905 = vpop.f32.mrb[0].mxu0
    %v3906 = vadd.f32 %v3713, %v3905
    %3907 = vmatprep.mubr.bf16.mxu0 %v427
    %3908 = vmatmul.mubr.bf16.gmra.mrb[0].mxu0 %v426
    %v3909 = vpop.f32.mrb[0].mxu0
    %v3910 = vadd.f32 %v3717, %v3909
    %v3911 = vpop.f32.mrb[0].mxu0
    %v3912 = vadd.f32 %v3719, %v3911
    %v3913 = vpop.f32.mrb[0].mxu0
    %v3914 = vadd.f32 %v3721, %v3913
    %v3915 = vpop.f32.mrb[0].mxu0
    %v3916 = vadd.f32 %v3723, %v3915
    %3917 = vmatprep.mubr.bf16.mxu0 %v435
    %3918 = vmatmul.mubr.bf16.gmra.mrb[0].mxu0 %v434
    %v3919 = vpop.f32.mrb[0].mxu0
    %v3920 = vadd.f32 %v3727, %v3919
    %v3921 = vpop.f32.mrb[0].mxu0
    %v3922 = vadd.f32 %v3729, %v3921
    %v3923 = vpop.f32.mrb[0].mxu0
    %v3924 = vadd.f32 %v3731, %v3923
    %v3925 = vpop.f32.mrb[0].mxu0
    %v3926 = vadd.f32 %v3733, %v3925
    %3927 = vmatprep.mubr.bf16.mxu0 %v443
    %3928 = vmatmul.mubr.bf16.gmra.mrb[0].mxu0 %v442
    %v3929 = vpop.f32.mrb[0].mxu0
    %v3930 = vadd.f32 %v3737, %v3929
    %v3931 = vpop.f32.mrb[0].mxu0
    %v3932 = vadd.f32 %v3739, %v3931
    %v3933 = vpop.f32.mrb[0].mxu0
    %v3934 = vadd.f32 %v3741, %v3933
    %v3935 = vpop.f32.mrb[0].mxu0
    %v3936 = vadd.f32 %v3743, %v3935
    %3937 = vmatprep.mubr.bf16.mxu0 %v451
    %3938 = vmatmul.mubr.bf16.gmra.mrb[0].mxu0 %v450
    %v3939 = vpop.f32.mrb[0].mxu0
    %v3940 = vadd.f32 %v3747, %v3939
    %v3941 = vpop.f32.mrb[0].mxu0
    %v3942 = vadd.f32 %v3749, %v3941
    %v3943 = vpop.f32.mrb[0].mxu0
    %v3944 = vadd.f32 %v3751, %v3943
    %v3945 = vpop.f32.mrb[0].mxu0
    %v3946 = vadd.f32 %v3753, %v3945
    %3947 = vmatprep.mubr.bf16.mxu0 %v459
    %3948 = vmatmul.mubr.bf16.gmra.mrb[0].mxu0 %v458
    %v3949 = vpop.f32.mrb[0].mxu0
    %v3950 = vadd.f32 %v3757, %v3949
    %v3951 = vpop.f32.mrb[0].mxu0
    %v3952 = vadd.f32 %v3759, %v3951
    %v3953 = vpop.f32.mrb[0].mxu0
    %v3954 = vadd.f32 %v3761, %v3953
    %v3955 = vpop.f32.mrb[0].mxu0
    %v3956 = vadd.f32 %v3763, %v3955
    %3957 = vmatprep.mubr.bf16.mxu0 %v467
    %3958 = vmatmul.mubr.bf16.gmra.mrb[0].mxu0 %v466
    %v3959 = vpop.f32.mrb[0].mxu0
    %v3960 = vadd.f32 %v3767, %v3959
    %v3961 = vpop.f32.mrb[0].mxu0
    %v3962 = vadd.f32 %v3769, %v3961
    %v3963 = vpop.f32.mrb[0].mxu0
    %v3964 = vadd.f32 %v3771, %v3963
    %v3965 = vpop.f32.mrb[0].mxu0
    %v3966 = vadd.f32 %v3773, %v3965
    %3967 = vmatprep.mubr.bf16.mxu0 %v475
    %3968 = vmatmul.mubr.bf16.gmra.mrb[0].mxu0 %v474
    %v3969 = vpop.f32.mrb[0].mxu0
    %v3970 = vadd.f32 %v3777, %v3969
    %v3971 = vpop.f32.mrb[0].mxu0
    %v3972 = vadd.f32 %v3779, %v3971
    %v3973 = vpop.f32.mrb[0].mxu0
    %v3974 = vadd.f32 %v3781, %v3973
    %v3975 = vpop.f32.mrb[0].mxu0
    %v3976 = vadd.f32 %v3783, %v3975
    %3977 = vmatprep.mubr.bf16.mxu0 %v483
    %3978 = vmatmul.mubr.bf16.gmra.mrb[0].mxu0 %v482
    %v3979 = vpop.f32.mrb[0].mxu0
    %v3980 = vadd.f32 %v3787, %v3979
    %v3981 = vpop.f32.mrb[0].mxu0
    %v3982 = vadd.f32 %v3789, %v3981
    %v3983 = vpop.f32.mrb[0].mxu0
    %v3984 = vadd.f32 %v3791, %v3983
    %v3985 = vpop.f32.mrb[0].mxu0
    %v3986 = vadd.f32 %v3793, %v3985
    %3987 = vdwg.mxu0
    %3988 = vmatprep.subr.bf16.mxu0 %v2835
    %3989 = vmatpush1.bf16.msra.mxu0 %v2834
    %3990 = vmatprep.subr.bf16.mxu0 %v2843
    %3991 = vmatpush1.bf16.msra.mxu0 %v2842
    %3992 = vmatprep.subr.bf16.mxu0 %v2851
    %3993 = vmatpush1.bf16.msra.mxu0 %v2850
    %3994 = vmatprep.subr.bf16.mxu0 %v2859
    %3995 = vmatpush1.bf16.msra.mxu0 %v2858
    %3996 = vmatprep.subr.bf16.mxu0 %v2867
    %3997 = vmatpush1.bf16.msra.mxu0 %v2866
    %3998 = vmatprep.subr.bf16.mxu0 %v2875
    %3999 = vmatpush1.bf16.msra.mxu0 %v2874
    %4000 = vmatprep.subr.bf16.mxu0 %v2883
    %4001 = vmatpush1.bf16.msra.mxu0 %v2882
    %4002 = vmatprep.subr.bf16.mxu0 %v2891
    %4003 = vmatpush1.bf16.msra.mxu0 %v2890
    %4004 = vmatprep.subr.bf16.mxu0 %v2899
    %4005 = vmatpush1.bf16.msra.mxu0 %v2898
    %4006 = vmatprep.subr.bf16.mxu0 %v2907
    %4007 = vmatpush1.bf16.msra.mxu0 %v2906
    %4008 = vmatprep.subr.bf16.mxu0 %v2915
    %4009 = vmatpush1.bf16.msra.mxu0 %v2914
    %4010 = vmatprep.subr.bf16.mxu0 %v2923
    %4011 = vmatpush1.bf16.msra.mxu0 %v2922
    %4012 = vmatprep.subr.bf16.mxu0 %v2931
    %4013 = vmatpush1.bf16.msra.mxu0 %v2930
    %4014 = vmatprep.subr.bf16.mxu0 %v2939
    %4015 = vmatpush1.bf16.msra.mxu0 %v2938
    %4016 = vmatprep.subr.bf16.mxu0 %v2947
    %4017 = vmatpush1.bf16.msra.mxu0 %v2946
    %4018 = vmatprep.subr.bf16.mxu0 %v2955
    %4019 = vmatpush1.bf16.msra.mxu0 %v2954
    %4020 = vmatprep.mubr.bf16.mxu0 %v365
    %4021 = vmatmul.mubr.bf16.gmra.mrb[0].mxu0 %v364
    %v4022 = vpop.f32.mrb[0].mxu0
    %v4023 = vadd.f32 %v3830, %v4022
    %v4024 = vpop.f32.mrb[0].mxu0
    %v4025 = vadd.f32 %v3832, %v4024
    %v4026 = vpop.f32.mrb[0].mxu0
    %v4027 = vadd.f32 %v3834, %v4026
    %v4028 = vpop.f32.mrb[0].mxu0
    %v4029 = vadd.f32 %v3836, %v4028
    %4030 = vmatprep.mubr.bf16.mxu0 %v373
    %4031 = vmatmul.mubr.bf16.gmra.mrb[0].mxu0 %v372
    %v4032 = vpop.f32.mrb[0].mxu0
    %v4033 = vadd.f32 %v3840, %v4032
    %v4034 = vpop.f32.mrb[0].mxu0
    %v4035 = vadd.f32 %v3842, %v4034
    %v4036 = vpop.f32.mrb[0].mxu0
    %v4037 = vadd.f32 %v3844, %v4036
    %v4038 = vpop.f32.mrb[0].mxu0
    %v4039 = vadd.f32 %v3846, %v4038
    %4040 = vmatprep.mubr.bf16.mxu0 %v381
    %4041 = vmatmul.mubr.bf16.gmra.mrb[0].mxu0 %v380
    %v4042 = vpop.f32.mrb[0].mxu0
    %v4043 = vadd.f32 %v3850, %v4042
    %v4044 = vpop.f32.mrb[0].mxu0
    %v4045 = vadd.f32 %v3852, %v4044
    %v4046 = vpop.f32.mrb[0].mxu0
    %v4047 = vadd.f32 %v3854, %v4046
    %v4048 = vpop.f32.mrb[0].mxu0
    %v4049 = vadd.f32 %v3856, %v4048
    %4050 = vmatprep.mubr.bf16.mxu0 %v389
    %4051 = vmatmul.mubr.bf16.gmra.mrb[0].mxu0 %v388
    %v4052 = vpop.f32.mrb[0].mxu0
    %v4053 = vadd.f32 %v3860, %v4052
    %v4054 = vpop.f32.mrb[0].mxu0
    %v4055 = vadd.f32 %v3862, %v4054
    %v4056 = vpop.f32.mrb[0].mxu0
    %v4057 = vadd.f32 %v3864, %v4056
    %v4058 = vpop.f32.mrb[0].mxu0
    %v4059 = vadd.f32 %v3866, %v4058
    %4060 = vmatprep.mubr.bf16.mxu0 %v397
    %4061 = vmatmul.mubr.bf16.gmra.mrb[0].mxu0 %v396
    %v4062 = vpop.f32.mrb[0].mxu0
    %v4063 = vadd.f32 %v3870, %v4062
    %v4064 = vpop.f32.mrb[0].mxu0
    %v4065 = vadd.f32 %v3872, %v4064
    %v4066 = vpop.f32.mrb[0].mxu0
    %v4067 = vadd.f32 %v3874, %v4066
    %v4068 = vpop.f32.mrb[0].mxu0
    %v4069 = vadd.f32 %v3876, %v4068
    %4070 = vmatprep.mubr.bf16.mxu0 %v405
    %4071 = vmatmul.mubr.bf16.gmra.mrb[0].mxu0 %v404
    %v4072 = vpop.f32.mrb[0].mxu0
    %v4073 = vadd.f32 %v3880, %v4072
    %v4074 = vpop.f32.mrb[0].mxu0
    %v4075 = vadd.f32 %v3882, %v4074
    %v4076 = vpop.f32.mrb[0].mxu0
    %v4077 = vadd.f32 %v3884, %v4076
    %v4078 = vpop.f32.mrb[0].mxu0
    %v4079 = vadd.f32 %v3886, %v4078
    %4080 = vmatprep.mubr.bf16.mxu0 %v413
    %4081 = vmatmul.mubr.bf16.gmra.mrb[0].mxu0 %v412
    %v4082 = vpop.f32.mrb[0].mxu0
    %v4083 = vadd.f32 %v3890, %v4082
    %v4084 = vpop.f32.mrb[0].mxu0
    %v4085 = vadd.f32 %v3892, %v4084
    %v4086 = vpop.f32.mrb[0].mxu0
    %v4087 = vadd.f32 %v3894, %v4086
    %v4088 = vpop.f32.mrb[0].mxu0
    %v4089 = vadd.f32 %v3896, %v4088
    %4090 = vmatprep.mubr.bf16.mxu0 %v421
    %4091 = vmatmul.mubr.bf16.gmra.mrb[0].mxu0 %v420
    %v4092 = vpop.f32.mrb[0].mxu0
    %v4093 = vadd.f32 %v3900, %v4092
    %v4094 = vpop.f32.mrb[0].mxu0
    %v4095 = vadd.f32 %v3902, %v4094
    %v4096 = vpop.f32.mrb[0].mxu0
    %v4097 = vadd.f32 %v3904, %v4096
    %v4098 = vpop.f32.mrb[0].mxu0
    %v4099 = vadd.f32 %v3906, %v4098
    %4100 = vmatprep.mubr.bf16.mxu0 %v429
    %4101 = vmatmul.mubr.bf16.gmra.mrb[0].mxu0 %v428
    %v4102 = vpop.f32.mrb[0].mxu0
    %v4103 = vadd.f32 %v3910, %v4102
    %v4104 = vpop.f32.mrb[0].mxu0
    %v4105 = vadd.f32 %v3912, %v4104
    %v4106 = vpop.f32.mrb[0].mxu0
    %v4107 = vadd.f32 %v3914, %v4106
    %v4108 = vpop.f32.mrb[0].mxu0
    %v4109 = vadd.f32 %v3916, %v4108
    %4110 = vmatprep.mubr.bf16.mxu0 %v437
    %4111 = vmatmul.mubr.bf16.gmra.mrb[0].mxu0 %v436
    %v4112 = vpop.f32.mrb[0].mxu0
    %v4113 = vadd.f32 %v3920, %v4112
    %v4114 = vpop.f32.mrb[0].mxu0
    %v4115 = vadd.f32 %v3922, %v4114
    %v4116 = vpop.f32.mrb[0].mxu0
    %v4117 = vadd.f32 %v3924, %v4116
    %v4118 = vpop.f32.mrb[0].mxu0
    %v4119 = vadd.f32 %v3926, %v4118
    %4120 = vmatprep.mubr.bf16.mxu0 %v445
    %4121 = vmatmul.mubr.bf16.gmra.mrb[0].mxu0 %v444
    %v4122 = vpop.f32.mrb[0].mxu0
    %v4123 = vadd.f32 %v3930, %v4122
    %v4124 = vpop.f32.mrb[0].mxu0
    %v4125 = vadd.f32 %v3932, %v4124
    %v4126 = vpop.f32.mrb[0].mxu0
    %v4127 = vadd.f32 %v3934, %v4126
    %v4128 = vpop.f32.mrb[0].mxu0
    %v4129 = vadd.f32 %v3936, %v4128
    %4130 = vmatprep.mubr.bf16.mxu0 %v453
    %4131 = vmatmul.mubr.bf16.gmra.mrb[0].mxu0 %v452
    %v4132 = vpop.f32.mrb[0].mxu0
    %v4133 = vadd.f32 %v3940, %v4132
    %v4134 = vpop.f32.mrb[0].mxu0
    %v4135 = vadd.f32 %v3942, %v4134
    %v4136 = vpop.f32.mrb[0].mxu0
    %v4137 = vadd.f32 %v3944, %v4136
    %v4138 = vpop.f32.mrb[0].mxu0
    %v4139 = vadd.f32 %v3946, %v4138
    %4140 = vmatprep.mubr.bf16.mxu0 %v461
    %4141 = vmatmul.mubr.bf16.gmra.mrb[0].mxu0 %v460
    %v4142 = vpop.f32.mrb[0].mxu0
    %v4143 = vadd.f32 %v3950, %v4142
    %v4144 = vpop.f32.mrb[0].mxu0
    %v4145 = vadd.f32 %v3952, %v4144
    %v4146 = vpop.f32.mrb[0].mxu0
    %v4147 = vadd.f32 %v3954, %v4146
    %v4148 = vpop.f32.mrb[0].mxu0
    %v4149 = vadd.f32 %v3956, %v4148
    %4150 = vmatprep.mubr.bf16.mxu0 %v469
    %4151 = vmatmul.mubr.bf16.gmra.mrb[0].mxu0 %v468
    %v4152 = vpop.f32.mrb[0].mxu0
    %v4153 = vadd.f32 %v3960, %v4152
    %v4154 = vpop.f32.mrb[0].mxu0
    %v4155 = vadd.f32 %v3962, %v4154
    %v4156 = vpop.f32.mrb[0].mxu0
    %v4157 = vadd.f32 %v3964, %v4156
    %v4158 = vpop.f32.mrb[0].mxu0
    %v4159 = vadd.f32 %v3966, %v4158
    %4160 = vmatprep.mubr.bf16.mxu0 %v477
    %4161 = vmatmul.mubr.bf16.gmra.mrb[0].mxu0 %v476
    %v4162 = vpop.f32.mrb[0].mxu0
    %v4163 = vadd.f32 %v3970, %v4162
    %v4164 = vpop.f32.mrb[0].mxu0
    %v4165 = vadd.f32 %v3972, %v4164
    %v4166 = vpop.f32.mrb[0].mxu0
    %v4167 = vadd.f32 %v3974, %v4166
    %v4168 = vpop.f32.mrb[0].mxu0
    %v4169 = vadd.f32 %v3976, %v4168
    %4170 = vmatprep.mubr.bf16.mxu0 %v485
    %4171 = vmatmul.mubr.bf16.gmra.mrb[0].mxu0 %v484
    %v4172 = vpop.f32.mrb[0].mxu0
    %v4173 = vadd.f32 %v3980, %v4172
    %v4174 = vpop.f32.mrb[0].mxu0
    %v4175 = vadd.f32 %v3982, %v4174
    %v4176 = vpop.f32.mrb[0].mxu0
    %v4177 = vadd.f32 %v3984, %v4176
    %v4178 = vpop.f32.mrb[0].mxu0
    %v4179 = vadd.f32 %v3986, %v4178
    %4180 = vdwg.mxu0
    %4181 = vmatprep.subr.bf16.mxu0 %v2963
    %4182 = vmatpush1.bf16.msra.mxu0 %v2962
    %4183 = vmatprep.subr.bf16.mxu0 %v2971
    %4184 = vmatpush1.bf16.msra.mxu0 %v2970
    %4185 = vmatprep.subr.bf16.mxu0 %v2979
    %4186 = vmatpush1.bf16.msra.mxu0 %v2978
    %4187 = vmatprep.subr.bf16.mxu0 %v2987
    %4188 = vmatpush1.bf16.msra.mxu0 %v2986
    %4189 = vmatprep.subr.bf16.mxu0 %v2995
    %4190 = vmatpush1.bf16.msra.mxu0 %v2994
    %4191 = vmatprep.subr.bf16.mxu0 %v3003
    %4192 = vmatpush1.bf16.msra.mxu0 %v3002
    %4193 = vmatprep.subr.bf16.mxu0 %v3011
    %4194 = vmatpush1.bf16.msra.mxu0 %v3010
    %4195 = vmatprep.subr.bf16.mxu0 %v3019
    %4196 = vmatpush1.bf16.msra.mxu0 %v3018
    %4197 = vmatprep.subr.bf16.mxu0 %v3027
    %4198 = vmatpush1.bf16.msra.mxu0 %v3026
    %4199 = vmatprep.subr.bf16.mxu0 %v3035
    %4200 = vmatpush1.bf16.msra.mxu0 %v3034
    %4201 = vmatprep.subr.bf16.mxu0 %v3043
    %4202 = vmatpush1.bf16.msra.mxu0 %v3042
    %4203 = vmatprep.subr.bf16.mxu0 %v3051
    %4204 = vmatpush1.bf16.msra.mxu0 %v3050
    %4205 = vmatprep.subr.bf16.mxu0 %v3059
    %4206 = vmatpush1.bf16.msra.mxu0 %v3058
    %4207 = vmatprep.subr.bf16.mxu0 %v3067
    %4208 = vmatpush1.bf16.msra.mxu0 %v3066
    %4209 = vmatprep.subr.bf16.mxu0 %v3075
    %4210 = vmatpush1.bf16.msra.mxu0 %v3074
    %4211 = vmatprep.subr.bf16.mxu0 %v3083
    %4212 = vmatpush1.bf16.msra.mxu0 %v3082
    %4213 = vmatprep.mubr.bf16.mxu0 %v367
    %4214 = vmatmul.mubr.bf16.gmra.mrb[0].mxu0 %v366
    %v4215 = vpop.f32.mrb[0].mxu0
    %v4216 = vadd.f32 %v4023, %v4215
    %v4217 = vpop.f32.mrb[0].mxu0
    %v4218 = vadd.f32 %v4025, %v4217
    %v4219 = vpop.f32.mrb[0].mxu0
    %v4220 = vadd.f32 %v4027, %v4219
    %v4221 = vpop.f32.mrb[0].mxu0
    %v4222 = vadd.f32 %v4029, %v4221
    %4223 = vmatprep.mubr.bf16.mxu0 %v375
    %4224 = vmatmul.mubr.bf16.gmra.mrb[0].mxu0 %v374
    %v4225 = vpop.f32.mrb[0].mxu0
    %v4226 = vadd.f32 %v4033, %v4225
    %v4227 = vpop.f32.mrb[0].mxu0
    %v4228 = vadd.f32 %v4035, %v4227
    %v4229 = vpop.f32.mrb[0].mxu0
    %v4230 = vadd.f32 %v4037, %v4229
    %v4231 = vpop.f32.mrb[0].mxu0
    %v4232 = vadd.f32 %v4039, %v4231
    %4233 = vmatprep.mubr.bf16.mxu0 %v383
    %4234 = vmatmul.mubr.bf16.gmra.mrb[0].mxu0 %v382
    %v4235 = vpop.f32.mrb[0].mxu0
    %v4236 = vadd.f32 %v4043, %v4235
    %v4237 = vpop.f32.mrb[0].mxu0
    %v4238 = vadd.f32 %v4045, %v4237
    %v4239 = vpop.f32.mrb[0].mxu0
    %v4240 = vadd.f32 %v4047, %v4239
    %v4241 = vpop.f32.mrb[0].mxu0
    %v4242 = vadd.f32 %v4049, %v4241
    %4243 = vmatprep.mubr.bf16.mxu0 %v391
    %4244 = vmatmul.mubr.bf16.gmra.mrb[0].mxu0 %v390
    %v4245 = vpop.f32.mrb[0].mxu0
    %v4246 = vadd.f32 %v4053, %v4245
    %v4247 = vpop.f32.mrb[0].mxu0
    %v4248 = vadd.f32 %v4055, %v4247
    %v4249 = vpop.f32.mrb[0].mxu0
    %v4250 = vadd.f32 %v4057, %v4249
    %v4251 = vpop.f32.mrb[0].mxu0
    %v4252 = vadd.f32 %v4059, %v4251
    %4253 = vmatprep.mubr.bf16.mxu0 %v399
    %4254 = vmatmul.mubr.bf16.gmra.mrb[0].mxu0 %v398
    %v4255 = vpop.f32.mrb[0].mxu0
    %v4256 = vadd.f32 %v4063, %v4255
    %v4257 = vpop.f32.mrb[0].mxu0
    %v4258 = vadd.f32 %v4065, %v4257
    %v4259 = vpop.f32.mrb[0].mxu0
    %v4260 = vadd.f32 %v4067, %v4259
    %v4261 = vpop.f32.mrb[0].mxu0
    %v4262 = vadd.f32 %v4069, %v4261
    %4263 = vmatprep.mubr.bf16.mxu0 %v407
    %4264 = vmatmul.mubr.bf16.gmra.mrb[0].mxu0 %v406
    %v4265 = vpop.f32.mrb[0].mxu0
    %v4266 = vadd.f32 %v4073, %v4265
    %v4267 = vpop.f32.mrb[0].mxu0
    %v4268 = vadd.f32 %v4075, %v4267
    %v4269 = vpop.f32.mrb[0].mxu0
    %v4270 = vadd.f32 %v4077, %v4269
    %v4271 = vpop.f32.mrb[0].mxu0
    %v4272 = vadd.f32 %v4079, %v4271
    %4273 = vmatprep.mubr.bf16.mxu0 %v415
    %4274 = vmatmul.mubr.bf16.gmra.mrb[0].mxu0 %v414
    %v4275 = vpop.f32.mrb[0].mxu0
    %v4276 = vadd.f32 %v4083, %v4275
    %v4277 = vpop.f32.mrb[0].mxu0
    %v4278 = vadd.f32 %v4085, %v4277
    %v4279 = vpop.f32.mrb[0].mxu0
    %v4280 = vadd.f32 %v4087, %v4279
    %v4281 = vpop.f32.mrb[0].mxu0
    %v4282 = vadd.f32 %v4089, %v4281
    %4283 = vmatprep.mubr.bf16.mxu0 %v423
    %4284 = vmatmul.mubr.bf16.gmra.mrb[0].mxu0 %v422
    %v4285 = vpop.f32.mrb[0].mxu0
    %v4286 = vadd.f32 %v4093, %v4285
    %v4287 = vpop.f32.mrb[0].mxu0
    %v4288 = vadd.f32 %v4095, %v4287
    %v4289 = vpop.f32.mrb[0].mxu0
    %v4290 = vadd.f32 %v4097, %v4289
    %v4291 = vpop.f32.mrb[0].mxu0
    %v4292 = vadd.f32 %v4099, %v4291
    %4293 = vmatprep.mubr.bf16.mxu0 %v431
    %4294 = vmatmul.mubr.bf16.gmra.mrb[0].mxu0 %v430
    %v4295 = vpop.f32.mrb[0].mxu0
    %v4296 = vadd.f32 %v4103, %v4295
    %v4297 = vpop.f32.mrb[0].mxu0
    %v4298 = vadd.f32 %v4105, %v4297
    %v4299 = vpop.f32.mrb[0].mxu0
    %v4300 = vadd.f32 %v4107, %v4299
    %v4301 = vpop.f32.mrb[0].mxu0
    %v4302 = vadd.f32 %v4109, %v4301
    %4303 = vmatprep.mubr.bf16.mxu0 %v439
    %4304 = vmatmul.mubr.bf16.gmra.mrb[0].mxu0 %v438
    %v4305 = vpop.f32.mrb[0].mxu0
    %v4306 = vadd.f32 %v4113, %v4305
    %v4307 = vpop.f32.mrb[0].mxu0
    %v4308 = vadd.f32 %v4115, %v4307
    %v4309 = vpop.f32.mrb[0].mxu0
    %v4310 = vadd.f32 %v4117, %v4309
    %v4311 = vpop.f32.mrb[0].mxu0
    %v4312 = vadd.f32 %v4119, %v4311
    %4313 = vmatprep.mubr.bf16.mxu0 %v447
    %4314 = vmatmul.mubr.bf16.gmra.mrb[0].mxu0 %v446
    %v4315 = vpop.f32.mrb[0].mxu0
    %v4316 = vadd.f32 %v4123, %v4315
    %v4317 = vpop.f32.mrb[0].mxu0
    %v4318 = vadd.f32 %v4125, %v4317
    %v4319 = vpop.f32.mrb[0].mxu0
    %v4320 = vadd.f32 %v4127, %v4319
    %v4321 = vpop.f32.mrb[0].mxu0
    %v4322 = vadd.f32 %v4129, %v4321
    %4323 = vmatprep.mubr.bf16.mxu0 %v455
    %4324 = vmatmul.mubr.bf16.gmra.mrb[0].mxu0 %v454
    %v4325 = vpop.f32.mrb[0].mxu0
    %v4326 = vadd.f32 %v4133, %v4325
    %v4327 = vpop.f32.mrb[0].mxu0
    %v4328 = vadd.f32 %v4135, %v4327
    %v4329 = vpop.f32.mrb[0].mxu0
    %v4330 = vadd.f32 %v4137, %v4329
    %v4331 = vpop.f32.mrb[0].mxu0
    %v4332 = vadd.f32 %v4139, %v4331
    %4333 = vmatprep.mubr.bf16.mxu0 %v463
    %4334 = vmatmul.mubr.bf16.gmra.mrb[0].mxu0 %v462
    %v4335 = vpop.f32.mrb[0].mxu0
    %v4336 = vadd.f32 %v4143, %v4335
    %v4337 = vpop.f32.mrb[0].mxu0
    %v4338 = vadd.f32 %v4145, %v4337
    %v4339 = vpop.f32.mrb[0].mxu0
    %v4340 = vadd.f32 %v4147, %v4339
    %v4341 = vpop.f32.mrb[0].mxu0
    %v4342 = vadd.f32 %v4149, %v4341
    %4343 = vmatprep.mubr.bf16.mxu0 %v471
    %4344 = vmatmul.mubr.bf16.gmra.mrb[0].mxu0 %v470
    %v4345 = vpop.f32.mrb[0].mxu0
    %v4346 = vadd.f32 %v4153, %v4345
    %v4347 = vpop.f32.mrb[0].mxu0
    %v4348 = vadd.f32 %v4155, %v4347
    %v4349 = vpop.f32.mrb[0].mxu0
    %v4350 = vadd.f32 %v4157, %v4349
    %v4351 = vpop.f32.mrb[0].mxu0
    %v4352 = vadd.f32 %v4159, %v4351
    %4353 = vmatprep.mubr.bf16.mxu0 %v479
    %4354 = vmatmul.mubr.bf16.gmra.mrb[0].mxu0 %v478
    %v4355 = vpop.f32.mrb[0].mxu0
    %v4356 = vadd.f32 %v4163, %v4355
    %v4357 = vpop.f32.mrb[0].mxu0
    %v4358 = vadd.f32 %v4165, %v4357
    %v4359 = vpop.f32.mrb[0].mxu0
    %v4360 = vadd.f32 %v4167, %v4359
    %v4361 = vpop.f32.mrb[0].mxu0
    %v4362 = vadd.f32 %v4169, %v4361
    %4363 = vmatprep.mubr.bf16.mxu0 %v487
    %4364 = vmatmul.mubr.bf16.gmra.mrb[0].mxu0 %v486
    %v4365 = vpop.f32.mrb[0].mxu0
    %v4366 = vadd.f32 %v4173, %v4365
    %v4367 = vpop.f32.mrb[0].mxu0
    %v4368 = vadd.f32 %v4175, %v4367
    %v4369 = vpop.f32.mrb[0].mxu0
    %v4370 = vadd.f32 %v4177, %v4369
    %v4371 = vpop.f32.mrb[0].mxu0
    %v4372 = vadd.f32 %v4179, %v4371
    %4373 = vdwg.mxu0
    %4374 = vmatprep.subr.bf16.mxu0 %v2581
    %4375 = vmatpush1.bf16.msra.mxu0 %v2580
    %4376 = vmatprep.subr.bf16.mxu0 %v2589
    %4377 = vmatpush1.bf16.msra.mxu0 %v2588
    %4378 = vmatprep.subr.bf16.mxu0 %v2597
    %4379 = vmatpush1.bf16.msra.mxu0 %v2596
    %4380 = vmatprep.subr.bf16.mxu0 %v2605
    %4381 = vmatpush1.bf16.msra.mxu0 %v2604
    %4382 = vmatprep.subr.bf16.mxu0 %v2613
    %4383 = vmatpush1.bf16.msra.mxu0 %v2612
    %4384 = vmatprep.subr.bf16.mxu0 %v2621
    %4385 = vmatpush1.bf16.msra.mxu0 %v2620
    %4386 = vmatprep.subr.bf16.mxu0 %v2629
    %4387 = vmatpush1.bf16.msra.mxu0 %v2628
    %4388 = vmatprep.subr.bf16.mxu0 %v2637
    %4389 = vmatpush1.bf16.msra.mxu0 %v2636
    %4390 = vmatprep.subr.bf16.mxu0 %v2645
    %4391 = vmatpush1.bf16.msra.mxu0 %v2644
    %4392 = vmatprep.subr.bf16.mxu0 %v2653
    %4393 = vmatpush1.bf16.msra.mxu0 %v2652
    %4394 = vmatprep.subr.bf16.mxu0 %v2661
    %4395 = vmatpush1.bf16.msra.mxu0 %v2660
    %4396 = vmatprep.subr.bf16.mxu0 %v2669
    %4397 = vmatpush1.bf16.msra.mxu0 %v2668
    %4398 = vmatprep.subr.bf16.mxu0 %v2677
    %4399 = vmatpush1.bf16.msra.mxu0 %v2676
    %4400 = vmatprep.subr.bf16.mxu0 %v2685
    %4401 = vmatpush1.bf16.msra.mxu0 %v2684
    %4402 = vmatprep.subr.bf16.mxu0 %v2693
    %4403 = vmatpush1.bf16.msra.mxu0 %v2692
    %4404 = vmatprep.subr.bf16.mxu0 %v2701
    %4405 = vmatpush1.bf16.msra.mxu0 %v2700
    %4406 = vmatprep.mubr.bf16.mxu0 %v361
    %4407 = vmatmul.mubr.bf16.gmra.mrb[0].mxu0 %v360
    %v4408 = vpop.f32.mrb[0].mxu0
    %v4409 = vadd.f32 %v1013, %v4408
    %v4410 = vpop.f32.mrb[0].mxu0
    %v4411 = vadd.f32 %v1017, %v4410
    %v4412 = vpop.f32.mrb[0].mxu0
    %v4413 = vadd.f32 %v1013, %v4412
    %v4414 = vpop.f32.mrb[0].mxu0
    %v4415 = vadd.f32 %v1017, %v4414
    %4416 = vmatprep.mubr.bf16.mxu0 %v369
    %4417 = vmatmul.mubr.bf16.gmra.mrb[0].mxu0 %v368
    %v4418 = vpop.f32.mrb[0].mxu0
    %v4419 = vadd.f32 %v1013, %v4418
    %v4420 = vpop.f32.mrb[0].mxu0
    %v4421 = vadd.f32 %v1017, %v4420
    %v4422 = vpop.f32.mrb[0].mxu0
    %v4423 = vadd.f32 %v1013, %v4422
    %v4424 = vpop.f32.mrb[0].mxu0
    %v4425 = vadd.f32 %v1017, %v4424
    %4426 = vmatprep.mubr.bf16.mxu0 %v377
    %4427 = vmatmul.mubr.bf16.gmra.mrb[0].mxu0 %v376
    %v4428 = vpop.f32.mrb[0].mxu0
    %v4429 = vadd.f32 %v1013, %v4428
    %v4430 = vpop.f32.mrb[0].mxu0
    %v4431 = vadd.f32 %v1017, %v4430
    %v4432 = vpop.f32.mrb[0].mxu0
    %v4433 = vadd.f32 %v1013, %v4432
    %v4434 = vpop.f32.mrb[0].mxu0
    %v4435 = vadd.f32 %v1017, %v4434
    %4436 = vmatprep.mubr.bf16.mxu0 %v385
    %4437 = vmatmul.mubr.bf16.gmra.mrb[0].mxu0 %v384
    %v4438 = vpop.f32.mrb[0].mxu0
    %v4439 = vadd.f32 %v1013, %v4438
    %v4440 = vpop.f32.mrb[0].mxu0
    %v4441 = vadd.f32 %v1017, %v4440
    %v4442 = vpop.f32.mrb[0].mxu0
    %v4443 = vadd.f32 %v1013, %v4442
    %v4444 = vpop.f32.mrb[0].mxu0
    %v4445 = vadd.f32 %v1017, %v4444
    %4446 = vmatprep.mubr.bf16.mxu0 %v393
    %4447 = vmatmul.mubr.bf16.gmra.mrb[0].mxu0 %v392
    %v4448 = vpop.f32.mrb[0].mxu0
    %v4449 = vadd.f32 %v1013, %v4448
    %v4450 = vpop.f32.mrb[0].mxu0
    %v4451 = vadd.f32 %v1017, %v4450
    %v4452 = vpop.f32.mrb[0].mxu0
    %v4453 = vadd.f32 %v1013, %v4452
    %v4454 = vpop.f32.mrb[0].mxu0
    %v4455 = vadd.f32 %v1017, %v4454
    %4456 = vmatprep.mubr.bf16.mxu0 %v401
    %4457 = vmatmul.mubr.bf16.gmra.mrb[0].mxu0 %v400
    %v4458 = vpop.f32.mrb[0].mxu0
    %v4459 = vadd.f32 %v1013, %v4458
    %v4460 = vpop.f32.mrb[0].mxu0
    %v4461 = vadd.f32 %v1017, %v4460
    %v4462 = vpop.f32.mrb[0].mxu0
    %v4463 = vadd.f32 %v1013, %v4462
    %v4464 = vpop.f32.mrb[0].mxu0
    %v4465 = vadd.f32 %v1017, %v4464
    %4466 = vmatprep.mubr.bf16.mxu0 %v409
    %4467 = vmatmul.mubr.bf16.gmra.mrb[0].mxu0 %v408
    %v4468 = vpop.f32.mrb[0].mxu0
    %v4469 = vadd.f32 %v1013, %v4468
    %v4470 = vpop.f32.mrb[0].mxu0
    %v4471 = vadd.f32 %v1017, %v4470
    %v4472 = vpop.f32.mrb[0].mxu0
    %v4473 = vadd.f32 %v1013, %v4472
    %v4474 = vpop.f32.mrb[0].mxu0
    %v4475 = vadd.f32 %v1017, %v4474
    %4476 = vmatprep.mubr.bf16.mxu0 %v417
    %4477 = vmatmul.mubr.bf16.gmra.mrb[0].mxu0 %v416
    %v4478 = vpop.f32.mrb[0].mxu0
    %v4479 = vadd.f32 %v1013, %v4478
    %v4480 = vpop.f32.mrb[0].mxu0
    %v4481 = vadd.f32 %v1017, %v4480
    %v4482 = vpop.f32.mrb[0].mxu0
    %v4483 = vadd.f32 %v1013, %v4482
    %v4484 = vpop.f32.mrb[0].mxu0
    %v4485 = vadd.f32 %v1017, %v4484
    %4486 = vmatprep.mubr.bf16.mxu0 %v425
    %4487 = vmatmul.mubr.bf16.gmra.mrb[0].mxu0 %v424
    %v4488 = vpop.f32.mrb[0].mxu0
    %v4489 = vadd.f32 %v1013, %v4488
    %v4490 = vpop.f32.mrb[0].mxu0
    %v4491 = vadd.f32 %v1017, %v4490
    %v4492 = vpop.f32.mrb[0].mxu0
    %v4493 = vadd.f32 %v1013, %v4492
    %v4494 = vpop.f32.mrb[0].mxu0
    %v4495 = vadd.f32 %v1017, %v4494
    %4496 = vmatprep.mubr.bf16.mxu0 %v433
    %4497 = vmatmul.mubr.bf16.gmra.mrb[0].mxu0 %v432
    %v4498 = vpop.f32.mrb[0].mxu0
    %v4499 = vadd.f32 %v1013, %v4498
    %v4500 = vpop.f32.mrb[0].mxu0
    %v4501 = vadd.f32 %v1017, %v4500
    %v4502 = vpop.f32.mrb[0].mxu0
    %v4503 = vadd.f32 %v1013, %v4502
    %v4504 = vpop.f32.mrb[0].mxu0
    %v4505 = vadd.f32 %v1017, %v4504
    %4506 = vmatprep.mubr.bf16.mxu0 %v441
    %4507 = vmatmul.mubr.bf16.gmra.mrb[0].mxu0 %v440
    %v4508 = vpop.f32.mrb[0].mxu0
    %v4509 = vadd.f32 %v1013, %v4508
    %v4510 = vpop.f32.mrb[0].mxu0
    %v4511 = vadd.f32 %v1017, %v4510
    %v4512 = vpop.f32.mrb[0].mxu0
    %v4513 = vadd.f32 %v1013, %v4512
    %v4514 = vpop.f32.mrb[0].mxu0
    %v4515 = vadd.f32 %v1017, %v4514
    %4516 = vmatprep.mubr.bf16.mxu0 %v449
    %4517 = vmatmul.mubr.bf16.gmra.mrb[0].mxu0 %v448
    %v4518 = vpop.f32.mrb[0].mxu0
    %v4519 = vadd.f32 %v1013, %v4518
    %v4520 = vpop.f32.mrb[0].mxu0
    %v4521 = vadd.f32 %v1017, %v4520
    %v4522 = vpop.f32.mrb[0].mxu0
    %v4523 = vadd.f32 %v1013, %v4522
    %v4524 = vpop.f32.mrb[0].mxu0
    %v4525 = vadd.f32 %v1017, %v4524
    %4526 = vmatprep.mubr.bf16.mxu0 %v457
    %4527 = vmatmul.mubr.bf16.gmra.mrb[0].mxu0 %v456
    %v4528 = vpop.f32.mrb[0].mxu0
    %v4529 = vadd.f32 %v1013, %v4528
    %v4530 = vpop.f32.mrb[0].mxu0
    %v4531 = vadd.f32 %v1017, %v4530
    %v4532 = vpop.f32.mrb[0].mxu0
    %v4533 = vadd.f32 %v1013, %v4532
    %v4534 = vpop.f32.mrb[0].mxu0
    %v4535 = vadd.f32 %v1017, %v4534
    %4536 = vmatprep.mubr.bf16.mxu0 %v465
    %4537 = vmatmul.mubr.bf16.gmra.mrb[0].mxu0 %v464
    %v4538 = vpop.f32.mrb[0].mxu0
    %v4539 = vadd.f32 %v1013, %v4538
    %v4540 = vpop.f32.mrb[0].mxu0
    %v4541 = vadd.f32 %v1017, %v4540
    %v4542 = vpop.f32.mrb[0].mxu0
    %v4543 = vadd.f32 %v1013, %v4542
    %v4544 = vpop.f32.mrb[0].mxu0
    %v4545 = vadd.f32 %v1017, %v4544
    %4546 = vmatprep.mubr.bf16.mxu0 %v473
    %4547 = vmatmul.mubr.bf16.gmra.mrb[0].mxu0 %v472
    %v4548 = vpop.f32.mrb[0].mxu0
    %v4549 = vadd.f32 %v1013, %v4548
    %v4550 = vpop.f32.mrb[0].mxu0
    %v4551 = vadd.f32 %v1017, %v4550
    %v4552 = vpop.f32.mrb[0].mxu0
    %v4553 = vadd.f32 %v1013, %v4552
    %v4554 = vpop.f32.mrb[0].mxu0
    %v4555 = vadd.f32 %v1017, %v4554
    %4556 = vmatprep.mubr.bf16.mxu0 %v481
    %4557 = vmatmul.mubr.bf16.gmra.mrb[0].mxu0 %v480
    %v4558 = vpop.f32.mrb[0].mxu0
    %v4559 = vadd.f32 %v1013, %v4558
    %v4560 = vpop.f32.mrb[0].mxu0
    %v4561 = vadd.f32 %v1017, %v4560
    %v4562 = vpop.f32.mrb[0].mxu0
    %v4563 = vadd.f32 %v1013, %v4562
    %v4564 = vpop.f32.mrb[0].mxu0
    %v4565 = vadd.f32 %v1017, %v4564
    %4566 = vdwg.mxu0
    %4567 = vmatprep.subr.bf16.mxu0 %v2709
    %4568 = vmatpush1.bf16.msra.mxu0 %v2708
    %4569 = vmatprep.subr.bf16.mxu0 %v2717
    %4570 = vmatpush1.bf16.msra.mxu0 %v2716
    %4571 = vmatprep.subr.bf16.mxu0 %v2725
    %4572 = vmatpush1.bf16.msra.mxu0 %v2724
    %4573 = vmatprep.subr.bf16.mxu0 %v2733
    %4574 = vmatpush1.bf16.msra.mxu0 %v2732
    %4575 = vmatprep.subr.bf16.mxu0 %v2741
    %4576 = vmatpush1.bf16.msra.mxu0 %v2740
    %4577 = vmatprep.subr.bf16.mxu0 %v2749
    %4578 = vmatpush1.bf16.msra.mxu0 %v2748
    %4579 = vmatprep.subr.bf16.mxu0 %v2757
    %4580 = vmatpush1.bf16.msra.mxu0 %v2756
    %4581 = vmatprep.subr.bf16.mxu0 %v2765
    %4582 = vmatpush1.bf16.msra.mxu0 %v2764
    %4583 = vmatprep.subr.bf16.mxu0 %v2773
    %4584 = vmatpush1.bf16.msra.mxu0 %v2772
    %4585 = vmatprep.subr.bf16.mxu0 %v2781
    %4586 = vmatpush1.bf16.msra.mxu0 %v2780
    %4587 = vmatprep.subr.bf16.mxu0 %v2789
    %4588 = vmatpush1.bf16.msra.mxu0 %v2788
    %4589 = vmatprep.subr.bf16.mxu0 %v2797
    %4590 = vmatpush1.bf16.msra.mxu0 %v2796
    %4591 = vmatprep.subr.bf16.mxu0 %v2805
    %4592 = vmatpush1.bf16.msra.mxu0 %v2804
    %4593 = vmatprep.subr.bf16.mxu0 %v2813
    %4594 = vmatpush1.bf16.msra.mxu0 %v2812
    %4595 = vmatprep.subr.bf16.mxu0 %v2821
    %4596 = vmatpush1.bf16.msra.mxu0 %v2820
    %4597 = vmatprep.subr.bf16.mxu0 %v2829
    %4598 = vmatpush1.bf16.msra.mxu0 %v2828
    %4599 = vmatprep.mubr.bf16.mxu0 %v363
    %4600 = vmatmul.mubr.bf16.gmra.mrb[0].mxu0 %v362
    %v4601 = vpop.f32.mrb[0].mxu0
    %v4602 = vadd.f32 %v4409, %v4601
    %v4603 = vpop.f32.mrb[0].mxu0
    %v4604 = vadd.f32 %v4411, %v4603
    %v4605 = vpop.f32.mrb[0].mxu0
    %v4606 = vadd.f32 %v4413, %v4605
    %v4607 = vpop.f32.mrb[0].mxu0
    %v4608 = vadd.f32 %v4415, %v4607
    %4609 = vmatprep.mubr.bf16.mxu0 %v371
    %4610 = vmatmul.mubr.bf16.gmra.mrb[0].mxu0 %v370
    %v4611 = vpop.f32.mrb[0].mxu0
    %v4612 = vadd.f32 %v4419, %v4611
    %v4613 = vpop.f32.mrb[0].mxu0
    %v4614 = vadd.f32 %v4421, %v4613
    %v4615 = vpop.f32.mrb[0].mxu0
    %v4616 = vadd.f32 %v4423, %v4615
    %v4617 = vpop.f32.mrb[0].mxu0
    %v4618 = vadd.f32 %v4425, %v4617
    %4619 = vmatprep.mubr.bf16.mxu0 %v379
    %4620 = vmatmul.mubr.bf16.gmra.mrb[0].mxu0 %v378
    %v4621 = vpop.f32.mrb[0].mxu0
    %v4622 = vadd.f32 %v4429, %v4621
    %v4623 = vpop.f32.mrb[0].mxu0
    %v4624 = vadd.f32 %v4431, %v4623
    %v4625 = vpop.f32.mrb[0].mxu0
    %v4626 = vadd.f32 %v4433, %v4625
    %v4627 = vpop.f32.mrb[0].mxu0
    %v4628 = vadd.f32 %v4435, %v4627
    %4629 = vmatprep.mubr.bf16.mxu0 %v387
    %4630 = vmatmul.mubr.bf16.gmra.mrb[0].mxu0 %v386
    %v4631 = vpop.f32.mrb[0].mxu0
    %v4632 = vadd.f32 %v4439, %v4631
    %v4633 = vpop.f32.mrb[0].mxu0
    %v4634 = vadd.f32 %v4441, %v4633
    %v4635 = vpop.f32.mrb[0].mxu0
    %v4636 = vadd.f32 %v4443, %v4635
    %v4637 = vpop.f32.mrb[0].mxu0
    %v4638 = vadd.f32 %v4445, %v4637
    %4639 = vmatprep.mubr.bf16.mxu0 %v395
    %4640 = vmatmul.mubr.bf16.gmra.mrb[0].mxu0 %v394
    %v4641 = vpop.f32.mrb[0].mxu0
    %v4642 = vadd.f32 %v4449, %v4641
    %v4643 = vpop.f32.mrb[0].mxu0
    %v4644 = vadd.f32 %v4451, %v4643
    %v4645 = vpop.f32.mrb[0].mxu0
    %v4646 = vadd.f32 %v4453, %v4645
    %v4647 = vpop.f32.mrb[0].mxu0
    %v4648 = vadd.f32 %v4455, %v4647
    %4649 = vmatprep.mubr.bf16.mxu0 %v403
    %4650 = vmatmul.mubr.bf16.gmra.mrb[0].mxu0 %v402
    %v4651 = vpop.f32.mrb[0].mxu0
    %v4652 = vadd.f32 %v4459, %v4651
    %v4653 = vpop.f32.mrb[0].mxu0
    %v4654 = vadd.f32 %v4461, %v4653
    %v4655 = vpop.f32.mrb[0].mxu0
    %v4656 = vadd.f32 %v4463, %v4655
    %v4657 = vpop.f32.mrb[0].mxu0
    %v4658 = vadd.f32 %v4465, %v4657
    %4659 = vmatprep.mubr.bf16.mxu0 %v411
    %4660 = vmatmul.mubr.bf16.gmra.mrb[0].mxu0 %v410
    %v4661 = vpop.f32.mrb[0].mxu0
    %v4662 = vadd.f32 %v4469, %v4661
    %v4663 = vpop.f32.mrb[0].mxu0
    %v4664 = vadd.f32 %v4471, %v4663
    %v4665 = vpop.f32.mrb[0].mxu0
    %v4666 = vadd.f32 %v4473, %v4665
    %v4667 = vpop.f32.mrb[0].mxu0
    %v4668 = vadd.f32 %v4475, %v4667
    %4669 = vmatprep.mubr.bf16.mxu0 %v419
    %4670 = vmatmul.mubr.bf16.gmra.mrb[0].mxu0 %v418
    %v4671 = vpop.f32.mrb[0].mxu0
    %v4672 = vadd.f32 %v4479, %v4671
    %v4673 = vpop.f32.mrb[0].mxu0
    %v4674 = vadd.f32 %v4481, %v4673
    %v4675 = vpop.f32.mrb[0].mxu0
    %v4676 = vadd.f32 %v4483, %v4675
    %v4677 = vpop.f32.mrb[0].mxu0
    %v4678 = vadd.f32 %v4485, %v4677
    %4679 = vmatprep.mubr.bf16.mxu0 %v427
    %4680 = vmatmul.mubr.bf16.gmra.mrb[0].mxu0 %v426
    %v4681 = vpop.f32.mrb[0].mxu0
    %v4682 = vadd.f32 %v4489, %v4681
    %v4683 = vpop.f32.mrb[0].mxu0
    %v4684 = vadd.f32 %v4491, %v4683
    %v4685 = vpop.f32.mrb[0].mxu0
    %v4686 = vadd.f32 %v4493, %v4685
    %v4687 = vpop.f32.mrb[0].mxu0
    %v4688 = vadd.f32 %v4495, %v4687
    %4689 = vmatprep.mubr.bf16.mxu0 %v435
    %4690 = vmatmul.mubr.bf16.gmra.mrb[0].mxu0 %v434
    %v4691 = vpop.f32.mrb[0].mxu0
    %v4692 = vadd.f32 %v4499, %v4691
    %v4693 = vpop.f32.mrb[0].mxu0
    %v4694 = vadd.f32 %v4501, %v4693
    %v4695 = vpop.f32.mrb[0].mxu0
    %v4696 = vadd.f32 %v4503, %v4695
    %v4697 = vpop.f32.mrb[0].mxu0
    %v4698 = vadd.f32 %v4505, %v4697
    %4699 = vmatprep.mubr.bf16.mxu0 %v443
    %4700 = vmatmul.mubr.bf16.gmra.mrb[0].mxu0 %v442
    %v4701 = vpop.f32.mrb[0].mxu0
    %v4702 = vadd.f32 %v4509, %v4701
    %v4703 = vpop.f32.mrb[0].mxu0
    %v4704 = vadd.f32 %v4511, %v4703
    %v4705 = vpop.f32.mrb[0].mxu0
    %v4706 = vadd.f32 %v4513, %v4705
    %v4707 = vpop.f32.mrb[0].mxu0
    %v4708 = vadd.f32 %v4515, %v4707
    %4709 = vmatprep.mubr.bf16.mxu0 %v451
    %4710 = vmatmul.mubr.bf16.gmra.mrb[0].mxu0 %v450
    %v4711 = vpop.f32.mrb[0].mxu0
    %v4712 = vadd.f32 %v4519, %v4711
    %v4713 = vpop.f32.mrb[0].mxu0
    %v4714 = vadd.f32 %v4521, %v4713
    %v4715 = vpop.f32.mrb[0].mxu0
    %v4716 = vadd.f32 %v4523, %v4715
    %v4717 = vpop.f32.mrb[0].mxu0
    %v4718 = vadd.f32 %v4525, %v4717
    %4719 = vmatprep.mubr.bf16.mxu0 %v459
    %4720 = vmatmul.mubr.bf16.gmra.mrb[0].mxu0 %v458
    %v4721 = vpop.f32.mrb[0].mxu0
    %v4722 = vadd.f32 %v4529, %v4721
    %v4723 = vpop.f32.mrb[0].mxu0
    %v4724 = vadd.f32 %v4531, %v4723
    %v4725 = vpop.f32.mrb[0].mxu0
    %v4726 = vadd.f32 %v4533, %v4725
    %v4727 = vpop.f32.mrb[0].mxu0
    %v4728 = vadd.f32 %v4535, %v4727
    %4729 = vmatprep.mubr.bf16.mxu0 %v467
    %4730 = vmatmul.mubr.bf16.gmra.mrb[0].mxu0 %v466
    %v4731 = vpop.f32.mrb[0].mxu0
    %v4732 = vadd.f32 %v4539, %v4731
    %v4733 = vpop.f32.mrb[0].mxu0
    %v4734 = vadd.f32 %v4541, %v4733
    %v4735 = vpop.f32.mrb[0].mxu0
    %v4736 = vadd.f32 %v4543, %v4735
    %v4737 = vpop.f32.mrb[0].mxu0
    %v4738 = vadd.f32 %v4545, %v4737
    %4739 = vmatprep.mubr.bf16.mxu0 %v475
    %4740 = vmatmul.mubr.bf16.gmra.mrb[0].mxu0 %v474
    %v4741 = vpop.f32.mrb[0].mxu0
    %v4742 = vadd.f32 %v4549, %v4741
    %v4743 = vpop.f32.mrb[0].mxu0
    %v4744 = vadd.f32 %v4551, %v4743
    %v4745 = vpop.f32.mrb[0].mxu0
    %v4746 = vadd.f32 %v4553, %v4745
    %v4747 = vpop.f32.mrb[0].mxu0
    %v4748 = vadd.f32 %v4555, %v4747
    %4749 = vmatprep.mubr.bf16.mxu0 %v483
    %4750 = vmatmul.mubr.bf16.gmra.mrb[0].mxu0 %v482
    %v4751 = vpop.f32.mrb[0].mxu0
    %v4752 = vadd.f32 %v4559, %v4751
    %v4753 = vpop.f32.mrb[0].mxu0
    %v4754 = vadd.f32 %v4561, %v4753
    %v4755 = vpop.f32.mrb[0].mxu0
    %v4756 = vadd.f32 %v4563, %v4755
    %v4757 = vpop.f32.mrb[0].mxu0
    %v4758 = vadd.f32 %v4565, %v4757
    %4759 = vdwg.mxu0
    %4760 = vmatprep.subr.bf16.mxu0 %v2837
    %4761 = vmatpush1.bf16.msra.mxu0 %v2836
    %4762 = vmatprep.subr.bf16.mxu0 %v2845
    %4763 = vmatpush1.bf16.msra.mxu0 %v2844
    %4764 = vmatprep.subr.bf16.mxu0 %v2853
    %4765 = vmatpush1.bf16.msra.mxu0 %v2852
    %4766 = vmatprep.subr.bf16.mxu0 %v2861
    %4767 = vmatpush1.bf16.msra.mxu0 %v2860
    %4768 = vmatprep.subr.bf16.mxu0 %v2869
    %4769 = vmatpush1.bf16.msra.mxu0 %v2868
    %4770 = vmatprep.subr.bf16.mxu0 %v2877
    %4771 = vmatpush1.bf16.msra.mxu0 %v2876
    %4772 = vmatprep.subr.bf16.mxu0 %v2885
    %4773 = vmatpush1.bf16.msra.mxu0 %v2884
    %4774 = vmatprep.subr.bf16.mxu0 %v2893
    %4775 = vmatpush1.bf16.msra.mxu0 %v2892
    %4776 = vmatprep.subr.bf16.mxu0 %v2901
    %4777 = vmatpush1.bf16.msra.mxu0 %v2900
    %4778 = vmatprep.subr.bf16.mxu0 %v2909
    %4779 = vmatpush1.bf16.msra.mxu0 %v2908
    %4780 = vmatprep.subr.bf16.mxu0 %v2917
    %4781 = vmatpush1.bf16.msra.mxu0 %v2916
    %4782 = vmatprep.subr.bf16.mxu0 %v2925
    %4783 = vmatpush1.bf16.msra.mxu0 %v2924
    %4784 = vmatprep.subr.bf16.mxu0 %v2933
    %4785 = vmatpush1.bf16.msra.mxu0 %v2932
    %4786 = vmatprep.subr.bf16.mxu0 %v2941
    %4787 = vmatpush1.bf16.msra.mxu0 %v2940
    %4788 = vmatprep.subr.bf16.mxu0 %v2949
    %4789 = vmatpush1.bf16.msra.mxu0 %v2948
    %4790 = vmatprep.subr.bf16.mxu0 %v2957
    %4791 = vmatpush1.bf16.msra.mxu0 %v2956
    %4792 = vmatprep.mubr.bf16.mxu0 %v365
    %4793 = vmatmul.mubr.bf16.gmra.mrb[0].mxu0 %v364
    %v4794 = vpop.f32.mrb[0].mxu0
    %v4795 = vadd.f32 %v4602, %v4794
    %v4796 = vpop.f32.mrb[0].mxu0
    %v4797 = vadd.f32 %v4604, %v4796
    %v4798 = vpop.f32.mrb[0].mxu0
    %v4799 = vadd.f32 %v4606, %v4798
    %v4800 = vpop.f32.mrb[0].mxu0
    %v4801 = vadd.f32 %v4608, %v4800
    %4802 = vmatprep.mubr.bf16.mxu0 %v373
    %4803 = vmatmul.mubr.bf16.gmra.mrb[0].mxu0 %v372
    %v4804 = vpop.f32.mrb[0].mxu0
    %v4805 = vadd.f32 %v4612, %v4804
    %v4806 = vpop.f32.mrb[0].mxu0
    %v4807 = vadd.f32 %v4614, %v4806
    %v4808 = vpop.f32.mrb[0].mxu0
    %v4809 = vadd.f32 %v4616, %v4808
    %v4810 = vpop.f32.mrb[0].mxu0
    %v4811 = vadd.f32 %v4618, %v4810
    %4812 = vmatprep.mubr.bf16.mxu0 %v381
    %4813 = vmatmul.mubr.bf16.gmra.mrb[0].mxu0 %v380
    %v4814 = vpop.f32.mrb[0].mxu0
    %v4815 = vadd.f32 %v4622, %v4814
    %v4816 = vpop.f32.mrb[0].mxu0
    %v4817 = vadd.f32 %v4624, %v4816
    %v4818 = vpop.f32.mrb[0].mxu0
    %v4819 = vadd.f32 %v4626, %v4818
    %v4820 = vpop.f32.mrb[0].mxu0
    %v4821 = vadd.f32 %v4628, %v4820
    %4822 = vmatprep.mubr.bf16.mxu0 %v389
    %4823 = vmatmul.mubr.bf16.gmra.mrb[0].mxu0 %v388
    %v4824 = vpop.f32.mrb[0].mxu0
    %v4825 = vadd.f32 %v4632, %v4824
    %v4826 = vpop.f32.mrb[0].mxu0
    %v4827 = vadd.f32 %v4634, %v4826
    %v4828 = vpop.f32.mrb[0].mxu0
    %v4829 = vadd.f32 %v4636, %v4828
    %v4830 = vpop.f32.mrb[0].mxu0
    %v4831 = vadd.f32 %v4638, %v4830
    %4832 = vmatprep.mubr.bf16.mxu0 %v397
    %4833 = vmatmul.mubr.bf16.gmra.mrb[0].mxu0 %v396
    %v4834 = vpop.f32.mrb[0].mxu0
    %v4835 = vadd.f32 %v4642, %v4834
    %v4836 = vpop.f32.mrb[0].mxu0
    %v4837 = vadd.f32 %v4644, %v4836
    %v4838 = vpop.f32.mrb[0].mxu0
    %v4839 = vadd.f32 %v4646, %v4838
    %v4840 = vpop.f32.mrb[0].mxu0
    %v4841 = vadd.f32 %v4648, %v4840
    %4842 = vmatprep.mubr.bf16.mxu0 %v405
    %4843 = vmatmul.mubr.bf16.gmra.mrb[0].mxu0 %v404
    %v4844 = vpop.f32.mrb[0].mxu0
    %v4845 = vadd.f32 %v4652, %v4844
    %v4846 = vpop.f32.mrb[0].mxu0
    %v4847 = vadd.f32 %v4654, %v4846
    %v4848 = vpop.f32.mrb[0].mxu0
    %v4849 = vadd.f32 %v4656, %v4848
    %v4850 = vpop.f32.mrb[0].mxu0
    %v4851 = vadd.f32 %v4658, %v4850
    %4852 = vmatprep.mubr.bf16.mxu0 %v413
    %4853 = vmatmul.mubr.bf16.gmra.mrb[0].mxu0 %v412
    %v4854 = vpop.f32.mrb[0].mxu0
    %v4855 = vadd.f32 %v4662, %v4854
    %v4856 = vpop.f32.mrb[0].mxu0
    %v4857 = vadd.f32 %v4664, %v4856
    %v4858 = vpop.f32.mrb[0].mxu0
    %v4859 = vadd.f32 %v4666, %v4858
    %v4860 = vpop.f32.mrb[0].mxu0
    %v4861 = vadd.f32 %v4668, %v4860
    %4862 = vmatprep.mubr.bf16.mxu0 %v421
    %4863 = vmatmul.mubr.bf16.gmra.mrb[0].mxu0 %v420
    %v4864 = vpop.f32.mrb[0].mxu0
    %v4865 = vadd.f32 %v4672, %v4864
    %v4866 = vpop.f32.mrb[0].mxu0
    %v4867 = vadd.f32 %v4674, %v4866
    %v4868 = vpop.f32.mrb[0].mxu0
    %v4869 = vadd.f32 %v4676, %v4868
    %v4870 = vpop.f32.mrb[0].mxu0
    %v4871 = vadd.f32 %v4678, %v4870
    %4872 = vmatprep.mubr.bf16.mxu0 %v429
    %4873 = vmatmul.mubr.bf16.gmra.mrb[0].mxu0 %v428
    %v4874 = vpop.f32.mrb[0].mxu0
    %v4875 = vadd.f32 %v4682, %v4874
    %v4876 = vpop.f32.mrb[0].mxu0
    %v4877 = vadd.f32 %v4684, %v4876
    %v4878 = vpop.f32.mrb[0].mxu0
    %v4879 = vadd.f32 %v4686, %v4878
    %v4880 = vpop.f32.mrb[0].mxu0
    %v4881 = vadd.f32 %v4688, %v4880
    %4882 = vmatprep.mubr.bf16.mxu0 %v437
    %4883 = vmatmul.mubr.bf16.gmra.mrb[0].mxu0 %v436
    %v4884 = vpop.f32.mrb[0].mxu0
    %v4885 = vadd.f32 %v4692, %v4884
    %v4886 = vpop.f32.mrb[0].mxu0
    %v4887 = vadd.f32 %v4694, %v4886
    %v4888 = vpop.f32.mrb[0].mxu0
    %v4889 = vadd.f32 %v4696, %v4888
    %v4890 = vpop.f32.mrb[0].mxu0
    %v4891 = vadd.f32 %v4698, %v4890
    %4892 = vmatprep.mubr.bf16.mxu0 %v445
    %4893 = vmatmul.mubr.bf16.gmra.mrb[0].mxu0 %v444
    %v4894 = vpop.f32.mrb[0].mxu0
    %v4895 = vadd.f32 %v4702, %v4894
    %v4896 = vpop.f32.mrb[0].mxu0
    %v4897 = vadd.f32 %v4704, %v4896
    %v4898 = vpop.f32.mrb[0].mxu0
    %v4899 = vadd.f32 %v4706, %v4898
    %v4900 = vpop.f32.mrb[0].mxu0
    %v4901 = vadd.f32 %v4708, %v4900
    %4902 = vmatprep.mubr.bf16.mxu0 %v453
    %4903 = vmatmul.mubr.bf16.gmra.mrb[0].mxu0 %v452
    %v4904 = vpop.f32.mrb[0].mxu0
    %v4905 = vadd.f32 %v4712, %v4904
    %v4906 = vpop.f32.mrb[0].mxu0
    %v4907 = vadd.f32 %v4714, %v4906
    %v4908 = vpop.f32.mrb[0].mxu0
    %v4909 = vadd.f32 %v4716, %v4908
    %v4910 = vpop.f32.mrb[0].mxu0
    %v4911 = vadd.f32 %v4718, %v4910
    %4912 = vmatprep.mubr.bf16.mxu0 %v461
    %4913 = vmatmul.mubr.bf16.gmra.mrb[0].mxu0 %v460
    %v4914 = vpop.f32.mrb[0].mxu0
    %v4915 = vadd.f32 %v4722, %v4914
    %v4916 = vpop.f32.mrb[0].mxu0
    %v4917 = vadd.f32 %v4724, %v4916
    %v4918 = vpop.f32.mrb[0].mxu0
    %v4919 = vadd.f32 %v4726, %v4918
    %v4920 = vpop.f32.mrb[0].mxu0
    %v4921 = vadd.f32 %v4728, %v4920
    %4922 = vmatprep.mubr.bf16.mxu0 %v469
    %4923 = vmatmul.mubr.bf16.gmra.mrb[0].mxu0 %v468
    %v4924 = vpop.f32.mrb[0].mxu0
    %v4925 = vadd.f32 %v4732, %v4924
    %v4926 = vpop.f32.mrb[0].mxu0
    %v4927 = vadd.f32 %v4734, %v4926
    %v4928 = vpop.f32.mrb[0].mxu0
    %v4929 = vadd.f32 %v4736, %v4928
    %v4930 = vpop.f32.mrb[0].mxu0
    %v4931 = vadd.f32 %v4738, %v4930
    %4932 = vmatprep.mubr.bf16.mxu0 %v477
    %4933 = vmatmul.mubr.bf16.gmra.mrb[0].mxu0 %v476
    %v4934 = vpop.f32.mrb[0].mxu0
    %v4935 = vadd.f32 %v4742, %v4934
    %v4936 = vpop.f32.mrb[0].mxu0
    %v4937 = vadd.f32 %v4744, %v4936
    %v4938 = vpop.f32.mrb[0].mxu0
    %v4939 = vadd.f32 %v4746, %v4938
    %v4940 = vpop.f32.mrb[0].mxu0
    %v4941 = vadd.f32 %v4748, %v4940
    %4942 = vmatprep.mubr.bf16.mxu0 %v485
    %4943 = vmatmul.mubr.bf16.gmra.mrb[0].mxu0 %v484
    %v4944 = vpop.f32.mrb[0].mxu0
    %v4945 = vadd.f32 %v4752, %v4944
    %v4946 = vpop.f32.mrb[0].mxu0
    %v4947 = vadd.f32 %v4754, %v4946
    %v4948 = vpop.f32.mrb[0].mxu0
    %v4949 = vadd.f32 %v4756, %v4948
    %v4950 = vpop.f32.mrb[0].mxu0
    %v4951 = vadd.f32 %v4758, %v4950
    %4952 = vdwg.mxu0
    %4953 = vmatprep.subr.bf16.mxu0 %v2965
    %4954 = vmatpush1.bf16.msra.mxu0 %v2964
    %4955 = vmatprep.subr.bf16.mxu0 %v2973
    %4956 = vmatpush1.bf16.msra.mxu0 %v2972
    %4957 = vmatprep.subr.bf16.mxu0 %v2981
    %4958 = vmatpush1.bf16.msra.mxu0 %v2980
    %4959 = vmatprep.subr.bf16.mxu0 %v2989
    %4960 = vmatpush1.bf16.msra.mxu0 %v2988
    %4961 = vmatprep.subr.bf16.mxu0 %v2997
    %4962 = vmatpush1.bf16.msra.mxu0 %v2996
    %4963 = vmatprep.subr.bf16.mxu0 %v3005
    %4964 = vmatpush1.bf16.msra.mxu0 %v3004
    %4965 = vmatprep.subr.bf16.mxu0 %v3013
    %4966 = vmatpush1.bf16.msra.mxu0 %v3012
    %4967 = vmatprep.subr.bf16.mxu0 %v3021
    %4968 = vmatpush1.bf16.msra.mxu0 %v3020
    %4969 = vmatprep.subr.bf16.mxu0 %v3029
    %4970 = vmatpush1.bf16.msra.mxu0 %v3028
    %4971 = vmatprep.subr.bf16.mxu0 %v3037
    %4972 = vmatpush1.bf16.msra.mxu0 %v3036
    %4973 = vmatprep.subr.bf16.mxu0 %v3045
    %4974 = vmatpush1.bf16.msra.mxu0 %v3044
    %4975 = vmatprep.subr.bf16.mxu0 %v3053
    %4976 = vmatpush1.bf16.msra.mxu0 %v3052
    %4977 = vmatprep.subr.bf16.mxu0 %v3061
    %4978 = vmatpush1.bf16.msra.mxu0 %v3060
    %4979 = vmatprep.subr.bf16.mxu0 %v3069
    %4980 = vmatpush1.bf16.msra.mxu0 %v3068
    %4981 = vmatprep.subr.bf16.mxu0 %v3077
    %4982 = vmatpush1.bf16.msra.mxu0 %v3076
    %4983 = vmatprep.subr.bf16.mxu0 %v3085
    %4984 = vmatpush1.bf16.msra.mxu0 %v3084
    %4985 = vmatprep.mubr.bf16.mxu0 %v367
    %4986 = vmatmul.mubr.bf16.gmra.mrb[0].mxu0 %v366
    %v4987 = vpop.f32.mrb[0].mxu0
    %v4988 = vadd.f32 %v4795, %v4987
    %v4989 = vpop.f32.mrb[0].mxu0
    %v4990 = vadd.f32 %v4797, %v4989
    %v4991 = vpop.f32.mrb[0].mxu0
    %v4992 = vadd.f32 %v4799, %v4991
    %v4993 = vpop.f32.mrb[0].mxu0
    %v4994 = vadd.f32 %v4801, %v4993
    %4995 = vmatprep.mubr.bf16.mxu0 %v375
    %4996 = vmatmul.mubr.bf16.gmra.mrb[0].mxu0 %v374
    %v4997 = vpop.f32.mrb[0].mxu0
    %v4998 = vadd.f32 %v4805, %v4997
    %v4999 = vpop.f32.mrb[0].mxu0
    %v5000 = vadd.f32 %v4807, %v4999
    %v5001 = vpop.f32.mrb[0].mxu0
    %v5002 = vadd.f32 %v4809, %v5001
    %v5003 = vpop.f32.mrb[0].mxu0
    %v5004 = vadd.f32 %v4811, %v5003
    %5005 = vmatprep.mubr.bf16.mxu0 %v383
    %5006 = vmatmul.mubr.bf16.gmra.mrb[0].mxu0 %v382
    %v5007 = vpop.f32.mrb[0].mxu0
    %v5008 = vadd.f32 %v4815, %v5007
    %v5009 = vpop.f32.mrb[0].mxu0
    %v5010 = vadd.f32 %v4817, %v5009
    %v5011 = vpop.f32.mrb[0].mxu0
    %v5012 = vadd.f32 %v4819, %v5011
    %v5013 = vpop.f32.mrb[0].mxu0
    %v5014 = vadd.f32 %v4821, %v5013
    %5015 = vmatprep.mubr.bf16.mxu0 %v391
    %5016 = vmatmul.mubr.bf16.gmra.mrb[0].mxu0 %v390
    %v5017 = vpop.f32.mrb[0].mxu0
    %v5018 = vadd.f32 %v4825, %v5017
    %v5019 = vpop.f32.mrb[0].mxu0
    %v5020 = vadd.f32 %v4827, %v5019
    %v5021 = vpop.f32.mrb[0].mxu0
    %v5022 = vadd.f32 %v4829, %v5021
    %v5023 = vpop.f32.mrb[0].mxu0
    %v5024 = vadd.f32 %v4831, %v5023
    %5025 = vmatprep.mubr.bf16.mxu0 %v399
    %5026 = vmatmul.mubr.bf16.gmra.mrb[0].mxu0 %v398
    %v5027 = vpop.f32.mrb[0].mxu0
    %v5028 = vadd.f32 %v4835, %v5027
    %v5029 = vpop.f32.mrb[0].mxu0
    %v5030 = vadd.f32 %v4837, %v5029
    %v5031 = vpop.f32.mrb[0].mxu0
    %v5032 = vadd.f32 %v4839, %v5031
    %v5033 = vpop.f32.mrb[0].mxu0
    %v5034 = vadd.f32 %v4841, %v5033
    %5035 = vmatprep.mubr.bf16.mxu0 %v407
    %5036 = vmatmul.mubr.bf16.gmra.mrb[0].mxu0 %v406
    %v5037 = vpop.f32.mrb[0].mxu0
    %v5038 = vadd.f32 %v4845, %v5037
    %v5039 = vpop.f32.mrb[0].mxu0
    %v5040 = vadd.f32 %v4847, %v5039
    %v5041 = vpop.f32.mrb[0].mxu0
    %v5042 = vadd.f32 %v4849, %v5041
    %v5043 = vpop.f32.mrb[0].mxu0
    %v5044 = vadd.f32 %v4851, %v5043
    %5045 = vmatprep.mubr.bf16.mxu0 %v415
    %5046 = vmatmul.mubr.bf16.gmra.mrb[0].mxu0 %v414
    %v5047 = vpop.f32.mrb[0].mxu0
    %v5048 = vadd.f32 %v4855, %v5047
    %v5049 = vpop.f32.mrb[0].mxu0
    %v5050 = vadd.f32 %v4857, %v5049
    %v5051 = vpop.f32.mrb[0].mxu0
    %v5052 = vadd.f32 %v4859, %v5051
    %v5053 = vpop.f32.mrb[0].mxu0
    %v5054 = vadd.f32 %v4861, %v5053
    %5055 = vmatprep.mubr.bf16.mxu0 %v423
    %5056 = vmatmul.mubr.bf16.gmra.mrb[0].mxu0 %v422
    %v5057 = vpop.f32.mrb[0].mxu0
    %v5058 = vadd.f32 %v4865, %v5057
    %v5059 = vpop.f32.mrb[0].mxu0
    %v5060 = vadd.f32 %v4867, %v5059
    %v5061 = vpop.f32.mrb[0].mxu0
    %v5062 = vadd.f32 %v4869, %v5061
    %v5063 = vpop.f32.mrb[0].mxu0
    %v5064 = vadd.f32 %v4871, %v5063
    %5065 = vmatprep.mubr.bf16.mxu0 %v431
    %5066 = vmatmul.mubr.bf16.gmra.mrb[0].mxu0 %v430
    %v5067 = vpop.f32.mrb[0].mxu0
    %v5068 = vadd.f32 %v4875, %v5067
    %v5069 = vpop.f32.mrb[0].mxu0
    %v5070 = vadd.f32 %v4877, %v5069
    %v5071 = vpop.f32.mrb[0].mxu0
    %v5072 = vadd.f32 %v4879, %v5071
    %v5073 = vpop.f32.mrb[0].mxu0
    %v5074 = vadd.f32 %v4881, %v5073
    %5075 = vmatprep.mubr.bf16.mxu0 %v439
    %5076 = vmatmul.mubr.bf16.gmra.mrb[0].mxu0 %v438
    %v5077 = vpop.f32.mrb[0].mxu0
    %v5078 = vadd.f32 %v4885, %v5077
    %v5079 = vpop.f32.mrb[0].mxu0
    %v5080 = vadd.f32 %v4887, %v5079
    %v5081 = vpop.f32.mrb[0].mxu0
    %v5082 = vadd.f32 %v4889, %v5081
    %v5083 = vpop.f32.mrb[0].mxu0
    %v5084 = vadd.f32 %v4891, %v5083
    %5085 = vmatprep.mubr.bf16.mxu0 %v447
    %5086 = vmatmul.mubr.bf16.gmra.mrb[0].mxu0 %v446
    %v5087 = vpop.f32.mrb[0].mxu0
    %v5088 = vadd.f32 %v4895, %v5087
    %v5089 = vpop.f32.mrb[0].mxu0
    %v5090 = vadd.f32 %v4897, %v5089
    %v5091 = vpop.f32.mrb[0].mxu0
    %v5092 = vadd.f32 %v4899, %v5091
    %v5093 = vpop.f32.mrb[0].mxu0
    %v5094 = vadd.f32 %v4901, %v5093
    %5095 = vmatprep.mubr.bf16.mxu0 %v455
    %5096 = vmatmul.mubr.bf16.gmra.mrb[0].mxu0 %v454
    %v5097 = vpop.f32.mrb[0].mxu0
    %v5098 = vadd.f32 %v4905, %v5097
    %v5099 = vpop.f32.mrb[0].mxu0
    %v5100 = vadd.f32 %v4907, %v5099
    %v5101 = vpop.f32.mrb[0].mxu0
    %v5102 = vadd.f32 %v4909, %v5101
    %v5103 = vpop.f32.mrb[0].mxu0
    %v5104 = vadd.f32 %v4911, %v5103
    %5105 = vmatprep.mubr.bf16.mxu0 %v463
    %5106 = vmatmul.mubr.bf16.gmra.mrb[0].mxu0 %v462
    %v5107 = vpop.f32.mrb[0].mxu0
    %v5108 = vadd.f32 %v4915, %v5107
    %v5109 = vpop.f32.mrb[0].mxu0
    %v5110 = vadd.f32 %v4917, %v5109
    %v5111 = vpop.f32.mrb[0].mxu0
    %v5112 = vadd.f32 %v4919, %v5111
    %v5113 = vpop.f32.mrb[0].mxu0
    %v5114 = vadd.f32 %v4921, %v5113
    %5115 = vmatprep.mubr.bf16.mxu0 %v471
    %5116 = vmatmul.mubr.bf16.gmra.mrb[0].mxu0 %v470
    %v5117 = vpop.f32.mrb[0].mxu0
    %v5118 = vadd.f32 %v4925, %v5117
    %v5119 = vpop.f32.mrb[0].mxu0
    %v5120 = vadd.f32 %v4927, %v5119
    %v5121 = vpop.f32.mrb[0].mxu0
    %v5122 = vadd.f32 %v4929, %v5121
    %v5123 = vpop.f32.mrb[0].mxu0
    %v5124 = vadd.f32 %v4931, %v5123
    %5125 = vmatprep.mubr.bf16.mxu0 %v479
    %5126 = vmatmul.mubr.bf16.gmra.mrb[0].mxu0 %v478
    %v5127 = vpop.f32.mrb[0].mxu0
    %v5128 = vadd.f32 %v4935, %v5127
    %v5129 = vpop.f32.mrb[0].mxu0
    %v5130 = vadd.f32 %v4937, %v5129
    %v5131 = vpop.f32.mrb[0].mxu0
    %v5132 = vadd.f32 %v4939, %v5131
    %v5133 = vpop.f32.mrb[0].mxu0
    %v5134 = vadd.f32 %v4941, %v5133
    %5135 = vmatprep.mubr.bf16.mxu0 %v487
    %5136 = vmatmul.mubr.bf16.gmra.mrb[0].mxu0 %v486
    %v5137 = vpop.f32.mrb[0].mxu0
    %v5138 = vadd.f32 %v4945, %v5137
    %v5139 = vpop.f32.mrb[0].mxu0
    %v5140 = vadd.f32 %v4947, %v5139
    %v5141 = vpop.f32.mrb[0].mxu0
    %v5142 = vadd.f32 %v4949, %v5141
    %v5143 = vpop.f32.mrb[0].mxu0
    %v5144 = vadd.f32 %v4951, %v5143
    %5145 = vdwg.mxu0
    %5146 = vmatprep.subr.bf16.mxu0 %v2583
    %5147 = vmatpush1.bf16.msra.mxu0 %v2582
    %5148 = vmatprep.subr.bf16.mxu0 %v2591
    %5149 = vmatpush1.bf16.msra.mxu0 %v2590
    %5150 = vmatprep.subr.bf16.mxu0 %v2599
    %5151 = vmatpush1.bf16.msra.mxu0 %v2598
    %5152 = vmatprep.subr.bf16.mxu0 %v2607
    %5153 = vmatpush1.bf16.msra.mxu0 %v2606
    %5154 = vmatprep.subr.bf16.mxu0 %v2615
    %5155 = vmatpush1.bf16.msra.mxu0 %v2614
    %5156 = vmatprep.subr.bf16.mxu0 %v2623
    %5157 = vmatpush1.bf16.msra.mxu0 %v2622
    %5158 = vmatprep.subr.bf16.mxu0 %v2631
    %5159 = vmatpush1.bf16.msra.mxu0 %v2630
    %5160 = vmatprep.subr.bf16.mxu0 %v2639
    %5161 = vmatpush1.bf16.msra.mxu0 %v2638
    %5162 = vmatprep.subr.bf16.mxu0 %v2647
    %5163 = vmatpush1.bf16.msra.mxu0 %v2646
    %5164 = vmatprep.subr.bf16.mxu0 %v2655
    %5165 = vmatpush1.bf16.msra.mxu0 %v2654
    %5166 = vmatprep.subr.bf16.mxu0 %v2663
    %5167 = vmatpush1.bf16.msra.mxu0 %v2662
    %5168 = vmatprep.subr.bf16.mxu0 %v2671
    %5169 = vmatpush1.bf16.msra.mxu0 %v2670
    %5170 = vmatprep.subr.bf16.mxu0 %v2679
    %5171 = vmatpush1.bf16.msra.mxu0 %v2678
    %5172 = vmatprep.subr.bf16.mxu0 %v2687
    %5173 = vmatpush1.bf16.msra.mxu0 %v2686
    %5174 = vmatprep.subr.bf16.mxu0 %v2695
    %5175 = vmatpush1.bf16.msra.mxu0 %v2694
    %5176 = vmatprep.subr.bf16.mxu0 %v2703
    %5177 = vmatpush1.bf16.msra.mxu0 %v2702
    %5178 = vmatprep.mubr.bf16.mxu0 %v361
    %5179 = vmatmul.mubr.bf16.gmra.mrb[0].mxu0 %v360
    %v5180 = vpop.f32.mrb[0].mxu0
    %v5181 = vadd.f32 %v1021, %v5180
    %v5182 = vpop.f32.mrb[0].mxu0
    %v5183 = vadd.f32 %v1025, %v5182
    %v5184 = vpop.f32.mrb[0].mxu0
    %v5185 = vadd.f32 %v1021, %v5184
    %v5186 = vpop.f32.mrb[0].mxu0
    %v5187 = vadd.f32 %v1025, %v5186
    %5188 = vmatprep.mubr.bf16.mxu0 %v369
    %5189 = vmatmul.mubr.bf16.gmra.mrb[0].mxu0 %v368
    %v5190 = vpop.f32.mrb[0].mxu0
    %v5191 = vadd.f32 %v1021, %v5190
    %v5192 = vpop.f32.mrb[0].mxu0
    %v5193 = vadd.f32 %v1025, %v5192
    %v5194 = vpop.f32.mrb[0].mxu0
    %v5195 = vadd.f32 %v1021, %v5194
    %v5196 = vpop.f32.mrb[0].mxu0
    %v5197 = vadd.f32 %v1025, %v5196
    %5198 = vmatprep.mubr.bf16.mxu0 %v377
    %5199 = vmatmul.mubr.bf16.gmra.mrb[0].mxu0 %v376
    %v5200 = vpop.f32.mrb[0].mxu0
    %v5201 = vadd.f32 %v1021, %v5200
    %v5202 = vpop.f32.mrb[0].mxu0
    %v5203 = vadd.f32 %v1025, %v5202
    %v5204 = vpop.f32.mrb[0].mxu0
    %v5205 = vadd.f32 %v1021, %v5204
    %v5206 = vpop.f32.mrb[0].mxu0
    %v5207 = vadd.f32 %v1025, %v5206
    %5208 = vmatprep.mubr.bf16.mxu0 %v385
    %5209 = vmatmul.mubr.bf16.gmra.mrb[0].mxu0 %v384
    %v5210 = vpop.f32.mrb[0].mxu0
    %v5211 = vadd.f32 %v1021, %v5210
    %v5212 = vpop.f32.mrb[0].mxu0
    %v5213 = vadd.f32 %v1025, %v5212
    %v5214 = vpop.f32.mrb[0].mxu0
    %v5215 = vadd.f32 %v1021, %v5214
    %v5216 = vpop.f32.mrb[0].mxu0
    %v5217 = vadd.f32 %v1025, %v5216
    %5218 = vmatprep.mubr.bf16.mxu0 %v393
    %5219 = vmatmul.mubr.bf16.gmra.mrb[0].mxu0 %v392
    %v5220 = vpop.f32.mrb[0].mxu0
    %v5221 = vadd.f32 %v1021, %v5220
    %v5222 = vpop.f32.mrb[0].mxu0
    %v5223 = vadd.f32 %v1025, %v5222
    %v5224 = vpop.f32.mrb[0].mxu0
    %v5225 = vadd.f32 %v1021, %v5224
    %v5226 = vpop.f32.mrb[0].mxu0
    %v5227 = vadd.f32 %v1025, %v5226
    %5228 = vmatprep.mubr.bf16.mxu0 %v401
    %5229 = vmatmul.mubr.bf16.gmra.mrb[0].mxu0 %v400
    %v5230 = vpop.f32.mrb[0].mxu0
    %v5231 = vadd.f32 %v1021, %v5230
    %v5232 = vpop.f32.mrb[0].mxu0
    %v5233 = vadd.f32 %v1025, %v5232
    %v5234 = vpop.f32.mrb[0].mxu0
    %v5235 = vadd.f32 %v1021, %v5234
    %v5236 = vpop.f32.mrb[0].mxu0
    %v5237 = vadd.f32 %v1025, %v5236
    %5238 = vmatprep.mubr.bf16.mxu0 %v409
    %5239 = vmatmul.mubr.bf16.gmra.mrb[0].mxu0 %v408
    %v5240 = vpop.f32.mrb[0].mxu0
    %v5241 = vadd.f32 %v1021, %v5240
    %v5242 = vpop.f32.mrb[0].mxu0
    %v5243 = vadd.f32 %v1025, %v5242
    %v5244 = vpop.f32.mrb[0].mxu0
    %v5245 = vadd.f32 %v1021, %v5244
    %v5246 = vpop.f32.mrb[0].mxu0
    %v5247 = vadd.f32 %v1025, %v5246
    %5248 = vmatprep.mubr.bf16.mxu0 %v417
    %5249 = vmatmul.mubr.bf16.gmra.mrb[0].mxu0 %v416
    %v5250 = vpop.f32.mrb[0].mxu0
    %v5251 = vadd.f32 %v1021, %v5250
    %v5252 = vpop.f32.mrb[0].mxu0
    %v5253 = vadd.f32 %v1025, %v5252
    %v5254 = vpop.f32.mrb[0].mxu0
    %v5255 = vadd.f32 %v1021, %v5254
    %v5256 = vpop.f32.mrb[0].mxu0
    %v5257 = vadd.f32 %v1025, %v5256
    %5258 = vmatprep.mubr.bf16.mxu0 %v425
    %5259 = vmatmul.mubr.bf16.gmra.mrb[0].mxu0 %v424
    %v5260 = vpop.f32.mrb[0].mxu0
    %v5261 = vadd.f32 %v1021, %v5260
    %v5262 = vpop.f32.mrb[0].mxu0
    %v5263 = vadd.f32 %v1025, %v5262
    %v5264 = vpop.f32.mrb[0].mxu0
    %v5265 = vadd.f32 %v1021, %v5264
    %v5266 = vpop.f32.mrb[0].mxu0
    %v5267 = vadd.f32 %v1025, %v5266
    %5268 = vmatprep.mubr.bf16.mxu0 %v433
    %5269 = vmatmul.mubr.bf16.gmra.mrb[0].mxu0 %v432
    %v5270 = vpop.f32.mrb[0].mxu0
    %v5271 = vadd.f32 %v1021, %v5270
    %v5272 = vpop.f32.mrb[0].mxu0
    %v5273 = vadd.f32 %v1025, %v5272
    %v5274 = vpop.f32.mrb[0].mxu0
    %v5275 = vadd.f32 %v1021, %v5274
    %v5276 = vpop.f32.mrb[0].mxu0
    %v5277 = vadd.f32 %v1025, %v5276
    %5278 = vmatprep.mubr.bf16.mxu0 %v441
    %5279 = vmatmul.mubr.bf16.gmra.mrb[0].mxu0 %v440
    %v5280 = vpop.f32.mrb[0].mxu0
    %v5281 = vadd.f32 %v1021, %v5280
    %v5282 = vpop.f32.mrb[0].mxu0
    %v5283 = vadd.f32 %v1025, %v5282
    %v5284 = vpop.f32.mrb[0].mxu0
    %v5285 = vadd.f32 %v1021, %v5284
    %v5286 = vpop.f32.mrb[0].mxu0
    %v5287 = vadd.f32 %v1025, %v5286
    %5288 = vmatprep.mubr.bf16.mxu0 %v449
    %5289 = vmatmul.mubr.bf16.gmra.mrb[0].mxu0 %v448
    %v5290 = vpop.f32.mrb[0].mxu0
    %v5291 = vadd.f32 %v1021, %v5290
    %v5292 = vpop.f32.mrb[0].mxu0
    %v5293 = vadd.f32 %v1025, %v5292
    %v5294 = vpop.f32.mrb[0].mxu0
    %v5295 = vadd.f32 %v1021, %v5294
    %v5296 = vpop.f32.mrb[0].mxu0
    %v5297 = vadd.f32 %v1025, %v5296
    %5298 = vmatprep.mubr.bf16.mxu0 %v457
    %5299 = vmatmul.mubr.bf16.gmra.mrb[0].mxu0 %v456
    %v5300 = vpop.f32.mrb[0].mxu0
    %v5301 = vadd.f32 %v1021, %v5300
    %v5302 = vpop.f32.mrb[0].mxu0
    %v5303 = vadd.f32 %v1025, %v5302
    %v5304 = vpop.f32.mrb[0].mxu0
    %v5305 = vadd.f32 %v1021, %v5304
    %v5306 = vpop.f32.mrb[0].mxu0
    %v5307 = vadd.f32 %v1025, %v5306
    %5308 = vmatprep.mubr.bf16.mxu0 %v465
    %5309 = vmatmul.mubr.bf16.gmra.mrb[0].mxu0 %v464
    %v5310 = vpop.f32.mrb[0].mxu0
    %v5311 = vadd.f32 %v1021, %v5310
    %v5312 = vpop.f32.mrb[0].mxu0
    %v5313 = vadd.f32 %v1025, %v5312
    %v5314 = vpop.f32.mrb[0].mxu0
    %v5315 = vadd.f32 %v1021, %v5314
    %v5316 = vpop.f32.mrb[0].mxu0
    %v5317 = vadd.f32 %v1025, %v5316
    %5318 = vmatprep.mubr.bf16.mxu0 %v473
    %5319 = vmatmul.mubr.bf16.gmra.mrb[0].mxu0 %v472
    %v5320 = vpop.f32.mrb[0].mxu0
    %v5321 = vadd.f32 %v1021, %v5320
    %v5322 = vpop.f32.mrb[0].mxu0
    %v5323 = vadd.f32 %v1025, %v5322
    %v5324 = vpop.f32.mrb[0].mxu0
    %v5325 = vadd.f32 %v1021, %v5324
    %v5326 = vpop.f32.mrb[0].mxu0
    %v5327 = vadd.f32 %v1025, %v5326
    %5328 = vmatprep.mubr.bf16.mxu0 %v481
    %5329 = vmatmul.mubr.bf16.gmra.mrb[0].mxu0 %v480
    %v5330 = vpop.f32.mrb[0].mxu0
    %v5331 = vadd.f32 %v1021, %v5330
    %v5332 = vpop.f32.mrb[0].mxu0
    %v5333 = vadd.f32 %v1025, %v5332
    %v5334 = vpop.f32.mrb[0].mxu0
    %v5335 = vadd.f32 %v1021, %v5334
    %v5336 = vpop.f32.mrb[0].mxu0
    %v5337 = vadd.f32 %v1025, %v5336
    %5338 = vdwg.mxu0
    %5339 = vmatprep.subr.bf16.mxu0 %v2711
    %5340 = vmatpush1.bf16.msra.mxu0 %v2710
    %5341 = vmatprep.subr.bf16.mxu0 %v2719
    %5342 = vmatpush1.bf16.msra.mxu0 %v2718
    %5343 = vmatprep.subr.bf16.mxu0 %v2727
    %5344 = vmatpush1.bf16.msra.mxu0 %v2726
    %5345 = vmatprep.subr.bf16.mxu0 %v2735
    %5346 = vmatpush1.bf16.msra.mxu0 %v2734
    %5347 = vmatprep.subr.bf16.mxu0 %v2743
    %5348 = vmatpush1.bf16.msra.mxu0 %v2742
    %5349 = vmatprep.subr.bf16.mxu0 %v2751
    %5350 = vmatpush1.bf16.msra.mxu0 %v2750
    %5351 = vmatprep.subr.bf16.mxu0 %v2759
    %5352 = vmatpush1.bf16.msra.mxu0 %v2758
    %5353 = vmatprep.subr.bf16.mxu0 %v2767
    %5354 = vmatpush1.bf16.msra.mxu0 %v2766
    %5355 = vmatprep.subr.bf16.mxu0 %v2775
    %5356 = vmatpush1.bf16.msra.mxu0 %v2774
    %5357 = vmatprep.subr.bf16.mxu0 %v2783
    %5358 = vmatpush1.bf16.msra.mxu0 %v2782
    %5359 = vmatprep.subr.bf16.mxu0 %v2791
    %5360 = vmatpush1.bf16.msra.mxu0 %v2790
    %5361 = vmatprep.subr.bf16.mxu0 %v2799
    %5362 = vmatpush1.bf16.msra.mxu0 %v2798
    %5363 = vmatprep.subr.bf16.mxu0 %v2807
    %5364 = vmatpush1.bf16.msra.mxu0 %v2806
    %5365 = vmatprep.subr.bf16.mxu0 %v2815
    %5366 = vmatpush1.bf16.msra.mxu0 %v2814
    %5367 = vmatprep.subr.bf16.mxu0 %v2823
    %5368 = vmatpush1.bf16.msra.mxu0 %v2822
    %5369 = vmatprep.subr.bf16.mxu0 %v2831
    %5370 = vmatpush1.bf16.msra.mxu0 %v2830
    %5371 = vmatprep.mubr.bf16.mxu0 %v363
    %5372 = vmatmul.mubr.bf16.gmra.mrb[0].mxu0 %v362
    %v5373 = vpop.f32.mrb[0].mxu0
    %v5374 = vadd.f32 %v5181, %v5373
    %v5375 = vpop.f32.mrb[0].mxu0
    %v5376 = vadd.f32 %v5183, %v5375
    %v5377 = vpop.f32.mrb[0].mxu0
    %v5378 = vadd.f32 %v5185, %v5377
    %v5379 = vpop.f32.mrb[0].mxu0
    %v5380 = vadd.f32 %v5187, %v5379
    %5381 = vmatprep.mubr.bf16.mxu0 %v371
    %5382 = vmatmul.mubr.bf16.gmra.mrb[0].mxu0 %v370
    %v5383 = vpop.f32.mrb[0].mxu0
    %v5384 = vadd.f32 %v5191, %v5383
    %v5385 = vpop.f32.mrb[0].mxu0
    %v5386 = vadd.f32 %v5193, %v5385
    %v5387 = vpop.f32.mrb[0].mxu0
    %v5388 = vadd.f32 %v5195, %v5387
    %v5389 = vpop.f32.mrb[0].mxu0
    %v5390 = vadd.f32 %v5197, %v5389
    %5391 = vmatprep.mubr.bf16.mxu0 %v379
    %5392 = vmatmul.mubr.bf16.gmra.mrb[0].mxu0 %v378
    %v5393 = vpop.f32.mrb[0].mxu0
    %v5394 = vadd.f32 %v5201, %v5393
    %v5395 = vpop.f32.mrb[0].mxu0
    %v5396 = vadd.f32 %v5203, %v5395
    %v5397 = vpop.f32.mrb[0].mxu0
    %v5398 = vadd.f32 %v5205, %v5397
    %v5399 = vpop.f32.mrb[0].mxu0
    %v5400 = vadd.f32 %v5207, %v5399
    %5401 = vmatprep.mubr.bf16.mxu0 %v387
    %5402 = vmatmul.mubr.bf16.gmra.mrb[0].mxu0 %v386
    %v5403 = vpop.f32.mrb[0].mxu0
    %v5404 = vadd.f32 %v5211, %v5403
    %v5405 = vpop.f32.mrb[0].mxu0
    %v5406 = vadd.f32 %v5213, %v5405
    %v5407 = vpop.f32.mrb[0].mxu0
    %v5408 = vadd.f32 %v5215, %v5407
    %v5409 = vpop.f32.mrb[0].mxu0
    %v5410 = vadd.f32 %v5217, %v5409
    %5411 = vmatprep.mubr.bf16.mxu0 %v395
    %5412 = vmatmul.mubr.bf16.gmra.mrb[0].mxu0 %v394
    %v5413 = vpop.f32.mrb[0].mxu0
    %v5414 = vadd.f32 %v5221, %v5413
    %v5415 = vpop.f32.mrb[0].mxu0
    %v5416 = vadd.f32 %v5223, %v5415
    %v5417 = vpop.f32.mrb[0].mxu0
    %v5418 = vadd.f32 %v5225, %v5417
    %v5419 = vpop.f32.mrb[0].mxu0
    %v5420 = vadd.f32 %v5227, %v5419
    %5421 = vmatprep.mubr.bf16.mxu0 %v403
    %5422 = vmatmul.mubr.bf16.gmra.mrb[0].mxu0 %v402
    %v5423 = vpop.f32.mrb[0].mxu0
    %v5424 = vadd.f32 %v5231, %v5423
    %v5425 = vpop.f32.mrb[0].mxu0
    %v5426 = vadd.f32 %v5233, %v5425
    %v5427 = vpop.f32.mrb[0].mxu0
    %v5428 = vadd.f32 %v5235, %v5427
    %v5429 = vpop.f32.mrb[0].mxu0
    %v5430 = vadd.f32 %v5237, %v5429
    %5431 = vmatprep.mubr.bf16.mxu0 %v411
    %5432 = vmatmul.mubr.bf16.gmra.mrb[0].mxu0 %v410
    %v5433 = vpop.f32.mrb[0].mxu0
    %v5434 = vadd.f32 %v5241, %v5433
    %v5435 = vpop.f32.mrb[0].mxu0
    %v5436 = vadd.f32 %v5243, %v5435
    %v5437 = vpop.f32.mrb[0].mxu0
    %v5438 = vadd.f32 %v5245, %v5437
    %v5439 = vpop.f32.mrb[0].mxu0
    %v5440 = vadd.f32 %v5247, %v5439
    %5441 = vmatprep.mubr.bf16.mxu0 %v419
    %5442 = vmatmul.mubr.bf16.gmra.mrb[0].mxu0 %v418
    %v5443 = vpop.f32.mrb[0].mxu0
    %v5444 = vadd.f32 %v5251, %v5443
    %v5445 = vpop.f32.mrb[0].mxu0
    %v5446 = vadd.f32 %v5253, %v5445
    %v5447 = vpop.f32.mrb[0].mxu0
    %v5448 = vadd.f32 %v5255, %v5447
    %v5449 = vpop.f32.mrb[0].mxu0
    %v5450 = vadd.f32 %v5257, %v5449
    %5451 = vmatprep.mubr.bf16.mxu0 %v427
    %5452 = vmatmul.mubr.bf16.gmra.mrb[0].mxu0 %v426
    %v5453 = vpop.f32.mrb[0].mxu0
    %v5454 = vadd.f32 %v5261, %v5453
    %v5455 = vpop.f32.mrb[0].mxu0
    %v5456 = vadd.f32 %v5263, %v5455
    %v5457 = vpop.f32.mrb[0].mxu0
    %v5458 = vadd.f32 %v5265, %v5457
    %v5459 = vpop.f32.mrb[0].mxu0
    %v5460 = vadd.f32 %v5267, %v5459
    %5461 = vmatprep.mubr.bf16.mxu0 %v435
    %5462 = vmatmul.mubr.bf16.gmra.mrb[0].mxu0 %v434
    %v5463 = vpop.f32.mrb[0].mxu0
    %v5464 = vadd.f32 %v5271, %v5463
    %v5465 = vpop.f32.mrb[0].mxu0
    %v5466 = vadd.f32 %v5273, %v5465
    %v5467 = vpop.f32.mrb[0].mxu0
    %v5468 = vadd.f32 %v5275, %v5467
    %v5469 = vpop.f32.mrb[0].mxu0
    %v5470 = vadd.f32 %v5277, %v5469
    %5471 = vmatprep.mubr.bf16.mxu0 %v443
    %5472 = vmatmul.mubr.bf16.gmra.mrb[0].mxu0 %v442
    %v5473 = vpop.f32.mrb[0].mxu0
    %v5474 = vadd.f32 %v5281, %v5473
    %v5475 = vpop.f32.mrb[0].mxu0
    %v5476 = vadd.f32 %v5283, %v5475
    %v5477 = vpop.f32.mrb[0].mxu0
    %v5478 = vadd.f32 %v5285, %v5477
    %v5479 = vpop.f32.mrb[0].mxu0
    %v5480 = vadd.f32 %v5287, %v5479
    %5481 = vmatprep.mubr.bf16.mxu0 %v451
    %5482 = vmatmul.mubr.bf16.gmra.mrb[0].mxu0 %v450
    %v5483 = vpop.f32.mrb[0].mxu0
    %v5484 = vadd.f32 %v5291, %v5483
    %v5485 = vpop.f32.mrb[0].mxu0
    %v5486 = vadd.f32 %v5293, %v5485
    %v5487 = vpop.f32.mrb[0].mxu0
    %v5488 = vadd.f32 %v5295, %v5487
    %v5489 = vpop.f32.mrb[0].mxu0
    %v5490 = vadd.f32 %v5297, %v5489
    %5491 = vmatprep.mubr.bf16.mxu0 %v459
    %5492 = vmatmul.mubr.bf16.gmra.mrb[0].mxu0 %v458
    %v5493 = vpop.f32.mrb[0].mxu0
    %v5494 = vadd.f32 %v5301, %v5493
    %v5495 = vpop.f32.mrb[0].mxu0
    %v5496 = vadd.f32 %v5303, %v5495
    %v5497 = vpop.f32.mrb[0].mxu0
    %v5498 = vadd.f32 %v5305, %v5497
    %v5499 = vpop.f32.mrb[0].mxu0
    %v5500 = vadd.f32 %v5307, %v5499
    %5501 = vmatprep.mubr.bf16.mxu0 %v467
    %5502 = vmatmul.mubr.bf16.gmra.mrb[0].mxu0 %v466
    %v5503 = vpop.f32.mrb[0].mxu0
    %v5504 = vadd.f32 %v5311, %v5503
    %v5505 = vpop.f32.mrb[0].mxu0
    %v5506 = vadd.f32 %v5313, %v5505
    %v5507 = vpop.f32.mrb[0].mxu0
    %v5508 = vadd.f32 %v5315, %v5507
    %v5509 = vpop.f32.mrb[0].mxu0
    %v5510 = vadd.f32 %v5317, %v5509
    %5511 = vmatprep.mubr.bf16.mxu0 %v475
    %5512 = vmatmul.mubr.bf16.gmra.mrb[0].mxu0 %v474
    %v5513 = vpop.f32.mrb[0].mxu0
    %v5514 = vadd.f32 %v5321, %v5513
    %v5515 = vpop.f32.mrb[0].mxu0
    %v5516 = vadd.f32 %v5323, %v5515
    %v5517 = vpop.f32.mrb[0].mxu0
    %v5518 = vadd.f32 %v5325, %v5517
    %v5519 = vpop.f32.mrb[0].mxu0
    %v5520 = vadd.f32 %v5327, %v5519
    %5521 = vmatprep.mubr.bf16.mxu0 %v483
    %5522 = vmatmul.mubr.bf16.gmra.mrb[0].mxu0 %v482
    %v5523 = vpop.f32.mrb[0].mxu0
    %v5524 = vadd.f32 %v5331, %v5523
    %v5525 = vpop.f32.mrb[0].mxu0
    %v5526 = vadd.f32 %v5333, %v5525
    %v5527 = vpop.f32.mrb[0].mxu0
    %v5528 = vadd.f32 %v5335, %v5527
    %v5529 = vpop.f32.mrb[0].mxu0
    %v5530 = vadd.f32 %v5337, %v5529
    %5531 = vdwg.mxu0
    %5532 = vmatprep.subr.bf16.mxu0 %v2839
    %5533 = vmatpush1.bf16.msra.mxu0 %v2838
    %5534 = vmatprep.subr.bf16.mxu0 %v2847
    %5535 = vmatpush1.bf16.msra.mxu0 %v2846
    %5536 = vmatprep.subr.bf16.mxu0 %v2855
    %5537 = vmatpush1.bf16.msra.mxu0 %v2854
    %5538 = vmatprep.subr.bf16.mxu0 %v2863
    %5539 = vmatpush1.bf16.msra.mxu0 %v2862
    %5540 = vmatprep.subr.bf16.mxu0 %v2871
    %5541 = vmatpush1.bf16.msra.mxu0 %v2870
    %5542 = vmatprep.subr.bf16.mxu0 %v2879
    %5543 = vmatpush1.bf16.msra.mxu0 %v2878
    %5544 = vmatprep.subr.bf16.mxu0 %v2887
    %5545 = vmatpush1.bf16.msra.mxu0 %v2886
    %5546 = vmatprep.subr.bf16.mxu0 %v2895
    %5547 = vmatpush1.bf16.msra.mxu0 %v2894
    %5548 = vmatprep.subr.bf16.mxu0 %v2903
    %5549 = vmatpush1.bf16.msra.mxu0 %v2902
    %5550 = vmatprep.subr.bf16.mxu0 %v2911
    %5551 = vmatpush1.bf16.msra.mxu0 %v2910
    %5552 = vmatprep.subr.bf16.mxu0 %v2919
    %5553 = vmatpush1.bf16.msra.mxu0 %v2918
    %5554 = vmatprep.subr.bf16.mxu0 %v2927
    %5555 = vmatpush1.bf16.msra.mxu0 %v2926
    %5556 = vmatprep.subr.bf16.mxu0 %v2935
    %5557 = vmatpush1.bf16.msra.mxu0 %v2934
    %5558 = vmatprep.subr.bf16.mxu0 %v2943
    %5559 = vmatpush1.bf16.msra.mxu0 %v2942
    %5560 = vmatprep.subr.bf16.mxu0 %v2951
    %5561 = vmatpush1.bf16.msra.mxu0 %v2950
    %5562 = vmatprep.subr.bf16.mxu0 %v2959
    %5563 = vmatpush1.bf16.msra.mxu0 %v2958
    %5564 = vmatprep.mubr.bf16.mxu0 %v365
    %5565 = vmatmul.mubr.bf16.gmra.mrb[0].mxu0 %v364
    %v5566 = vpop.f32.mrb[0].mxu0
    %v5567 = vadd.f32 %v5374, %v5566
    %v5568 = vpop.f32.mrb[0].mxu0
    %v5569 = vadd.f32 %v5376, %v5568
    %v5570 = vpop.f32.mrb[0].mxu0
    %v5571 = vadd.f32 %v5378, %v5570
    %v5572 = vpop.f32.mrb[0].mxu0
    %v5573 = vadd.f32 %v5380, %v5572
    %5574 = vmatprep.mubr.bf16.mxu0 %v373
    %5575 = vmatmul.mubr.bf16.gmra.mrb[0].mxu0 %v372
    %v5576 = vpop.f32.mrb[0].mxu0
    %v5577 = vadd.f32 %v5384, %v5576
    %v5578 = vpop.f32.mrb[0].mxu0
    %v5579 = vadd.f32 %v5386, %v5578
    %v5580 = vpop.f32.mrb[0].mxu0
    %v5581 = vadd.f32 %v5388, %v5580
    %v5582 = vpop.f32.mrb[0].mxu0
    %v5583 = vadd.f32 %v5390, %v5582
    %5584 = vmatprep.mubr.bf16.mxu0 %v381
    %5585 = vmatmul.mubr.bf16.gmra.mrb[0].mxu0 %v380
    %v5586 = vpop.f32.mrb[0].mxu0
    %v5587 = vadd.f32 %v5394, %v5586
    %v5588 = vpop.f32.mrb[0].mxu0
    %v5589 = vadd.f32 %v5396, %v5588
    %v5590 = vpop.f32.mrb[0].mxu0
    %v5591 = vadd.f32 %v5398, %v5590
    %v5592 = vpop.f32.mrb[0].mxu0
    %v5593 = vadd.f32 %v5400, %v5592
    %5594 = vmatprep.mubr.bf16.mxu0 %v389
    %5595 = vmatmul.mubr.bf16.gmra.mrb[0].mxu0 %v388
    %v5596 = vpop.f32.mrb[0].mxu0
    %v5597 = vadd.f32 %v5404, %v5596
    %v5598 = vpop.f32.mrb[0].mxu0
    %v5599 = vadd.f32 %v5406, %v5598
    %v5600 = vpop.f32.mrb[0].mxu0
    %v5601 = vadd.f32 %v5408, %v5600
    %v5602 = vpop.f32.mrb[0].mxu0
    %v5603 = vadd.f32 %v5410, %v5602
    %5604 = vmatprep.mubr.bf16.mxu0 %v397
    %5605 = vmatmul.mubr.bf16.gmra.mrb[0].mxu0 %v396
    %v5606 = vpop.f32.mrb[0].mxu0
    %v5607 = vadd.f32 %v5414, %v5606
    %v5608 = vpop.f32.mrb[0].mxu0
    %v5609 = vadd.f32 %v5416, %v5608
    %v5610 = vpop.f32.mrb[0].mxu0
    %v5611 = vadd.f32 %v5418, %v5610
    %v5612 = vpop.f32.mrb[0].mxu0
    %v5613 = vadd.f32 %v5420, %v5612
    %5614 = vmatprep.mubr.bf16.mxu0 %v405
    %5615 = vmatmul.mubr.bf16.gmra.mrb[0].mxu0 %v404
    %v5616 = vpop.f32.mrb[0].mxu0
    %v5617 = vadd.f32 %v5424, %v5616
    %v5618 = vpop.f32.mrb[0].mxu0
    %v5619 = vadd.f32 %v5426, %v5618
    %v5620 = vpop.f32.mrb[0].mxu0
    %v5621 = vadd.f32 %v5428, %v5620
    %v5622 = vpop.f32.mrb[0].mxu0
    %v5623 = vadd.f32 %v5430, %v5622
    %5624 = vmatprep.mubr.bf16.mxu0 %v413
    %5625 = vmatmul.mubr.bf16.gmra.mrb[0].mxu0 %v412
    %v5626 = vpop.f32.mrb[0].mxu0
    %v5627 = vadd.f32 %v5434, %v5626
    %v5628 = vpop.f32.mrb[0].mxu0
    %v5629 = vadd.f32 %v5436, %v5628
    %v5630 = vpop.f32.mrb[0].mxu0
    %v5631 = vadd.f32 %v5438, %v5630
    %v5632 = vpop.f32.mrb[0].mxu0
    %v5633 = vadd.f32 %v5440, %v5632
    %5634 = vmatprep.mubr.bf16.mxu0 %v421
    %5635 = vmatmul.mubr.bf16.gmra.mrb[0].mxu0 %v420
    %v5636 = vpop.f32.mrb[0].mxu0
    %v5637 = vadd.f32 %v5444, %v5636
    %v5638 = vpop.f32.mrb[0].mxu0
    %v5639 = vadd.f32 %v5446, %v5638
    %v5640 = vpop.f32.mrb[0].mxu0
    %v5641 = vadd.f32 %v5448, %v5640
    %v5642 = vpop.f32.mrb[0].mxu0
    %v5643 = vadd.f32 %v5450, %v5642
    %5644 = vmatprep.mubr.bf16.mxu0 %v429
    %5645 = vmatmul.mubr.bf16.gmra.mrb[0].mxu0 %v428
    %v5646 = vpop.f32.mrb[0].mxu0
    %v5647 = vadd.f32 %v5454, %v5646
    %v5648 = vpop.f32.mrb[0].mxu0
    %v5649 = vadd.f32 %v5456, %v5648
    %v5650 = vpop.f32.mrb[0].mxu0
    %v5651 = vadd.f32 %v5458, %v5650
    %v5652 = vpop.f32.mrb[0].mxu0
    %v5653 = vadd.f32 %v5460, %v5652
    %5654 = vmatprep.mubr.bf16.mxu0 %v437
    %5655 = vmatmul.mubr.bf16.gmra.mrb[0].mxu0 %v436
    %v5656 = vpop.f32.mrb[0].mxu0
    %v5657 = vadd.f32 %v5464, %v5656
    %v5658 = vpop.f32.mrb[0].mxu0
    %v5659 = vadd.f32 %v5466, %v5658
    %v5660 = vpop.f32.mrb[0].mxu0
    %v5661 = vadd.f32 %v5468, %v5660
    %v5662 = vpop.f32.mrb[0].mxu0
    %v5663 = vadd.f32 %v5470, %v5662
    %5664 = vmatprep.mubr.bf16.mxu0 %v445
    %5665 = vmatmul.mubr.bf16.gmra.mrb[0].mxu0 %v444
    %v5666 = vpop.f32.mrb[0].mxu0
    %v5667 = vadd.f32 %v5474, %v5666
    %v5668 = vpop.f32.mrb[0].mxu0
    %v5669 = vadd.f32 %v5476, %v5668
    %v5670 = vpop.f32.mrb[0].mxu0
    %v5671 = vadd.f32 %v5478, %v5670
    %v5672 = vpop.f32.mrb[0].mxu0
    %v5673 = vadd.f32 %v5480, %v5672
    %5674 = vmatprep.mubr.bf16.mxu0 %v453
    %5675 = vmatmul.mubr.bf16.gmra.mrb[0].mxu0 %v452
    %v5676 = vpop.f32.mrb[0].mxu0
    %v5677 = vadd.f32 %v5484, %v5676
    %v5678 = vpop.f32.mrb[0].mxu0
    %v5679 = vadd.f32 %v5486, %v5678
    %v5680 = vpop.f32.mrb[0].mxu0
    %v5681 = vadd.f32 %v5488, %v5680
    %v5682 = vpop.f32.mrb[0].mxu0
    %v5683 = vadd.f32 %v5490, %v5682
    %5684 = vmatprep.mubr.bf16.mxu0 %v461
    %5685 = vmatmul.mubr.bf16.gmra.mrb[0].mxu0 %v460
    %v5686 = vpop.f32.mrb[0].mxu0
    %v5687 = vadd.f32 %v5494, %v5686
    %v5688 = vpop.f32.mrb[0].mxu0
    %v5689 = vadd.f32 %v5496, %v5688
    %v5690 = vpop.f32.mrb[0].mxu0
    %v5691 = vadd.f32 %v5498, %v5690
    %v5692 = vpop.f32.mrb[0].mxu0
    %v5693 = vadd.f32 %v5500, %v5692
    %5694 = vmatprep.mubr.bf16.mxu0 %v469
    %5695 = vmatmul.mubr.bf16.gmra.mrb[0].mxu0 %v468
    %v5696 = vpop.f32.mrb[0].mxu0
    %v5697 = vadd.f32 %v5504, %v5696
    %v5698 = vpop.f32.mrb[0].mxu0
    %v5699 = vadd.f32 %v5506, %v5698
    %v5700 = vpop.f32.mrb[0].mxu0
    %v5701 = vadd.f32 %v5508, %v5700
    %v5702 = vpop.f32.mrb[0].mxu0
    %v5703 = vadd.f32 %v5510, %v5702
    %5704 = vmatprep.mubr.bf16.mxu0 %v477
    %5705 = vmatmul.mubr.bf16.gmra.mrb[0].mxu0 %v476
    %v5706 = vpop.f32.mrb[0].mxu0
    %v5707 = vadd.f32 %v5514, %v5706
    %v5708 = vpop.f32.mrb[0].mxu0
    %v5709 = vadd.f32 %v5516, %v5708
    %v5710 = vpop.f32.mrb[0].mxu0
    %v5711 = vadd.f32 %v5518, %v5710
    %v5712 = vpop.f32.mrb[0].mxu0
    %v5713 = vadd.f32 %v5520, %v5712
    %5714 = vmatprep.mubr.bf16.mxu0 %v485
    %5715 = vmatmul.mubr.bf16.gmra.mrb[0].mxu0 %v484
    %v5716 = vpop.f32.mrb[0].mxu0
    %v5717 = vadd.f32 %v5524, %v5716
    %v5718 = vpop.f32.mrb[0].mxu0
    %v5719 = vadd.f32 %v5526, %v5718
    %v5720 = vpop.f32.mrb[0].mxu0
    %v5721 = vadd.f32 %v5528, %v5720
    %v5722 = vpop.f32.mrb[0].mxu0
    %v5723 = vadd.f32 %v5530, %v5722
    %5724 = vdwg.mxu0
    %5725 = vmatprep.subr.bf16.mxu0 %v2967
    %5726 = vmatpush1.bf16.msra.mxu0 %v2966
    %5727 = vmatprep.subr.bf16.mxu0 %v2975
    %5728 = vmatpush1.bf16.msra.mxu0 %v2974
    %5729 = vmatprep.subr.bf16.mxu0 %v2983
    %5730 = vmatpush1.bf16.msra.mxu0 %v2982
    %5731 = vmatprep.subr.bf16.mxu0 %v2991
    %5732 = vmatpush1.bf16.msra.mxu0 %v2990
    %5733 = vmatprep.subr.bf16.mxu0 %v2999
    %5734 = vmatpush1.bf16.msra.mxu0 %v2998
    %5735 = vmatprep.subr.bf16.mxu0 %v3007
    %5736 = vmatpush1.bf16.msra.mxu0 %v3006
    %5737 = vmatprep.subr.bf16.mxu0 %v3015
    %5738 = vmatpush1.bf16.msra.mxu0 %v3014
    %5739 = vmatprep.subr.bf16.mxu0 %v3023
    %5740 = vmatpush1.bf16.msra.mxu0 %v3022
    %5741 = vmatprep.subr.bf16.mxu0 %v3031
    %5742 = vmatpush1.bf16.msra.mxu0 %v3030
    %5743 = vmatprep.subr.bf16.mxu0 %v3039
    %5744 = vmatpush1.bf16.msra.mxu0 %v3038
    %5745 = vmatprep.subr.bf16.mxu0 %v3047
    %5746 = vmatpush1.bf16.msra.mxu0 %v3046
    %5747 = vmatprep.subr.bf16.mxu0 %v3055
    %5748 = vmatpush1.bf16.msra.mxu0 %v3054
    %5749 = vmatprep.subr.bf16.mxu0 %v3063
    %5750 = vmatpush1.bf16.msra.mxu0 %v3062
    %5751 = vmatprep.subr.bf16.mxu0 %v3071
    %5752 = vmatpush1.bf16.msra.mxu0 %v3070
    %5753 = vmatprep.subr.bf16.mxu0 %v3079
    %5754 = vmatpush1.bf16.msra.mxu0 %v3078
    %5755 = vmatprep.subr.bf16.mxu0 %v3087
    %5756 = vmatpush1.bf16.msra.mxu0 %v3086
    %5757 = vmatprep.mubr.bf16.mxu0 %v367
    %5758 = vmatmul.mubr.bf16.gmra.mrb[0].mxu0 %v366
    %v5759 = vpop.f32.mrb[0].mxu0
    %v5760 = vadd.f32 %v5567, %v5759
    %v5761 = vpop.f32.mrb[0].mxu0
    %v5762 = vadd.f32 %v5569, %v5761
    %v5763 = vpop.f32.mrb[0].mxu0
    %v5764 = vadd.f32 %v5571, %v5763
    %v5765 = vpop.f32.mrb[0].mxu0
    %v5766 = vadd.f32 %v5573, %v5765
    %5767 = vmatprep.mubr.bf16.mxu0 %v375
    %5768 = vmatmul.mubr.bf16.gmra.mrb[0].mxu0 %v374
    %v5769 = vpop.f32.mrb[0].mxu0
    %v5770 = vadd.f32 %v5577, %v5769
    %v5771 = vpop.f32.mrb[0].mxu0
    %v5772 = vadd.f32 %v5579, %v5771
    %v5773 = vpop.f32.mrb[0].mxu0
    %v5774 = vadd.f32 %v5581, %v5773
    %v5775 = vpop.f32.mrb[0].mxu0
    %v5776 = vadd.f32 %v5583, %v5775
    %5777 = vmatprep.mubr.bf16.mxu0 %v383
    %5778 = vmatmul.mubr.bf16.gmra.mrb[0].mxu0 %v382
    %v5779 = vpop.f32.mrb[0].mxu0
    %v5780 = vadd.f32 %v5587, %v5779
    %v5781 = vpop.f32.mrb[0].mxu0
    %v5782 = vadd.f32 %v5589, %v5781
    %v5783 = vpop.f32.mrb[0].mxu0
    %v5784 = vadd.f32 %v5591, %v5783
    %v5785 = vpop.f32.mrb[0].mxu0
    %v5786 = vadd.f32 %v5593, %v5785
    %5787 = vmatprep.mubr.bf16.mxu0 %v391
    %5788 = vmatmul.mubr.bf16.gmra.mrb[0].mxu0 %v390
    %v5789 = vpop.f32.mrb[0].mxu0
    %v5790 = vadd.f32 %v5597, %v5789
    %v5791 = vpop.f32.mrb[0].mxu0
    %v5792 = vadd.f32 %v5599, %v5791
    %v5793 = vpop.f32.mrb[0].mxu0
    %v5794 = vadd.f32 %v5601, %v5793
    %v5795 = vpop.f32.mrb[0].mxu0
    %v5796 = vadd.f32 %v5603, %v5795
    %5797 = vmatprep.mubr.bf16.mxu0 %v399
    %5798 = vmatmul.mubr.bf16.gmra.mrb[0].mxu0 %v398
    %v5799 = vpop.f32.mrb[0].mxu0
    %v5800 = vadd.f32 %v5607, %v5799
    %v5801 = vpop.f32.mrb[0].mxu0
    %v5802 = vadd.f32 %v5609, %v5801
    %v5803 = vpop.f32.mrb[0].mxu0
    %v5804 = vadd.f32 %v5611, %v5803
    %v5805 = vpop.f32.mrb[0].mxu0
    %v5806 = vadd.f32 %v5613, %v5805
    %5807 = vmatprep.mubr.bf16.mxu0 %v407
    %5808 = vmatmul.mubr.bf16.gmra.mrb[0].mxu0 %v406
    %v5809 = vpop.f32.mrb[0].mxu0
    %v5810 = vadd.f32 %v5617, %v5809
    %v5811 = vpop.f32.mrb[0].mxu0
    %v5812 = vadd.f32 %v5619, %v5811
    %v5813 = vpop.f32.mrb[0].mxu0
    %v5814 = vadd.f32 %v5621, %v5813
    %v5815 = vpop.f32.mrb[0].mxu0
    %v5816 = vadd.f32 %v5623, %v5815
    %5817 = vmatprep.mubr.bf16.mxu0 %v415
    %5818 = vmatmul.mubr.bf16.gmra.mrb[0].mxu0 %v414
    %v5819 = vpop.f32.mrb[0].mxu0
    %v5820 = vadd.f32 %v5627, %v5819
    %v5821 = vpop.f32.mrb[0].mxu0
    %v5822 = vadd.f32 %v5629, %v5821
    %v5823 = vpop.f32.mrb[0].mxu0
    %v5824 = vadd.f32 %v5631, %v5823
    %v5825 = vpop.f32.mrb[0].mxu0
    %v5826 = vadd.f32 %v5633, %v5825
    %5827 = vmatprep.mubr.bf16.mxu0 %v423
    %5828 = vmatmul.mubr.bf16.gmra.mrb[0].mxu0 %v422
    %v5829 = vpop.f32.mrb[0].mxu0
    %v5830 = vadd.f32 %v5637, %v5829
    %v5831 = vpop.f32.mrb[0].mxu0
    %v5832 = vadd.f32 %v5639, %v5831
    %v5833 = vpop.f32.mrb[0].mxu0
    %v5834 = vadd.f32 %v5641, %v5833
    %v5835 = vpop.f32.mrb[0].mxu0
    %v5836 = vadd.f32 %v5643, %v5835
    %5837 = vmatprep.mubr.bf16.mxu0 %v431
    %5838 = vmatmul.mubr.bf16.gmra.mrb[0].mxu0 %v430
    %v5839 = vpop.f32.mrb[0].mxu0
    %v5840 = vadd.f32 %v5647, %v5839
    %v5841 = vpop.f32.mrb[0].mxu0
    %v5842 = vadd.f32 %v5649, %v5841
    %v5843 = vpop.f32.mrb[0].mxu0
    %v5844 = vadd.f32 %v5651, %v5843
    %v5845 = vpop.f32.mrb[0].mxu0
    %v5846 = vadd.f32 %v5653, %v5845
    %5847 = vmatprep.mubr.bf16.mxu0 %v439
    %5848 = vmatmul.mubr.bf16.gmra.mrb[0].mxu0 %v438
    %v5849 = vpop.f32.mrb[0].mxu0
    %v5850 = vadd.f32 %v5657, %v5849
    %v5851 = vpop.f32.mrb[0].mxu0
    %v5852 = vadd.f32 %v5659, %v5851
    %v5853 = vpop.f32.mrb[0].mxu0
    %v5854 = vadd.f32 %v5661, %v5853
    %v5855 = vpop.f32.mrb[0].mxu0
    %v5856 = vadd.f32 %v5663, %v5855
    %5857 = vmatprep.mubr.bf16.mxu0 %v447
    %5858 = vmatmul.mubr.bf16.gmra.mrb[0].mxu0 %v446
    %v5859 = vpop.f32.mrb[0].mxu0
    %v5860 = vadd.f32 %v5667, %v5859
    %v5861 = vpop.f32.mrb[0].mxu0
    %v5862 = vadd.f32 %v5669, %v5861
    %v5863 = vpop.f32.mrb[0].mxu0
    %v5864 = vadd.f32 %v5671, %v5863
    %v5865 = vpop.f32.mrb[0].mxu0
    %v5866 = vadd.f32 %v5673, %v5865
    %5867 = vmatprep.mubr.bf16.mxu0 %v455
    %5868 = vmatmul.mubr.bf16.gmra.mrb[0].mxu0 %v454
    %v5869 = vpop.f32.mrb[0].mxu0
    %v5870 = vadd.f32 %v5677, %v5869
    %v5871 = vpop.f32.mrb[0].mxu0
    %v5872 = vadd.f32 %v5679, %v5871
    %v5873 = vpop.f32.mrb[0].mxu0
    %v5874 = vadd.f32 %v5681, %v5873
    %v5875 = vpop.f32.mrb[0].mxu0
    %v5876 = vadd.f32 %v5683, %v5875
    %5877 = vmatprep.mubr.bf16.mxu0 %v463
    %5878 = vmatmul.mubr.bf16.gmra.mrb[0].mxu0 %v462
    %v5879 = vpop.f32.mrb[0].mxu0
    %v5880 = vadd.f32 %v5687, %v5879
    %v5881 = vpop.f32.mrb[0].mxu0
    %v5882 = vadd.f32 %v5689, %v5881
    %v5883 = vpop.f32.mrb[0].mxu0
    %v5884 = vadd.f32 %v5691, %v5883
    %v5885 = vpop.f32.mrb[0].mxu0
    %v5886 = vadd.f32 %v5693, %v5885
    %5887 = vmatprep.mubr.bf16.mxu0 %v471
    %5888 = vmatmul.mubr.bf16.gmra.mrb[0].mxu0 %v470
    %v5889 = vpop.f32.mrb[0].mxu0
    %v5890 = vadd.f32 %v5697, %v5889
    %v5891 = vpop.f32.mrb[0].mxu0
    %v5892 = vadd.f32 %v5699, %v5891
    %v5893 = vpop.f32.mrb[0].mxu0
    %v5894 = vadd.f32 %v5701, %v5893
    %v5895 = vpop.f32.mrb[0].mxu0
    %v5896 = vadd.f32 %v5703, %v5895
    %5897 = vmatprep.mubr.bf16.mxu0 %v479
    %5898 = vmatmul.mubr.bf16.gmra.mrb[0].mxu0 %v478
    %v5899 = vpop.f32.mrb[0].mxu0
    %v5900 = vadd.f32 %v5707, %v5899
    %v5901 = vpop.f32.mrb[0].mxu0
    %v5902 = vadd.f32 %v5709, %v5901
    %v5903 = vpop.f32.mrb[0].mxu0
    %v5904 = vadd.f32 %v5711, %v5903
    %v5905 = vpop.f32.mrb[0].mxu0
    %v5906 = vadd.f32 %v5713, %v5905
    %5907 = vmatprep.mubr.bf16.mxu0 %v487
    %5908 = vmatmul.mubr.bf16.gmra.mrb[0].mxu0 %v486
    %v5909 = vpop.f32.mrb[0].mxu0
    %v5910 = vadd.f32 %v5717, %v5909
    %v5911 = vpop.f32.mrb[0].mxu0
    %v5912 = vadd.f32 %v5719, %v5911
    %v5913 = vpop.f32.mrb[0].mxu0
    %v5914 = vadd.f32 %v5721, %v5913
    %v5915 = vpop.f32.mrb[0].mxu0
    %v5916 = vadd.f32 %v5723, %v5915
    %5917 = vdwg.mxu0
    %5918 = vmatprep.subr.bf16.mxu0 %v2585
    %5919 = vmatpush1.bf16.msra.mxu0 %v2584
    %5920 = vmatprep.subr.bf16.mxu0 %v2593
    %5921 = vmatpush1.bf16.msra.mxu0 %v2592
    %5922 = vmatprep.subr.bf16.mxu0 %v2601
    %5923 = vmatpush1.bf16.msra.mxu0 %v2600
    %5924 = vmatprep.subr.bf16.mxu0 %v2609
    %5925 = vmatpush1.bf16.msra.mxu0 %v2608
    %5926 = vmatprep.subr.bf16.mxu0 %v2617
    %5927 = vmatpush1.bf16.msra.mxu0 %v2616
    %5928 = vmatprep.subr.bf16.mxu0 %v2625
    %5929 = vmatpush1.bf16.msra.mxu0 %v2624
    %5930 = vmatprep.subr.bf16.mxu0 %v2633
    %5931 = vmatpush1.bf16.msra.mxu0 %v2632
    %5932 = vmatprep.subr.bf16.mxu0 %v2641
    %5933 = vmatpush1.bf16.msra.mxu0 %v2640
    %5934 = vmatprep.subr.bf16.mxu0 %v2649
    %5935 = vmatpush1.bf16.msra.mxu0 %v2648
    %5936 = vmatprep.subr.bf16.mxu0 %v2657
    %5937 = vmatpush1.bf16.msra.mxu0 %v2656
    %5938 = vmatprep.subr.bf16.mxu0 %v2665
    %5939 = vmatpush1.bf16.msra.mxu0 %v2664
    %5940 = vmatprep.subr.bf16.mxu0 %v2673
    %5941 = vmatpush1.bf16.msra.mxu0 %v2672
    %5942 = vmatprep.subr.bf16.mxu0 %v2681
    %5943 = vmatpush1.bf16.msra.mxu0 %v2680
    %5944 = vmatprep.subr.bf16.mxu0 %v2689
    %5945 = vmatpush1.bf16.msra.mxu0 %v2688
    %5946 = vmatprep.subr.bf16.mxu0 %v2697
    %5947 = vmatpush1.bf16.msra.mxu0 %v2696
    %5948 = vmatprep.subr.bf16.mxu0 %v2705
    %5949 = vmatpush1.bf16.msra.mxu0 %v2704
    %5950 = vmatprep.mubr.bf16.mxu0 %v361
    %5951 = vmatmul.mubr.bf16.gmra.mrb[0].mxu0 %v360
    %v5952 = vpop.f32.mrb[0].mxu0
    %v5953 = vadd.f32 %v1029, %v5952
    %v5954 = vpop.f32.mrb[0].mxu0
    %v5955 = vadd.f32 %v1033, %v5954
    %v5956 = vpop.f32.mrb[0].mxu0
    %v5957 = vadd.f32 %v1029, %v5956
    %v5958 = vpop.f32.mrb[0].mxu0
    %v5959 = vadd.f32 %v1033, %v5958
    %5960 = vmatprep.mubr.bf16.mxu0 %v369
    %5961 = vmatmul.mubr.bf16.gmra.mrb[0].mxu0 %v368
    %v5962 = vpop.f32.mrb[0].mxu0
    %v5963 = vadd.f32 %v1029, %v5962
    %v5964 = vpop.f32.mrb[0].mxu0
    %v5965 = vadd.f32 %v1033, %v5964
    %v5966 = vpop.f32.mrb[0].mxu0
    %v5967 = vadd.f32 %v1029, %v5966
    %v5968 = vpop.f32.mrb[0].mxu0
    %v5969 = vadd.f32 %v1033, %v5968
    %5970 = vmatprep.mubr.bf16.mxu0 %v377
    %5971 = vmatmul.mubr.bf16.gmra.mrb[0].mxu0 %v376
    %v5972 = vpop.f32.mrb[0].mxu0
    %v5973 = vadd.f32 %v1029, %v5972
    %v5974 = vpop.f32.mrb[0].mxu0
    %v5975 = vadd.f32 %v1033, %v5974
    %v5976 = vpop.f32.mrb[0].mxu0
    %v5977 = vadd.f32 %v1029, %v5976
    %v5978 = vpop.f32.mrb[0].mxu0
    %v5979 = vadd.f32 %v1033, %v5978
    %5980 = vmatprep.mubr.bf16.mxu0 %v385
    %5981 = vmatmul.mubr.bf16.gmra.mrb[0].mxu0 %v384
    %v5982 = vpop.f32.mrb[0].mxu0
    %v5983 = vadd.f32 %v1029, %v5982
    %v5984 = vpop.f32.mrb[0].mxu0
    %v5985 = vadd.f32 %v1033, %v5984
    %v5986 = vpop.f32.mrb[0].mxu0
    %v5987 = vadd.f32 %v1029, %v5986
    %v5988 = vpop.f32.mrb[0].mxu0
    %v5989 = vadd.f32 %v1033, %v5988
    %5990 = vmatprep.mubr.bf16.mxu0 %v393
    %5991 = vmatmul.mubr.bf16.gmra.mrb[0].mxu0 %v392
    %v5992 = vpop.f32.mrb[0].mxu0
    %v5993 = vadd.f32 %v1029, %v5992
    %v5994 = vpop.f32.mrb[0].mxu0
    %v5995 = vadd.f32 %v1033, %v5994
    %v5996 = vpop.f32.mrb[0].mxu0
    %v5997 = vadd.f32 %v1029, %v5996
    %v5998 = vpop.f32.mrb[0].mxu0
    %v5999 = vadd.f32 %v1033, %v5998
    %6000 = vmatprep.mubr.bf16.mxu0 %v401
    %6001 = vmatmul.mubr.bf16.gmra.mrb[0].mxu0 %v400
    %v6002 = vpop.f32.mrb[0].mxu0
    %v6003 = vadd.f32 %v1029, %v6002
    %v6004 = vpop.f32.mrb[0].mxu0
    %v6005 = vadd.f32 %v1033, %v6004
    %v6006 = vpop.f32.mrb[0].mxu0
    %v6007 = vadd.f32 %v1029, %v6006
    %v6008 = vpop.f32.mrb[0].mxu0
    %v6009 = vadd.f32 %v1033, %v6008
    %6010 = vmatprep.mubr.bf16.mxu0 %v409
    %6011 = vmatmul.mubr.bf16.gmra.mrb[0].mxu0 %v408
    %v6012 = vpop.f32.mrb[0].mxu0
    %v6013 = vadd.f32 %v1029, %v6012
    %v6014 = vpop.f32.mrb[0].mxu0
    %v6015 = vadd.f32 %v1033, %v6014
    %v6016 = vpop.f32.mrb[0].mxu0
    %v6017 = vadd.f32 %v1029, %v6016
    %v6018 = vpop.f32.mrb[0].mxu0
    %v6019 = vadd.f32 %v1033, %v6018
    %6020 = vmatprep.mubr.bf16.mxu0 %v417
    %6021 = vmatmul.mubr.bf16.gmra.mrb[0].mxu0 %v416
    %v6022 = vpop.f32.mrb[0].mxu0
    %v6023 = vadd.f32 %v1029, %v6022
    %v6024 = vpop.f32.mrb[0].mxu0
    %v6025 = vadd.f32 %v1033, %v6024
    %v6026 = vpop.f32.mrb[0].mxu0
    %v6027 = vadd.f32 %v1029, %v6026
    %v6028 = vpop.f32.mrb[0].mxu0
    %v6029 = vadd.f32 %v1033, %v6028
    %6030 = vmatprep.mubr.bf16.mxu0 %v425
    %6031 = vmatmul.mubr.bf16.gmra.mrb[0].mxu0 %v424
    %v6032 = vpop.f32.mrb[0].mxu0
    %v6033 = vadd.f32 %v1029, %v6032
    %v6034 = vpop.f32.mrb[0].mxu0
    %v6035 = vadd.f32 %v1033, %v6034
    %v6036 = vpop.f32.mrb[0].mxu0
    %v6037 = vadd.f32 %v1029, %v6036
    %v6038 = vpop.f32.mrb[0].mxu0
    %v6039 = vadd.f32 %v1033, %v6038
    %6040 = vmatprep.mubr.bf16.mxu0 %v433
    %6041 = vmatmul.mubr.bf16.gmra.mrb[0].mxu0 %v432
    %v6042 = vpop.f32.mrb[0].mxu0
    %v6043 = vadd.f32 %v1029, %v6042
    %v6044 = vpop.f32.mrb[0].mxu0
    %v6045 = vadd.f32 %v1033, %v6044
    %v6046 = vpop.f32.mrb[0].mxu0
    %v6047 = vadd.f32 %v1029, %v6046
    %v6048 = vpop.f32.mrb[0].mxu0
    %v6049 = vadd.f32 %v1033, %v6048
    %6050 = vmatprep.mubr.bf16.mxu0 %v441
    %6051 = vmatmul.mubr.bf16.gmra.mrb[0].mxu0 %v440
    %v6052 = vpop.f32.mrb[0].mxu0
    %v6053 = vadd.f32 %v1029, %v6052
    %v6054 = vpop.f32.mrb[0].mxu0
    %v6055 = vadd.f32 %v1033, %v6054
    %v6056 = vpop.f32.mrb[0].mxu0
    %v6057 = vadd.f32 %v1029, %v6056
    %v6058 = vpop.f32.mrb[0].mxu0
    %v6059 = vadd.f32 %v1033, %v6058
    %6060 = vmatprep.mubr.bf16.mxu0 %v449
    %6061 = vmatmul.mubr.bf16.gmra.mrb[0].mxu0 %v448
    %v6062 = vpop.f32.mrb[0].mxu0
    %v6063 = vadd.f32 %v1029, %v6062
    %v6064 = vpop.f32.mrb[0].mxu0
    %v6065 = vadd.f32 %v1033, %v6064
    %v6066 = vpop.f32.mrb[0].mxu0
    %v6067 = vadd.f32 %v1029, %v6066
    %v6068 = vpop.f32.mrb[0].mxu0
    %v6069 = vadd.f32 %v1033, %v6068
    %6070 = vmatprep.mubr.bf16.mxu0 %v457
    %6071 = vmatmul.mubr.bf16.gmra.mrb[0].mxu0 %v456
    %v6072 = vpop.f32.mrb[0].mxu0
    %v6073 = vadd.f32 %v1029, %v6072
    %v6074 = vpop.f32.mrb[0].mxu0
    %v6075 = vadd.f32 %v1033, %v6074
    %v6076 = vpop.f32.mrb[0].mxu0
    %v6077 = vadd.f32 %v1029, %v6076
    %v6078 = vpop.f32.mrb[0].mxu0
    %v6079 = vadd.f32 %v1033, %v6078
    %6080 = vmatprep.mubr.bf16.mxu0 %v465
    %6081 = vmatmul.mubr.bf16.gmra.mrb[0].mxu0 %v464
    %v6082 = vpop.f32.mrb[0].mxu0
    %v6083 = vadd.f32 %v1029, %v6082
    %v6084 = vpop.f32.mrb[0].mxu0
    %v6085 = vadd.f32 %v1033, %v6084
    %v6086 = vpop.f32.mrb[0].mxu0
    %v6087 = vadd.f32 %v1029, %v6086
    %v6088 = vpop.f32.mrb[0].mxu0
    %v6089 = vadd.f32 %v1033, %v6088
    %6090 = vmatprep.mubr.bf16.mxu0 %v473
    %6091 = vmatmul.mubr.bf16.gmra.mrb[0].mxu0 %v472
    %v6092 = vpop.f32.mrb[0].mxu0
    %v6093 = vadd.f32 %v1029, %v6092
    %v6094 = vpop.f32.mrb[0].mxu0
    %v6095 = vadd.f32 %v1033, %v6094
    %v6096 = vpop.f32.mrb[0].mxu0
    %v6097 = vadd.f32 %v1029, %v6096
    %v6098 = vpop.f32.mrb[0].mxu0
    %v6099 = vadd.f32 %v1033, %v6098
    %6100 = vmatprep.mubr.bf16.mxu0 %v481
    %6101 = vmatmul.mubr.bf16.gmra.mrb[0].mxu0 %v480
    %v6102 = vpop.f32.mrb[0].mxu0
    %v6103 = vadd.f32 %v1029, %v6102
    %v6104 = vpop.f32.mrb[0].mxu0
    %v6105 = vadd.f32 %v1033, %v6104
    %v6106 = vpop.f32.mrb[0].mxu0
    %v6107 = vadd.f32 %v1029, %v6106
    %v6108 = vpop.f32.mrb[0].mxu0
    %v6109 = vadd.f32 %v1033, %v6108
    %6110 = vdwg.mxu0
    %6111 = vmatprep.subr.bf16.mxu0 %v2713
    %6112 = vmatpush1.bf16.msra.mxu0 %v2712
    %6113 = vmatprep.subr.bf16.mxu0 %v2721
    %6114 = vmatpush1.bf16.msra.mxu0 %v2720
    %6115 = vmatprep.subr.bf16.mxu0 %v2729
    %6116 = vmatpush1.bf16.msra.mxu0 %v2728
    %6117 = vmatprep.subr.bf16.mxu0 %v2737
    %6118 = vmatpush1.bf16.msra.mxu0 %v2736
    %6119 = vmatprep.subr.bf16.mxu0 %v2745
    %6120 = vmatpush1.bf16.msra.mxu0 %v2744
    %6121 = vmatprep.subr.bf16.mxu0 %v2753
    %6122 = vmatpush1.bf16.msra.mxu0 %v2752
    %6123 = vmatprep.subr.bf16.mxu0 %v2761
    %6124 = vmatpush1.bf16.msra.mxu0 %v2760
    %6125 = vmatprep.subr.bf16.mxu0 %v2769
    %6126 = vmatpush1.bf16.msra.mxu0 %v2768
    %6127 = vmatprep.subr.bf16.mxu0 %v2777
    %6128 = vmatpush1.bf16.msra.mxu0 %v2776
    %6129 = vmatprep.subr.bf16.mxu0 %v2785
    %6130 = vmatpush1.bf16.msra.mxu0 %v2784
    %6131 = vmatprep.subr.bf16.mxu0 %v2793
    %6132 = vmatpush1.bf16.msra.mxu0 %v2792
    %6133 = vmatprep.subr.bf16.mxu0 %v2801
    %6134 = vmatpush1.bf16.msra.mxu0 %v2800
    %6135 = vmatprep.subr.bf16.mxu0 %v2809
    %6136 = vmatpush1.bf16.msra.mxu0 %v2808
    %6137 = vmatprep.subr.bf16.mxu0 %v2817
    %6138 = vmatpush1.bf16.msra.mxu0 %v2816
    %6139 = vmatprep.subr.bf16.mxu0 %v2825
    %6140 = vmatpush1.bf16.msra.mxu0 %v2824
    %6141 = vmatprep.subr.bf16.mxu0 %v2833
    %6142 = vmatpush1.bf16.msra.mxu0 %v2832
    %6143 = vmatprep.mubr.bf16.mxu0 %v363
    %6144 = vmatmul.mubr.bf16.gmra.mrb[0].mxu0 %v362
    %v6145 = vpop.f32.mrb[0].mxu0
    %v6146 = vadd.f32 %v5953, %v6145
    %v6147 = vpop.f32.mrb[0].mxu0
    %v6148 = vadd.f32 %v5955, %v6147
    %v6149 = vpop.f32.mrb[0].mxu0
    %v6150 = vadd.f32 %v5957, %v6149
    %v6151 = vpop.f32.mrb[0].mxu0
    %v6152 = vadd.f32 %v5959, %v6151
    %6153 = vmatprep.mubr.bf16.mxu0 %v371
    %6154 = vmatmul.mubr.bf16.gmra.mrb[0].mxu0 %v370
    %v6155 = vpop.f32.mrb[0].mxu0
    %v6156 = vadd.f32 %v5963, %v6155
    %v6157 = vpop.f32.mrb[0].mxu0
    %v6158 = vadd.f32 %v5965, %v6157
    %v6159 = vpop.f32.mrb[0].mxu0
    %v6160 = vadd.f32 %v5967, %v6159
    %v6161 = vpop.f32.mrb[0].mxu0
    %v6162 = vadd.f32 %v5969, %v6161
    %6163 = vmatprep.mubr.bf16.mxu0 %v379
    %6164 = vmatmul.mubr.bf16.gmra.mrb[0].mxu0 %v378
    %v6165 = vpop.f32.mrb[0].mxu0
    %v6166 = vadd.f32 %v5973, %v6165
    %v6167 = vpop.f32.mrb[0].mxu0
    %v6168 = vadd.f32 %v5975, %v6167
    %v6169 = vpop.f32.mrb[0].mxu0
    %v6170 = vadd.f32 %v5977, %v6169
    %v6171 = vpop.f32.mrb[0].mxu0
    %v6172 = vadd.f32 %v5979, %v6171
    %6173 = vmatprep.mubr.bf16.mxu0 %v387
    %6174 = vmatmul.mubr.bf16.gmra.mrb[0].mxu0 %v386
    %v6175 = vpop.f32.mrb[0].mxu0
    %v6176 = vadd.f32 %v5983, %v6175
    %v6177 = vpop.f32.mrb[0].mxu0
    %v6178 = vadd.f32 %v5985, %v6177
    %v6179 = vpop.f32.mrb[0].mxu0
    %v6180 = vadd.f32 %v5987, %v6179
    %v6181 = vpop.f32.mrb[0].mxu0
    %v6182 = vadd.f32 %v5989, %v6181
    %6183 = vmatprep.mubr.bf16.mxu0 %v395
    %6184 = vmatmul.mubr.bf16.gmra.mrb[0].mxu0 %v394
    %v6185 = vpop.f32.mrb[0].mxu0
    %v6186 = vadd.f32 %v5993, %v6185
    %v6187 = vpop.f32.mrb[0].mxu0
    %v6188 = vadd.f32 %v5995, %v6187
    %v6189 = vpop.f32.mrb[0].mxu0
    %v6190 = vadd.f32 %v5997, %v6189
    %v6191 = vpop.f32.mrb[0].mxu0
    %v6192 = vadd.f32 %v5999, %v6191
    %6193 = vmatprep.mubr.bf16.mxu0 %v403
    %6194 = vmatmul.mubr.bf16.gmra.mrb[0].mxu0 %v402
    %v6195 = vpop.f32.mrb[0].mxu0
    %v6196 = vadd.f32 %v6003, %v6195
    %v6197 = vpop.f32.mrb[0].mxu0
    %v6198 = vadd.f32 %v6005, %v6197
    %v6199 = vpop.f32.mrb[0].mxu0
    %v6200 = vadd.f32 %v6007, %v6199
    %v6201 = vpop.f32.mrb[0].mxu0
    %v6202 = vadd.f32 %v6009, %v6201
    %6203 = vmatprep.mubr.bf16.mxu0 %v411
    %6204 = vmatmul.mubr.bf16.gmra.mrb[0].mxu0 %v410
    %v6205 = vpop.f32.mrb[0].mxu0
    %v6206 = vadd.f32 %v6013, %v6205
    %v6207 = vpop.f32.mrb[0].mxu0
    %v6208 = vadd.f32 %v6015, %v6207
    %v6209 = vpop.f32.mrb[0].mxu0
    %v6210 = vadd.f32 %v6017, %v6209
    %v6211 = vpop.f32.mrb[0].mxu0
    %v6212 = vadd.f32 %v6019, %v6211
    %6213 = vmatprep.mubr.bf16.mxu0 %v419
    %6214 = vmatmul.mubr.bf16.gmra.mrb[0].mxu0 %v418
    %v6215 = vpop.f32.mrb[0].mxu0
    %v6216 = vadd.f32 %v6023, %v6215
    %v6217 = vpop.f32.mrb[0].mxu0
    %v6218 = vadd.f32 %v6025, %v6217
    %v6219 = vpop.f32.mrb[0].mxu0
    %v6220 = vadd.f32 %v6027, %v6219
    %v6221 = vpop.f32.mrb[0].mxu0
    %v6222 = vadd.f32 %v6029, %v6221
    %6223 = vmatprep.mubr.bf16.mxu0 %v427
    %6224 = vmatmul.mubr.bf16.gmra.mrb[0].mxu0 %v426
    %v6225 = vpop.f32.mrb[0].mxu0
    %v6226 = vadd.f32 %v6033, %v6225
    %v6227 = vpop.f32.mrb[0].mxu0
    %v6228 = vadd.f32 %v6035, %v6227
    %v6229 = vpop.f32.mrb[0].mxu0
    %v6230 = vadd.f32 %v6037, %v6229
    %v6231 = vpop.f32.mrb[0].mxu0
    %v6232 = vadd.f32 %v6039, %v6231
    %6233 = vmatprep.mubr.bf16.mxu0 %v435
    %6234 = vmatmul.mubr.bf16.gmra.mrb[0].mxu0 %v434
    %v6235 = vpop.f32.mrb[0].mxu0
    %v6236 = vadd.f32 %v6043, %v6235
    %v6237 = vpop.f32.mrb[0].mxu0
    %v6238 = vadd.f32 %v6045, %v6237
    %v6239 = vpop.f32.mrb[0].mxu0
    %v6240 = vadd.f32 %v6047, %v6239
    %v6241 = vpop.f32.mrb[0].mxu0
    %v6242 = vadd.f32 %v6049, %v6241
    %6243 = vmatprep.mubr.bf16.mxu0 %v443
    %6244 = vmatmul.mubr.bf16.gmra.mrb[0].mxu0 %v442
    %v6245 = vpop.f32.mrb[0].mxu0
    %v6246 = vadd.f32 %v6053, %v6245
    %v6247 = vpop.f32.mrb[0].mxu0
    %v6248 = vadd.f32 %v6055, %v6247
    %v6249 = vpop.f32.mrb[0].mxu0
    %v6250 = vadd.f32 %v6057, %v6249
    %v6251 = vpop.f32.mrb[0].mxu0
    %v6252 = vadd.f32 %v6059, %v6251
    %6253 = vmatprep.mubr.bf16.mxu0 %v451
    %6254 = vmatmul.mubr.bf16.gmra.mrb[0].mxu0 %v450
    %v6255 = vpop.f32.mrb[0].mxu0
    %v6256 = vadd.f32 %v6063, %v6255
    %v6257 = vpop.f32.mrb[0].mxu0
    %v6258 = vadd.f32 %v6065, %v6257
    %v6259 = vpop.f32.mrb[0].mxu0
    %v6260 = vadd.f32 %v6067, %v6259
    %v6261 = vpop.f32.mrb[0].mxu0
    %v6262 = vadd.f32 %v6069, %v6261
    %6263 = vmatprep.mubr.bf16.mxu0 %v459
    %6264 = vmatmul.mubr.bf16.gmra.mrb[0].mxu0 %v458
    %v6265 = vpop.f32.mrb[0].mxu0
    %v6266 = vadd.f32 %v6073, %v6265
    %v6267 = vpop.f32.mrb[0].mxu0
    %v6268 = vadd.f32 %v6075, %v6267
    %v6269 = vpop.f32.mrb[0].mxu0
    %v6270 = vadd.f32 %v6077, %v6269
    %v6271 = vpop.f32.mrb[0].mxu0
    %v6272 = vadd.f32 %v6079, %v6271
    %6273 = vmatprep.mubr.bf16.mxu0 %v467
    %6274 = vmatmul.mubr.bf16.gmra.mrb[0].mxu0 %v466
    %v6275 = vpop.f32.mrb[0].mxu0
    %v6276 = vadd.f32 %v6083, %v6275
    %v6277 = vpop.f32.mrb[0].mxu0
    %v6278 = vadd.f32 %v6085, %v6277
    %v6279 = vpop.f32.mrb[0].mxu0
    %v6280 = vadd.f32 %v6087, %v6279
    %v6281 = vpop.f32.mrb[0].mxu0
    %v6282 = vadd.f32 %v6089, %v6281
    %6283 = vmatprep.mubr.bf16.mxu0 %v475
    %6284 = vmatmul.mubr.bf16.gmra.mrb[0].mxu0 %v474
    %v6285 = vpop.f32.mrb[0].mxu0
    %v6286 = vadd.f32 %v6093, %v6285
    %v6287 = vpop.f32.mrb[0].mxu0
    %v6288 = vadd.f32 %v6095, %v6287
    %v6289 = vpop.f32.mrb[0].mxu0
    %v6290 = vadd.f32 %v6097, %v6289
    %v6291 = vpop.f32.mrb[0].mxu0
    %v6292 = vadd.f32 %v6099, %v6291
    %6293 = vmatprep.mubr.bf16.mxu0 %v483
    %6294 = vmatmul.mubr.bf16.gmra.mrb[0].mxu0 %v482
    %v6295 = vpop.f32.mrb[0].mxu0
    %v6296 = vadd.f32 %v6103, %v6295
    %v6297 = vpop.f32.mrb[0].mxu0
    %v6298 = vadd.f32 %v6105, %v6297
    %v6299 = vpop.f32.mrb[0].mxu0
    %v6300 = vadd.f32 %v6107, %v6299
    %v6301 = vpop.f32.mrb[0].mxu0
    %v6302 = vadd.f32 %v6109, %v6301
    %6303 = vdwg.mxu0
    %6304 = vmatprep.subr.bf16.mxu0 %v2841
    %6305 = vmatpush1.bf16.msra.mxu0 %v2840
    %6306 = vmatprep.subr.bf16.mxu0 %v2849
    %6307 = vmatpush1.bf16.msra.mxu0 %v2848
    %6308 = vmatprep.subr.bf16.mxu0 %v2857
    %6309 = vmatpush1.bf16.msra.mxu0 %v2856
    %6310 = vmatprep.subr.bf16.mxu0 %v2865
    %6311 = vmatpush1.bf16.msra.mxu0 %v2864
    %6312 = vmatprep.subr.bf16.mxu0 %v2873
    %6313 = vmatpush1.bf16.msra.mxu0 %v2872
    %6314 = vmatprep.subr.bf16.mxu0 %v2881
    %6315 = vmatpush1.bf16.msra.mxu0 %v2880
    %6316 = vmatprep.subr.bf16.mxu0 %v2889
    %6317 = vmatpush1.bf16.msra.mxu0 %v2888
    %6318 = vmatprep.subr.bf16.mxu0 %v2897
    %6319 = vmatpush1.bf16.msra.mxu0 %v2896
    %6320 = vmatprep.subr.bf16.mxu0 %v2905
    %6321 = vmatpush1.bf16.msra.mxu0 %v2904
    %6322 = vmatprep.subr.bf16.mxu0 %v2913
    %6323 = vmatpush1.bf16.msra.mxu0 %v2912
    %6324 = vmatprep.subr.bf16.mxu0 %v2921
    %6325 = vmatpush1.bf16.msra.mxu0 %v2920
    %6326 = vmatprep.subr.bf16.mxu0 %v2929
    %6327 = vmatpush1.bf16.msra.mxu0 %v2928
    %6328 = vmatprep.subr.bf16.mxu0 %v2937
    %6329 = vmatpush1.bf16.msra.mxu0 %v2936
    %6330 = vmatprep.subr.bf16.mxu0 %v2945
    %6331 = vmatpush1.bf16.msra.mxu0 %v2944
    %6332 = vmatprep.subr.bf16.mxu0 %v2953
    %6333 = vmatpush1.bf16.msra.mxu0 %v2952
    %6334 = vmatprep.subr.bf16.mxu0 %v2961
    %6335 = vmatpush1.bf16.msra.mxu0 %v2960
    %6336 = vmatprep.mubr.bf16.mxu0 %v365
    %6337 = vmatmul.mubr.bf16.gmra.mrb[0].mxu0 %v364
    %v6338 = vpop.f32.mrb[0].mxu0
    %v6339 = vadd.f32 %v6146, %v6338
    %v6340 = vpop.f32.mrb[0].mxu0
    %v6341 = vadd.f32 %v6148, %v6340
    %v6342 = vpop.f32.mrb[0].mxu0
    %v6343 = vadd.f32 %v6150, %v6342
    %v6344 = vpop.f32.mrb[0].mxu0
    %v6345 = vadd.f32 %v6152, %v6344
    %6346 = vmatprep.mubr.bf16.mxu0 %v373
    %6347 = vmatmul.mubr.bf16.gmra.mrb[0].mxu0 %v372
    %v6348 = vpop.f32.mrb[0].mxu0
    %v6349 = vadd.f32 %v6156, %v6348
    %v6350 = vpop.f32.mrb[0].mxu0
    %v6351 = vadd.f32 %v6158, %v6350
    %v6352 = vpop.f32.mrb[0].mxu0
    %v6353 = vadd.f32 %v6160, %v6352
    %v6354 = vpop.f32.mrb[0].mxu0
    %v6355 = vadd.f32 %v6162, %v6354
    %6356 = vmatprep.mubr.bf16.mxu0 %v381
    %6357 = vmatmul.mubr.bf16.gmra.mrb[0].mxu0 %v380
    %v6358 = vpop.f32.mrb[0].mxu0
    %v6359 = vadd.f32 %v6166, %v6358
    %v6360 = vpop.f32.mrb[0].mxu0
    %v6361 = vadd.f32 %v6168, %v6360
    %v6362 = vpop.f32.mrb[0].mxu0
    %v6363 = vadd.f32 %v6170, %v6362
    %v6364 = vpop.f32.mrb[0].mxu0
    %v6365 = vadd.f32 %v6172, %v6364
    %6366 = vmatprep.mubr.bf16.mxu0 %v389
    %6367 = vmatmul.mubr.bf16.gmra.mrb[0].mxu0 %v388
    %v6368 = vpop.f32.mrb[0].mxu0
    %v6369 = vadd.f32 %v6176, %v6368
    %v6370 = vpop.f32.mrb[0].mxu0
    %v6371 = vadd.f32 %v6178, %v6370
    %v6372 = vpop.f32.mrb[0].mxu0
    %v6373 = vadd.f32 %v6180, %v6372
    %v6374 = vpop.f32.mrb[0].mxu0
    %v6375 = vadd.f32 %v6182, %v6374
    %6376 = vmatprep.mubr.bf16.mxu0 %v397
    %6377 = vmatmul.mubr.bf16.gmra.mrb[0].mxu0 %v396
    %v6378 = vpop.f32.mrb[0].mxu0
    %v6379 = vadd.f32 %v6186, %v6378
    %v6380 = vpop.f32.mrb[0].mxu0
    %v6381 = vadd.f32 %v6188, %v6380
    %v6382 = vpop.f32.mrb[0].mxu0
    %v6383 = vadd.f32 %v6190, %v6382
    %v6384 = vpop.f32.mrb[0].mxu0
    %v6385 = vadd.f32 %v6192, %v6384
    %6386 = vmatprep.mubr.bf16.mxu0 %v405
    %6387 = vmatmul.mubr.bf16.gmra.mrb[0].mxu0 %v404
    %v6388 = vpop.f32.mrb[0].mxu0
    %v6389 = vadd.f32 %v6196, %v6388
    %v6390 = vpop.f32.mrb[0].mxu0
    %v6391 = vadd.f32 %v6198, %v6390
    %v6392 = vpop.f32.mrb[0].mxu0
    %v6393 = vadd.f32 %v6200, %v6392
    %v6394 = vpop.f32.mrb[0].mxu0
    %v6395 = vadd.f32 %v6202, %v6394
    %6396 = vmatprep.mubr.bf16.mxu0 %v413
    %6397 = vmatmul.mubr.bf16.gmra.mrb[0].mxu0 %v412
    %v6398 = vpop.f32.mrb[0].mxu0
    %v6399 = vadd.f32 %v6206, %v6398
    %v6400 = vpop.f32.mrb[0].mxu0
    %v6401 = vadd.f32 %v6208, %v6400
    %v6402 = vpop.f32.mrb[0].mxu0
    %v6403 = vadd.f32 %v6210, %v6402
    %v6404 = vpop.f32.mrb[0].mxu0
    %v6405 = vadd.f32 %v6212, %v6404
    %6406 = vmatprep.mubr.bf16.mxu0 %v421
    %6407 = vmatmul.mubr.bf16.gmra.mrb[0].mxu0 %v420
    %v6408 = vpop.f32.mrb[0].mxu0
    %v6409 = vadd.f32 %v6216, %v6408
    %v6410 = vpop.f32.mrb[0].mxu0
    %v6411 = vadd.f32 %v6218, %v6410
    %v6412 = vpop.f32.mrb[0].mxu0
    %v6413 = vadd.f32 %v6220, %v6412
    %v6414 = vpop.f32.mrb[0].mxu0
    %v6415 = vadd.f32 %v6222, %v6414
    %6416 = vmatprep.mubr.bf16.mxu0 %v429
    %6417 = vmatmul.mubr.bf16.gmra.mrb[0].mxu0 %v428
    %v6418 = vpop.f32.mrb[0].mxu0
    %v6419 = vadd.f32 %v6226, %v6418
    %v6420 = vpop.f32.mrb[0].mxu0
    %v6421 = vadd.f32 %v6228, %v6420
    %v6422 = vpop.f32.mrb[0].mxu0
    %v6423 = vadd.f32 %v6230, %v6422
    %v6424 = vpop.f32.mrb[0].mxu0
    %v6425 = vadd.f32 %v6232, %v6424
    %6426 = vmatprep.mubr.bf16.mxu0 %v437
    %6427 = vmatmul.mubr.bf16.gmra.mrb[0].mxu0 %v436
    %v6428 = vpop.f32.mrb[0].mxu0
    %v6429 = vadd.f32 %v6236, %v6428
    %v6430 = vpop.f32.mrb[0].mxu0
    %v6431 = vadd.f32 %v6238, %v6430
    %v6432 = vpop.f32.mrb[0].mxu0
    %v6433 = vadd.f32 %v6240, %v6432
    %v6434 = vpop.f32.mrb[0].mxu0
    %v6435 = vadd.f32 %v6242, %v6434
    %6436 = vmatprep.mubr.bf16.mxu0 %v445
    %6437 = vmatmul.mubr.bf16.gmra.mrb[0].mxu0 %v444
    %v6438 = vpop.f32.mrb[0].mxu0
    %v6439 = vadd.f32 %v6246, %v6438
    %v6440 = vpop.f32.mrb[0].mxu0
    %v6441 = vadd.f32 %v6248, %v6440
    %v6442 = vpop.f32.mrb[0].mxu0
    %v6443 = vadd.f32 %v6250, %v6442
    %v6444 = vpop.f32.mrb[0].mxu0
    %v6445 = vadd.f32 %v6252, %v6444
    %6446 = vmatprep.mubr.bf16.mxu0 %v453
    %6447 = vmatmul.mubr.bf16.gmra.mrb[0].mxu0 %v452
    %v6448 = vpop.f32.mrb[0].mxu0
    %v6449 = vadd.f32 %v6256, %v6448
    %v6450 = vpop.f32.mrb[0].mxu0
    %v6451 = vadd.f32 %v6258, %v6450
    %v6452 = vpop.f32.mrb[0].mxu0
    %v6453 = vadd.f32 %v6260, %v6452
    %v6454 = vpop.f32.mrb[0].mxu0
    %v6455 = vadd.f32 %v6262, %v6454
    %6456 = vmatprep.mubr.bf16.mxu0 %v461
    %6457 = vmatmul.mubr.bf16.gmra.mrb[0].mxu0 %v460
    %v6458 = vpop.f32.mrb[0].mxu0
    %v6459 = vadd.f32 %v6266, %v6458
    %v6460 = vpop.f32.mrb[0].mxu0
    %v6461 = vadd.f32 %v6268, %v6460
    %v6462 = vpop.f32.mrb[0].mxu0
    %v6463 = vadd.f32 %v6270, %v6462
    %v6464 = vpop.f32.mrb[0].mxu0
    %v6465 = vadd.f32 %v6272, %v6464
    %6466 = vmatprep.mubr.bf16.mxu0 %v469
    %6467 = vmatmul.mubr.bf16.gmra.mrb[0].mxu0 %v468
    %v6468 = vpop.f32.mrb[0].mxu0
    %v6469 = vadd.f32 %v6276, %v6468
    %v6470 = vpop.f32.mrb[0].mxu0
    %v6471 = vadd.f32 %v6278, %v6470
    %v6472 = vpop.f32.mrb[0].mxu0
    %v6473 = vadd.f32 %v6280, %v6472
    %v6474 = vpop.f32.mrb[0].mxu0
    %v6475 = vadd.f32 %v6282, %v6474
    %6476 = vmatprep.mubr.bf16.mxu0 %v477
    %6477 = vmatmul.mubr.bf16.gmra.mrb[0].mxu0 %v476
    %v6478 = vpop.f32.mrb[0].mxu0
    %v6479 = vadd.f32 %v6286, %v6478
    %v6480 = vpop.f32.mrb[0].mxu0
    %v6481 = vadd.f32 %v6288, %v6480
    %v6482 = vpop.f32.mrb[0].mxu0
    %v6483 = vadd.f32 %v6290, %v6482
    %v6484 = vpop.f32.mrb[0].mxu0
    %v6485 = vadd.f32 %v6292, %v6484
    %6486 = vmatprep.mubr.bf16.mxu0 %v485
    %6487 = vmatmul.mubr.bf16.gmra.mrb[0].mxu0 %v484
    %v6488 = vpop.f32.mrb[0].mxu0
    %v6489 = vadd.f32 %v6296, %v6488
    %v6490 = vpop.f32.mrb[0].mxu0
    %v6491 = vadd.f32 %v6298, %v6490
    %v6492 = vpop.f32.mrb[0].mxu0
    %v6493 = vadd.f32 %v6300, %v6492
    %v6494 = vpop.f32.mrb[0].mxu0
    %v6495 = vadd.f32 %v6302, %v6494
    %6496 = vdwg.mxu0
    %6497 = vmatprep.subr.bf16.mxu0 %v2969
    %6498 = vmatpush1.bf16.msra.mxu0 %v2968
    %6499 = vmatprep.subr.bf16.mxu0 %v2977
    %6500 = vmatpush1.bf16.msra.mxu0 %v2976
    %6501 = vmatprep.subr.bf16.mxu0 %v2985
    %6502 = vmatpush1.bf16.msra.mxu0 %v2984
    %6503 = vmatprep.subr.bf16.mxu0 %v2993
    %6504 = vmatpush1.bf16.msra.mxu0 %v2992
    %6505 = vmatprep.subr.bf16.mxu0 %v3001
    %6506 = vmatpush1.bf16.msra.mxu0 %v3000
    %6507 = vmatprep.subr.bf16.mxu0 %v3009
    %6508 = vmatpush1.bf16.msra.mxu0 %v3008
    %6509 = vmatprep.subr.bf16.mxu0 %v3017
    %6510 = vmatpush1.bf16.msra.mxu0 %v3016
    %6511 = vmatprep.subr.bf16.mxu0 %v3025
    %6512 = vmatpush1.bf16.msra.mxu0 %v3024
    %6513 = vmatprep.subr.bf16.mxu0 %v3033
    %6514 = vmatpush1.bf16.msra.mxu0 %v3032
    %6515 = vmatprep.subr.bf16.mxu0 %v3041
    %6516 = vmatpush1.bf16.msra.mxu0 %v3040
    %6517 = vmatprep.subr.bf16.mxu0 %v3049
    %6518 = vmatpush1.bf16.msra.mxu0 %v3048
    %6519 = vmatprep.subr.bf16.mxu0 %v3057
    %6520 = vmatpush1.bf16.msra.mxu0 %v3056
    %6521 = vmatprep.subr.bf16.mxu0 %v3065
    %6522 = vmatpush1.bf16.msra.mxu0 %v3064
    %6523 = vmatprep.subr.bf16.mxu0 %v3073
    %6524 = vmatpush1.bf16.msra.mxu0 %v3072
    %6525 = vmatprep.subr.bf16.mxu0 %v3081
    %6526 = vmatpush1.bf16.msra.mxu0 %v3080
    %6527 = vmatprep.subr.bf16.mxu0 %v3089
    %6528 = vmatpush1.bf16.msra.mxu0 %v3088
    %6529 = vmatprep.mubr.bf16.mxu0 %v367
    %6530 = vmatmul.mubr.bf16.gmra.mrb[0].mxu0 %v366
    %v6531 = vpop.f32.mrb[0].mxu0
    %v6532 = vadd.f32 %v6339, %v6531
    %v6533 = vpop.f32.mrb[0].mxu0
    %v6534 = vadd.f32 %v6341, %v6533
    %v6535 = vpop.f32.mrb[0].mxu0
    %v6536 = vadd.f32 %v6343, %v6535
    %v6537 = vpop.f32.mrb[0].mxu0
    %v6538 = vadd.f32 %v6345, %v6537
    %6539 = vmatprep.mubr.bf16.mxu0 %v375
    %6540 = vmatmul.mubr.bf16.gmra.mrb[0].mxu0 %v374
    %v6541 = vpop.f32.mrb[0].mxu0
    %v6542 = vadd.f32 %v6349, %v6541
    %v6543 = vpop.f32.mrb[0].mxu0
    %v6544 = vadd.f32 %v6351, %v6543
    %v6545 = vpop.f32.mrb[0].mxu0
    %v6546 = vadd.f32 %v6353, %v6545
    %v6547 = vpop.f32.mrb[0].mxu0
    %v6548 = vadd.f32 %v6355, %v6547
    %6549 = vmatprep.mubr.bf16.mxu0 %v383
    %6550 = vmatmul.mubr.bf16.gmra.mrb[0].mxu0 %v382
    %v6551 = vpop.f32.mrb[0].mxu0
    %v6552 = vadd.f32 %v6359, %v6551
    %v6553 = vpop.f32.mrb[0].mxu0
    %v6554 = vadd.f32 %v6361, %v6553
    %v6555 = vpop.f32.mrb[0].mxu0
    %v6556 = vadd.f32 %v6363, %v6555
    %v6557 = vpop.f32.mrb[0].mxu0
    %v6558 = vadd.f32 %v6365, %v6557
    %6559 = vmatprep.mubr.bf16.mxu0 %v391
    %6560 = vmatmul.mubr.bf16.gmra.mrb[0].mxu0 %v390
    %v6561 = vpop.f32.mrb[0].mxu0
    %v6562 = vadd.f32 %v6369, %v6561
    %v6563 = vpop.f32.mrb[0].mxu0
    %v6564 = vadd.f32 %v6371, %v6563
    %v6565 = vpop.f32.mrb[0].mxu0
    %v6566 = vadd.f32 %v6373, %v6565
    %v6567 = vpop.f32.mrb[0].mxu0
    %v6568 = vadd.f32 %v6375, %v6567
    %6569 = vmatprep.mubr.bf16.mxu0 %v399
    %6570 = vmatmul.mubr.bf16.gmra.mrb[0].mxu0 %v398
    %v6571 = vpop.f32.mrb[0].mxu0
    %v6572 = vadd.f32 %v6379, %v6571
    %v6573 = vpop.f32.mrb[0].mxu0
    %v6574 = vadd.f32 %v6381, %v6573
    %v6575 = vpop.f32.mrb[0].mxu0
    %v6576 = vadd.f32 %v6383, %v6575
    %v6577 = vpop.f32.mrb[0].mxu0
    %v6578 = vadd.f32 %v6385, %v6577
    %6579 = vmatprep.mubr.bf16.mxu0 %v407
    %6580 = vmatmul.mubr.bf16.gmra.mrb[0].mxu0 %v406
    %v6581 = vpop.f32.mrb[0].mxu0
    %v6582 = vadd.f32 %v6389, %v6581
    %v6583 = vpop.f32.mrb[0].mxu0
    %v6584 = vadd.f32 %v6391, %v6583
    %v6585 = vpop.f32.mrb[0].mxu0
    %v6586 = vadd.f32 %v6393, %v6585
    %v6587 = vpop.f32.mrb[0].mxu0
    %v6588 = vadd.f32 %v6395, %v6587
    %6589 = vmatprep.mubr.bf16.mxu0 %v415
    %6590 = vmatmul.mubr.bf16.gmra.mrb[0].mxu0 %v414
    %v6591 = vpop.f32.mrb[0].mxu0
    %v6592 = vadd.f32 %v6399, %v6591
    %v6593 = vpop.f32.mrb[0].mxu0
    %v6594 = vadd.f32 %v6401, %v6593
    %v6595 = vpop.f32.mrb[0].mxu0
    %v6596 = vadd.f32 %v6403, %v6595
    %v6597 = vpop.f32.mrb[0].mxu0
    %v6598 = vadd.f32 %v6405, %v6597
    %6599 = vmatprep.mubr.bf16.mxu0 %v423
    %6600 = vmatmul.mubr.bf16.gmra.mrb[0].mxu0 %v422
    %v6601 = vpop.f32.mrb[0].mxu0
    %v6602 = vadd.f32 %v6409, %v6601
    %v6603 = vpop.f32.mrb[0].mxu0
    %v6604 = vadd.f32 %v6411, %v6603
    %v6605 = vpop.f32.mrb[0].mxu0
    %v6606 = vadd.f32 %v6413, %v6605
    %v6607 = vpop.f32.mrb[0].mxu0
    %v6608 = vadd.f32 %v6415, %v6607
    %6609 = vmatprep.mubr.bf16.mxu0 %v431
    %6610 = vmatmul.mubr.bf16.gmra.mrb[0].mxu0 %v430
    %v6611 = vpop.f32.mrb[0].mxu0
    %v6612 = vadd.f32 %v6419, %v6611
    %v6613 = vpop.f32.mrb[0].mxu0
    %v6614 = vadd.f32 %v6421, %v6613
    %v6615 = vpop.f32.mrb[0].mxu0
    %v6616 = vadd.f32 %v6423, %v6615
    %v6617 = vpop.f32.mrb[0].mxu0
    %v6618 = vadd.f32 %v6425, %v6617
    %6619 = vmatprep.mubr.bf16.mxu0 %v439
    %6620 = vmatmul.mubr.bf16.gmra.mrb[0].mxu0 %v438
    %v6621 = vpop.f32.mrb[0].mxu0
    %v6622 = vadd.f32 %v6429, %v6621
    %v6623 = vpop.f32.mrb[0].mxu0
    %v6624 = vadd.f32 %v6431, %v6623
    %v6625 = vpop.f32.mrb[0].mxu0
    %v6626 = vadd.f32 %v6433, %v6625
    %v6627 = vpop.f32.mrb[0].mxu0
    %v6628 = vadd.f32 %v6435, %v6627
    %6629 = vmatprep.mubr.bf16.mxu0 %v447
    %6630 = vmatmul.mubr.bf16.gmra.mrb[0].mxu0 %v446
    %v6631 = vpop.f32.mrb[0].mxu0
    %v6632 = vadd.f32 %v6439, %v6631
    %v6633 = vpop.f32.mrb[0].mxu0
    %v6634 = vadd.f32 %v6441, %v6633
    %v6635 = vpop.f32.mrb[0].mxu0
    %v6636 = vadd.f32 %v6443, %v6635
    %v6637 = vpop.f32.mrb[0].mxu0
    %v6638 = vadd.f32 %v6445, %v6637
    %6639 = vmatprep.mubr.bf16.mxu0 %v455
    %6640 = vmatmul.mubr.bf16.gmra.mrb[0].mxu0 %v454
    %v6641 = vpop.f32.mrb[0].mxu0
    %v6642 = vadd.f32 %v6449, %v6641
    %v6643 = vpop.f32.mrb[0].mxu0
    %v6644 = vadd.f32 %v6451, %v6643
    %v6645 = vpop.f32.mrb[0].mxu0
    %v6646 = vadd.f32 %v6453, %v6645
    %v6647 = vpop.f32.mrb[0].mxu0
    %v6648 = vadd.f32 %v6455, %v6647
    %6649 = vmatprep.mubr.bf16.mxu0 %v463
    %6650 = vmatmul.mubr.bf16.gmra.mrb[0].mxu0 %v462
    %v6651 = vpop.f32.mrb[0].mxu0
    %v6652 = vadd.f32 %v6459, %v6651
    %v6653 = vpop.f32.mrb[0].mxu0
    %v6654 = vadd.f32 %v6461, %v6653
    %v6655 = vpop.f32.mrb[0].mxu0
    %v6656 = vadd.f32 %v6463, %v6655
    %v6657 = vpop.f32.mrb[0].mxu0
    %v6658 = vadd.f32 %v6465, %v6657
    %6659 = vmatprep.mubr.bf16.mxu0 %v471
    %6660 = vmatmul.mubr.bf16.gmra.mrb[0].mxu0 %v470
    %v6661 = vpop.f32.mrb[0].mxu0
    %v6662 = vadd.f32 %v6469, %v6661
    %v6663 = vpop.f32.mrb[0].mxu0
    %v6664 = vadd.f32 %v6471, %v6663
    %v6665 = vpop.f32.mrb[0].mxu0
    %v6666 = vadd.f32 %v6473, %v6665
    %v6667 = vpop.f32.mrb[0].mxu0
    %v6668 = vadd.f32 %v6475, %v6667
    %6669 = vmatprep.mubr.bf16.mxu0 %v479
    %6670 = vmatmul.mubr.bf16.gmra.mrb[0].mxu0 %v478
    %v6671 = vpop.f32.mrb[0].mxu0
    %v6672 = vadd.f32 %v6479, %v6671
    %v6673 = vpop.f32.mrb[0].mxu0
    %v6674 = vadd.f32 %v6481, %v6673
    %v6675 = vpop.f32.mrb[0].mxu0
    %v6676 = vadd.f32 %v6483, %v6675
    %v6677 = vpop.f32.mrb[0].mxu0
    %v6678 = vadd.f32 %v6485, %v6677
    %6679 = vmatprep.mubr.bf16.mxu0 %v487
    %6680 = vmatmul.mubr.bf16.gmra.mrb[0].mxu0 %v486
    %v6681 = vpop.f32.mrb[0].mxu0
    %v6682 = vadd.f32 %v6489, %v6681
    %v6683 = vpop.f32.mrb[0].mxu0
    %v6684 = vadd.f32 %v6491, %v6683
    %v6685 = vpop.f32.mrb[0].mxu0
    %v6686 = vadd.f32 %v6493, %v6685
    %v6687 = vpop.f32.mrb[0].mxu0
    %v6688 = vadd.f32 %v6495, %v6687
    %6689 = vdwg.mxu0
    %v6690 = vmax.f32 %v4216, 0.0
    %v6691 = vmax.f32 %v4218, 0.0
    %v6692 = vmax.f32 %v4988, 0.0
    %v6693 = vmax.f32 %v4990, 0.0
    %v6694 = vmax.f32 %v5760, 0.0
    %v6695 = vmax.f32 %v5762, 0.0
    %v6696 = vmax.f32 %v6532, 0.0
    %v6697 = vmax.f32 %v6534, 0.0
    %v6698 = vmax.f32 %v4220, 0.0
    %v6699 = vmax.f32 %v4222, 0.0
    %v6700 = vmax.f32 %v4992, 0.0
    %v6701 = vmax.f32 %v4994, 0.0
    %v6702 = vmax.f32 %v5764, 0.0
    %v6703 = vmax.f32 %v5766, 0.0
    %v6704 = vmax.f32 %v6536, 0.0
    %v6705 = vmax.f32 %v6538, 0.0
    %v6706 = vmax.f32 %v4226, 0.0
    %v6707 = vmax.f32 %v4228, 0.0
    %v6708 = vmax.f32 %v4998, 0.0
    %v6709 = vmax.f32 %v5000, 0.0
    %v6710 = vmax.f32 %v5770, 0.0
    %v6711 = vmax.f32 %v5772, 0.0
    %v6712 = vmax.f32 %v6542, 0.0
    %v6713 = vmax.f32 %v6544, 0.0
    %v6714 = vmax.f32 %v4230, 0.0
    %v6715 = vmax.f32 %v4232, 0.0
    %v6716 = vmax.f32 %v5002, 0.0
    %v6717 = vmax.f32 %v5004, 0.0
    %v6718 = vmax.f32 %v5774, 0.0
    %v6719 = vmax.f32 %v5776, 0.0
    %v6720 = vmax.f32 %v6546, 0.0
    %v6721 = vmax.f32 %v6548, 0.0
    %v6722 = vmax.f32 %v4236, 0.0
    %v6723 = vmax.f32 %v4238, 0.0
    %v6724 = vmax.f32 %v5008, 0.0
    %v6725 = vmax.f32 %v5010, 0.0
    %v6726 = vmax.f32 %v5780, 0.0
    %v6727 = vmax.f32 %v5782, 0.0
    %v6728 = vmax.f32 %v6552, 0.0
    %v6729 = vmax.f32 %v6554, 0.0
    %v6730 = vmax.f32 %v4240, 0.0
    %v6731 = vmax.f32 %v4242, 0.0
    %v6732 = vmax.f32 %v5012, 0.0
    %v6733 = vmax.f32 %v5014, 0.0
    %v6734 = vmax.f32 %v5784, 0.0
    %v6735 = vmax.f32 %v5786, 0.0
    %v6736 = vmax.f32 %v6556, 0.0
    %v6737 = vmax.f32 %v6558, 0.0
    %v6738 = vmax.f32 %v4246, 0.0
    %v6739 = vmax.f32 %v4248, 0.0
    %v6740 = vmax.f32 %v5018, 0.0
    %v6741 = vmax.f32 %v5020, 0.0
    %v6742 = vmax.f32 %v5790, 0.0
    %v6743 = vmax.f32 %v5792, 0.0
    %v6744 = vmax.f32 %v6562, 0.0
    %v6745 = vmax.f32 %v6564, 0.0
    %v6746 = vmax.f32 %v4250, 0.0
    %v6747 = vmax.f32 %v4252, 0.0
    %v6748 = vmax.f32 %v5022, 0.0
    %v6749 = vmax.f32 %v5024, 0.0
    %v6750 = vmax.f32 %v5794, 0.0
    %v6751 = vmax.f32 %v5796, 0.0
    %v6752 = vmax.f32 %v6566, 0.0
    %v6753 = vmax.f32 %v6568, 0.0
    %v6754 = vmax.f32 %v4256, 0.0
    %v6755 = vmax.f32 %v4258, 0.0
    %v6756 = vmax.f32 %v5028, 0.0
    %v6757 = vmax.f32 %v5030, 0.0
    %v6758 = vmax.f32 %v5800, 0.0
    %v6759 = vmax.f32 %v5802, 0.0
    %v6760 = vmax.f32 %v6572, 0.0
    %v6761 = vmax.f32 %v6574, 0.0
    %v6762 = vmax.f32 %v4260, 0.0
    %v6763 = vmax.f32 %v4262, 0.0
    %v6764 = vmax.f32 %v5032, 0.0
    %v6765 = vmax.f32 %v5034, 0.0
    %v6766 = vmax.f32 %v5804, 0.0
    %v6767 = vmax.f32 %v5806, 0.0
    %v6768 = vmax.f32 %v6576, 0.0
    %v6769 = vmax.f32 %v6578, 0.0
    %v6770 = vmax.f32 %v4266, 0.0
    %v6771 = vmax.f32 %v4268, 0.0
    %v6772 = vmax.f32 %v5038, 0.0
    %v6773 = vmax.f32 %v5040, 0.0
    %v6774 = vmax.f32 %v5810, 0.0
    %v6775 = vmax.f32 %v5812, 0.0
    %v6776 = vmax.f32 %v6582, 0.0
    %v6777 = vmax.f32 %v6584, 0.0
    %v6778 = vmax.f32 %v4270, 0.0
    %v6779 = vmax.f32 %v4272, 0.0
    %v6780 = vmax.f32 %v5042, 0.0
    %v6781 = vmax.f32 %v5044, 0.0
    %v6782 = vmax.f32 %v5814, 0.0
    %v6783 = vmax.f32 %v5816, 0.0
    %v6784 = vmax.f32 %v6586, 0.0
    %v6785 = vmax.f32 %v6588, 0.0
    %v6786 = vmax.f32 %v4276, 0.0
    %v6787 = vmax.f32 %v4278, 0.0
    %v6788 = vmax.f32 %v5048, 0.0
    %v6789 = vmax.f32 %v5050, 0.0
    %v6790 = vmax.f32 %v5820, 0.0
    %v6791 = vmax.f32 %v5822, 0.0
    %v6792 = vmax.f32 %v6592, 0.0
    %v6793 = vmax.f32 %v6594, 0.0
    %v6794 = vmax.f32 %v4280, 0.0
    %v6795 = vmax.f32 %v4282, 0.0
    %v6796 = vmax.f32 %v5052, 0.0
    %v6797 = vmax.f32 %v5054, 0.0
    %v6798 = vmax.f32 %v5824, 0.0
    %v6799 = vmax.f32 %v5826, 0.0
    %v6800 = vmax.f32 %v6596, 0.0
    %v6801 = vmax.f32 %v6598, 0.0
    %v6802 = vmax.f32 %v4286, 0.0
    %v6803 = vmax.f32 %v4288, 0.0
    %v6804 = vmax.f32 %v5058, 0.0
    %v6805 = vmax.f32 %v5060, 0.0
    %v6806 = vmax.f32 %v5830, 0.0
    %v6807 = vmax.f32 %v5832, 0.0
    %v6808 = vmax.f32 %v6602, 0.0
    %v6809 = vmax.f32 %v6604, 0.0
    %v6810 = vmax.f32 %v4290, 0.0
    %v6811 = vmax.f32 %v4292, 0.0
    %v6812 = vmax.f32 %v5062, 0.0
    %v6813 = vmax.f32 %v5064, 0.0
    %v6814 = vmax.f32 %v5834, 0.0
    %v6815 = vmax.f32 %v5836, 0.0
    %v6816 = vmax.f32 %v6606, 0.0
    %v6817 = vmax.f32 %v6608, 0.0
    %v6818 = vmax.f32 %v4296, 0.0
    %v6819 = vmax.f32 %v4298, 0.0
    %v6820 = vmax.f32 %v5068, 0.0
    %v6821 = vmax.f32 %v5070, 0.0
    %v6822 = vmax.f32 %v5840, 0.0
    %v6823 = vmax.f32 %v5842, 0.0
    %v6824 = vmax.f32 %v6612, 0.0
    %v6825 = vmax.f32 %v6614, 0.0
    %v6826 = vmax.f32 %v4300, 0.0
    %v6827 = vmax.f32 %v4302, 0.0
    %v6828 = vmax.f32 %v5072, 0.0
    %v6829 = vmax.f32 %v5074, 0.0
    %v6830 = vmax.f32 %v5844, 0.0
    %v6831 = vmax.f32 %v5846, 0.0
    %v6832 = vmax.f32 %v6616, 0.0
    %v6833 = vmax.f32 %v6618, 0.0
    %v6834 = vmax.f32 %v4306, 0.0
    %v6835 = vmax.f32 %v4308, 0.0
    %v6836 = vmax.f32 %v5078, 0.0
    %v6837 = vmax.f32 %v5080, 0.0
    %v6838 = vmax.f32 %v5850, 0.0
    %v6839 = vmax.f32 %v5852, 0.0
    %v6840 = vmax.f32 %v6622, 0.0
    %v6841 = vmax.f32 %v6624, 0.0
    %v6842 = vmax.f32 %v4310, 0.0
    %v6843 = vmax.f32 %v4312, 0.0
    %v6844 = vmax.f32 %v5082, 0.0
    %v6845 = vmax.f32 %v5084, 0.0
    %v6846 = vmax.f32 %v5854, 0.0
    %v6847 = vmax.f32 %v5856, 0.0
    %v6848 = vmax.f32 %v6626, 0.0
    %v6849 = vmax.f32 %v6628, 0.0
    %v6850 = vmax.f32 %v4316, 0.0
    %v6851 = vmax.f32 %v4318, 0.0
    %v6852 = vmax.f32 %v5088, 0.0
    %v6853 = vmax.f32 %v5090, 0.0
    %v6854 = vmax.f32 %v5860, 0.0
    %v6855 = vmax.f32 %v5862, 0.0
    %v6856 = vmax.f32 %v6632, 0.0
    %v6857 = vmax.f32 %v6634, 0.0
    %v6858 = vmax.f32 %v4320, 0.0
    %v6859 = vmax.f32 %v4322, 0.0
    %v6860 = vmax.f32 %v5092, 0.0
    %v6861 = vmax.f32 %v5094, 0.0
    %v6862 = vmax.f32 %v5864, 0.0
    %v6863 = vmax.f32 %v5866, 0.0
    %v6864 = vmax.f32 %v6636, 0.0
    %v6865 = vmax.f32 %v6638, 0.0
    %v6866 = vmax.f32 %v4326, 0.0
    %v6867 = vmax.f32 %v4328, 0.0
    %v6868 = vmax.f32 %v5098, 0.0
    %v6869 = vmax.f32 %v5100, 0.0
    %v6870 = vmax.f32 %v5870, 0.0
    %v6871 = vmax.f32 %v5872, 0.0
    %v6872 = vmax.f32 %v6642, 0.0
    %v6873 = vmax.f32 %v6644, 0.0
    %v6874 = vmax.f32 %v4330, 0.0
    %v6875 = vmax.f32 %v4332, 0.0
    %v6876 = vmax.f32 %v5102, 0.0
    %v6877 = vmax.f32 %v5104, 0.0
    %v6878 = vmax.f32 %v5874, 0.0
    %v6879 = vmax.f32 %v5876, 0.0
    %v6880 = vmax.f32 %v6646, 0.0
    %v6881 = vmax.f32 %v6648, 0.0
    %v6882 = vmax.f32 %v4336, 0.0
    %v6883 = vmax.f32 %v4338, 0.0
    %v6884 = vmax.f32 %v5108, 0.0
    %v6885 = vmax.f32 %v5110, 0.0
    %v6886 = vmax.f32 %v5880, 0.0
    %v6887 = vmax.f32 %v5882, 0.0
    %v6888 = vmax.f32 %v6652, 0.0
    %v6889 = vmax.f32 %v6654, 0.0
    %v6890 = vmax.f32 %v4340, 0.0
    %v6891 = vmax.f32 %v4342, 0.0
    %v6892 = vmax.f32 %v5112, 0.0
    %v6893 = vmax.f32 %v5114, 0.0
    %v6894 = vmax.f32 %v5884, 0.0
    %v6895 = vmax.f32 %v5886, 0.0
    %v6896 = vmax.f32 %v6656, 0.0
    %v6897 = vmax.f32 %v6658, 0.0
    %v6898 = vmax.f32 %v4346, 0.0
    %v6899 = vmax.f32 %v4348, 0.0
    %v6900 = vmax.f32 %v5118, 0.0
    %v6901 = vmax.f32 %v5120, 0.0
    %v6902 = vmax.f32 %v5890, 0.0
    %v6903 = vmax.f32 %v5892, 0.0
    %v6904 = vmax.f32 %v6662, 0.0
    %v6905 = vmax.f32 %v6664, 0.0
    %v6906 = vmax.f32 %v4350, 0.0
    %v6907 = vmax.f32 %v4352, 0.0
    %v6908 = vmax.f32 %v5122, 0.0
    %v6909 = vmax.f32 %v5124, 0.0
    %v6910 = vmax.f32 %v5894, 0.0
    %v6911 = vmax.f32 %v5896, 0.0
    %v6912 = vmax.f32 %v6666, 0.0
    %v6913 = vmax.f32 %v6668, 0.0
    %v6914 = vmax.f32 %v4356, 0.0
    %v6915 = vmax.f32 %v4358, 0.0
    %v6916 = vmax.f32 %v5128, 0.0
    %v6917 = vmax.f32 %v5130, 0.0
    %v6918 = vmax.f32 %v5900, 0.0
    %v6919 = vmax.f32 %v5902, 0.0
    %v6920 = vmax.f32 %v6672, 0.0
    %v6921 = vmax.f32 %v6674, 0.0
    %v6922 = vmax.f32 %v4360, 0.0
    %v6923 = vmax.f32 %v4362, 0.0
    %v6924 = vmax.f32 %v5132, 0.0
    %v6925 = vmax.f32 %v5134, 0.0
    %v6926 = vmax.f32 %v5904, 0.0
    %v6927 = vmax.f32 %v5906, 0.0
    %v6928 = vmax.f32 %v6676, 0.0
    %v6929 = vmax.f32 %v6678, 0.0
    %v6930 = vmax.f32 %v4366, 0.0
    %v6931 = vmax.f32 %v4368, 0.0
    %v6932 = vmax.f32 %v5138, 0.0
    %v6933 = vmax.f32 %v5140, 0.0
    %v6934 = vmax.f32 %v5910, 0.0
    %v6935 = vmax.f32 %v5912, 0.0
    %v6936 = vmax.f32 %v6682, 0.0
    %v6937 = vmax.f32 %v6684, 0.0
    %v6938 = vmax.f32 %v4370, 0.0
    %v6939 = vmax.f32 %v4372, 0.0
    %v6940 = vmax.f32 %v5142, 0.0
    %v6941 = vmax.f32 %v5144, 0.0
    %v6942 = vmax.f32 %v5914, 0.0
    %v6943 = vmax.f32 %v5916, 0.0
    %v6944 = vmax.f32 %v6686, 0.0
    %v6945 = vmax.f32 %v6688, 0.0
    %v6946 = vpack.c.bf16 %v6698, %v6690
    %v6947 = vpack.c.bf16 %v6699, %v6691
    %v6948 = vpack.c.bf16 %v6700, %v6692
    %v6949 = vpack.c.bf16 %v6701, %v6693
    %v6950 = vpack.c.bf16 %v6702, %v6694
    %v6951 = vpack.c.bf16 %v6703, %v6695
    %v6952 = vpack.c.bf16 %v6704, %v6696
    %v6953 = vpack.c.bf16 %v6705, %v6697
    %v6954 = vpack.c.bf16 %v6714, %v6706
    %v6955 = vpack.c.bf16 %v6715, %v6707
    %v6956 = vpack.c.bf16 %v6716, %v6708
    %v6957 = vpack.c.bf16 %v6717, %v6709
    %v6958 = vpack.c.bf16 %v6718, %v6710
    %v6959 = vpack.c.bf16 %v6719, %v6711
    %v6960 = vpack.c.bf16 %v6720, %v6712
    %v6961 = vpack.c.bf16 %v6721, %v6713
    %v6962 = vpack.c.bf16 %v6730, %v6722
    %v6963 = vpack.c.bf16 %v6731, %v6723
    %v6964 = vpack.c.bf16 %v6732, %v6724
    %v6965 = vpack.c.bf16 %v6733, %v6725
    %v6966 = vpack.c.bf16 %v6734, %v6726
    %v6967 = vpack.c.bf16 %v6735, %v6727
    %v6968 = vpack.c.bf16 %v6736, %v6728
    %v6969 = vpack.c.bf16 %v6737, %v6729
    %v6970 = vpack.c.bf16 %v6746, %v6738
    %v6971 = vpack.c.bf16 %v6747, %v6739
    %v6972 = vpack.c.bf16 %v6748, %v6740
    %v6973 = vpack.c.bf16 %v6749, %v6741
    %v6974 = vpack.c.bf16 %v6750, %v6742
    %v6975 = vpack.c.bf16 %v6751, %v6743
    %v6976 = vpack.c.bf16 %v6752, %v6744
    %v6977 = vpack.c.bf16 %v6753, %v6745
    %v6978 = vpack.c.bf16 %v6762, %v6754
    %v6979 = vpack.c.bf16 %v6763, %v6755
    %v6980 = vpack.c.bf16 %v6764, %v6756
    %v6981 = vpack.c.bf16 %v6765, %v6757
    %v6982 = vpack.c.bf16 %v6766, %v6758
    %v6983 = vpack.c.bf16 %v6767, %v6759
    %v6984 = vpack.c.bf16 %v6768, %v6760
    %v6985 = vpack.c.bf16 %v6769, %v6761
    %v6986 = vpack.c.bf16 %v6778, %v6770
    %v6987 = vpack.c.bf16 %v6779, %v6771
    %v6988 = vpack.c.bf16 %v6780, %v6772
    %v6989 = vpack.c.bf16 %v6781, %v6773
    %v6990 = vpack.c.bf16 %v6782, %v6774
    %v6991 = vpack.c.bf16 %v6783, %v6775
    %v6992 = vpack.c.bf16 %v6784, %v6776
    %v6993 = vpack.c.bf16 %v6785, %v6777
    %v6994 = vpack.c.bf16 %v6794, %v6786
    %v6995 = vpack.c.bf16 %v6795, %v6787
    %v6996 = vpack.c.bf16 %v6796, %v6788
    %v6997 = vpack.c.bf16 %v6797, %v6789
    %v6998 = vpack.c.bf16 %v6798, %v6790
    %v6999 = vpack.c.bf16 %v6799, %v6791
    %v7000 = vpack.c.bf16 %v6800, %v6792
    %v7001 = vpack.c.bf16 %v6801, %v6793
    %v7002 = vpack.c.bf16 %v6810, %v6802
    %v7003 = vpack.c.bf16 %v6811, %v6803
    %v7004 = vpack.c.bf16 %v6812, %v6804
    %v7005 = vpack.c.bf16 %v6813, %v6805
    %v7006 = vpack.c.bf16 %v6814, %v6806
    %v7007 = vpack.c.bf16 %v6815, %v6807
    %v7008 = vpack.c.bf16 %v6816, %v6808
    %v7009 = vpack.c.bf16 %v6817, %v6809
    %v7010 = vpack.c.bf16 %v6826, %v6818
    %v7011 = vpack.c.bf16 %v6827, %v6819
    %v7012 = vpack.c.bf16 %v6828, %v6820
    %v7013 = vpack.c.bf16 %v6829, %v6821
    %v7014 = vpack.c.bf16 %v6830, %v6822
    %v7015 = vpack.c.bf16 %v6831, %v6823
    %v7016 = vpack.c.bf16 %v6832, %v6824
    %v7017 = vpack.c.bf16 %v6833, %v6825
    %v7018 = vpack.c.bf16 %v6842, %v6834
    %v7019 = vpack.c.bf16 %v6843, %v6835
    %v7020 = vpack.c.bf16 %v6844, %v6836
    %v7021 = vpack.c.bf16 %v6845, %v6837
    %v7022 = vpack.c.bf16 %v6846, %v6838
    %v7023 = vpack.c.bf16 %v6847, %v6839
    %v7024 = vpack.c.bf16 %v6848, %v6840
    %v7025 = vpack.c.bf16 %v6849, %v6841
    %v7026 = vpack.c.bf16 %v6858, %v6850
    %v7027 = vpack.c.bf16 %v6859, %v6851
    %v7028 = vpack.c.bf16 %v6860, %v6852
    %v7029 = vpack.c.bf16 %v6861, %v6853
    %v7030 = vpack.c.bf16 %v6862, %v6854
    %v7031 = vpack.c.bf16 %v6863, %v6855
    %v7032 = vpack.c.bf16 %v6864, %v6856
    %v7033 = vpack.c.bf16 %v6865, %v6857
    %v7034 = vpack.c.bf16 %v6874, %v6866
    %v7035 = vpack.c.bf16 %v6875, %v6867
    %v7036 = vpack.c.bf16 %v6876, %v6868
    %v7037 = vpack.c.bf16 %v6877, %v6869
    %v7038 = vpack.c.bf16 %v6878, %v6870
    %v7039 = vpack.c.bf16 %v6879, %v6871
    %v7040 = vpack.c.bf16 %v6880, %v6872
    %v7041 = vpack.c.bf16 %v6881, %v6873
    %v7042 = vpack.c.bf16 %v6890, %v6882
    %v7043 = vpack.c.bf16 %v6891, %v6883
    %v7044 = vpack.c.bf16 %v6892, %v6884
    %v7045 = vpack.c.bf16 %v6893, %v6885
    %v7046 = vpack.c.bf16 %v6894, %v6886
    %v7047 = vpack.c.bf16 %v6895, %v6887
    %v7048 = vpack.c.bf16 %v6896, %v6888
    %v7049 = vpack.c.bf16 %v6897, %v6889
    %v7050 = vpack.c.bf16 %v6906, %v6898
    %v7051 = vpack.c.bf16 %v6907, %v6899
    %v7052 = vpack.c.bf16 %v6908, %v6900
    %v7053 = vpack.c.bf16 %v6909, %v6901
    %v7054 = vpack.c.bf16 %v6910, %v6902
    %v7055 = vpack.c.bf16 %v6911, %v6903
    %v7056 = vpack.c.bf16 %v6912, %v6904
    %v7057 = vpack.c.bf16 %v6913, %v6905
    %v7058 = vpack.c.bf16 %v6922, %v6914
    %v7059 = vpack.c.bf16 %v6923, %v6915
    %v7060 = vpack.c.bf16 %v6924, %v6916
    %v7061 = vpack.c.bf16 %v6925, %v6917
    %v7062 = vpack.c.bf16 %v6926, %v6918
    %v7063 = vpack.c.bf16 %v6927, %v6919
    %v7064 = vpack.c.bf16 %v6928, %v6920
    %v7065 = vpack.c.bf16 %v6929, %v6921
    %v7066 = vpack.c.bf16 %v6938, %v6930
    %v7067 = vpack.c.bf16 %v6939, %v6931
    %v7068 = vpack.c.bf16 %v6940, %v6932
    %v7069 = vpack.c.bf16 %v6941, %v6933
    %v7070 = vpack.c.bf16 %v6942, %v6934
    %v7071 = vpack.c.bf16 %v6943, %v6935
    %v7072 = vpack.c.bf16 %v6944, %v6936
    %v7073 = vpack.c.bf16 %v6945, %v6937
    %v7074 = vld [vmem:[#allocation8] sm:$0xff]
    %v7075 = vld [vmem:[#allocation8 + $0x8] sm:$0xff]
    %v7076 = vld [vmem:[#allocation8 + $0x10] sm:$0xff]
    %v7077 = vld [vmem:[#allocation8 + $0x18] sm:$0xff]
    %v7078 = vld [vmem:[#allocation8 + $0x20] sm:$0xff]
    %v7079 = vld [vmem:[#allocation8 + $0x28] sm:$0xff]
    %v7080 = vld [vmem:[#allocation8 + $0x30] sm:$0xff]
    %v7081 = vld [vmem:[#allocation8 + $0x38] sm:$0xff]
    %v7082 = vld [vmem:[#allocation8 + $0x40] sm:$0xff]
    %v7083 = vld [vmem:[#allocation8 + $0x48] sm:$0xff]
    %v7084 = vld [vmem:[#allocation8 + $0x50] sm:$0xff]
    %v7085 = vld [vmem:[#allocation8 + $0x58] sm:$0xff]
    %v7086 = vld [vmem:[#allocation8 + $0x60] sm:$0xff]
    %v7087 = vld [vmem:[#allocation8 + $0x68] sm:$0xff]
    %v7088 = vld [vmem:[#allocation8 + $0x70] sm:$0xff]
    %v7089 = vld [vmem:[#allocation8 + $0x78] sm:$0xff]
    %v7090 = vld [vmem:[#allocation8 + $0x80] sm:$0xff]
    %v7091 = vld [vmem:[#allocation8 + $0x88] sm:$0xff]
    %v7092 = vld [vmem:[#allocation8 + $0x90] sm:$0xff]
    %v7093 = vld [vmem:[#allocation8 + $0x98] sm:$0xff]
    %v7094 = vld [vmem:[#allocation8 + $0xa0] sm:$0xff]
    %v7095 = vld [vmem:[#allocation8 + $0xa8] sm:$0xff]
    %v7096 = vld [vmem:[#allocation8 + $0xb0] sm:$0xff]
    %v7097 = vld [vmem:[#allocation8 + $0xb8] sm:$0xff]
    %v7098 = vld [vmem:[#allocation8 + $0xc0] sm:$0xff]
    %v7099 = vld [vmem:[#allocation8 + $0xc8] sm:$0xff]
    %v7100 = vld [vmem:[#allocation8 + $0xd0] sm:$0xff]
    %v7101 = vld [vmem:[#allocation8 + $0xd8] sm:$0xff]
    %v7102 = vld [vmem:[#allocation8 + $0xe0] sm:$0xff]
    %v7103 = vld [vmem:[#allocation8 + $0xe8] sm:$0xff]
    %v7104 = vld [vmem:[#allocation8 + $0xf0] sm:$0xff]
    %v7105 = vld [vmem:[#allocation8 + $0xf8] sm:$0xff]
    %v7106 = vld [vmem:[#allocation8 + $0x100] sm:$0xff]
    %v7107 = vld [vmem:[#allocation8 + $0x108] sm:$0xff]
    %v7108 = vld [vmem:[#allocation8 + $0x110] sm:$0xff]
    %v7109 = vld [vmem:[#allocation8 + $0x118] sm:$0xff]
    %v7110 = vld [vmem:[#allocation8 + $0x120] sm:$0xff]
    %v7111 = vld [vmem:[#allocation8 + $0x128] sm:$0xff]
    %v7112 = vld [vmem:[#allocation8 + $0x130] sm:$0xff]
    %v7113 = vld [vmem:[#allocation8 + $0x138] sm:$0xff]
    %v7114 = vld [vmem:[#allocation8 + $0x140] sm:$0xff]
    %v7115 = vld [vmem:[#allocation8 + $0x148] sm:$0xff]
    %v7116 = vld [vmem:[#allocation8 + $0x150] sm:$0xff]
    %v7117 = vld [vmem:[#allocation8 + $0x158] sm:$0xff]
    %v7118 = vld [vmem:[#allocation8 + $0x160] sm:$0xff]
    %v7119 = vld [vmem:[#allocation8 + $0x168] sm:$0xff]
    %v7120 = vld [vmem:[#allocation8 + $0x170] sm:$0xff]
    %v7121 = vld [vmem:[#allocation8 + $0x178] sm:$0xff]
    %v7122 = vld [vmem:[#allocation8 + $0x180] sm:$0xff]
    %v7123 = vld [vmem:[#allocation8 + $0x188] sm:$0xff]
    %v7124 = vld [vmem:[#allocation8 + $0x190] sm:$0xff]
    %v7125 = vld [vmem:[#allocation8 + $0x198] sm:$0xff]
    %v7126 = vld [vmem:[#allocation8 + $0x1a0] sm:$0xff]
    %v7127 = vld [vmem:[#allocation8 + $0x1a8] sm:$0xff]
    %v7128 = vld [vmem:[#allocation8 + $0x1b0] sm:$0xff]
    %v7129 = vld [vmem:[#allocation8 + $0x1b8] sm:$0xff]
    %v7130 = vld [vmem:[#allocation8 + $0x1c0] sm:$0xff]
    %v7131 = vld [vmem:[#allocation8 + $0x1c8] sm:$0xff]
    %v7132 = vld [vmem:[#allocation8 + $0x1d0] sm:$0xff]
    %v7133 = vld [vmem:[#allocation8 + $0x1d8] sm:$0xff]
    %v7134 = vld [vmem:[#allocation8 + $0x1e0] sm:$0xff]
    %v7135 = vld [vmem:[#allocation8 + $0x1e8] sm:$0xff]
    %v7136 = vld [vmem:[#allocation8 + $0x1f0] sm:$0xff]
    %v7137 = vld [vmem:[#allocation8 + $0x1f8] sm:$0xff]
    %v7138 = vld [vmem:[#allocation8 + $0x200] sm:$0xff]
    %v7139 = vld [vmem:[#allocation8 + $0x208] sm:$0xff]
    %v7140 = vld [vmem:[#allocation8 + $0x210] sm:$0xff]
    %v7141 = vld [vmem:[#allocation8 + $0x218] sm:$0xff]
    %v7142 = vld [vmem:[#allocation8 + $0x220] sm:$0xff]
    %v7143 = vld [vmem:[#allocation8 + $0x228] sm:$0xff]
    %v7144 = vld [vmem:[#allocation8 + $0x230] sm:$0xff]
    %v7145 = vld [vmem:[#allocation8 + $0x238] sm:$0xff]
    %v7146 = vld [vmem:[#allocation8 + $0x240] sm:$0xff]
    %v7147 = vld [vmem:[#allocation8 + $0x248] sm:$0xff]
    %v7148 = vld [vmem:[#allocation8 + $0x250] sm:$0xff]
    %v7149 = vld [vmem:[#allocation8 + $0x258] sm:$0xff]
    %v7150 = vld [vmem:[#allocation8 + $0x260] sm:$0xff]
    %v7151 = vld [vmem:[#allocation8 + $0x268] sm:$0xff]
    %v7152 = vld [vmem:[#allocation8 + $0x270] sm:$0xff]
    %v7153 = vld [vmem:[#allocation8 + $0x278] sm:$0xff]
    %v7154 = vld [vmem:[#allocation8 + $0x280] sm:$0xff]
    %v7155 = vld [vmem:[#allocation8 + $0x288] sm:$0xff]
    %v7156 = vld [vmem:[#allocation8 + $0x290] sm:$0xff]
    %v7157 = vld [vmem:[#allocation8 + $0x298] sm:$0xff]
    %v7158 = vld [vmem:[#allocation8 + $0x2a0] sm:$0xff]
    %v7159 = vld [vmem:[#allocation8 + $0x2a8] sm:$0xff]
    %v7160 = vld [vmem:[#allocation8 + $0x2b0] sm:$0xff]
    %v7161 = vld [vmem:[#allocation8 + $0x2b8] sm:$0xff]
    %v7162 = vld [vmem:[#allocation8 + $0x2c0] sm:$0xff]
    %v7163 = vld [vmem:[#allocation8 + $0x2c8] sm:$0xff]
    %v7164 = vld [vmem:[#allocation8 + $0x2d0] sm:$0xff]
    %v7165 = vld [vmem:[#allocation8 + $0x2d8] sm:$0xff]
    %v7166 = vld [vmem:[#allocation8 + $0x2e0] sm:$0xff]
    %v7167 = vld [vmem:[#allocation8 + $0x2e8] sm:$0xff]
    %v7168 = vld [vmem:[#allocation8 + $0x2f0] sm:$0xff]
    %v7169 = vld [vmem:[#allocation8 + $0x2f8] sm:$0xff]
    %v7170 = vld [vmem:[#allocation8 + $0x300] sm:$0xff]
    %v7171 = vld [vmem:[#allocation8 + $0x308] sm:$0xff]
    %v7172 = vld [vmem:[#allocation8 + $0x310] sm:$0xff]
    %v7173 = vld [vmem:[#allocation8 + $0x318] sm:$0xff]
    %v7174 = vld [vmem:[#allocation8 + $0x320] sm:$0xff]
    %v7175 = vld [vmem:[#allocation8 + $0x328] sm:$0xff]
    %v7176 = vld [vmem:[#allocation8 + $0x330] sm:$0xff]
    %v7177 = vld [vmem:[#allocation8 + $0x338] sm:$0xff]
    %v7178 = vld [vmem:[#allocation8 + $0x340] sm:$0xff]
    %v7179 = vld [vmem:[#allocation8 + $0x348] sm:$0xff]
    %v7180 = vld [vmem:[#allocation8 + $0x350] sm:$0xff]
    %v7181 = vld [vmem:[#allocation8 + $0x358] sm:$0xff]
    %v7182 = vld [vmem:[#allocation8 + $0x360] sm:$0xff]
    %v7183 = vld [vmem:[#allocation8 + $0x368] sm:$0xff]
    %v7184 = vld [vmem:[#allocation8 + $0x370] sm:$0xff]
    %v7185 = vld [vmem:[#allocation8 + $0x378] sm:$0xff]
    %v7186 = vld [vmem:[#allocation8 + $0x380] sm:$0xff]
    %v7187 = vld [vmem:[#allocation8 + $0x388] sm:$0xff]
    %v7188 = vld [vmem:[#allocation8 + $0x390] sm:$0xff]
    %v7189 = vld [vmem:[#allocation8 + $0x398] sm:$0xff]
    %v7190 = vld [vmem:[#allocation8 + $0x3a0] sm:$0xff]
    %v7191 = vld [vmem:[#allocation8 + $0x3a8] sm:$0xff]
    %v7192 = vld [vmem:[#allocation8 + $0x3b0] sm:$0xff]
    %v7193 = vld [vmem:[#allocation8 + $0x3b8] sm:$0xff]
    %v7194 = vld [vmem:[#allocation8 + $0x3c0] sm:$0xff]
    %v7195 = vld [vmem:[#allocation8 + $0x3c8] sm:$0xff]
    %v7196 = vld [vmem:[#allocation8 + $0x3d0] sm:$0xff]
    %v7197 = vld [vmem:[#allocation8 + $0x3d8] sm:$0xff]
    %v7198 = vld [vmem:[#allocation8 + $0x3e0] sm:$0xff]
    %v7199 = vld [vmem:[#allocation8 + $0x3e8] sm:$0xff]
    %v7200 = vld [vmem:[#allocation8 + $0x3f0] sm:$0xff]
    %v7201 = vld [vmem:[#allocation8 + $0x3f8] sm:$0xff]
    %v7202 = vld [vmem:[#allocation10] sm:$0x3]
    %v7204 = vlaneseq
    %v7205 = vshrl.u32 %v7204, 7
    %v7206 = vsub.s32 0, %v7205
    %v7207 = vrot.slane %v7202, %v7206
    %v7208 = vlaneseq
    %v7209 = vshrl.u32 %v7208, 7
    %v7210 = vsub.s32 1, %v7209
    %v7211 = vrot.slane %v7202, %v7210
    %v7342 = vunpack.c.l.b16 %v7074
    %v7343 = vunpack.c.h.b16 %v7074
    %v7344 = vunpack.c.l.b16 %v7075
    %v7345 = vunpack.c.h.b16 %v7075
    %v7346 = vunpack.c.l.b16 %v7076
    %v7347 = vunpack.c.h.b16 %v7076
    %v7348 = vunpack.c.l.b16 %v7077
    %v7349 = vunpack.c.h.b16 %v7077
    %v7350 = vunpack.c.l.b16 %v7078
    %v7351 = vunpack.c.h.b16 %v7078
    %v7352 = vunpack.c.l.b16 %v7079
    %v7353 = vunpack.c.h.b16 %v7079
    %v7354 = vunpack.c.l.b16 %v7080
    %v7355 = vunpack.c.h.b16 %v7080
    %v7356 = vunpack.c.l.b16 %v7081
    %v7357 = vunpack.c.h.b16 %v7081
    %v7358 = vunpack.c.l.b16 %v7082
    %v7359 = vunpack.c.h.b16 %v7082
    %v7360 = vunpack.c.l.b16 %v7083
    %v7361 = vunpack.c.h.b16 %v7083
    %v7362 = vunpack.c.l.b16 %v7084
    %v7363 = vunpack.c.h.b16 %v7084
    %v7364 = vunpack.c.l.b16 %v7085
    %v7365 = vunpack.c.h.b16 %v7085
    %v7366 = vunpack.c.l.b16 %v7086
    %v7367 = vunpack.c.h.b16 %v7086
    %v7368 = vunpack.c.l.b16 %v7087
    %v7369 = vunpack.c.h.b16 %v7087
    %v7370 = vunpack.c.l.b16 %v7088
    %v7371 = vunpack.c.h.b16 %v7088
    %v7372 = vunpack.c.l.b16 %v7089
    %v7373 = vunpack.c.h.b16 %v7089
    %v7374 = vunpack.c.l.b16 %v7090
    %v7375 = vunpack.c.h.b16 %v7090
    %v7376 = vunpack.c.l.b16 %v7091
    %v7377 = vunpack.c.h.b16 %v7091
    %v7378 = vunpack.c.l.b16 %v7092
    %v7379 = vunpack.c.h.b16 %v7092
    %v7380 = vunpack.c.l.b16 %v7093
    %v7381 = vunpack.c.h.b16 %v7093
    %v7382 = vunpack.c.l.b16 %v7094
    %v7383 = vunpack.c.h.b16 %v7094
    %v7384 = vunpack.c.l.b16 %v7095
    %v7385 = vunpack.c.h.b16 %v7095
    %v7386 = vunpack.c.l.b16 %v7096
    %v7387 = vunpack.c.h.b16 %v7096
    %v7388 = vunpack.c.l.b16 %v7097
    %v7389 = vunpack.c.h.b16 %v7097
    %v7390 = vunpack.c.l.b16 %v7098
    %v7391 = vunpack.c.h.b16 %v7098
    %v7392 = vunpack.c.l.b16 %v7099
    %v7393 = vunpack.c.h.b16 %v7099
    %v7394 = vunpack.c.l.b16 %v7100
    %v7395 = vunpack.c.h.b16 %v7100
    %v7396 = vunpack.c.l.b16 %v7101
    %v7397 = vunpack.c.h.b16 %v7101
    %v7398 = vunpack.c.l.b16 %v7102
    %v7399 = vunpack.c.h.b16 %v7102
    %v7400 = vunpack.c.l.b16 %v7103
    %v7401 = vunpack.c.h.b16 %v7103
    %v7402 = vunpack.c.l.b16 %v7104
    %v7403 = vunpack.c.h.b16 %v7104
    %v7404 = vunpack.c.l.b16 %v7105
    %v7405 = vunpack.c.h.b16 %v7105
    %v7406 = vunpack.c.l.b16 %v7106
    %v7407 = vunpack.c.h.b16 %v7106
    %v7408 = vunpack.c.l.b16 %v7107
    %v7409 = vunpack.c.h.b16 %v7107
    %v7410 = vunpack.c.l.b16 %v7108
    %v7411 = vunpack.c.h.b16 %v7108
    %v7412 = vunpack.c.l.b16 %v7109
    %v7413 = vunpack.c.h.b16 %v7109
    %v7414 = vunpack.c.l.b16 %v7110
    %v7415 = vunpack.c.h.b16 %v7110
    %v7416 = vunpack.c.l.b16 %v7111
    %v7417 = vunpack.c.h.b16 %v7111
    %v7418 = vunpack.c.l.b16 %v7112
    %v7419 = vunpack.c.h.b16 %v7112
    %v7420 = vunpack.c.l.b16 %v7113
    %v7421 = vunpack.c.h.b16 %v7113
    %v7422 = vunpack.c.l.b16 %v7114
    %v7423 = vunpack.c.h.b16 %v7114
    %v7424 = vunpack.c.l.b16 %v7115
    %v7425 = vunpack.c.h.b16 %v7115
    %v7426 = vunpack.c.l.b16 %v7116
    %v7427 = vunpack.c.h.b16 %v7116
    %v7428 = vunpack.c.l.b16 %v7117
    %v7429 = vunpack.c.h.b16 %v7117
    %v7430 = vunpack.c.l.b16 %v7118
    %v7431 = vunpack.c.h.b16 %v7118
    %v7432 = vunpack.c.l.b16 %v7119
    %v7433 = vunpack.c.h.b16 %v7119
    %v7434 = vunpack.c.l.b16 %v7120
    %v7435 = vunpack.c.h.b16 %v7120
    %v7436 = vunpack.c.l.b16 %v7121
    %v7437 = vunpack.c.h.b16 %v7121
    %v7438 = vunpack.c.l.b16 %v7122
    %v7439 = vunpack.c.h.b16 %v7122
    %v7440 = vunpack.c.l.b16 %v7123
    %v7441 = vunpack.c.h.b16 %v7123
    %v7442 = vunpack.c.l.b16 %v7124
    %v7443 = vunpack.c.h.b16 %v7124
    %v7444 = vunpack.c.l.b16 %v7125
    %v7445 = vunpack.c.h.b16 %v7125
    %v7446 = vunpack.c.l.b16 %v7126
    %v7447 = vunpack.c.h.b16 %v7126
    %v7448 = vunpack.c.l.b16 %v7127
    %v7449 = vunpack.c.h.b16 %v7127
    %v7450 = vunpack.c.l.b16 %v7128
    %v7451 = vunpack.c.h.b16 %v7128
    %v7452 = vunpack.c.l.b16 %v7129
    %v7453 = vunpack.c.h.b16 %v7129
    %v7454 = vunpack.c.l.b16 %v7130
    %v7455 = vunpack.c.h.b16 %v7130
    %v7456 = vunpack.c.l.b16 %v7131
    %v7457 = vunpack.c.h.b16 %v7131
    %v7458 = vunpack.c.l.b16 %v7132
    %v7459 = vunpack.c.h.b16 %v7132
    %v7460 = vunpack.c.l.b16 %v7133
    %v7461 = vunpack.c.h.b16 %v7133
    %v7462 = vunpack.c.l.b16 %v7134
    %v7463 = vunpack.c.h.b16 %v7134
    %v7464 = vunpack.c.l.b16 %v7135
    %v7465 = vunpack.c.h.b16 %v7135
    %v7466 = vunpack.c.l.b16 %v7136
    %v7467 = vunpack.c.h.b16 %v7136
    %v7468 = vunpack.c.l.b16 %v7137
    %v7469 = vunpack.c.h.b16 %v7137
    %v7470 = vunpack.c.l.b16 %v7138
    %v7471 = vunpack.c.h.b16 %v7138
    %v7472 = vunpack.c.l.b16 %v7139
    %v7473 = vunpack.c.h.b16 %v7139
    %v7474 = vunpack.c.l.b16 %v7140
    %v7475 = vunpack.c.h.b16 %v7140
    %v7476 = vunpack.c.l.b16 %v7141
    %v7477 = vunpack.c.h.b16 %v7141
    %v7478 = vunpack.c.l.b16 %v7142
    %v7479 = vunpack.c.h.b16 %v7142
    %v7480 = vunpack.c.l.b16 %v7143
    %v7481 = vunpack.c.h.b16 %v7143
    %v7482 = vunpack.c.l.b16 %v7144
    %v7483 = vunpack.c.h.b16 %v7144
    %v7484 = vunpack.c.l.b16 %v7145
    %v7485 = vunpack.c.h.b16 %v7145
    %v7486 = vunpack.c.l.b16 %v7146
    %v7487 = vunpack.c.h.b16 %v7146
    %v7488 = vunpack.c.l.b16 %v7147
    %v7489 = vunpack.c.h.b16 %v7147
    %v7490 = vunpack.c.l.b16 %v7148
    %v7491 = vunpack.c.h.b16 %v7148
    %v7492 = vunpack.c.l.b16 %v7149
    %v7493 = vunpack.c.h.b16 %v7149
    %v7494 = vunpack.c.l.b16 %v7150
    %v7495 = vunpack.c.h.b16 %v7150
    %v7496 = vunpack.c.l.b16 %v7151
    %v7497 = vunpack.c.h.b16 %v7151
    %v7498 = vunpack.c.l.b16 %v7152
    %v7499 = vunpack.c.h.b16 %v7152
    %v7500 = vunpack.c.l.b16 %v7153
    %v7501 = vunpack.c.h.b16 %v7153
    %v7502 = vunpack.c.l.b16 %v7154
    %v7503 = vunpack.c.h.b16 %v7154
    %v7504 = vunpack.c.l.b16 %v7155
    %v7505 = vunpack.c.h.b16 %v7155
    %v7506 = vunpack.c.l.b16 %v7156
    %v7507 = vunpack.c.h.b16 %v7156
    %v7508 = vunpack.c.l.b16 %v7157
    %v7509 = vunpack.c.h.b16 %v7157
    %v7510 = vunpack.c.l.b16 %v7158
    %v7511 = vunpack.c.h.b16 %v7158
    %v7512 = vunpack.c.l.b16 %v7159
    %v7513 = vunpack.c.h.b16 %v7159
    %v7514 = vunpack.c.l.b16 %v7160
    %v7515 = vunpack.c.h.b16 %v7160
    %v7516 = vunpack.c.l.b16 %v7161
    %v7517 = vunpack.c.h.b16 %v7161
    %v7518 = vunpack.c.l.b16 %v7162
    %v7519 = vunpack.c.h.b16 %v7162
    %v7520 = vunpack.c.l.b16 %v7163
    %v7521 = vunpack.c.h.b16 %v7163
    %v7522 = vunpack.c.l.b16 %v7164
    %v7523 = vunpack.c.h.b16 %v7164
    %v7524 = vunpack.c.l.b16 %v7165
    %v7525 = vunpack.c.h.b16 %v7165
    %v7526 = vunpack.c.l.b16 %v7166
    %v7527 = vunpack.c.h.b16 %v7166
    %v7528 = vunpack.c.l.b16 %v7167
    %v7529 = vunpack.c.h.b16 %v7167
    %v7530 = vunpack.c.l.b16 %v7168
    %v7531 = vunpack.c.h.b16 %v7168
    %v7532 = vunpack.c.l.b16 %v7169
    %v7533 = vunpack.c.h.b16 %v7169
    %v7534 = vunpack.c.l.b16 %v7170
    %v7535 = vunpack.c.h.b16 %v7170
    %v7536 = vunpack.c.l.b16 %v7171
    %v7537 = vunpack.c.h.b16 %v7171
    %v7538 = vunpack.c.l.b16 %v7172
    %v7539 = vunpack.c.h.b16 %v7172
    %v7540 = vunpack.c.l.b16 %v7173
    %v7541 = vunpack.c.h.b16 %v7173
    %v7542 = vunpack.c.l.b16 %v7174
    %v7543 = vunpack.c.h.b16 %v7174
    %v7544 = vunpack.c.l.b16 %v7175
    %v7545 = vunpack.c.h.b16 %v7175
    %v7546 = vunpack.c.l.b16 %v7176
    %v7547 = vunpack.c.h.b16 %v7176
    %v7548 = vunpack.c.l.b16 %v7177
    %v7549 = vunpack.c.h.b16 %v7177
    %v7550 = vunpack.c.l.b16 %v7178
    %v7551 = vunpack.c.h.b16 %v7178
    %v7552 = vunpack.c.l.b16 %v7179
    %v7553 = vunpack.c.h.b16 %v7179
    %v7554 = vunpack.c.l.b16 %v7180
    %v7555 = vunpack.c.h.b16 %v7180
    %v7556 = vunpack.c.l.b16 %v7181
    %v7557 = vunpack.c.h.b16 %v7181
    %v7558 = vunpack.c.l.b16 %v7182
    %v7559 = vunpack.c.h.b16 %v7182
    %v7560 = vunpack.c.l.b16 %v7183
    %v7561 = vunpack.c.h.b16 %v7183
    %v7562 = vunpack.c.l.b16 %v7184
    %v7563 = vunpack.c.h.b16 %v7184
    %v7564 = vunpack.c.l.b16 %v7185
    %v7565 = vunpack.c.h.b16 %v7185
    %v7566 = vunpack.c.l.b16 %v7186
    %v7567 = vunpack.c.h.b16 %v7186
    %v7568 = vunpack.c.l.b16 %v7187
    %v7569 = vunpack.c.h.b16 %v7187
    %v7570 = vunpack.c.l.b16 %v7188
    %v7571 = vunpack.c.h.b16 %v7188
    %v7572 = vunpack.c.l.b16 %v7189
    %v7573 = vunpack.c.h.b16 %v7189
    %v7574 = vunpack.c.l.b16 %v7190
    %v7575 = vunpack.c.h.b16 %v7190
    %v7576 = vunpack.c.l.b16 %v7191
    %v7577 = vunpack.c.h.b16 %v7191
    %v7578 = vunpack.c.l.b16 %v7192
    %v7579 = vunpack.c.h.b16 %v7192
    %v7580 = vunpack.c.l.b16 %v7193
    %v7581 = vunpack.c.h.b16 %v7193
    %v7582 = vunpack.c.l.b16 %v7194
    %v7583 = vunpack.c.h.b16 %v7194
    %v7584 = vunpack.c.l.b16 %v7195
    %v7585 = vunpack.c.h.b16 %v7195
    %v7586 = vunpack.c.l.b16 %v7196
    %v7587 = vunpack.c.h.b16 %v7196
    %v7588 = vunpack.c.l.b16 %v7197
    %v7589 = vunpack.c.h.b16 %v7197
    %v7590 = vunpack.c.l.b16 %v7198
    %v7591 = vunpack.c.h.b16 %v7198
    %v7592 = vunpack.c.l.b16 %v7199
    %v7593 = vunpack.c.h.b16 %v7199
    %v7594 = vunpack.c.l.b16 %v7200
    %v7595 = vunpack.c.h.b16 %v7200
    %v7596 = vunpack.c.l.b16 %v7201
    %v7597 = vunpack.c.h.b16 %v7201
    %v7598 = vpack.c.b16 %v7344, %v7342
    %v7599 = vpack.c.b16 %v7345, %v7343
    %v7600 = vpack.c.b16 %v7348, %v7346
    %v7601 = vpack.c.b16 %v7349, %v7347
    %v7602 = vpack.c.b16 %v7352, %v7350
    %v7603 = vpack.c.b16 %v7353, %v7351
    %v7604 = vpack.c.b16 %v7356, %v7354
    %v7605 = vpack.c.b16 %v7357, %v7355
    %v7606 = vpack.c.b16 %v7360, %v7358
    %v7607 = vpack.c.b16 %v7361, %v7359
    %v7608 = vpack.c.b16 %v7364, %v7362
    %v7609 = vpack.c.b16 %v7365, %v7363
    %v7610 = vpack.c.b16 %v7368, %v7366
    %v7611 = vpack.c.b16 %v7369, %v7367
    %v7612 = vpack.c.b16 %v7372, %v7370
    %v7613 = vpack.c.b16 %v7373, %v7371
    %v7614 = vpack.c.b16 %v7376, %v7374
    %v7615 = vpack.c.b16 %v7377, %v7375
    %v7616 = vpack.c.b16 %v7380, %v7378
    %v7617 = vpack.c.b16 %v7381, %v7379
    %v7618 = vpack.c.b16 %v7384, %v7382
    %v7619 = vpack.c.b16 %v7385, %v7383
    %v7620 = vpack.c.b16 %v7388, %v7386
    %v7621 = vpack.c.b16 %v7389, %v7387
    %v7622 = vpack.c.b16 %v7392, %v7390
    %v7623 = vpack.c.b16 %v7393, %v7391
    %v7624 = vpack.c.b16 %v7396, %v7394
    %v7625 = vpack.c.b16 %v7397, %v7395
    %v7626 = vpack.c.b16 %v7400, %v7398
    %v7627 = vpack.c.b16 %v7401, %v7399
    %v7628 = vpack.c.b16 %v7404, %v7402
    %v7629 = vpack.c.b16 %v7405, %v7403
    %v7630 = vpack.c.b16 %v7408, %v7406
    %v7631 = vpack.c.b16 %v7409, %v7407
    %v7632 = vpack.c.b16 %v7412, %v7410
    %v7633 = vpack.c.b16 %v7413, %v7411
    %v7634 = vpack.c.b16 %v7416, %v7414
    %v7635 = vpack.c.b16 %v7417, %v7415
    %v7636 = vpack.c.b16 %v7420, %v7418
    %v7637 = vpack.c.b16 %v7421, %v7419
    %v7638 = vpack.c.b16 %v7424, %v7422
    %v7639 = vpack.c.b16 %v7425, %v7423
    %v7640 = vpack.c.b16 %v7428, %v7426
    %v7641 = vpack.c.b16 %v7429, %v7427
    %v7642 = vpack.c.b16 %v7432, %v7430
    %v7643 = vpack.c.b16 %v7433, %v7431
    %v7644 = vpack.c.b16 %v7436, %v7434
    %v7645 = vpack.c.b16 %v7437, %v7435
    %v7646 = vpack.c.b16 %v7440, %v7438
    %v7647 = vpack.c.b16 %v7441, %v7439
    %v7648 = vpack.c.b16 %v7444, %v7442
    %v7649 = vpack.c.b16 %v7445, %v7443
    %v7650 = vpack.c.b16 %v7448, %v7446
    %v7651 = vpack.c.b16 %v7449, %v7447
    %v7652 = vpack.c.b16 %v7452, %v7450
    %v7653 = vpack.c.b16 %v7453, %v7451
    %v7654 = vpack.c.b16 %v7456, %v7454
    %v7655 = vpack.c.b16 %v7457, %v7455
    %v7656 = vpack.c.b16 %v7460, %v7458
    %v7657 = vpack.c.b16 %v7461, %v7459
    %v7658 = vpack.c.b16 %v7464, %v7462
    %v7659 = vpack.c.b16 %v7465, %v7463
    %v7660 = vpack.c.b16 %v7468, %v7466
    %v7661 = vpack.c.b16 %v7469, %v7467
    %v7662 = vpack.c.b16 %v7472, %v7470
    %v7663 = vpack.c.b16 %v7473, %v7471
    %v7664 = vpack.c.b16 %v7476, %v7474
    %v7665 = vpack.c.b16 %v7477, %v7475
    %v7666 = vpack.c.b16 %v7480, %v7478
    %v7667 = vpack.c.b16 %v7481, %v7479
    %v7668 = vpack.c.b16 %v7484, %v7482
    %v7669 = vpack.c.b16 %v7485, %v7483
    %v7670 = vpack.c.b16 %v7488, %v7486
    %v7671 = vpack.c.b16 %v7489, %v7487
    %v7672 = vpack.c.b16 %v7492, %v7490
    %v7673 = vpack.c.b16 %v7493, %v7491
    %v7674 = vpack.c.b16 %v7496, %v7494
    %v7675 = vpack.c.b16 %v7497, %v7495
    %v7676 = vpack.c.b16 %v7500, %v7498
    %v7677 = vpack.c.b16 %v7501, %v7499
    %v7678 = vpack.c.b16 %v7504, %v7502
    %v7679 = vpack.c.b16 %v7505, %v7503
    %v7680 = vpack.c.b16 %v7508, %v7506
    %v7681 = vpack.c.b16 %v7509, %v7507
    %v7682 = vpack.c.b16 %v7512, %v7510
    %v7683 = vpack.c.b16 %v7513, %v7511
    %v7684 = vpack.c.b16 %v7516, %v7514
    %v7685 = vpack.c.b16 %v7517, %v7515
    %v7686 = vpack.c.b16 %v7520, %v7518
    %v7687 = vpack.c.b16 %v7521, %v7519
    %v7688 = vpack.c.b16 %v7524, %v7522
    %v7689 = vpack.c.b16 %v7525, %v7523
    %v7690 = vpack.c.b16 %v7528, %v7526
    %v7691 = vpack.c.b16 %v7529, %v7527
    %v7692 = vpack.c.b16 %v7532, %v7530
    %v7693 = vpack.c.b16 %v7533, %v7531
    %v7694 = vpack.c.b16 %v7536, %v7534
    %v7695 = vpack.c.b16 %v7537, %v7535
    %v7696 = vpack.c.b16 %v7540, %v7538
    %v7697 = vpack.c.b16 %v7541, %v7539
    %v7698 = vpack.c.b16 %v7544, %v7542
    %v7699 = vpack.c.b16 %v7545, %v7543
    %v7700 = vpack.c.b16 %v7548, %v7546
    %v7701 = vpack.c.b16 %v7549, %v7547
    %v7702 = vpack.c.b16 %v7552, %v7550
    %v7703 = vpack.c.b16 %v7553, %v7551
    %v7704 = vpack.c.b16 %v7556, %v7554
    %v7705 = vpack.c.b16 %v7557, %v7555
    %v7706 = vpack.c.b16 %v7560, %v7558
    %v7707 = vpack.c.b16 %v7561, %v7559
    %v7708 = vpack.c.b16 %v7564, %v7562
    %v7709 = vpack.c.b16 %v7565, %v7563
    %v7710 = vpack.c.b16 %v7568, %v7566
    %v7711 = vpack.c.b16 %v7569, %v7567
    %v7712 = vpack.c.b16 %v7572, %v7570
    %v7713 = vpack.c.b16 %v7573, %v7571
    %v7714 = vpack.c.b16 %v7576, %v7574
    %v7715 = vpack.c.b16 %v7577, %v7575
    %v7716 = vpack.c.b16 %v7580, %v7578
    %v7717 = vpack.c.b16 %v7581, %v7579
    %v7718 = vpack.c.b16 %v7584, %v7582
    %v7719 = vpack.c.b16 %v7585, %v7583
    %v7720 = vpack.c.b16 %v7588, %v7586
    %v7721 = vpack.c.b16 %v7589, %v7587
    %v7722 = vpack.c.b16 %v7592, %v7590
    %v7723 = vpack.c.b16 %v7593, %v7591
    %v7724 = vpack.c.b16 %v7596, %v7594
    %v7725 = vpack.c.b16 %v7597, %v7595
    %7854 = vmatprep.subr.bf16.mxu0 %v7599
    %7855 = vmatpush1.bf16.msra.mxu0 %v7598
    %7856 = vmatprep.subr.bf16.mxu0 %v7601
    %7857 = vmatpush1.bf16.msra.mxu0 %v7600
    %7858 = vmatprep.subr.bf16.mxu0 %v7603
    %7859 = vmatpush1.bf16.msra.mxu0 %v7602
    %7860 = vmatprep.subr.bf16.mxu0 %v7605
    %7861 = vmatpush1.bf16.msra.mxu0 %v7604
    %7862 = vmatprep.subr.bf16.mxu0 %v7607
    %7863 = vmatpush1.bf16.msra.mxu0 %v7606
    %7864 = vmatprep.subr.bf16.mxu0 %v7609
    %7865 = vmatpush1.bf16.msra.mxu0 %v7608
    %7866 = vmatprep.subr.bf16.mxu0 %v7611
    %7867 = vmatpush1.bf16.msra.mxu0 %v7610
    %7868 = vmatprep.subr.bf16.mxu0 %v7613
    %7869 = vmatpush1.bf16.msra.mxu0 %v7612
    %7870 = vmatprep.subr.bf16.mxu0 %v7615
    %7871 = vmatpush1.bf16.msra.mxu0 %v7614
    %7872 = vmatprep.subr.bf16.mxu0 %v7617
    %7873 = vmatpush1.bf16.msra.mxu0 %v7616
    %7874 = vmatprep.subr.bf16.mxu0 %v7619
    %7875 = vmatpush1.bf16.msra.mxu0 %v7618
    %7876 = vmatprep.subr.bf16.mxu0 %v7621
    %7877 = vmatpush1.bf16.msra.mxu0 %v7620
    %7878 = vmatprep.subr.bf16.mxu0 %v7623
    %7879 = vmatpush1.bf16.msra.mxu0 %v7622
    %7880 = vmatprep.subr.bf16.mxu0 %v7625
    %7881 = vmatpush1.bf16.msra.mxu0 %v7624
    %7882 = vmatprep.subr.bf16.mxu0 %v7627
    %7883 = vmatpush1.bf16.msra.mxu0 %v7626
    %7884 = vmatprep.subr.bf16.mxu0 %v7629
    %7885 = vmatpush1.bf16.msra.mxu0 %v7628
    %7886 = vmatprep.mubr.bf16.mxu0 %v6947
    %7887 = vmatmul.mubr.bf16.gmra.mrb[0].mxu0 %v6946
    %v7888 = vpop.f32.mrb[0].mxu0
    %v7889 = vadd.f32 %v7207, %v7888
    %v7890 = vpop.f32.mrb[0].mxu0
    %v7891 = vadd.f32 %v7211, %v7890
    %v7892 = vpop.f32.mrb[0].mxu0
    %v7893 = vadd.f32 %v7207, %v7892
    %v7894 = vpop.f32.mrb[0].mxu0
    %v7895 = vadd.f32 %v7211, %v7894
    %7896 = vmatprep.mubr.bf16.mxu0 %v6955
    %7897 = vmatmul.mubr.bf16.gmra.mrb[0].mxu0 %v6954
    %v7898 = vpop.f32.mrb[0].mxu0
    %v7899 = vadd.f32 %v7207, %v7898
    %v7900 = vpop.f32.mrb[0].mxu0
    %v7901 = vadd.f32 %v7211, %v7900
    %v7902 = vpop.f32.mrb[0].mxu0
    %v7903 = vadd.f32 %v7207, %v7902
    %v7904 = vpop.f32.mrb[0].mxu0
    %v7905 = vadd.f32 %v7211, %v7904
    %7906 = vmatprep.mubr.bf16.mxu0 %v6963
    %7907 = vmatmul.mubr.bf16.gmra.mrb[0].mxu0 %v6962
    %v7908 = vpop.f32.mrb[0].mxu0
    %v7909 = vadd.f32 %v7207, %v7908
    %v7910 = vpop.f32.mrb[0].mxu0
    %v7911 = vadd.f32 %v7211, %v7910
    %v7912 = vpop.f32.mrb[0].mxu0
    %v7913 = vadd.f32 %v7207, %v7912
    %v7914 = vpop.f32.mrb[0].mxu0
    %v7915 = vadd.f32 %v7211, %v7914
    %7916 = vmatprep.mubr.bf16.mxu0 %v6971
    %7917 = vmatmul.mubr.bf16.gmra.mrb[0].mxu0 %v6970
    %v7918 = vpop.f32.mrb[0].mxu0
    %v7919 = vadd.f32 %v7207, %v7918
    %v7920 = vpop.f32.mrb[0].mxu0
    %v7921 = vadd.f32 %v7211, %v7920
    %v7922 = vpop.f32.mrb[0].mxu0
    %v7923 = vadd.f32 %v7207, %v7922
    %v7924 = vpop.f32.mrb[0].mxu0
    %v7925 = vadd.f32 %v7211, %v7924
    %7926 = vmatprep.mubr.bf16.mxu0 %v6979
    %7927 = vmatmul.mubr.bf16.gmra.mrb[0].mxu0 %v6978
    %v7928 = vpop.f32.mrb[0].mxu0
    %v7929 = vadd.f32 %v7207, %v7928
    %v7930 = vpop.f32.mrb[0].mxu0
    %v7931 = vadd.f32 %v7211, %v7930
    %v7932 = vpop.f32.mrb[0].mxu0
    %v7933 = vadd.f32 %v7207, %v7932
    %v7934 = vpop.f32.mrb[0].mxu0
    %v7935 = vadd.f32 %v7211, %v7934
    %7936 = vmatprep.mubr.bf16.mxu0 %v6987
    %7937 = vmatmul.mubr.bf16.gmra.mrb[0].mxu0 %v6986
    %v7938 = vpop.f32.mrb[0].mxu0
    %v7939 = vadd.f32 %v7207, %v7938
    %v7940 = vpop.f32.mrb[0].mxu0
    %v7941 = vadd.f32 %v7211, %v7940
    %v7942 = vpop.f32.mrb[0].mxu0
    %v7943 = vadd.f32 %v7207, %v7942
    %v7944 = vpop.f32.mrb[0].mxu0
    %v7945 = vadd.f32 %v7211, %v7944
    %7946 = vmatprep.mubr.bf16.mxu0 %v6995
    %7947 = vmatmul.mubr.bf16.gmra.mrb[0].mxu0 %v6994
    %v7948 = vpop.f32.mrb[0].mxu0
    %v7949 = vadd.f32 %v7207, %v7948
    %v7950 = vpop.f32.mrb[0].mxu0
    %v7951 = vadd.f32 %v7211, %v7950
    %v7952 = vpop.f32.mrb[0].mxu0
    %v7953 = vadd.f32 %v7207, %v7952
    %v7954 = vpop.f32.mrb[0].mxu0
    %v7955 = vadd.f32 %v7211, %v7954
    %7956 = vmatprep.mubr.bf16.mxu0 %v7003
    %7957 = vmatmul.mubr.bf16.gmra.mrb[0].mxu0 %v7002
    %v7958 = vpop.f32.mrb[0].mxu0
    %v7959 = vadd.f32 %v7207, %v7958
    %v7960 = vpop.f32.mrb[0].mxu0
    %v7961 = vadd.f32 %v7211, %v7960
    %v7962 = vpop.f32.mrb[0].mxu0
    %v7963 = vadd.f32 %v7207, %v7962
    %v7964 = vpop.f32.mrb[0].mxu0
    %v7965 = vadd.f32 %v7211, %v7964
    %7966 = vmatprep.mubr.bf16.mxu0 %v7011
    %7967 = vmatmul.mubr.bf16.gmra.mrb[0].mxu0 %v7010
    %v7968 = vpop.f32.mrb[0].mxu0
    %v7969 = vadd.f32 %v7207, %v7968
    %v7970 = vpop.f32.mrb[0].mxu0
    %v7971 = vadd.f32 %v7211, %v7970
    %v7972 = vpop.f32.mrb[0].mxu0
    %v7973 = vadd.f32 %v7207, %v7972
    %v7974 = vpop.f32.mrb[0].mxu0
    %v7975 = vadd.f32 %v7211, %v7974
    %7976 = vmatprep.mubr.bf16.mxu0 %v7019
    %7977 = vmatmul.mubr.bf16.gmra.mrb[0].mxu0 %v7018
    %v7978 = vpop.f32.mrb[0].mxu0
    %v7979 = vadd.f32 %v7207, %v7978
    %v7980 = vpop.f32.mrb[0].mxu0
    %v7981 = vadd.f32 %v7211, %v7980
    %v7982 = vpop.f32.mrb[0].mxu0
    %v7983 = vadd.f32 %v7207, %v7982
    %v7984 = vpop.f32.mrb[0].mxu0
    %v7985 = vadd.f32 %v7211, %v7984
    %7986 = vmatprep.mubr.bf16.mxu0 %v7027
    %7987 = vmatmul.mubr.bf16.gmra.mrb[0].mxu0 %v7026
    %v7988 = vpop.f32.mrb[0].mxu0
    %v7989 = vadd.f32 %v7207, %v7988
    %v7990 = vpop.f32.mrb[0].mxu0
    %v7991 = vadd.f32 %v7211, %v7990
    %v7992 = vpop.f32.mrb[0].mxu0
    %v7993 = vadd.f32 %v7207, %v7992
    %v7994 = vpop.f32.mrb[0].mxu0
    %v7995 = vadd.f32 %v7211, %v7994
    %7996 = vmatprep.mubr.bf16.mxu0 %v7035
    %7997 = vmatmul.mubr.bf16.gmra.mrb[0].mxu0 %v7034
    %v7998 = vpop.f32.mrb[0].mxu0
    %v7999 = vadd.f32 %v7207, %v7998
    %v8000 = vpop.f32.mrb[0].mxu0
    %v8001 = vadd.f32 %v7211, %v8000
    %v8002 = vpop.f32.mrb[0].mxu0
    %v8003 = vadd.f32 %v7207, %v8002
    %v8004 = vpop.f32.mrb[0].mxu0
    %v8005 = vadd.f32 %v7211, %v8004
    %8006 = vmatprep.mubr.bf16.mxu0 %v7043
    %8007 = vmatmul.mubr.bf16.gmra.mrb[0].mxu0 %v7042
    %v8008 = vpop.f32.mrb[0].mxu0
    %v8009 = vadd.f32 %v7207, %v8008
    %v8010 = vpop.f32.mrb[0].mxu0
    %v8011 = vadd.f32 %v7211, %v8010
    %v8012 = vpop.f32.mrb[0].mxu0
    %v8013 = vadd.f32 %v7207, %v8012
    %v8014 = vpop.f32.mrb[0].mxu0
    %v8015 = vadd.f32 %v7211, %v8014
    %8016 = vmatprep.mubr.bf16.mxu0 %v7051
    %8017 = vmatmul.mubr.bf16.gmra.mrb[0].mxu0 %v7050
    %v8018 = vpop.f32.mrb[0].mxu0
    %v8019 = vadd.f32 %v7207, %v8018
    %v8020 = vpop.f32.mrb[0].mxu0
    %v8021 = vadd.f32 %v7211, %v8020
    %v8022 = vpop.f32.mrb[0].mxu0
    %v8023 = vadd.f32 %v7207, %v8022
    %v8024 = vpop.f32.mrb[0].mxu0
    %v8025 = vadd.f32 %v7211, %v8024
    %8026 = vmatprep.mubr.bf16.mxu0 %v7059
    %8027 = vmatmul.mubr.bf16.gmra.mrb[0].mxu0 %v7058
    %v8028 = vpop.f32.mrb[0].mxu0
    %v8029 = vadd.f32 %v7207, %v8028
    %v8030 = vpop.f32.mrb[0].mxu0
    %v8031 = vadd.f32 %v7211, %v8030
    %v8032 = vpop.f32.mrb[0].mxu0
    %v8033 = vadd.f32 %v7207, %v8032
    %v8034 = vpop.f32.mrb[0].mxu0
    %v8035 = vadd.f32 %v7211, %v8034
    %8036 = vmatprep.mubr.bf16.mxu0 %v7067
    %8037 = vmatmul.mubr.bf16.gmra.mrb[0].mxu0 %v7066
    %v8038 = vpop.f32.mrb[0].mxu0
    %v8039 = vadd.f32 %v7207, %v8038
    %v8040 = vpop.f32.mrb[0].mxu0
    %v8041 = vadd.f32 %v7211, %v8040
    %v8042 = vpop.f32.mrb[0].mxu0
    %v8043 = vadd.f32 %v7207, %v8042
    %v8044 = vpop.f32.mrb[0].mxu0
    %v8045 = vadd.f32 %v7211, %v8044
    %8046 = vdwg.mxu0
    %8047 = vmatprep.subr.bf16.mxu0 %v7631
    %8048 = vmatpush1.bf16.msra.mxu0 %v7630
    %8049 = vmatprep.subr.bf16.mxu0 %v7633
    %8050 = vmatpush1.bf16.msra.mxu0 %v7632
    %8051 = vmatprep.subr.bf16.mxu0 %v7635
    %8052 = vmatpush1.bf16.msra.mxu0 %v7634
    %8053 = vmatprep.subr.bf16.mxu0 %v7637
    %8054 = vmatpush1.bf16.msra.mxu0 %v7636
    %8055 = vmatprep.subr.bf16.mxu0 %v7639
    %8056 = vmatpush1.bf16.msra.mxu0 %v7638
    %8057 = vmatprep.subr.bf16.mxu0 %v7641
    %8058 = vmatpush1.bf16.msra.mxu0 %v7640
    %8059 = vmatprep.subr.bf16.mxu0 %v7643
    %8060 = vmatpush1.bf16.msra.mxu0 %v7642
    %8061 = vmatprep.subr.bf16.mxu0 %v7645
    %8062 = vmatpush1.bf16.msra.mxu0 %v7644
    %8063 = vmatprep.subr.bf16.mxu0 %v7647
    %8064 = vmatpush1.bf16.msra.mxu0 %v7646
    %8065 = vmatprep.subr.bf16.mxu0 %v7649
    %8066 = vmatpush1.bf16.msra.mxu0 %v7648
    %8067 = vmatprep.subr.bf16.mxu0 %v7651
    %8068 = vmatpush1.bf16.msra.mxu0 %v7650
    %8069 = vmatprep.subr.bf16.mxu0 %v7653
    %8070 = vmatpush1.bf16.msra.mxu0 %v7652
    %8071 = vmatprep.subr.bf16.mxu0 %v7655
    %8072 = vmatpush1.bf16.msra.mxu0 %v7654
    %8073 = vmatprep.subr.bf16.mxu0 %v7657
    %8074 = vmatpush1.bf16.msra.mxu0 %v7656
    %8075 = vmatprep.subr.bf16.mxu0 %v7659
    %8076 = vmatpush1.bf16.msra.mxu0 %v7658
    %8077 = vmatprep.subr.bf16.mxu0 %v7661
    %8078 = vmatpush1.bf16.msra.mxu0 %v7660
    %8079 = vmatprep.mubr.bf16.mxu0 %v6949
    %8080 = vmatmul.mubr.bf16.gmra.mrb[0].mxu0 %v6948
    %v8081 = vpop.f32.mrb[0].mxu0
    %v8082 = vadd.f32 %v7889, %v8081
    %v8083 = vpop.f32.mrb[0].mxu0
    %v8084 = vadd.f32 %v7891, %v8083
    %v8085 = vpop.f32.mrb[0].mxu0
    %v8086 = vadd.f32 %v7893, %v8085
    %v8087 = vpop.f32.mrb[0].mxu0
    %v8088 = vadd.f32 %v7895, %v8087
    %8089 = vmatprep.mubr.bf16.mxu0 %v6957
    %8090 = vmatmul.mubr.bf16.gmra.mrb[0].mxu0 %v6956
    %v8091 = vpop.f32.mrb[0].mxu0
    %v8092 = vadd.f32 %v7899, %v8091
    %v8093 = vpop.f32.mrb[0].mxu0
    %v8094 = vadd.f32 %v7901, %v8093
    %v8095 = vpop.f32.mrb[0].mxu0
    %v8096 = vadd.f32 %v7903, %v8095
    %v8097 = vpop.f32.mrb[0].mxu0
    %v8098 = vadd.f32 %v7905, %v8097
    %8099 = vmatprep.mubr.bf16.mxu0 %v6965
    %8100 = vmatmul.mubr.bf16.gmra.mrb[0].mxu0 %v6964
    %v8101 = vpop.f32.mrb[0].mxu0
    %v8102 = vadd.f32 %v7909, %v8101
    %v8103 = vpop.f32.mrb[0].mxu0
    %v8104 = vadd.f32 %v7911, %v8103
    %v8105 = vpop.f32.mrb[0].mxu0
    %v8106 = vadd.f32 %v7913, %v8105
    %v8107 = vpop.f32.mrb[0].mxu0
    %v8108 = vadd.f32 %v7915, %v8107
    %8109 = vmatprep.mubr.bf16.mxu0 %v6973
    %8110 = vmatmul.mubr.bf16.gmra.mrb[0].mxu0 %v6972
    %v8111 = vpop.f32.mrb[0].mxu0
    %v8112 = vadd.f32 %v7919, %v8111
    %v8113 = vpop.f32.mrb[0].mxu0
    %v8114 = vadd.f32 %v7921, %v8113
    %v8115 = vpop.f32.mrb[0].mxu0
    %v8116 = vadd.f32 %v7923, %v8115
    %v8117 = vpop.f32.mrb[0].mxu0
    %v8118 = vadd.f32 %v7925, %v8117
    %8119 = vmatprep.mubr.bf16.mxu0 %v6981
    %8120 = vmatmul.mubr.bf16.gmra.mrb[0].mxu0 %v6980
    %v8121 = vpop.f32.mrb[0].mxu0
    %v8122 = vadd.f32 %v7929, %v8121
    %v8123 = vpop.f32.mrb[0].mxu0
    %v8124 = vadd.f32 %v7931, %v8123
    %v8125 = vpop.f32.mrb[0].mxu0
    %v8126 = vadd.f32 %v7933, %v8125
    %v8127 = vpop.f32.mrb[0].mxu0
    %v8128 = vadd.f32 %v7935, %v8127
    %8129 = vmatprep.mubr.bf16.mxu0 %v6989
    %8130 = vmatmul.mubr.bf16.gmra.mrb[0].mxu0 %v6988
    %v8131 = vpop.f32.mrb[0].mxu0
    %v8132 = vadd.f32 %v7939, %v8131
    %v8133 = vpop.f32.mrb[0].mxu0
    %v8134 = vadd.f32 %v7941, %v8133
    %v8135 = vpop.f32.mrb[0].mxu0
    %v8136 = vadd.f32 %v7943, %v8135
    %v8137 = vpop.f32.mrb[0].mxu0
    %v8138 = vadd.f32 %v7945, %v8137
    %8139 = vmatprep.mubr.bf16.mxu0 %v6997
    %8140 = vmatmul.mubr.bf16.gmra.mrb[0].mxu0 %v6996
    %v8141 = vpop.f32.mrb[0].mxu0
    %v8142 = vadd.f32 %v7949, %v8141
    %v8143 = vpop.f32.mrb[0].mxu0
    %v8144 = vadd.f32 %v7951, %v8143
    %v8145 = vpop.f32.mrb[0].mxu0
    %v8146 = vadd.f32 %v7953, %v8145
    %v8147 = vpop.f32.mrb[0].mxu0
    %v8148 = vadd.f32 %v7955, %v8147
    %8149 = vmatprep.mubr.bf16.mxu0 %v7005
    %8150 = vmatmul.mubr.bf16.gmra.mrb[0].mxu0 %v7004
    %v8151 = vpop.f32.mrb[0].mxu0
    %v8152 = vadd.f32 %v7959, %v8151
    %v8153 = vpop.f32.mrb[0].mxu0
    %v8154 = vadd.f32 %v7961, %v8153
    %v8155 = vpop.f32.mrb[0].mxu0
    %v8156 = vadd.f32 %v7963, %v8155
    %v8157 = vpop.f32.mrb[0].mxu0
    %v8158 = vadd.f32 %v7965, %v8157
    %8159 = vmatprep.mubr.bf16.mxu0 %v7013
    %8160 = vmatmul.mubr.bf16.gmra.mrb[0].mxu0 %v7012
    %v8161 = vpop.f32.mrb[0].mxu0
    %v8162 = vadd.f32 %v7969, %v8161
    %v8163 = vpop.f32.mrb[0].mxu0
    %v8164 = vadd.f32 %v7971, %v8163
    %v8165 = vpop.f32.mrb[0].mxu0
    %v8166 = vadd.f32 %v7973, %v8165
    %v8167 = vpop.f32.mrb[0].mxu0
    %v8168 = vadd.f32 %v7975, %v8167
    %8169 = vmatprep.mubr.bf16.mxu0 %v7021
    %8170 = vmatmul.mubr.bf16.gmra.mrb[0].mxu0 %v7020
    %v8171 = vpop.f32.mrb[0].mxu0
    %v8172 = vadd.f32 %v7979, %v8171
    %v8173 = vpop.f32.mrb[0].mxu0
    %v8174 = vadd.f32 %v7981, %v8173
    %v8175 = vpop.f32.mrb[0].mxu0
    %v8176 = vadd.f32 %v7983, %v8175
    %v8177 = vpop.f32.mrb[0].mxu0
    %v8178 = vadd.f32 %v7985, %v8177
    %8179 = vmatprep.mubr.bf16.mxu0 %v7029
    %8180 = vmatmul.mubr.bf16.gmra.mrb[0].mxu0 %v7028
    %v8181 = vpop.f32.mrb[0].mxu0
    %v8182 = vadd.f32 %v7989, %v8181
    %v8183 = vpop.f32.mrb[0].mxu0
    %v8184 = vadd.f32 %v7991, %v8183
    %v8185 = vpop.f32.mrb[0].mxu0
    %v8186 = vadd.f32 %v7993, %v8185
    %v8187 = vpop.f32.mrb[0].mxu0
    %v8188 = vadd.f32 %v7995, %v8187
    %8189 = vmatprep.mubr.bf16.mxu0 %v7037
    %8190 = vmatmul.mubr.bf16.gmra.mrb[0].mxu0 %v7036
    %v8191 = vpop.f32.mrb[0].mxu0
    %v8192 = vadd.f32 %v7999, %v8191
    %v8193 = vpop.f32.mrb[0].mxu0
    %v8194 = vadd.f32 %v8001, %v8193
    %v8195 = vpop.f32.mrb[0].mxu0
    %v8196 = vadd.f32 %v8003, %v8195
    %v8197 = vpop.f32.mrb[0].mxu0
    %v8198 = vadd.f32 %v8005, %v8197
    %8199 = vmatprep.mubr.bf16.mxu0 %v7045
    %8200 = vmatmul.mubr.bf16.gmra.mrb[0].mxu0 %v7044
    %v8201 = vpop.f32.mrb[0].mxu0
    %v8202 = vadd.f32 %v8009, %v8201
    %v8203 = vpop.f32.mrb[0].mxu0
    %v8204 = vadd.f32 %v8011, %v8203
    %v8205 = vpop.f32.mrb[0].mxu0
    %v8206 = vadd.f32 %v8013, %v8205
    %v8207 = vpop.f32.mrb[0].mxu0
    %v8208 = vadd.f32 %v8015, %v8207
    %8209 = vmatprep.mubr.bf16.mxu0 %v7053
    %8210 = vmatmul.mubr.bf16.gmra.mrb[0].mxu0 %v7052
    %v8211 = vpop.f32.mrb[0].mxu0
    %v8212 = vadd.f32 %v8019, %v8211
    %v8213 = vpop.f32.mrb[0].mxu0
    %v8214 = vadd.f32 %v8021, %v8213
    %v8215 = vpop.f32.mrb[0].mxu0
    %v8216 = vadd.f32 %v8023, %v8215
    %v8217 = vpop.f32.mrb[0].mxu0
    %v8218 = vadd.f32 %v8025, %v8217
    %8219 = vmatprep.mubr.bf16.mxu0 %v7061
    %8220 = vmatmul.mubr.bf16.gmra.mrb[0].mxu0 %v7060
    %v8221 = vpop.f32.mrb[0].mxu0
    %v8222 = vadd.f32 %v8029, %v8221
    %v8223 = vpop.f32.mrb[0].mxu0
    %v8224 = vadd.f32 %v8031, %v8223
    %v8225 = vpop.f32.mrb[0].mxu0
    %v8226 = vadd.f32 %v8033, %v8225
    %v8227 = vpop.f32.mrb[0].mxu0
    %v8228 = vadd.f32 %v8035, %v8227
    %8229 = vmatprep.mubr.bf16.mxu0 %v7069
    %8230 = vmatmul.mubr.bf16.gmra.mrb[0].mxu0 %v7068
    %v8231 = vpop.f32.mrb[0].mxu0
    %v8232 = vadd.f32 %v8039, %v8231
    %v8233 = vpop.f32.mrb[0].mxu0
    %v8234 = vadd.f32 %v8041, %v8233
    %v8235 = vpop.f32.mrb[0].mxu0
    %v8236 = vadd.f32 %v8043, %v8235
    %v8237 = vpop.f32.mrb[0].mxu0
    %v8238 = vadd.f32 %v8045, %v8237
    %8239 = vdwg.mxu0
    %8240 = vmatprep.subr.bf16.mxu0 %v7663
    %8241 = vmatpush1.bf16.msra.mxu0 %v7662
    %8242 = vmatprep.subr.bf16.mxu0 %v7665
    %8243 = vmatpush1.bf16.msra.mxu0 %v7664
    %8244 = vmatprep.subr.bf16.mxu0 %v7667
    %8245 = vmatpush1.bf16.msra.mxu0 %v7666
    %8246 = vmatprep.subr.bf16.mxu0 %v7669
    %8247 = vmatpush1.bf16.msra.mxu0 %v7668
    %8248 = vmatprep.subr.bf16.mxu0 %v7671
    %8249 = vmatpush1.bf16.msra.mxu0 %v7670
    %8250 = vmatprep.subr.bf16.mxu0 %v7673
    %8251 = vmatpush1.bf16.msra.mxu0 %v7672
    %8252 = vmatprep.subr.bf16.mxu0 %v7675
    %8253 = vmatpush1.bf16.msra.mxu0 %v7674
    %8254 = vmatprep.subr.bf16.mxu0 %v7677
    %8255 = vmatpush1.bf16.msra.mxu0 %v7676
    %8256 = vmatprep.subr.bf16.mxu0 %v7679
    %8257 = vmatpush1.bf16.msra.mxu0 %v7678
    %8258 = vmatprep.subr.bf16.mxu0 %v7681
    %8259 = vmatpush1.bf16.msra.mxu0 %v7680
    %8260 = vmatprep.subr.bf16.mxu0 %v7683
    %8261 = vmatpush1.bf16.msra.mxu0 %v7682
    %8262 = vmatprep.subr.bf16.mxu0 %v7685
    %8263 = vmatpush1.bf16.msra.mxu0 %v7684
    %8264 = vmatprep.subr.bf16.mxu0 %v7687
    %8265 = vmatpush1.bf16.msra.mxu0 %v7686
    %8266 = vmatprep.subr.bf16.mxu0 %v7689
    %8267 = vmatpush1.bf16.msra.mxu0 %v7688
    %8268 = vmatprep.subr.bf16.mxu0 %v7691
    %8269 = vmatpush1.bf16.msra.mxu0 %v7690
    %8270 = vmatprep.subr.bf16.mxu0 %v7693
    %8271 = vmatpush1.bf16.msra.mxu0 %v7692
    %8272 = vmatprep.mubr.bf16.mxu0 %v6951
    %8273 = vmatmul.mubr.bf16.gmra.mrb[0].mxu0 %v6950
    %v8274 = vpop.f32.mrb[0].mxu0
    %v8275 = vadd.f32 %v8082, %v8274
    %v8276 = vpop.f32.mrb[0].mxu0
    %v8277 = vadd.f32 %v8084, %v8276
    %v8278 = vpop.f32.mrb[0].mxu0
    %v8279 = vadd.f32 %v8086, %v8278
    %v8280 = vpop.f32.mrb[0].mxu0
    %v8281 = vadd.f32 %v8088, %v8280
    %8282 = vmatprep.mubr.bf16.mxu0 %v6959
    %8283 = vmatmul.mubr.bf16.gmra.mrb[0].mxu0 %v6958
    %v8284 = vpop.f32.mrb[0].mxu0
    %v8285 = vadd.f32 %v8092, %v8284
    %v8286 = vpop.f32.mrb[0].mxu0
    %v8287 = vadd.f32 %v8094, %v8286
    %v8288 = vpop.f32.mrb[0].mxu0
    %v8289 = vadd.f32 %v8096, %v8288
    %v8290 = vpop.f32.mrb[0].mxu0
    %v8291 = vadd.f32 %v8098, %v8290
    %8292 = vmatprep.mubr.bf16.mxu0 %v6967
    %8293 = vmatmul.mubr.bf16.gmra.mrb[0].mxu0 %v6966
    %v8294 = vpop.f32.mrb[0].mxu0
    %v8295 = vadd.f32 %v8102, %v8294
    %v8296 = vpop.f32.mrb[0].mxu0
    %v8297 = vadd.f32 %v8104, %v8296
    %v8298 = vpop.f32.mrb[0].mxu0
    %v8299 = vadd.f32 %v8106, %v8298
    %v8300 = vpop.f32.mrb[0].mxu0
    %v8301 = vadd.f32 %v8108, %v8300
    %8302 = vmatprep.mubr.bf16.mxu0 %v6975
    %8303 = vmatmul.mubr.bf16.gmra.mrb[0].mxu0 %v6974
    %v8304 = vpop.f32.mrb[0].mxu0
    %v8305 = vadd.f32 %v8112, %v8304
    %v8306 = vpop.f32.mrb[0].mxu0
    %v8307 = vadd.f32 %v8114, %v8306
    %v8308 = vpop.f32.mrb[0].mxu0
    %v8309 = vadd.f32 %v8116, %v8308
    %v8310 = vpop.f32.mrb[0].mxu0
    %v8311 = vadd.f32 %v8118, %v8310
    %8312 = vmatprep.mubr.bf16.mxu0 %v6983
    %8313 = vmatmul.mubr.bf16.gmra.mrb[0].mxu0 %v6982
    %v8314 = vpop.f32.mrb[0].mxu0
    %v8315 = vadd.f32 %v8122, %v8314
    %v8316 = vpop.f32.mrb[0].mxu0
    %v8317 = vadd.f32 %v8124, %v8316
    %v8318 = vpop.f32.mrb[0].mxu0
    %v8319 = vadd.f32 %v8126, %v8318
    %v8320 = vpop.f32.mrb[0].mxu0
    %v8321 = vadd.f32 %v8128, %v8320
    %8322 = vmatprep.mubr.bf16.mxu0 %v6991
    %8323 = vmatmul.mubr.bf16.gmra.mrb[0].mxu0 %v6990
    %v8324 = vpop.f32.mrb[0].mxu0
    %v8325 = vadd.f32 %v8132, %v8324
    %v8326 = vpop.f32.mrb[0].mxu0
    %v8327 = vadd.f32 %v8134, %v8326
    %v8328 = vpop.f32.mrb[0].mxu0
    %v8329 = vadd.f32 %v8136, %v8328
    %v8330 = vpop.f32.mrb[0].mxu0
    %v8331 = vadd.f32 %v8138, %v8330
    %8332 = vmatprep.mubr.bf16.mxu0 %v6999
    %8333 = vmatmul.mubr.bf16.gmra.mrb[0].mxu0 %v6998
    %v8334 = vpop.f32.mrb[0].mxu0
    %v8335 = vadd.f32 %v8142, %v8334
    %v8336 = vpop.f32.mrb[0].mxu0
    %v8337 = vadd.f32 %v8144, %v8336
    %v8338 = vpop.f32.mrb[0].mxu0
    %v8339 = vadd.f32 %v8146, %v8338
    %v8340 = vpop.f32.mrb[0].mxu0
    %v8341 = vadd.f32 %v8148, %v8340
    %8342 = vmatprep.mubr.bf16.mxu0 %v7007
    %8343 = vmatmul.mubr.bf16.gmra.mrb[0].mxu0 %v7006
    %v8344 = vpop.f32.mrb[0].mxu0
    %v8345 = vadd.f32 %v8152, %v8344
    %v8346 = vpop.f32.mrb[0].mxu0
    %v8347 = vadd.f32 %v8154, %v8346
    %v8348 = vpop.f32.mrb[0].mxu0
    %v8349 = vadd.f32 %v8156, %v8348
    %v8350 = vpop.f32.mrb[0].mxu0
    %v8351 = vadd.f32 %v8158, %v8350
    %8352 = vmatprep.mubr.bf16.mxu0 %v7015
    %8353 = vmatmul.mubr.bf16.gmra.mrb[0].mxu0 %v7014
    %v8354 = vpop.f32.mrb[0].mxu0
    %v8355 = vadd.f32 %v8162, %v8354
    %v8356 = vpop.f32.mrb[0].mxu0
    %v8357 = vadd.f32 %v8164, %v8356
    %v8358 = vpop.f32.mrb[0].mxu0
    %v8359 = vadd.f32 %v8166, %v8358
    %v8360 = vpop.f32.mrb[0].mxu0
    %v8361 = vadd.f32 %v8168, %v8360
    %8362 = vmatprep.mubr.bf16.mxu0 %v7023
    %8363 = vmatmul.mubr.bf16.gmra.mrb[0].mxu0 %v7022
    %v8364 = vpop.f32.mrb[0].mxu0
    %v8365 = vadd.f32 %v8172, %v8364
    %v8366 = vpop.f32.mrb[0].mxu0
    %v8367 = vadd.f32 %v8174, %v8366
    %v8368 = vpop.f32.mrb[0].mxu0
    %v8369 = vadd.f32 %v8176, %v8368
    %v8370 = vpop.f32.mrb[0].mxu0
    %v8371 = vadd.f32 %v8178, %v8370
    %8372 = vmatprep.mubr.bf16.mxu0 %v7031
    %8373 = vmatmul.mubr.bf16.gmra.mrb[0].mxu0 %v7030
    %v8374 = vpop.f32.mrb[0].mxu0
    %v8375 = vadd.f32 %v8182, %v8374
    %v8376 = vpop.f32.mrb[0].mxu0
    %v8377 = vadd.f32 %v8184, %v8376
    %v8378 = vpop.f32.mrb[0].mxu0
    %v8379 = vadd.f32 %v8186, %v8378
    %v8380 = vpop.f32.mrb[0].mxu0
    %v8381 = vadd.f32 %v8188, %v8380
    %8382 = vmatprep.mubr.bf16.mxu0 %v7039
    %8383 = vmatmul.mubr.bf16.gmra.mrb[0].mxu0 %v7038
    %v8384 = vpop.f32.mrb[0].mxu0
    %v8385 = vadd.f32 %v8192, %v8384
    %v8386 = vpop.f32.mrb[0].mxu0
    %v8387 = vadd.f32 %v8194, %v8386
    %v8388 = vpop.f32.mrb[0].mxu0
    %v8389 = vadd.f32 %v8196, %v8388
    %v8390 = vpop.f32.mrb[0].mxu0
    %v8391 = vadd.f32 %v8198, %v8390
    %8392 = vmatprep.mubr.bf16.mxu0 %v7047
    %8393 = vmatmul.mubr.bf16.gmra.mrb[0].mxu0 %v7046
    %v8394 = vpop.f32.mrb[0].mxu0
    %v8395 = vadd.f32 %v8202, %v8394
    %v8396 = vpop.f32.mrb[0].mxu0
    %v8397 = vadd.f32 %v8204, %v8396
    %v8398 = vpop.f32.mrb[0].mxu0
    %v8399 = vadd.f32 %v8206, %v8398
    %v8400 = vpop.f32.mrb[0].mxu0
    %v8401 = vadd.f32 %v8208, %v8400
    %8402 = vmatprep.mubr.bf16.mxu0 %v7055
    %8403 = vmatmul.mubr.bf16.gmra.mrb[0].mxu0 %v7054
    %v8404 = vpop.f32.mrb[0].mxu0
    %v8405 = vadd.f32 %v8212, %v8404
    %v8406 = vpop.f32.mrb[0].mxu0
    %v8407 = vadd.f32 %v8214, %v8406
    %v8408 = vpop.f32.mrb[0].mxu0
    %v8409 = vadd.f32 %v8216, %v8408
    %v8410 = vpop.f32.mrb[0].mxu0
    %v8411 = vadd.f32 %v8218, %v8410
    %8412 = vmatprep.mubr.bf16.mxu0 %v7063
    %8413 = vmatmul.mubr.bf16.gmra.mrb[0].mxu0 %v7062
    %v8414 = vpop.f32.mrb[0].mxu0
    %v8415 = vadd.f32 %v8222, %v8414
    %v8416 = vpop.f32.mrb[0].mxu0
    %v8417 = vadd.f32 %v8224, %v8416
    %v8418 = vpop.f32.mrb[0].mxu0
    %v8419 = vadd.f32 %v8226, %v8418
    %v8420 = vpop.f32.mrb[0].mxu0
    %v8421 = vadd.f32 %v8228, %v8420
    %8422 = vmatprep.mubr.bf16.mxu0 %v7071
    %8423 = vmatmul.mubr.bf16.gmra.mrb[0].mxu0 %v7070
    %v8424 = vpop.f32.mrb[0].mxu0
    %v8425 = vadd.f32 %v8232, %v8424
    %v8426 = vpop.f32.mrb[0].mxu0
    %v8427 = vadd.f32 %v8234, %v8426
    %v8428 = vpop.f32.mrb[0].mxu0
    %v8429 = vadd.f32 %v8236, %v8428
    %v8430 = vpop.f32.mrb[0].mxu0
    %v8431 = vadd.f32 %v8238, %v8430
    %8432 = vdwg.mxu0
    %8433 = vmatprep.subr.bf16.mxu0 %v7695
    %8434 = vmatpush1.bf16.msra.mxu0 %v7694
    %8435 = vmatprep.subr.bf16.mxu0 %v7697
    %8436 = vmatpush1.bf16.msra.mxu0 %v7696
    %8437 = vmatprep.subr.bf16.mxu0 %v7699
    %8438 = vmatpush1.bf16.msra.mxu0 %v7698
    %8439 = vmatprep.subr.bf16.mxu0 %v7701
    %8440 = vmatpush1.bf16.msra.mxu0 %v7700
    %8441 = vmatprep.subr.bf16.mxu0 %v7703
    %8442 = vmatpush1.bf16.msra.mxu0 %v7702
    %8443 = vmatprep.subr.bf16.mxu0 %v7705
    %8444 = vmatpush1.bf16.msra.mxu0 %v7704
    %8445 = vmatprep.subr.bf16.mxu0 %v7707
    %8446 = vmatpush1.bf16.msra.mxu0 %v7706
    %8447 = vmatprep.subr.bf16.mxu0 %v7709
    %8448 = vmatpush1.bf16.msra.mxu0 %v7708
    %8449 = vmatprep.subr.bf16.mxu0 %v7711
    %8450 = vmatpush1.bf16.msra.mxu0 %v7710
    %8451 = vmatprep.subr.bf16.mxu0 %v7713
    %8452 = vmatpush1.bf16.msra.mxu0 %v7712
    %8453 = vmatprep.subr.bf16.mxu0 %v7715
    %8454 = vmatpush1.bf16.msra.mxu0 %v7714
    %8455 = vmatprep.subr.bf16.mxu0 %v7717
    %8456 = vmatpush1.bf16.msra.mxu0 %v7716
    %8457 = vmatprep.subr.bf16.mxu0 %v7719
    %8458 = vmatpush1.bf16.msra.mxu0 %v7718
    %8459 = vmatprep.subr.bf16.mxu0 %v7721
    %8460 = vmatpush1.bf16.msra.mxu0 %v7720
    %8461 = vmatprep.subr.bf16.mxu0 %v7723
    %8462 = vmatpush1.bf16.msra.mxu0 %v7722
    %8463 = vmatprep.subr.bf16.mxu0 %v7725
    %8464 = vmatpush1.bf16.msra.mxu0 %v7724
    %8465 = vmatprep.mubr.bf16.mxu0 %v6953
    %8466 = vmatmul.mubr.bf16.gmra.mrb[0].mxu0 %v6952
    %v8467 = vpop.f32.mrb[0].mxu0
    %v8468 = vadd.f32 %v8275, %v8467
    %v8469 = vpop.f32.mrb[0].mxu0
    %v8470 = vadd.f32 %v8277, %v8469
    %v8471 = vpop.f32.mrb[0].mxu0
    %v8472 = vadd.f32 %v8279, %v8471
    %v8473 = vpop.f32.mrb[0].mxu0
    %v8474 = vadd.f32 %v8281, %v8473
    %8475 = vmatprep.mubr.bf16.mxu0 %v6961
    %8476 = vmatmul.mubr.bf16.gmra.mrb[0].mxu0 %v6960
    %v8477 = vpop.f32.mrb[0].mxu0
    %v8478 = vadd.f32 %v8285, %v8477
    %v8479 = vpop.f32.mrb[0].mxu0
    %v8480 = vadd.f32 %v8287, %v8479
    %v8481 = vpop.f32.mrb[0].mxu0
    %v8482 = vadd.f32 %v8289, %v8481
    %v8483 = vpop.f32.mrb[0].mxu0
    %v8484 = vadd.f32 %v8291, %v8483
    %8485 = vmatprep.mubr.bf16.mxu0 %v6969
    %8486 = vmatmul.mubr.bf16.gmra.mrb[0].mxu0 %v6968
    %v8487 = vpop.f32.mrb[0].mxu0
    %v8488 = vadd.f32 %v8295, %v8487
    %v8489 = vpop.f32.mrb[0].mxu0
    %v8490 = vadd.f32 %v8297, %v8489
    %v8491 = vpop.f32.mrb[0].mxu0
    %v8492 = vadd.f32 %v8299, %v8491
    %v8493 = vpop.f32.mrb[0].mxu0
    %v8494 = vadd.f32 %v8301, %v8493
    %8495 = vmatprep.mubr.bf16.mxu0 %v6977
    %8496 = vmatmul.mubr.bf16.gmra.mrb[0].mxu0 %v6976
    %v8497 = vpop.f32.mrb[0].mxu0
    %v8498 = vadd.f32 %v8305, %v8497
    %v8499 = vpop.f32.mrb[0].mxu0
    %v8500 = vadd.f32 %v8307, %v8499
    %v8501 = vpop.f32.mrb[0].mxu0
    %v8502 = vadd.f32 %v8309, %v8501
    %v8503 = vpop.f32.mrb[0].mxu0
    %v8504 = vadd.f32 %v8311, %v8503
    %8505 = vmatprep.mubr.bf16.mxu0 %v6985
    %8506 = vmatmul.mubr.bf16.gmra.mrb[0].mxu0 %v6984
    %v8507 = vpop.f32.mrb[0].mxu0
    %v8508 = vadd.f32 %v8315, %v8507
    %v8509 = vpop.f32.mrb[0].mxu0
    %v8510 = vadd.f32 %v8317, %v8509
    %v8511 = vpop.f32.mrb[0].mxu0
    %v8512 = vadd.f32 %v8319, %v8511
    %v8513 = vpop.f32.mrb[0].mxu0
    %v8514 = vadd.f32 %v8321, %v8513
    %8515 = vmatprep.mubr.bf16.mxu0 %v6993
    %8516 = vmatmul.mubr.bf16.gmra.mrb[0].mxu0 %v6992
    %v8517 = vpop.f32.mrb[0].mxu0
    %v8518 = vadd.f32 %v8325, %v8517
    %v8519 = vpop.f32.mrb[0].mxu0
    %v8520 = vadd.f32 %v8327, %v8519
    %v8521 = vpop.f32.mrb[0].mxu0
    %v8522 = vadd.f32 %v8329, %v8521
    %v8523 = vpop.f32.mrb[0].mxu0
    %v8524 = vadd.f32 %v8331, %v8523
    %8525 = vmatprep.mubr.bf16.mxu0 %v7001
    %8526 = vmatmul.mubr.bf16.gmra.mrb[0].mxu0 %v7000
    %v8527 = vpop.f32.mrb[0].mxu0
    %v8528 = vadd.f32 %v8335, %v8527
    %v8529 = vpop.f32.mrb[0].mxu0
    %v8530 = vadd.f32 %v8337, %v8529
    %v8531 = vpop.f32.mrb[0].mxu0
    %v8532 = vadd.f32 %v8339, %v8531
    %v8533 = vpop.f32.mrb[0].mxu0
    %v8534 = vadd.f32 %v8341, %v8533
    %8535 = vmatprep.mubr.bf16.mxu0 %v7009
    %8536 = vmatmul.mubr.bf16.gmra.mrb[0].mxu0 %v7008
    %v8537 = vpop.f32.mrb[0].mxu0
    %v8538 = vadd.f32 %v8345, %v8537
    %v8539 = vpop.f32.mrb[0].mxu0
    %v8540 = vadd.f32 %v8347, %v8539
    %v8541 = vpop.f32.mrb[0].mxu0
    %v8542 = vadd.f32 %v8349, %v8541
    %v8543 = vpop.f32.mrb[0].mxu0
    %v8544 = vadd.f32 %v8351, %v8543
    %8545 = vmatprep.mubr.bf16.mxu0 %v7017
    %8546 = vmatmul.mubr.bf16.gmra.mrb[0].mxu0 %v7016
    %v8547 = vpop.f32.mrb[0].mxu0
    %v8548 = vadd.f32 %v8355, %v8547
    %v8549 = vpop.f32.mrb[0].mxu0
    %v8550 = vadd.f32 %v8357, %v8549
    %v8551 = vpop.f32.mrb[0].mxu0
    %v8552 = vadd.f32 %v8359, %v8551
    %v8553 = vpop.f32.mrb[0].mxu0
    %v8554 = vadd.f32 %v8361, %v8553
    %8555 = vmatprep.mubr.bf16.mxu0 %v7025
    %8556 = vmatmul.mubr.bf16.gmra.mrb[0].mxu0 %v7024
    %v8557 = vpop.f32.mrb[0].mxu0
    %v8558 = vadd.f32 %v8365, %v8557
    %v8559 = vpop.f32.mrb[0].mxu0
    %v8560 = vadd.f32 %v8367, %v8559
    %v8561 = vpop.f32.mrb[0].mxu0
    %v8562 = vadd.f32 %v8369, %v8561
    %v8563 = vpop.f32.mrb[0].mxu0
    %v8564 = vadd.f32 %v8371, %v8563
    %8565 = vmatprep.mubr.bf16.mxu0 %v7033
    %8566 = vmatmul.mubr.bf16.gmra.mrb[0].mxu0 %v7032
    %v8567 = vpop.f32.mrb[0].mxu0
    %v8568 = vadd.f32 %v8375, %v8567
    %v8569 = vpop.f32.mrb[0].mxu0
    %v8570 = vadd.f32 %v8377, %v8569
    %v8571 = vpop.f32.mrb[0].mxu0
    %v8572 = vadd.f32 %v8379, %v8571
    %v8573 = vpop.f32.mrb[0].mxu0
    %v8574 = vadd.f32 %v8381, %v8573
    %8575 = vmatprep.mubr.bf16.mxu0 %v7041
    %8576 = vmatmul.mubr.bf16.gmra.mrb[0].mxu0 %v7040
    %v8577 = vpop.f32.mrb[0].mxu0
    %v8578 = vadd.f32 %v8385, %v8577
    %v8579 = vpop.f32.mrb[0].mxu0
    %v8580 = vadd.f32 %v8387, %v8579
    %v8581 = vpop.f32.mrb[0].mxu0
    %v8582 = vadd.f32 %v8389, %v8581
    %v8583 = vpop.f32.mrb[0].mxu0
    %v8584 = vadd.f32 %v8391, %v8583
    %8585 = vmatprep.mubr.bf16.mxu0 %v7049
    %8586 = vmatmul.mubr.bf16.gmra.mrb[0].mxu0 %v7048
    %v8587 = vpop.f32.mrb[0].mxu0
    %v8588 = vadd.f32 %v8395, %v8587
    %v8589 = vpop.f32.mrb[0].mxu0
    %v8590 = vadd.f32 %v8397, %v8589
    %v8591 = vpop.f32.mrb[0].mxu0
    %v8592 = vadd.f32 %v8399, %v8591
    %v8593 = vpop.f32.mrb[0].mxu0
    %v8594 = vadd.f32 %v8401, %v8593
    %8595 = vmatprep.mubr.bf16.mxu0 %v7057
    %8596 = vmatmul.mubr.bf16.gmra.mrb[0].mxu0 %v7056
    %v8597 = vpop.f32.mrb[0].mxu0
    %v8598 = vadd.f32 %v8405, %v8597
    %v8599 = vpop.f32.mrb[0].mxu0
    %v8600 = vadd.f32 %v8407, %v8599
    %v8601 = vpop.f32.mrb[0].mxu0
    %v8602 = vadd.f32 %v8409, %v8601
    %v8603 = vpop.f32.mrb[0].mxu0
    %v8604 = vadd.f32 %v8411, %v8603
    %8605 = vmatprep.mubr.bf16.mxu0 %v7065
    %8606 = vmatmul.mubr.bf16.gmra.mrb[0].mxu0 %v7064
    %v8607 = vpop.f32.mrb[0].mxu0
    %v8608 = vadd.f32 %v8415, %v8607
    %v8609 = vpop.f32.mrb[0].mxu0
    %v8610 = vadd.f32 %v8417, %v8609
    %v8611 = vpop.f32.mrb[0].mxu0
    %v8612 = vadd.f32 %v8419, %v8611
    %v8613 = vpop.f32.mrb[0].mxu0
    %v8614 = vadd.f32 %v8421, %v8613
    %8615 = vmatprep.mubr.bf16.mxu0 %v7073
    %8616 = vmatmul.mubr.bf16.gmra.mrb[0].mxu0 %v7072
    %v8617 = vpop.f32.mrb[0].mxu0
    %v8618 = vadd.f32 %v8425, %v8617
    %v8619 = vpop.f32.mrb[0].mxu0
    %v8620 = vadd.f32 %v8427, %v8619
    %v8621 = vpop.f32.mrb[0].mxu0
    %v8622 = vadd.f32 %v8429, %v8621
    %v8623 = vpop.f32.mrb[0].mxu0
    %v8624 = vadd.f32 %v8431, %v8623
    %8625 = vdwg.mxu0
    %v8626 = vmax.f32 %v8468, 0.0
    %v8627 = vmax.f32 %v8470, 0.0
    %v8628 = vmax.f32 %v8472, 0.0
    %v8629 = vmax.f32 %v8474, 0.0
    %v8630 = vmax.f32 %v8478, 0.0
    %v8631 = vmax.f32 %v8480, 0.0
    %v8632 = vmax.f32 %v8482, 0.0
    %v8633 = vmax.f32 %v8484, 0.0
    %v8634 = vmax.f32 %v8488, 0.0
    %v8635 = vmax.f32 %v8490, 0.0
    %v8636 = vmax.f32 %v8492, 0.0
    %v8637 = vmax.f32 %v8494, 0.0
    %v8638 = vmax.f32 %v8498, 0.0
    %v8639 = vmax.f32 %v8500, 0.0
    %v8640 = vmax.f32 %v8502, 0.0
    %v8641 = vmax.f32 %v8504, 0.0
    %v8642 = vmax.f32 %v8508, 0.0
    %v8643 = vmax.f32 %v8510, 0.0
    %v8644 = vmax.f32 %v8512, 0.0
    %v8645 = vmax.f32 %v8514, 0.0
    %v8646 = vmax.f32 %v8518, 0.0
    %v8647 = vmax.f32 %v8520, 0.0
    %v8648 = vmax.f32 %v8522, 0.0
    %v8649 = vmax.f32 %v8524, 0.0
    %v8650 = vmax.f32 %v8528, 0.0
    %v8651 = vmax.f32 %v8530, 0.0
    %v8652 = vmax.f32 %v8532, 0.0
    %v8653 = vmax.f32 %v8534, 0.0
    %v8654 = vmax.f32 %v8538, 0.0
    %v8655 = vmax.f32 %v8540, 0.0
    %v8656 = vmax.f32 %v8542, 0.0
    %v8657 = vmax.f32 %v8544, 0.0
    %v8658 = vmax.f32 %v8548, 0.0
    %v8659 = vmax.f32 %v8550, 0.0
    %v8660 = vmax.f32 %v8552, 0.0
    %v8661 = vmax.f32 %v8554, 0.0
    %v8662 = vmax.f32 %v8558, 0.0
    %v8663 = vmax.f32 %v8560, 0.0
    %v8664 = vmax.f32 %v8562, 0.0
    %v8665 = vmax.f32 %v8564, 0.0
    %v8666 = vmax.f32 %v8568, 0.0
    %v8667 = vmax.f32 %v8570, 0.0
    %v8668 = vmax.f32 %v8572, 0.0
    %v8669 = vmax.f32 %v8574, 0.0
    %v8670 = vmax.f32 %v8578, 0.0
    %v8671 = vmax.f32 %v8580, 0.0
    %v8672 = vmax.f32 %v8582, 0.0
    %v8673 = vmax.f32 %v8584, 0.0
    %v8674 = vmax.f32 %v8588, 0.0
    %v8675 = vmax.f32 %v8590, 0.0
    %v8676 = vmax.f32 %v8592, 0.0
    %v8677 = vmax.f32 %v8594, 0.0
    %v8678 = vmax.f32 %v8598, 0.0
    %v8679 = vmax.f32 %v8600, 0.0
    %v8680 = vmax.f32 %v8602, 0.0
    %v8681 = vmax.f32 %v8604, 0.0
    %v8682 = vmax.f32 %v8608, 0.0
    %v8683 = vmax.f32 %v8610, 0.0
    %v8684 = vmax.f32 %v8612, 0.0
    %v8685 = vmax.f32 %v8614, 0.0
    %v8686 = vmax.f32 %v8618, 0.0
    %v8687 = vmax.f32 %v8620, 0.0
    %v8688 = vmax.f32 %v8622, 0.0
    %v8689 = vmax.f32 %v8624, 0.0
    %v8690 = vld [vmem:[#allocation11] sm:$0x3]
    %v8692 = vlaneseq
    %v8693 = vshrl.u32 %v8692, 7
    %v8694 = vsub.s32 0, %v8693
    %v8695 = vrot.slane %v8690, %v8694
    %v8696 = vlaneseq
    %v8697 = vshrl.u32 %v8696, 7
    %v8698 = vsub.s32 1, %v8697
    %v8699 = vrot.slane %v8690, %v8698
    %v8702 = vmul.f32 %v8626, %v8695
    %v8703 = vmul.f32 %v8627, %v8699
    %v8704 = vmul.f32 %v8628, %v8695
    %v8705 = vmul.f32 %v8629, %v8699
    %v8706 = vmul.f32 %v8630, %v8695
    %v8707 = vmul.f32 %v8631, %v8699
    %v8708 = vmul.f32 %v8632, %v8695
    %v8709 = vmul.f32 %v8633, %v8699
    %v8710 = vmul.f32 %v8634, %v8695
    %v8711 = vmul.f32 %v8635, %v8699
    %v8712 = vmul.f32 %v8636, %v8695
    %v8713 = vmul.f32 %v8637, %v8699
    %v8714 = vmul.f32 %v8638, %v8695
    %v8715 = vmul.f32 %v8639, %v8699
    %v8716 = vmul.f32 %v8640, %v8695
    %v8717 = vmul.f32 %v8641, %v8699
    %v8718 = vmul.f32 %v8642, %v8695
    %v8719 = vmul.f32 %v8643, %v8699
    %v8720 = vmul.f32 %v8644, %v8695
    %v8721 = vmul.f32 %v8645, %v8699
    %v8722 = vmul.f32 %v8646, %v8695
    %v8723 = vmul.f32 %v8647, %v8699
    %v8724 = vmul.f32 %v8648, %v8695
    %v8725 = vmul.f32 %v8649, %v8699
    %v8726 = vmul.f32 %v8650, %v8695
    %v8727 = vmul.f32 %v8651, %v8699
    %v8728 = vmul.f32 %v8652, %v8695
    %v8729 = vmul.f32 %v8653, %v8699
    %v8730 = vmul.f32 %v8654, %v8695
    %v8731 = vmul.f32 %v8655, %v8699
    %v8732 = vmul.f32 %v8656, %v8695
    %v8733 = vmul.f32 %v8657, %v8699
    %v8734 = vmul.f32 %v8658, %v8695
    %v8735 = vmul.f32 %v8659, %v8699
    %v8736 = vmul.f32 %v8660, %v8695
    %v8737 = vmul.f32 %v8661, %v8699
    %v8738 = vmul.f32 %v8662, %v8695
    %v8739 = vmul.f32 %v8663, %v8699
    %v8740 = vmul.f32 %v8664, %v8695
    %v8741 = vmul.f32 %v8665, %v8699
    %v8742 = vmul.f32 %v8666, %v8695
    %v8743 = vmul.f32 %v8667, %v8699
    %v8744 = vmul.f32 %v8668, %v8695
    %v8745 = vmul.f32 %v8669, %v8699
    %v8746 = vmul.f32 %v8670, %v8695
    %v8747 = vmul.f32 %v8671, %v8699
    %v8748 = vmul.f32 %v8672, %v8695
    %v8749 = vmul.f32 %v8673, %v8699
    %v8750 = vmul.f32 %v8674, %v8695
    %v8751 = vmul.f32 %v8675, %v8699
    %v8752 = vmul.f32 %v8676, %v8695
    %v8753 = vmul.f32 %v8677, %v8699
    %v8754 = vmul.f32 %v8678, %v8695
    %v8755 = vmul.f32 %v8679, %v8699
    %v8756 = vmul.f32 %v8680, %v8695
    %v8757 = vmul.f32 %v8681, %v8699
    %v8758 = vmul.f32 %v8682, %v8695
    %v8759 = vmul.f32 %v8683, %v8699
    %v8760 = vmul.f32 %v8684, %v8695
    %v8761 = vmul.f32 %v8685, %v8699
    %v8762 = vmul.f32 %v8686, %v8695
    %v8763 = vmul.f32 %v8687, %v8699
    %v8764 = vmul.f32 %v8688, %v8695
    %v8765 = vmul.f32 %v8689, %v8699
    %v8766 = vadd.f32 %v8702, %v8703
    %8767 = vadd.xlane.f32.xlu0 %v8766
    %v8768 = vpop.xlane.xlu0 %8767
    %v8769 = vadd.f32 %v8704, %v8705
    %8770 = vadd.xlane.f32.xlu0 %v8769
    %v8771 = vpop.xlane.xlu0 %8770
    %v8772 = vadd.f32 %v8706, %v8707
    %8773 = vadd.xlane.f32.xlu0 %v8772
    %v8774 = vpop.xlane.xlu0 %8773
    %v8775 = vadd.f32 %v8708, %v8709
    %8776 = vadd.xlane.f32.xlu0 %v8775
    %v8777 = vpop.xlane.xlu0 %8776
    %v8778 = vadd.f32 %v8710, %v8711
    %8779 = vadd.xlane.f32.xlu0 %v8778
    %v8780 = vpop.xlane.xlu0 %8779
    %v8781 = vadd.f32 %v8712, %v8713
    %8782 = vadd.xlane.f32.xlu0 %v8781
    %v8783 = vpop.xlane.xlu0 %8782
    %v8784 = vadd.f32 %v8714, %v8715
    %8785 = vadd.xlane.f32.xlu0 %v8784
    %v8786 = vpop.xlane.xlu0 %8785
    %v8787 = vadd.f32 %v8716, %v8717
    %8788 = vadd.xlane.f32.xlu0 %v8787
    %v8789 = vpop.xlane.xlu0 %8788
    %v8790 = vadd.f32 %v8718, %v8719
    %8791 = vadd.xlane.f32.xlu0 %v8790
    %v8792 = vpop.xlane.xlu0 %8791
    %v8793 = vadd.f32 %v8720, %v8721
    %8794 = vadd.xlane.f32.xlu0 %v8793
    %v8795 = vpop.xlane.xlu0 %8794
    %v8796 = vadd.f32 %v8722, %v8723
    %8797 = vadd.xlane.f32.xlu0 %v8796
    %v8798 = vpop.xlane.xlu0 %8797
    %v8799 = vadd.f32 %v8724, %v8725
    %8800 = vadd.xlane.f32.xlu0 %v8799
    %v8801 = vpop.xlane.xlu0 %8800
    %v8802 = vadd.f32 %v8726, %v8727
    %8803 = vadd.xlane.f32.xlu0 %v8802
    %v8804 = vpop.xlane.xlu0 %8803
    %v8805 = vadd.f32 %v8728, %v8729
    %8806 = vadd.xlane.f32.xlu0 %v8805
    %v8807 = vpop.xlane.xlu0 %8806
    %v8808 = vadd.f32 %v8730, %v8731
    %8809 = vadd.xlane.f32.xlu0 %v8808
    %v8810 = vpop.xlane.xlu0 %8809
    %v8811 = vadd.f32 %v8732, %v8733
    %8812 = vadd.xlane.f32.xlu0 %v8811
    %v8813 = vpop.xlane.xlu0 %8812
    %v8814 = vadd.f32 %v8734, %v8735
    %8815 = vadd.xlane.f32.xlu0 %v8814
    %v8816 = vpop.xlane.xlu0 %8815
    %v8817 = vadd.f32 %v8736, %v8737
    %8818 = vadd.xlane.f32.xlu0 %v8817
    %v8819 = vpop.xlane.xlu0 %8818
    %v8820 = vadd.f32 %v8738, %v8739
    %8821 = vadd.xlane.f32.xlu0 %v8820
    %v8822 = vpop.xlane.xlu0 %8821
    %v8823 = vadd.f32 %v8740, %v8741
    %8824 = vadd.xlane.f32.xlu0 %v8823
    %v8825 = vpop.xlane.xlu0 %8824
    %v8826 = vadd.f32 %v8742, %v8743
    %8827 = vadd.xlane.f32.xlu0 %v8826
    %v8828 = vpop.xlane.xlu0 %8827
    %v8829 = vadd.f32 %v8744, %v8745
    %8830 = vadd.xlane.f32.xlu0 %v8829
    %v8831 = vpop.xlane.xlu0 %8830
    %v8832 = vadd.f32 %v8746, %v8747
    %8833 = vadd.xlane.f32.xlu0 %v8832
    %v8834 = vpop.xlane.xlu0 %8833
    %v8835 = vadd.f32 %v8748, %v8749
    %8836 = vadd.xlane.f32.xlu0 %v8835
    %v8837 = vpop.xlane.xlu0 %8836
    %v8838 = vadd.f32 %v8750, %v8751
    %8839 = vadd.xlane.f32.xlu0 %v8838
    %v8840 = vpop.xlane.xlu0 %8839
    %v8841 = vadd.f32 %v8752, %v8753
    %8842 = vadd.xlane.f32.xlu0 %v8841
    %v8843 = vpop.xlane.xlu0 %8842
    %v8844 = vadd.f32 %v8754, %v8755
    %8845 = vadd.xlane.f32.xlu0 %v8844
    %v8846 = vpop.xlane.xlu0 %8845
    %v8847 = vadd.f32 %v8756, %v8757
    %8848 = vadd.xlane.f32.xlu0 %v8847
    %v8849 = vpop.xlane.xlu0 %8848
    %v8850 = vadd.f32 %v8758, %v8759
    %8851 = vadd.xlane.f32.xlu0 %v8850
    %v8852 = vpop.xlane.xlu0 %8851
    %v8853 = vadd.f32 %v8760, %v8761
    %8854 = vadd.xlane.f32.xlu0 %v8853
    %v8855 = vpop.xlane.xlu0 %8854
    %v8856 = vadd.f32 %v8762, %v8763
    %8857 = vadd.xlane.f32.xlu0 %v8856
    %v8858 = vpop.xlane.xlu0 %8857
    %v8859 = vadd.f32 %v8764, %v8765
    %8860 = vadd.xlane.f32.xlu0 %v8859
    %v8861 = vpop.xlane.xlu0 %8860
    %v8862 = vld [vmem:[#allocation2] sm:$0x1]
    %v8864 = vlaneseq
    %v8865 = vshrl.u32 %v8864, 7
    %v8866 = vsub.s32 0, %v8865
    %v8867 = vrot.slane %v8862, %v8866
    %v8869 = vadd.f32 %v8768, %v8867
    %v8870 = vadd.f32 %v8771, %v8867
    %v8871 = vadd.f32 %v8774, %v8867
    %v8872 = vadd.f32 %v8777, %v8867
    %v8873 = vadd.f32 %v8780, %v8867
    %v8874 = vadd.f32 %v8783, %v8867
    %v8875 = vadd.f32 %v8786, %v8867
    %v8876 = vadd.f32 %v8789, %v8867
    %v8877 = vadd.f32 %v8792, %v8867
    %v8878 = vadd.f32 %v8795, %v8867
    %v8879 = vadd.f32 %v8798, %v8867
    %v8880 = vadd.f32 %v8801, %v8867
    %v8881 = vadd.f32 %v8804, %v8867
    %v8882 = vadd.f32 %v8807, %v8867
    %v8883 = vadd.f32 %v8810, %v8867
    %v8884 = vadd.f32 %v8813, %v8867
    %v8885 = vadd.f32 %v8816, %v8867
    %v8886 = vadd.f32 %v8819, %v8867
    %v8887 = vadd.f32 %v8822, %v8867
    %v8888 = vadd.f32 %v8825, %v8867
    %v8889 = vadd.f32 %v8828, %v8867
    %v8890 = vadd.f32 %v8831, %v8867
    %v8891 = vadd.f32 %v8834, %v8867
    %v8892 = vadd.f32 %v8837, %v8867
    %v8893 = vadd.f32 %v8840, %v8867
    %v8894 = vadd.f32 %v8843, %v8867
    %v8895 = vadd.f32 %v8846, %v8867
    %v8896 = vadd.f32 %v8849, %v8867
    %v8897 = vadd.f32 %v8852, %v8867
    %v8898 = vadd.f32 %v8855, %v8867
    %v8899 = vadd.f32 %v8858, %v8867
    %v8900 = vadd.f32 %v8861, %v8867
    %v8901 = vxor.u32 %v8869, 2147483648
    %v8902 = vxor.u32 %v8870, 2147483648
    %v8903 = vxor.u32 %v8871, 2147483648
    %v8904 = vxor.u32 %v8872, 2147483648
    %v8905 = vxor.u32 %v8873, 2147483648
    %v8906 = vxor.u32 %v8874, 2147483648
    %v8907 = vxor.u32 %v8875, 2147483648
    %v8908 = vxor.u32 %v8876, 2147483648
    %v8909 = vxor.u32 %v8877, 2147483648
    %v8910 = vxor.u32 %v8878, 2147483648
    %v8911 = vxor.u32 %v8879, 2147483648
    %v8912 = vxor.u32 %v8880, 2147483648
    %v8913 = vxor.u32 %v8881, 2147483648
    %v8914 = vxor.u32 %v8882, 2147483648
    %v8915 = vxor.u32 %v8883, 2147483648
    %v8916 = vxor.u32 %v8884, 2147483648
    %v8917 = vxor.u32 %v8885, 2147483648
    %v8918 = vxor.u32 %v8886, 2147483648
    %v8919 = vxor.u32 %v8887, 2147483648
    %v8920 = vxor.u32 %v8888, 2147483648
    %v8921 = vxor.u32 %v8889, 2147483648
    %v8922 = vxor.u32 %v8890, 2147483648
    %v8923 = vxor.u32 %v8891, 2147483648
    %v8924 = vxor.u32 %v8892, 2147483648
    %v8925 = vxor.u32 %v8893, 2147483648
    %v8926 = vxor.u32 %v8894, 2147483648
    %v8927 = vxor.u32 %v8895, 2147483648
    %v8928 = vxor.u32 %v8896, 2147483648
    %v8929 = vxor.u32 %v8897, 2147483648
    %v8930 = vxor.u32 %v8898, 2147483648
    %v8931 = vxor.u32 %v8899, 2147483648
    %v8932 = vxor.u32 %v8900, 2147483648
    %v8933 = vmul.f32 %v8901, 1.442695
    %v8934 = vpow.pop %v8933
    %v8935 = vmul.f32 %v8902, 1.442695
    %v8936 = vpow.pop %v8935
    %v8937 = vmul.f32 %v8903, 1.442695
    %v8938 = vpow.pop %v8937
    %v8939 = vmul.f32 %v8904, 1.442695
    %v8940 = vpow.pop %v8939
    %v8941 = vmul.f32 %v8905, 1.442695
    %v8942 = vpow.pop %v8941
    %v8943 = vmul.f32 %v8906, 1.442695
    %v8944 = vpow.pop %v8943
    %v8945 = vmul.f32 %v8907, 1.442695
    %v8946 = vpow.pop %v8945
    %v8947 = vmul.f32 %v8908, 1.442695
    %v8948 = vpow.pop %v8947
    %v8949 = vmul.f32 %v8909, 1.442695
    %v8950 = vpow.pop %v8949
    %v8951 = vmul.f32 %v8910, 1.442695
    %v8952 = vpow.pop %v8951
    %v8953 = vmul.f32 %v8911, 1.442695
    %v8954 = vpow.pop %v8953
    %v8955 = vmul.f32 %v8912, 1.442695
    %v8956 = vpow.pop %v8955
    %v8957 = vmul.f32 %v8913, 1.442695
    %v8958 = vpow.pop %v8957
    %v8959 = vmul.f32 %v8914, 1.442695
    %v8960 = vpow.pop %v8959
    %v8961 = vmul.f32 %v8915, 1.442695
    %v8962 = vpow.pop %v8961
    %v8963 = vmul.f32 %v8916, 1.442695
    %v8964 = vpow.pop %v8963
    %v8965 = vmul.f32 %v8917, 1.442695
    %v8966 = vpow.pop %v8965
    %v8967 = vmul.f32 %v8918, 1.442695
    %v8968 = vpow.pop %v8967
    %v8969 = vmul.f32 %v8919, 1.442695
    %v8970 = vpow.pop %v8969
    %v8971 = vmul.f32 %v8920, 1.442695
    %v8972 = vpow.pop %v8971
    %v8973 = vmul.f32 %v8921, 1.442695
    %v8974 = vpow.pop %v8973
    %v8975 = vmul.f32 %v8922, 1.442695
    %v8976 = vpow.pop %v8975
    %v8977 = vmul.f32 %v8923, 1.442695
    %v8978 = vpow.pop %v8977
    %v8979 = vmul.f32 %v8924, 1.442695
    %v8980 = vpow.pop %v8979
    %v8981 = vmul.f32 %v8925, 1.442695
    %v8982 = vpow.pop %v8981
    %v8983 = vmul.f32 %v8926, 1.442695
    %v8984 = vpow.pop %v8983
    %v8985 = vmul.f32 %v8927, 1.442695
    %v8986 = vpow.pop %v8985
    %v8987 = vmul.f32 %v8928, 1.442695
    %v8988 = vpow.pop %v8987
    %v8989 = vmul.f32 %v8929, 1.442695
    %v8990 = vpow.pop %v8989
    %v8991 = vmul.f32 %v8930, 1.442695
    %v8992 = vpow.pop %v8991
    %v8993 = vmul.f32 %v8931, 1.442695
    %v8994 = vpow.pop %v8993
    %v8995 = vmul.f32 %v8932, 1.442695
    %v8996 = vpow.pop %v8995
    %v8997 = vadd.f32 %v8934, 1.0
    %v8998 = vadd.f32 %v8936, 1.0
    %v8999 = vadd.f32 %v8938, 1.0
    %v9000 = vadd.f32 %v8940, 1.0
    %v9001 = vadd.f32 %v8942, 1.0
    %v9002 = vadd.f32 %v8944, 1.0
    %v9003 = vadd.f32 %v8946, 1.0
    %v9004 = vadd.f32 %v8948, 1.0
    %v9005 = vadd.f32 %v8950, 1.0
    %v9006 = vadd.f32 %v8952, 1.0
    %v9007 = vadd.f32 %v8954, 1.0
    %v9008 = vadd.f32 %v8956, 1.0
    %v9009 = vadd.f32 %v8958, 1.0
    %v9010 = vadd.f32 %v8960, 1.0
    %v9011 = vadd.f32 %v8962, 1.0
    %v9012 = vadd.f32 %v8964, 1.0
    %v9013 = vadd.f32 %v8966, 1.0
    %v9014 = vadd.f32 %v8968, 1.0
    %v9015 = vadd.f32 %v8970, 1.0
    %v9016 = vadd.f32 %v8972, 1.0
    %v9017 = vadd.f32 %v8974, 1.0
    %v9018 = vadd.f32 %v8976, 1.0
    %v9019 = vadd.f32 %v8978, 1.0
    %v9020 = vadd.f32 %v8980, 1.0
    %v9021 = vadd.f32 %v8982, 1.0
    %v9022 = vadd.f32 %v8984, 1.0
    %v9023 = vadd.f32 %v8986, 1.0
    %v9024 = vadd.f32 %v8988, 1.0
    %v9025 = vadd.f32 %v8990, 1.0
    %v9026 = vadd.f32 %v8992, 1.0
    %v9027 = vadd.f32 %v8994, 1.0
    %v9028 = vadd.f32 %v8996, 1.0
    %v9029 = vrcp.pop %v8997
    %v9030 = vmul.f32 1.0, %v9029
    %v9031 = vrcp.pop %v8998
    %v9032 = vmul.f32 1.0, %v9031
    %v9033 = vrcp.pop %v8999
    %v9034 = vmul.f32 1.0, %v9033
    %v9035 = vrcp.pop %v9000
    %v9036 = vmul.f32 1.0, %v9035
    %v9037 = vrcp.pop %v9001
    %v9038 = vmul.f32 1.0, %v9037
    %v9039 = vrcp.pop %v9002
    %v9040 = vmul.f32 1.0, %v9039
    %v9041 = vrcp.pop %v9003
    %v9042 = vmul.f32 1.0, %v9041
    %v9043 = vrcp.pop %v9004
    %v9044 = vmul.f32 1.0, %v9043
    %v9045 = vrcp.pop %v9005
    %v9046 = vmul.f32 1.0, %v9045
    %v9047 = vrcp.pop %v9006
    %v9048 = vmul.f32 1.0, %v9047
    %v9049 = vrcp.pop %v9007
    %v9050 = vmul.f32 1.0, %v9049
    %v9051 = vrcp.pop %v9008
    %v9052 = vmul.f32 1.0, %v9051
    %v9053 = vrcp.pop %v9009
    %v9054 = vmul.f32 1.0, %v9053
    %v9055 = vrcp.pop %v9010
    %v9056 = vmul.f32 1.0, %v9055
    %v9057 = vrcp.pop %v9011
    %v9058 = vmul.f32 1.0, %v9057
    %v9059 = vrcp.pop %v9012
    %v9060 = vmul.f32 1.0, %v9059
    %v9061 = vrcp.pop %v9013
    %v9062 = vmul.f32 1.0, %v9061
    %v9063 = vrcp.pop %v9014
    %v9064 = vmul.f32 1.0, %v9063
    %v9065 = vrcp.pop %v9015
    %v9066 = vmul.f32 1.0, %v9065
    %v9067 = vrcp.pop %v9016
    %v9068 = vmul.f32 1.0, %v9067
    %v9069 = vrcp.pop %v9017
    %v9070 = vmul.f32 1.0, %v9069
    %v9071 = vrcp.pop %v9018
    %v9072 = vmul.f32 1.0, %v9071
    %v9073 = vrcp.pop %v9019
    %v9074 = vmul.f32 1.0, %v9073
    %v9075 = vrcp.pop %v9020
    %v9076 = vmul.f32 1.0, %v9075
    %v9077 = vrcp.pop %v9021
    %v9078 = vmul.f32 1.0, %v9077
    %v9079 = vrcp.pop %v9022
    %v9080 = vmul.f32 1.0, %v9079
    %v9081 = vrcp.pop %v9023
    %v9082 = vmul.f32 1.0, %v9081
    %v9083 = vrcp.pop %v9024
    %v9084 = vmul.f32 1.0, %v9083
    %v9085 = vrcp.pop %v9025
    %v9086 = vmul.f32 1.0, %v9085
    %v9087 = vrcp.pop %v9026
    %v9088 = vmul.f32 1.0, %v9087
    %v9089 = vrcp.pop %v9027
    %v9090 = vmul.f32 1.0, %v9089
    %v9091 = vrcp.pop %v9028
    %v9092 = vmul.f32 1.0, %v9091
    %vm9093 = vcmask 7168
    %9094 = vst.msk [vmem:[%s7] sm:$0xff] %vm9093, %v9030
    %9095 = vst.msk [vmem:[%s7 + $0x8] sm:$0xff] %vm9093, %v9032
    %9096 = vst.msk [vmem:[%s7 + $0x10] sm:$0xff] %vm9093, %v9034
    %9097 = vst.msk [vmem:[%s7 + $0x18] sm:$0xff] %vm9093, %v9036
    %9098 = vst.msk [vmem:[%s7 + $0x20] sm:$0xff] %vm9093, %v9038
    %9099 = vst.msk [vmem:[%s7 + $0x28] sm:$0xff] %vm9093, %v9040
    %9100 = vst.msk [vmem:[%s7 + $0x30] sm:$0xff] %vm9093, %v9042
    %9101 = vst.msk [vmem:[%s7 + $0x38] sm:$0xff] %vm9093, %v9044
    %9102 = vst.msk [vmem:[%s7 + $0x40] sm:$0xff] %vm9093, %v9046
    %9103 = vst.msk [vmem:[%s7 + $0x48] sm:$0xff] %vm9093, %v9048
    %9104 = vst.msk [vmem:[%s7 + $0x50] sm:$0xff] %vm9093, %v9050
    %9105 = vst.msk [vmem:[%s7 + $0x58] sm:$0xff] %vm9093, %v9052
    %9106 = vst.msk [vmem:[%s7 + $0x60] sm:$0xff] %vm9093, %v9054
    %9107 = vst.msk [vmem:[%s7 + $0x68] sm:$0xff] %vm9093, %v9056
    %9108 = vst.msk [vmem:[%s7 + $0x70] sm:$0xff] %vm9093, %v9058
    %9109 = vst.msk [vmem:[%s7 + $0x78] sm:$0xff] %vm9093, %v9060
    %9110 = vst.msk [vmem:[%s7 + $0x80] sm:$0xff] %vm9093, %v9062
    %9111 = vst.msk [vmem:[%s7 + $0x88] sm:$0xff] %vm9093, %v9064
    %9112 = vst.msk [vmem:[%s7 + $0x90] sm:$0xff] %vm9093, %v9066
    %9113 = vst.msk [vmem:[%s7 + $0x98] sm:$0xff] %vm9093, %v9068
    %9114 = vst.msk [vmem:[%s7 + $0xa0] sm:$0xff] %vm9093, %v9070
    %9115 = vst.msk [vmem:[%s7 + $0xa8] sm:$0xff] %vm9093, %v9072
    %9116 = vst.msk [vmem:[%s7 + $0xb0] sm:$0xff] %vm9093, %v9074
    %9117 = vst.msk [vmem:[%s7 + $0xb8] sm:$0xff] %vm9093, %v9076
    %9118 = vst.msk [vmem:[%s7 + $0xc0] sm:$0xff] %vm9093, %v9078
    %9119 = vst.msk [vmem:[%s7 + $0xc8] sm:$0xff] %vm9093, %v9080
    %9120 = vst.msk [vmem:[%s7 + $0xd0] sm:$0xff] %vm9093, %v9082
    %9121 = vst.msk [vmem:[%s7 + $0xd8] sm:$0xff] %vm9093, %v9084
    %9122 = vst.msk [vmem:[%s7 + $0xe0] sm:$0xff] %vm9093, %v9086
    %9123 = vst.msk [vmem:[%s7 + $0xe8] sm:$0xff] %vm9093, %v9088
    %9124 = vst.msk [vmem:[%s7 + $0xf0] sm:$0xff] %vm9093, %v9090
    %9125 = vst.msk [vmem:[%s7 + $0xf8] sm:$0xff] %vm9093, %v9092
    // Predicated region
    $region54: #{tpu_custom_call.1} parent=1 // pred_check
      _
    $region55: #{tpu_custom_call.1} parent=1 // pred_check_branch
      %9127 = sbr.rel (0) target = $region57
    $region56: #{tpu_custom_call.1} parent=1 // pred_region
      _
    $region57: #{tpu_custom_call.1} parent=1 // pred_fallthru
      _
    // Predicated region
    $region58: #{tpu_custom_call.1} parent=1 // pred_check
      _
    $region59: #{tpu_custom_call.1} parent=1 // pred_check_branch
      %9129 = sbr.rel (0) target = $region61
    $region60: #{tpu_custom_call.1} parent=1 // pred_region
      _
    $region61: #{tpu_custom_call.1} parent=1 // pred_fallthru
      _
    %9130 = vsyncpa [#allocation4], 1
    %9131 = vsyncpa [#allocation6], 1
    %9132 = vsyncpa [#allocation9], 1
    %9133 = vsyncpa [#allocation12], 1

</llo_original>
